<compile_context>
chip_gen: v6e
topology: v6e:2x2x1
jax: 0.10.0
libtpu: 0.0.40
codegen_flags: <defaults>
</compile_context>

<pallas_src>
import jax
import jax.numpy as jnp
from jax import lax
from jax.experimental import pallas as pl
from jax.experimental.pallas import tpu as pltpu

# ---- model hyper-params (small, consistent with the module) ----
BATCH = 8                       # per-forward batch (BatchNorm statistics group)
LATENT_DIM = 32
CHANNELS = 1
IMG_SIZE = 16
IMG_PROD = CHANNELS * IMG_SIZE * IMG_SIZE     # 256
HIDDENS = (128, 256, 512, 1024)
BN_EPS = 0.8                    # nn.BatchNorm1d(out_feat, 0.8) -> eps = 0.8
LRELU_SLOPE = 0.2

GROUPS_PER_STEP = 4             # independent batches stacked per grid step (32 MXU rows)


def _leaky_relu(x):
    return jnp.where(x > 0, x, LRELU_SLOPE * x)


def generator_kernel(z_ref,
                     w1_ref, b1_ref,
                     w2_ref, b2_ref, g2_ref, be2_ref,
                     w3_ref, b3_ref, g3_ref, be3_ref,
                     w4_ref, b4_ref, g4_ref, be4_ref,
                     w5_ref, b5_ref,
                     out_ref):
    """Fused MLP forward on a (GROUPS_PER_STEP*BATCH, F) activation slab.

    Weights live in VMEM with constant block indices -> fetched once, resident
    across all grid steps. BN statistics are computed per 8-row batch.
    """
    rows = z_ref.shape[0]            # static: GROUPS_PER_STEP * BATCH
    n_groups = rows // BATCH

    def linear(x, w_ref, b_ref):
        # bf16 MXU inputs, f32 accumulation, f32 bias add.
        y = jnp.dot(x.astype(jnp.bfloat16), w_ref[...],
                    preferred_element_type=jnp.float32)
        return y + b_ref[...].astype(jnp.float32)

    def batchnorm(x, g_ref, be_ref):
        # PyTorch train-mode BatchNorm1d: biased batch variance, eps = 0.8.
        # Stats per 8-sample batch: reduce over axis=1 of (n_groups, BATCH, F).
        f = x.shape[-1]
        x3 = x.reshape(n_groups, BATCH, f)
        mean = jnp.mean(x3, axis=1, keepdims=True)                       # (G,1,F)
        var = jnp.mean(jnp.square(x3 - mean), axis=1, keepdims=True)     # (G,1,F)
        scale = g_ref[...] * lax.rsqrt(var + BN_EPS)                     # fold affine
        shift = be_ref[...] - mean * scale
        return (x3 * scale + shift).reshape(rows, f)

    h = _leaky_relu(linear(z_ref[...], w1_ref, b1_ref))
    h = _leaky_relu(batchnorm(linear(h, w2_ref, b2_ref), g2_ref, be2_ref))
    h = _leaky_relu(batchnorm(linear(h, w3_ref, b3_ref), g3_ref, be3_ref))
    h = _leaky_relu(batchnorm(linear(h, w4_ref, b4_ref), g4_ref, be4_ref))
    out_ref[...] = jnp.tanh(linear(h, w5_ref, b5_ref))


def init_params(key):
    """Deterministic init matching PyTorch Linear default: U(-1/sqrt(in), 1/sqrt(in)).
    Weights stored transposed (in, out) so the kernel does x @ W.
    Linear weights/biases stored in bf16 (halves weight DMA); BN params in f32."""
    dims = (LATENT_DIM,) + HIDDENS + (IMG_PROD,)
    params = []
    for i in range(len(dims) - 1):
        fan_in, fan_out = dims[i], dims[i + 1]
        key, kw, kb = jax.random.split(key, 3)
        bound = 1.0 / jnp.sqrt(jnp.float32(fan_in))
        w = jax.random.uniform(kw, (fan_in, fan_out), jnp.float32, -bound, bound)
        b = jax.random.uniform(kb, (1, fan_out), jnp.float32, -bound, bound)
        w = w.astype(jnp.bfloat16)
        b = b.astype(jnp.bfloat16)
        if i in (1, 2, 3):  # layers followed by BatchNorm1d
            gamma = jnp.ones((1, fan_out), jnp.float32)
            beta = jnp.zeros((1, fan_out), jnp.float32)
            params.append((w, b, gamma, beta))
        else:
            params.append((w, b))
    return params


def _resident_spec(arr):
    """Full-array block, constant index -> DMA'd once, resident across the grid."""
    return pl.BlockSpec(arr.shape, lambda i: (0,) * arr.ndim)


@jax.jit
def generator_forward(z, params):
    """z: (num_batches, BATCH, LATENT_DIM) -- num_batches independent PyTorch
    forward() calls (BatchNorm stats per 8-sample batch, train mode).
    Returns (num_batches, BATCH, C, H, W)."""
    num_batches = z.shape[0]
    assert z.shape[1:] == (BATCH, LATENT_DIM)
    assert num_batches % GROUPS_PER_STEP == 0
    num_steps = num_batches // GROUPS_PER_STEP
    rows_per_step = GROUPS_PER_STEP * BATCH

    z2d = z.reshape(num_batches * BATCH, LATENT_DIM)

    flat_params = []
    for p in params:
        flat_params.extend(p)

    in_specs = [pl.BlockSpec((rows_per_step, LATENT_DIM), lambda i: (i, 0))]
    in_specs += [_resident_spec(a) for a in flat_params]

    out_flat = pl.pallas_call(
        generator_kernel,
        grid=(num_steps,),
        out_shape=jax.ShapeDtypeStruct((num_batches * BATCH, IMG_PROD), jnp.float32),
        in_specs=in_specs,
        out_specs=pl.BlockSpec((rows_per_step, IMG_PROD), lambda i: (i, 0)),
        compiler_params=pltpu.CompilerParams(
            dimension_semantics=("parallel",),   # v7x: shard steps across 2 TCs
            vmem_limit_bytes=16 << 20,           # ~5 MiB needed; headroom on v7x
        ),
    )(z2d, *flat_params)

    # img.view(img.size(0), *img_shape) -> NCHW, per batch
    return out_flat.reshape(num_batches, BATCH, CHANNELS, IMG_SIZE, IMG_SIZE)


def generator_reference(z, params):
    """Pure-JAX reference mirroring the kernel math (bf16 weights, f32 accum)."""
    nb = z.shape[0]
    x = z.reshape(nb * BATCH, LATENT_DIM)

    def linear(x, w, b):
        return jnp.dot(x.astype(jnp.bfloat16), w,
                       preferred_element_type=jnp.float32) + b.astype(jnp.float32)

    def bn(x, g, be):
        f = x.shape[-1]
        x3 = x.reshape(nb, BATCH, f)
        mean = jnp.mean(x3, axis=1, keepdims=True)
        var = jnp.mean(jnp.square(x3 - mean), axis=1, keepdims=True)
        y = (x3 - mean) * lax.rsqrt(var + BN_EPS) * g + be
        return y.reshape(nb * BATCH, f)

    (w1, b1), (w2, b2, g2, be2), (w3, b3, g3, be3), (w4, b4, g4, be4), (w5, b5) = params
    h = _leaky_relu(linear(x, w1, b1))
    h = _leaky_relu(bn(linear(h, w2, b2), g2, be2))
    h = _leaky_relu(bn(linear(h, w3, b3), g3, be3))
    h = _leaky_relu(bn(linear(h, w4, b4), g4, be4))
    out = jnp.tanh(linear(h, w5, b5))
    return out.reshape(nb, BATCH, CHANNELS, IMG_SIZE, IMG_SIZE)


if __name__ == "__main__":
    key = jax.random.PRNGKey(0)
    key_p, key_z = jax.random.split(key)
    params = init_params(key_p)

    num_batches = 8                              # 8 independent 8-sample batches
    z = jax.random.normal(key_z, (num_batches, BATCH, LATENT_DIM), jnp.float32)

    img = generator_forward(z, params)
    jax.block_until_ready(img)

    assert img.shape == (num_batches, BATCH, CHANNELS, IMG_SIZE, IMG_SIZE)
    assert img.dtype == jnp.float32

    ref = generator_reference(z, params)
    max_err = float(jnp.max(jnp.abs(img - ref)))
    assert max_err < 2e-2, f"max abs error vs reference: {max_err}"

    print("KERNEL_OK")
</pallas_src>

<mosaic_0001>
module attributes {stable_mosaic.version = 11 : i64} {
  func.func @generator_kernel(%arg0: i32, %arg1: memref<32x32xf32, #tpu.memory_space<vmem>>, %arg2: memref<32x128xbf16, #tpu.memory_space<vmem>>, %arg3: memref<1x128xbf16, #tpu.memory_space<vmem>>, %arg4: memref<128x256xbf16, #tpu.memory_space<vmem>>, %arg5: memref<1x256xbf16, #tpu.memory_space<vmem>>, %arg6: memref<1x256xf32, #tpu.memory_space<vmem>>, %arg7: memref<1x256xf32, #tpu.memory_space<vmem>>, %arg8: memref<256x512xbf16, #tpu.memory_space<vmem>>, %arg9: memref<1x512xbf16, #tpu.memory_space<vmem>>, %arg10: memref<1x512xf32, #tpu.memory_space<vmem>>, %arg11: memref<1x512xf32, #tpu.memory_space<vmem>>, %arg12: memref<512x1024xbf16, #tpu.memory_space<vmem>>, %arg13: memref<1x1024xbf16, #tpu.memory_space<vmem>>, %arg14: memref<1x1024xf32, #tpu.memory_space<vmem>>, %arg15: memref<1x1024xf32, #tpu.memory_space<vmem>>, %arg16: memref<1024x256xbf16, #tpu.memory_space<vmem>>, %arg17: memref<1x256xbf16, #tpu.memory_space<vmem>>, %arg18: memref<32x256xf32, #tpu.memory_space<vmem>>) attributes {dimension_semantics = [#tpu.dimension_semantics<parallel>], iteration_bounds = array<i64: 2>, scalar_prefetch = 0 : i64, scratch_operands = 0 : i64, tpu.core_type = #tpu.core_type<tc>, window_params = [{transform_indices = @transform_0, window_bounds = array<i64: 32, 32>}, {pipeline_mode = #tpu.pipeline_mode<synchronous>, transform_indices = @transform_1, window_bounds = array<i64: 32, 128>}, {pipeline_mode = #tpu.pipeline_mode<synchronous>, transform_indices = @transform_2, window_bounds = array<i64: 1, 128>}, {pipeline_mode = #tpu.pipeline_mode<synchronous>, transform_indices = @transform_3, window_bounds = array<i64: 128, 256>}, {pipeline_mode = #tpu.pipeline_mode<synchronous>, transform_indices = @transform_4, window_bounds = array<i64: 1, 256>}, {pipeline_mode = #tpu.pipeline_mode<synchronous>, transform_indices = @transform_5, window_bounds = array<i64: 1, 256>}, {pipeline_mode = #tpu.pipeline_mode<synchronous>, transform_indices = @transform_6, window_bounds = array<i64: 1, 256>}, {pipeline_mode = #tpu.pipeline_mode<synchronous>, transform_indices = @transform_7, window_bounds = array<i64: 256, 512>}, {pipeline_mode = #tpu.pipeline_mode<synchronous>, transform_indices = @transform_8, window_bounds = array<i64: 1, 512>}, {pipeline_mode = #tpu.pipeline_mode<synchronous>, transform_indices = @transform_9, window_bounds = array<i64: 1, 512>}, {pipeline_mode = #tpu.pipeline_mode<synchronous>, transform_indices = @transform_10, window_bounds = array<i64: 1, 512>}, {pipeline_mode = #tpu.pipeline_mode<synchronous>, transform_indices = @transform_11, window_bounds = array<i64: 512, 1024>}, {pipeline_mode = #tpu.pipeline_mode<synchronous>, transform_indices = @transform_12, window_bounds = array<i64: 1, 1024>}, {pipeline_mode = #tpu.pipeline_mode<synchronous>, transform_indices = @transform_13, window_bounds = array<i64: 1, 1024>}, {pipeline_mode = #tpu.pipeline_mode<synchronous>, transform_indices = @transform_14, window_bounds = array<i64: 1, 1024>}, {pipeline_mode = #tpu.pipeline_mode<synchronous>, transform_indices = @transform_15, window_bounds = array<i64: 1024, 256>}, {pipeline_mode = #tpu.pipeline_mode<synchronous>, transform_indices = @transform_16, window_bounds = array<i64: 1, 256>}, {transform_indices = @transform_17, window_bounds = array<i64: 32, 256>}]} {
    %c0 = arith.constant 0 : index
    %c0_0 = arith.constant 0 : index
    %0 = vector.load %arg1[%c0, %c0_0] : memref<32x32xf32, #tpu.memory_space<vmem>>, vector<32x32xf32>
    %1 = arith.truncf %0 : vector<32x32xf32> to vector<32x32xbf16>
    %c0_1 = arith.constant 0 : index
    %c0_2 = arith.constant 0 : index
    %2 = vector.load %arg2[%c0_1, %c0_2] : memref<32x128xbf16, #tpu.memory_space<vmem>>, vector<32x128xbf16>
    %cst = arith.constant dense<0.000000e+00> : vector<32x128xf32>
    %3 = tpu.matmul %1, %2, %cst {dimension_numbers = #tpu.dot_dimension_numbers<[1], [0], [0], [1], [0, 0, 1, 1], [], []>} : vector<32x32xbf16>, vector<32x128xbf16>, vector<32x128xf32> -> vector<32x128xf32>
    %c0_3 = arith.constant 0 : index
    %c0_4 = arith.constant 0 : index
    %4 = vector.load %arg3[%c0_3, %c0_4] : memref<1x128xbf16, #tpu.memory_space<vmem>>, vector<1x128xbf16>
    %5 = arith.extf %4 : vector<1x128xbf16> to vector<1x128xf32>
    %6 = vector.broadcast %5 : vector<1x128xf32> to vector<32x128xf32>
    %7 = arith.addf %3, %6 : vector<32x128xf32>
    %cst_5 = arith.constant 0.000000e+00 : f32
    %8 = vector.broadcast %cst_5 : f32 to vector<32x128xf32>
    %9 = arith.cmpf ogt, %7, %8 : vector<32x128xf32>
    %cst_6 = arith.constant 2.000000e-01 : f32
    %10 = vector.broadcast %cst_6 : f32 to vector<32x128xf32>
    %11 = arith.mulf %10, %7 : vector<32x128xf32>
    %12 = arith.select %9, %7, %11 : vector<32x128xi1>, vector<32x128xf32>
    %13 = arith.truncf %12 : vector<32x128xf32> to vector<32x128xbf16>
    %c0_7 = arith.constant 0 : index
    %c0_8 = arith.constant 0 : index
    %14 = vector.load %arg4[%c0_7, %c0_8] : memref<128x256xbf16, #tpu.memory_space<vmem>>, vector<128x256xbf16>
    %cst_9 = arith.constant dense<0.000000e+00> : vector<32x256xf32>
    %15 = tpu.matmul %13, %14, %cst_9 {dimension_numbers = #tpu.dot_dimension_numbers<[1], [0], [0], [1], [0, 0, 1, 1], [], []>} : vector<32x128xbf16>, vector<128x256xbf16>, vector<32x256xf32> -> vector<32x256xf32>
    %c0_10 = arith.constant 0 : index
    %c0_11 = arith.constant 0 : index
    %16 = vector.load %arg5[%c0_10, %c0_11] : memref<1x256xbf16, #tpu.memory_space<vmem>>, vector<1x256xbf16>
    %17 = arith.extf %16 : vector<1x256xbf16> to vector<1x256xf32>
    %18 = vector.broadcast %17 : vector<1x256xf32> to vector<32x256xf32>
    %19 = arith.addf %15, %18 : vector<32x256xf32>
    %20 = vector.shape_cast %19 : vector<32x256xf32> to vector<4x8x256xf32>
    %cst_12 = arith.constant dense<0.000000e+00> : vector<4x256xf32>
    %21 = vector.multi_reduction <add>, %20, %cst_12 [1] : vector<4x8x256xf32> to vector<4x256xf32>
    %22 = vector.shape_cast %21 : vector<4x256xf32> to vector<4x1x256xf32>
    %cst_13 = arith.constant 8.000000e+00 : f32
    %23 = vector.broadcast %cst_13 : f32 to vector<4x1x256xf32>
    %24 = arith.divf %22, %23 : vector<4x1x256xf32>
    %25 = vector.broadcast %24 : vector<4x1x256xf32> to vector<4x8x256xf32>
    %26 = arith.subf %20, %25 : vector<4x8x256xf32>
    %27 = arith.mulf %26, %26 : vector<4x8x256xf32>
    %cst_14 = arith.constant dense<0.000000e+00> : vector<4x256xf32>
    %28 = vector.multi_reduction <add>, %27, %cst_14 [1] : vector<4x8x256xf32> to vector<4x256xf32>
    %29 = vector.shape_cast %28 : vector<4x256xf32> to vector<4x1x256xf32>
    %cst_15 = arith.constant 8.000000e+00 : f32
    %30 = vector.broadcast %cst_15 : f32 to vector<4x1x256xf32>
    %31 = arith.divf %29, %30 : vector<4x1x256xf32>
    %c0_16 = arith.constant 0 : index
    %c0_17 = arith.constant 0 : index
    %32 = vector.load %arg6[%c0_16, %c0_17] : memref<1x256xf32, #tpu.memory_space<vmem>>, vector<1x256xf32>
    %cst_18 = arith.constant 8.000000e-01 : f32
    %33 = vector.broadcast %cst_18 : f32 to vector<4x1x256xf32>
    %34 = arith.addf %31, %33 : vector<4x1x256xf32>
    %35 = math.rsqrt %34 : vector<4x1x256xf32>
    %36 = vector.shape_cast %32 : vector<1x256xf32> to vector<1x1x256xf32>
    %37 = vector.broadcast %36 : vector<1x1x256xf32> to vector<4x1x256xf32>
    %38 = arith.mulf %37, %35 : vector<4x1x256xf32>
    %c0_19 = arith.constant 0 : index
    %c0_20 = arith.constant 0 : index
    %39 = vector.load %arg7[%c0_19, %c0_20] : memref<1x256xf32, #tpu.memory_space<vmem>>, vector<1x256xf32>
    %40 = arith.mulf %24, %38 : vector<4x1x256xf32>
    %41 = vector.shape_cast %39 : vector<1x256xf32> to vector<1x1x256xf32>
    %42 = vector.broadcast %41 : vector<1x1x256xf32> to vector<4x1x256xf32>
    %43 = arith.subf %42, %40 : vector<4x1x256xf32>
    %44 = vector.broadcast %38 : vector<4x1x256xf32> to vector<4x8x256xf32>
    %45 = arith.mulf %20, %44 : vector<4x8x256xf32>
    %46 = vector.broadcast %43 : vector<4x1x256xf32> to vector<4x8x256xf32>
    %47 = arith.addf %45, %46 : vector<4x8x256xf32>
    %48 = vector.shape_cast %47 : vector<4x8x256xf32> to vector<32x256xf32>
    %cst_21 = arith.constant 0.000000e+00 : f32
    %49 = vector.broadcast %cst_21 : f32 to vector<32x256xf32>
    %50 = arith.cmpf ogt, %48, %49 : vector<32x256xf32>
    %cst_22 = arith.constant 2.000000e-01 : f32
    %51 = vector.broadcast %cst_22 : f32 to vector<32x256xf32>
    %52 = arith.mulf %51, %48 : vector<32x256xf32>
    %53 = arith.select %50, %48, %52 : vector<32x256xi1>, vector<32x256xf32>
    %54 = arith.truncf %53 : vector<32x256xf32> to vector<32x256xbf16>
    %c0_23 = arith.constant 0 : index
    %c0_24 = arith.constant 0 : index
    %55 = vector.load %arg8[%c0_23, %c0_24] : memref<256x512xbf16, #tpu.memory_space<vmem>>, vector<256x512xbf16>
    %cst_25 = arith.constant dense<0.000000e+00> : vector<32x512xf32>
    %56 = tpu.matmul %54, %55, %cst_25 {dimension_numbers = #tpu.dot_dimension_numbers<[1], [0], [0], [1], [0, 0, 1, 1], [], []>} : vector<32x256xbf16>, vector<256x512xbf16>, vector<32x512xf32> -> vector<32x512xf32>
    %c0_26 = arith.constant 0 : index
    %c0_27 = arith.constant 0 : index
    %57 = vector.load %arg9[%c0_26, %c0_27] : memref<1x512xbf16, #tpu.memory_space<vmem>>, vector<1x512xbf16>
    %58 = arith.extf %57 : vector<1x512xbf16> to vector<1x512xf32>
    %59 = vector.broadcast %58 : vector<1x512xf32> to vector<32x512xf32>
    %60 = arith.addf %56, %59 : vector<32x512xf32>
    %61 = vector.shape_cast %60 : vector<32x512xf32> to vector<4x8x512xf32>
    %cst_28 = arith.constant dense<0.000000e+00> : vector<4x512xf32>
    %62 = vector.multi_reduction <add>, %61, %cst_28 [1] : vector<4x8x512xf32> to vector<4x512xf32>
    %63 = vector.shape_cast %62 : vector<4x512xf32> to vector<4x1x512xf32>
    %cst_29 = arith.constant 8.000000e+00 : f32
    %64 = vector.broadcast %cst_29 : f32 to vector<4x1x512xf32>
    %65 = arith.divf %63, %64 : vector<4x1x512xf32>
    %66 = vector.broadcast %65 : vector<4x1x512xf32> to vector<4x8x512xf32>
    %67 = arith.subf %61, %66 : vector<4x8x512xf32>
    %68 = arith.mulf %67, %67 : vector<4x8x512xf32>
    %cst_30 = arith.constant dense<0.000000e+00> : vector<4x512xf32>
    %69 = vector.multi_reduction <add>, %68, %cst_30 [1] : vector<4x8x512xf32> to vector<4x512xf32>
    %70 = vector.shape_cast %69 : vector<4x512xf32> to vector<4x1x512xf32>
    %cst_31 = arith.constant 8.000000e+00 : f32
    %71 = vector.broadcast %cst_31 : f32 to vector<4x1x512xf32>
    %72 = arith.divf %70, %71 : vector<4x1x512xf32>
    %c0_32 = arith.constant 0 : index
    %c0_33 = arith.constant 0 : index
    %73 = vector.load %arg10[%c0_32, %c0_33] : memref<1x512xf32, #tpu.memory_space<vmem>>, vector<1x512xf32>
    %cst_34 = arith.constant 8.000000e-01 : f32
    %74 = vector.broadcast %cst_34 : f32 to vector<4x1x512xf32>
    %75 = arith.addf %72, %74 : vector<4x1x512xf32>
    %76 = math.rsqrt %75 : vector<4x1x512xf32>
    %77 = vector.shape_cast %73 : vector<1x512xf32> to vector<1x1x512xf32>
    %78 = vector.broadcast %77 : vector<1x1x512xf32> to vector<4x1x512xf32>
    %79 = arith.mulf %78, %76 : vector<4x1x512xf32>
    %c0_35 = arith.constant 0 : index
    %c0_36 = arith.constant 0 : index
    %80 = vector.load %arg11[%c0_35, %c0_36] : memref<1x512xf32, #tpu.memory_space<vmem>>, vector<1x512xf32>
    %81 = arith.mulf %65, %79 : vector<4x1x512xf32>
    %82 = vector.shape_cast %80 : vector<1x512xf32> to vector<1x1x512xf32>
    %83 = vector.broadcast %82 : vector<1x1x512xf32> to vector<4x1x512xf32>
    %84 = arith.subf %83, %81 : vector<4x1x512xf32>
    %85 = vector.broadcast %79 : vector<4x1x512xf32> to vector<4x8x512xf32>
    %86 = arith.mulf %61, %85 : vector<4x8x512xf32>
    %87 = vector.broadcast %84 : vector<4x1x512xf32> to vector<4x8x512xf32>
    %88 = arith.addf %86, %87 : vector<4x8x512xf32>
    %89 = vector.shape_cast %88 : vector<4x8x512xf32> to vector<32x512xf32>
    %cst_37 = arith.constant 0.000000e+00 : f32
    %90 = vector.broadcast %cst_37 : f32 to vector<32x512xf32>
    %91 = arith.cmpf ogt, %89, %90 : vector<32x512xf32>
    %cst_38 = arith.constant 2.000000e-01 : f32
    %92 = vector.broadcast %cst_38 : f32 to vector<32x512xf32>
    %93 = arith.mulf %92, %89 : vector<32x512xf32>
    %94 = arith.select %91, %89, %93 : vector<32x512xi1>, vector<32x512xf32>
    %95 = arith.truncf %94 : vector<32x512xf32> to vector<32x512xbf16>
    %c0_39 = arith.constant 0 : index
    %c0_40 = arith.constant 0 : index
    %96 = vector.load %arg12[%c0_39, %c0_40] : memref<512x1024xbf16, #tpu.memory_space<vmem>>, vector<512x1024xbf16>
    %cst_41 = arith.constant dense<0.000000e+00> : vector<32x1024xf32>
    %97 = tpu.matmul %95, %96, %cst_41 {dimension_numbers = #tpu.dot_dimension_numbers<[1], [0], [0], [1], [0, 0, 1, 1], [], []>} : vector<32x512xbf16>, vector<512x1024xbf16>, vector<32x1024xf32> -> vector<32x1024xf32>
    %c0_42 = arith.constant 0 : index
    %c0_43 = arith.constant 0 : index
    %98 = vector.load %arg13[%c0_42, %c0_43] : memref<1x1024xbf16, #tpu.memory_space<vmem>>, vector<1x1024xbf16>
    %99 = arith.extf %98 : vector<1x1024xbf16> to vector<1x1024xf32>
    %100 = vector.broadcast %99 : vector<1x1024xf32> to vector<32x1024xf32>
    %101 = arith.addf %97, %100 : vector<32x1024xf32>
    %102 = vector.shape_cast %101 : vector<32x1024xf32> to vector<4x8x1024xf32>
    %cst_44 = arith.constant dense<0.000000e+00> : vector<4x1024xf32>
    %103 = vector.multi_reduction <add>, %102, %cst_44 [1] : vector<4x8x1024xf32> to vector<4x1024xf32>
    %104 = vector.shape_cast %103 : vector<4x1024xf32> to vector<4x1x1024xf32>
    %cst_45 = arith.constant 8.000000e+00 : f32
    %105 = vector.broadcast %cst_45 : f32 to vector<4x1x1024xf32>
    %106 = arith.divf %104, %105 : vector<4x1x1024xf32>
    %107 = vector.broadcast %106 : vector<4x1x1024xf32> to vector<4x8x1024xf32>
    %108 = arith.subf %102, %107 : vector<4x8x1024xf32>
    %109 = arith.mulf %108, %108 : vector<4x8x1024xf32>
    %cst_46 = arith.constant dense<0.000000e+00> : vector<4x1024xf32>
    %110 = vector.multi_reduction <add>, %109, %cst_46 [1] : vector<4x8x1024xf32> to vector<4x1024xf32>
    %111 = vector.shape_cast %110 : vector<4x1024xf32> to vector<4x1x1024xf32>
    %cst_47 = arith.constant 8.000000e+00 : f32
    %112 = vector.broadcast %cst_47 : f32 to vector<4x1x1024xf32>
    %113 = arith.divf %111, %112 : vector<4x1x1024xf32>
    %c0_48 = arith.constant 0 : index
    %c0_49 = arith.constant 0 : index
    %114 = vector.load %arg14[%c0_48, %c0_49] : memref<1x1024xf32, #tpu.memory_space<vmem>>, vector<1x1024xf32>
    %cst_50 = arith.constant 8.000000e-01 : f32
    %115 = vector.broadcast %cst_50 : f32 to vector<4x1x1024xf32>
    %116 = arith.addf %113, %115 : vector<4x1x1024xf32>
    %117 = math.rsqrt %116 : vector<4x1x1024xf32>
    %118 = vector.shape_cast %114 : vector<1x1024xf32> to vector<1x1x1024xf32>
    %119 = vector.broadcast %118 : vector<1x1x1024xf32> to vector<4x1x1024xf32>
    %120 = arith.mulf %119, %117 : vector<4x1x1024xf32>
    %c0_51 = arith.constant 0 : index
    %c0_52 = arith.constant 0 : index
    %121 = vector.load %arg15[%c0_51, %c0_52] : memref<1x1024xf32, #tpu.memory_space<vmem>>, vector<1x1024xf32>
    %122 = arith.mulf %106, %120 : vector<4x1x1024xf32>
    %123 = vector.shape_cast %121 : vector<1x1024xf32> to vector<1x1x1024xf32>
    %124 = vector.broadcast %123 : vector<1x1x1024xf32> to vector<4x1x1024xf32>
    %125 = arith.subf %124, %122 : vector<4x1x1024xf32>
    %126 = vector.broadcast %120 : vector<4x1x1024xf32> to vector<4x8x1024xf32>
    %127 = arith.mulf %102, %126 : vector<4x8x1024xf32>
    %128 = vector.broadcast %125 : vector<4x1x1024xf32> to vector<4x8x1024xf32>
    %129 = arith.addf %127, %128 : vector<4x8x1024xf32>
    %130 = vector.shape_cast %129 : vector<4x8x1024xf32> to vector<32x1024xf32>
    %cst_53 = arith.constant 0.000000e+00 : f32
    %131 = vector.broadcast %cst_53 : f32 to vector<32x1024xf32>
    %132 = arith.cmpf ogt, %130, %131 : vector<32x1024xf32>
    %cst_54 = arith.constant 2.000000e-01 : f32
    %133 = vector.broadcast %cst_54 : f32 to vector<32x1024xf32>
    %134 = arith.mulf %133, %130 : vector<32x1024xf32>
    %135 = arith.select %132, %130, %134 : vector<32x1024xi1>, vector<32x1024xf32>
    %136 = arith.truncf %135 : vector<32x1024xf32> to vector<32x1024xbf16>
    %c0_55 = arith.constant 0 : index
    %c0_56 = arith.constant 0 : index
    %137 = vector.load %arg16[%c0_55, %c0_56] : memref<1024x256xbf16, #tpu.memory_space<vmem>>, vector<1024x256xbf16>
    %cst_57 = arith.constant dense<0.000000e+00> : vector<32x256xf32>
    %138 = tpu.matmul %136, %137, %cst_57 {dimension_numbers = #tpu.dot_dimension_numbers<[1], [0], [0], [1], [0, 0, 1, 1], [], []>} : vector<32x1024xbf16>, vector<1024x256xbf16>, vector<32x256xf32> -> vector<32x256xf32>
    %c0_58 = arith.constant 0 : index
    %c0_59 = arith.constant 0 : index
    %139 = vector.load %arg17[%c0_58, %c0_59] : memref<1x256xbf16, #tpu.memory_space<vmem>>, vector<1x256xbf16>
    %140 = arith.extf %139 : vector<1x256xbf16> to vector<1x256xf32>
    %141 = vector.broadcast %140 : vector<1x256xf32> to vector<32x256xf32>
    %142 = arith.addf %138, %141 : vector<32x256xf32>
    %143 = math.tanh %142 : vector<32x256xf32>
    %c0_60 = arith.constant 0 : index
    %c0_61 = arith.constant 0 : index
    %144 = vector.load %arg18[%c0_60, %c0_61] : memref<32x256xf32, #tpu.memory_space<vmem>>, vector<32x256xf32>
    tpu.vector_store %arg18[%c0_60, %c0_61], %143 {strides = array<i32>} : memref<32x256xf32, #tpu.memory_space<vmem>>, vector<32x256xf32>,
    return
  }
  func.func @transform_0(%arg0: i32) -> (i32, i32) {
    %c0_i32 = arith.constant 0 : i32
    %c0_i32_0 = arith.constant 0 : i32
    return %arg0, %c0_i32 : i32, i32
  }
  func.func @transform_1(%arg0: i32) -> (i32, i32) {
    %c0_i32 = arith.constant 0 : i32
    %c0_i32_0 = arith.constant 0 : i32
    %c0_i32_1 = arith.constant 0 : i32
    return %c0_i32, %c0_i32_0 : i32, i32
  }
  func.func @transform_2(%arg0: i32) -> (i32, i32) {
    %c0_i32 = arith.constant 0 : i32
    %c0_i32_0 = arith.constant 0 : i32
    %c0_i32_1 = arith.constant 0 : i32
    return %c0_i32, %c0_i32_0 : i32, i32
  }
  func.func @transform_3(%arg0: i32) -> (i32, i32) {
    %c0_i32 = arith.constant 0 : i32
    %c0_i32_0 = arith.constant 0 : i32
    %c0_i32_1 = arith.constant 0 : i32
    return %c0_i32, %c0_i32_0 : i32, i32
  }
  func.func @transform_4(%arg0: i32) -> (i32, i32) {
    %c0_i32 = arith.constant 0 : i32
    %c0_i32_0 = arith.constant 0 : i32
    %c0_i32_1 = arith.constant 0 : i32
    return %c0_i32, %c0_i32_0 : i32, i32
  }
  func.func @transform_5(%arg0: i32) -> (i32, i32) {
    %c0_i32 = arith.constant 0 : i32
    %c0_i32_0 = arith.constant 0 : i32
    %c0_i32_1 = arith.constant 0 : i32
    return %c0_i32, %c0_i32_0 : i32, i32
  }
  func.func @transform_6(%arg0: i32) -> (i32, i32) {
    %c0_i32 = arith.constant 0 : i32
    %c0_i32_0 = arith.constant 0 : i32
    %c0_i32_1 = arith.constant 0 : i32
    return %c0_i32, %c0_i32_0 : i32, i32
  }
  func.func @transform_7(%arg0: i32) -> (i32, i32) {
    %c0_i32 = arith.constant 0 : i32
    %c0_i32_0 = arith.constant 0 : i32
    %c0_i32_1 = arith.constant 0 : i32
    return %c0_i32, %c0_i32_0 : i32, i32
  }
  func.func @transform_8(%arg0: i32) -> (i32, i32) {
    %c0_i32 = arith.constant 0 : i32
    %c0_i32_0 = arith.constant 0 : i32
    %c0_i32_1 = arith.constant 0 : i32
    return %c0_i32, %c0_i32_0 : i32, i32
  }
  func.func @transform_9(%arg0: i32) -> (i32, i32) {
    %c0_i32 = arith.constant 0 : i32
    %c0_i32_0 = arith.constant 0 : i32
    %c0_i32_1 = arith.constant 0 : i32
    return %c0_i32, %c0_i32_0 : i32, i32
  }
  func.func @transform_10(%arg0: i32) -> (i32, i32) {
    %c0_i32 = arith.constant 0 : i32
    %c0_i32_0 = arith.constant 0 : i32
    %c0_i32_1 = arith.constant 0 : i32
    return %c0_i32, %c0_i32_0 : i32, i32
  }
  func.func @transform_11(%arg0: i32) -> (i32, i32) {
    %c0_i32 = arith.constant 0 : i32
    %c0_i32_0 = arith.constant 0 : i32
    %c0_i32_1 = arith.constant 0 : i32
    return %c0_i32, %c0_i32_0 : i32, i32
  }
  func.func @transform_12(%arg0: i32) -> (i32, i32) {
    %c0_i32 = arith.constant 0 : i32
    %c0_i32_0 = arith.constant 0 : i32
    %c0_i32_1 = arith.constant 0 : i32
    return %c0_i32, %c0_i32_0 : i32, i32
  }
  func.func @transform_13(%arg0: i32) -> (i32, i32) {
    %c0_i32 = arith.constant 0 : i32
    %c0_i32_0 = arith.constant 0 : i32
    %c0_i32_1 = arith.constant 0 : i32
    return %c0_i32, %c0_i32_0 : i32, i32
  }
  func.func @transform_14(%arg0: i32) -> (i32, i32) {
    %c0_i32 = arith.constant 0 : i32
    %c0_i32_0 = arith.constant 0 : i32
    %c0_i32_1 = arith.constant 0 : i32
    return %c0_i32, %c0_i32_0 : i32, i32
  }
  func.func @transform_15(%arg0: i32) -> (i32, i32) {
    %c0_i32 = arith.constant 0 : i32
    %c0_i32_0 = arith.constant 0 : i32
    %c0_i32_1 = arith.constant 0 : i32
    return %c0_i32, %c0_i32_0 : i32, i32
  }
  func.func @transform_16(%arg0: i32) -> (i32, i32) {
    %c0_i32 = arith.constant 0 : i32
    %c0_i32_0 = arith.constant 0 : i32
    %c0_i32_1 = arith.constant 0 : i32
    return %c0_i32, %c0_i32_0 : i32, i32
  }
  func.func @transform_17(%arg0: i32) -> (i32, i32) {
    %c0_i32 = arith.constant 0 : i32
    %c0_i32_0 = arith.constant 0 : i32
    return %arg0, %c0_i32 : i32, i32
  }
}

</mosaic_0001>

<llo_original>
// kernel: generator_forward.1
$region0: #{generator_forward.1}
  #allocation0 [shape = 'u32[]', space=smem, size = 0x4, offset = 0x4, fixed_abs, tag = 'smem constant byte address 0x4 - core index']
  #allocation1 [shape = 'u32[144,128]{1,0:T(1,128)}', space=vmem, size = 0x12000, scoped, tag = 'internal scratch']
  %s0 = inlined_call_operand.hbm [shape: f32[64,32], index: 0, kind: input, shape index: {}]
  %s1 = inlined_call_operand.hbm [shape: bf16[32,128], index: 1, kind: input, shape index: {}]
  %s2 = inlined_call_operand.hbm [shape: bf16[1,128], index: 2, kind: input, shape index: {}]
  %s3 = inlined_call_operand.hbm [shape: bf16[128,256], index: 3, kind: input, shape index: {}]
  %s4 = inlined_call_operand.hbm [shape: bf16[1,256], index: 4, kind: input, shape index: {}]
  %s5 = inlined_call_operand.hbm [shape: f32[1,256], index: 5, kind: input, shape index: {}]
  %s6 = inlined_call_operand.hbm [shape: f32[1,256], index: 6, kind: input, shape index: {}]
  %s7 = inlined_call_operand.hbm [shape: bf16[256,512], index: 7, kind: input, shape index: {}]
  %s8 = inlined_call_operand.hbm [shape: bf16[1,512], index: 8, kind: input, shape index: {}]
  %s9 = inlined_call_operand.hbm [shape: f32[1,512], index: 9, kind: input, shape index: {}]
  %s10 = inlined_call_operand.hbm [shape: f32[1,512], index: 10, kind: input, shape index: {}]
  %s11 = inlined_call_operand.hbm [shape: bf16[512,1024], index: 11, kind: input, shape index: {}]
  %s12 = inlined_call_operand.vmem [shape: bf16[1,1024], index: 12, kind: input, shape index: {}]
  %s13 = inlined_call_operand.vmem [shape: f32[1,1024], index: 13, kind: input, shape index: {}]
  %s14 = inlined_call_operand.vmem [shape: f32[1,1024], index: 14, kind: input, shape index: {}]
  %s15 = inlined_call_operand.hbm [shape: bf16[1024,256], index: 15, kind: input, shape index: {}]
  %s16 = inlined_call_operand.vmem [shape: bf16[1,256], index: 16, kind: input, shape index: {}]
  %s17 = inlined_call_operand.vmem [shape: f32[64,256], index: 17, kind: output, shape index: {}]
  %s18 = sld [smem:[#allocation0]]
  $region153: #{generator_forward.1} parent=0
    _
  %s20 = ssub.s32 1, %s18
  %s21 = scalar_select 0, %s20, %s18
  $region1: #{generator_forward.1} parent=0
    #allocation2 [shape = 'u8[32768]{0}', space=vmem, size = 0x8000, scoped, tag = 'input window, operand 0']
    #allocation3 [shape = 's32[2]{0}', space=sflag, size = 0x8, scoped, tag = 'scoped memory for generator_forward.1']
    #allocation4 [shape = 'u8[8192]{0}', space=vmem, size = 0x2000, scoped, tag = 'input window, operand 1, single buffered']
    #allocation5 [shape = 's32[1]{0}', space=sflag, size = 0x4, scoped, tag = 'scoped memory for generator_forward.1']
    #allocation6 [shape = 'u8[512]{0}', space=vmem, size = 0x400, scoped, tag = 'input window, operand 2, single buffered']
    #allocation7 [shape = 'u8[65536]{0}', space=vmem, size = 0x10000, scoped, tag = 'input window, operand 3, single buffered']
    #allocation8 [shape = 's32[1]{0}', space=sflag, size = 0x4, scoped, tag = 'scoped memory for generator_forward.1']
    #allocation9 [shape = 'u8[1024]{0}', space=vmem, size = 0x400, scoped, tag = 'input window, operand 4, single buffered']
    #allocation10 [shape = 'u8[1024]{0}', space=vmem, size = 0x400, scoped, tag = 'input window, operand 5, single buffered']
    #allocation11 [shape = 's32[1]{0}', space=sflag, size = 0x4, scoped, tag = 'scoped memory for generator_forward.1']
    #allocation12 [shape = 'u8[1024]{0}', space=vmem, size = 0x400, scoped, tag = 'input window, operand 6, single buffered']
    #allocation13 [shape = 'u8[262144]{0}', space=vmem, size = 0x40000, scoped, tag = 'input window, operand 7, single buffered']
    #allocation14 [shape = 's32[1]{0}', space=sflag, size = 0x4, scoped, tag = 'scoped memory for generator_forward.1']
    #allocation15 [shape = 'u8[2048]{0}', space=vmem, size = 0x800, scoped, tag = 'input window, operand 8, single buffered']
    #allocation16 [shape = 'u8[2048]{0}', space=vmem, size = 0x800, scoped, tag = 'input window, operand 9, single buffered']
    #allocation17 [shape = 's32[1]{0}', space=sflag, size = 0x4, scoped, tag = 'scoped memory for generator_forward.1']
    #allocation18 [shape = 'u8[2048]{0}', space=vmem, size = 0x800, scoped, tag = 'input window, operand 10, single buffered']
    #allocation19 [shape = 'u8[1048576]{0}', space=vmem, size = 0x100000, scoped, tag = 'input window, operand 11, single buffered']
    #allocation20 [shape = 's32[1]{0}', space=sflag, size = 0x4, scoped, tag = 'scoped memory for generator_forward.1']
    #allocation21 [shape = 'u8[524288]{0}', space=vmem, size = 0x80000, scoped, tag = 'input window, operand 15, single buffered']
    %22 = vsyncpa [#allocation3], 0
    %s23 = scalar_lea.sflag [#allocation3], 1
    %24 = vsyncpa %s23, 0
    %25 = vsyncpa [#allocation5], 0
    %26 = vsyncpa [#allocation8], 0
    %27 = vsyncpa [#allocation11], 0
    %28 = vsyncpa [#allocation14], 0
    %29 = vsyncpa [#allocation17], 0
    %30 = vsyncpa [#allocation20], 0
    loop: start=0, step=1, limit=4
    $region2: #{generator_forward.1} parent=1 // loop_pre_header
      _
    $region3: #{generator_forward.1} parent=1 // loop_header
      %s32 = sphi 0, %s36
      %p33 = scmp.ge.s32.totalorder %s32, 4
      %s42 = sphi 0, %s44
      %s45 = sphi 0, %s42
      %s46 = sphi 0, %s45
      %s62 = sphi 0, %s46
      %s66 = sphi 0, %s66
      %s68 = sphi 0, %s66
      %s69 = sphi 0, %s68
      %s83 = sphi 0, %s69
      %s87 = sphi 0, %s87
      %s89 = sphi 0, %s87
      %s90 = sphi 0, %s89
      %s104 = sphi 0, %s90
      %s108 = sphi 0, %s108
      %s110 = sphi 0, %s108
      %s111 = sphi 0, %s110
      %s125 = sphi 0, %s111
      %s129 = sphi 0, %s129
      %s131 = sphi 0, %s129
      %s132 = sphi 0, %s131
      %s146 = sphi 0, %s132
      %s150 = sphi 0, %s150
      %s152 = sphi 0, %s150
      %s153 = sphi 0, %s152
      %s167 = sphi 0, %s153
      %s171 = sphi 0, %s171
      %s173 = sphi 0, %s171
      %s174 = sphi 0, %s173
      %s188 = sphi 0, %s174
      %s192 = sphi 0, %s192
      %s194 = sphi 0, %s192
      %s195 = sphi 0, %s194
      %s209 = sphi 0, %s195
      %s213 = sphi 0, %s213
      %s215 = sphi 0, %s213
      %s216 = sphi 0, %s215
      %s230 = sphi 0, %s216
      %s234 = sphi 0, %s234
      %s236 = sphi 0, %s234
      %s237 = sphi 0, %s236
      %s251 = sphi 0, %s237
      %s255 = sphi 0, %s255
      %s257 = sphi 0, %s255
      %s258 = sphi 0, %s257
      %s272 = sphi 0, %s258
      %s276 = sphi 0, %s276
      %s278 = sphi 0, %s276
      %s279 = sphi 0, %s278
      %s293 = sphi 0, %s279
      %s297 = sphi 0, %s297
      %s299 = sphi 0, %s297
      %s300 = sphi 0, %s299
      %s314 = sphi 0, %s300
      %s318 = sphi 0, %s318
      %s320 = sphi 0, %s318
      %s321 = sphi 0, %s320
      %s335 = sphi 0, %s321
      %s339 = sphi 0, %s339
      %s341 = sphi 0, %s339
      %s342 = sphi 0, %s341
      %s356 = sphi 0, %s342
      %s360 = sphi 0, %s360
      %s362 = sphi 0, %s360
      %s363 = sphi 0, %s362
      %s377 = sphi 0, %s363
      %s381 = sphi 0, %s381
      %s383 = sphi 0, %s381
      %s384 = sphi 0, %s383
      %s398 = sphi 0, %s384
      %s404 = sphi 0, %s406
      %s407 = sphi 0, %s404
      %s408 = sphi 0, %s407
      %s424 = sphi 0, %s408
    $region4: #{generator_forward.1} parent=1 // loop_header_branch
      %35 = sbr.rel (%p33) target = $region8
    $region5: #{generator_forward.1} parent=1 // loop_body
      %s37 = ssub.s32 %s32, 1
      %s38 = ssub.s32 %s32, 2
      %s39 = sadd.s32 %s32, 1
      %s40 = ssub.s32 %s32, %s39
      %p41 = scmp.eq.s32.totalorder %s40, 0
      %s43 = sadd.s32 %s42, 1
      %s44 = scalar_select %p41, %s42, %s43
      %p47 = pneg %p41
      %p48 = scmp.eq.s32.totalorder %s32, 1
      %p49 = por %p47, %p48
      %p50 = scmp.ne.s32.totalorder %s42, %s45
      %p51 = scmp.eq.s32.totalorder %s32, 0
      %p52 = por %p50, %p51
      %p53 = scmp.ne.s32.totalorder %s42, %s45
      %p54 = scmp.eq.s32.totalorder %s37, 1
      %p55 = por %p53, %p54
      %p56 = scmp.ne.s32.totalorder %s45, %s46
      %p57 = scmp.eq.s32.totalorder %s37, 0
      %p58 = por %p56, %p57
      %p59 = scmp.ne.s32.totalorder %s45, %s46
      %p60 = scmp.eq.s32.totalorder %s38, 1
      %p61 = por %p59, %p60
      %p63 = scmp.ne.s32.totalorder %s46, %s62
      %p64 = scmp.eq.s32.totalorder %s38, 0
      %p65 = por %p63, %p64
      %s67 = sadd.s32 %s66, 1
      %p70 = scmp.eq.s32.totalorder %s32, 1
      %p71 = scmp.ne.s32.totalorder %s66, %s68
      %p72 = scmp.eq.s32.totalorder %s32, 0
      %p73 = por %p71, %p72
      %p74 = scmp.ne.s32.totalorder %s66, %s68
      %p75 = scmp.eq.s32.totalorder %s37, 1
      %p76 = por %p74, %p75
      %p77 = scmp.ne.s32.totalorder %s68, %s69
      %p78 = scmp.eq.s32.totalorder %s37, 0
      %p79 = por %p77, %p78
      %p80 = scmp.ne.s32.totalorder %s68, %s69
      %p81 = scmp.eq.s32.totalorder %s38, 1
      %p82 = por %p80, %p81
      %p84 = scmp.ne.s32.totalorder %s69, %s83
      %p85 = scmp.eq.s32.totalorder %s38, 0
      %p86 = por %p84, %p85
      %s88 = sadd.s32 %s87, 1
      %p91 = scmp.eq.s32.totalorder %s32, 1
      %p92 = scmp.ne.s32.totalorder %s87, %s89
      %p93 = scmp.eq.s32.totalorder %s32, 0
      %p94 = por %p92, %p93
      %p95 = scmp.ne.s32.totalorder %s87, %s89
      %p96 = scmp.eq.s32.totalorder %s37, 1
      %p97 = por %p95, %p96
      %p98 = scmp.ne.s32.totalorder %s89, %s90
      %p99 = scmp.eq.s32.totalorder %s37, 0
      %p100 = por %p98, %p99
      %p101 = scmp.ne.s32.totalorder %s89, %s90
      %p102 = scmp.eq.s32.totalorder %s38, 1
      %p103 = por %p101, %p102
      %p105 = scmp.ne.s32.totalorder %s90, %s104
      %p106 = scmp.eq.s32.totalorder %s38, 0
      %p107 = por %p105, %p106
      %s109 = sadd.s32 %s108, 1
      %p112 = scmp.eq.s32.totalorder %s32, 1
      %p113 = scmp.ne.s32.totalorder %s108, %s110
      %p114 = scmp.eq.s32.totalorder %s32, 0
      %p115 = por %p113, %p114
      %p116 = scmp.ne.s32.totalorder %s108, %s110
      %p117 = scmp.eq.s32.totalorder %s37, 1
      %p118 = por %p116, %p117
      %p119 = scmp.ne.s32.totalorder %s110, %s111
      %p120 = scmp.eq.s32.totalorder %s37, 0
      %p121 = por %p119, %p120
      %p122 = scmp.ne.s32.totalorder %s110, %s111
      %p123 = scmp.eq.s32.totalorder %s38, 1
      %p124 = por %p122, %p123
      %p126 = scmp.ne.s32.totalorder %s111, %s125
      %p127 = scmp.eq.s32.totalorder %s38, 0
      %p128 = por %p126, %p127
      %s130 = sadd.s32 %s129, 1
      %p133 = scmp.eq.s32.totalorder %s32, 1
      %p134 = scmp.ne.s32.totalorder %s129, %s131
      %p135 = scmp.eq.s32.totalorder %s32, 0
      %p136 = por %p134, %p135
      %p137 = scmp.ne.s32.totalorder %s129, %s131
      %p138 = scmp.eq.s32.totalorder %s37, 1
      %p139 = por %p137, %p138
      %p140 = scmp.ne.s32.totalorder %s131, %s132
      %p141 = scmp.eq.s32.totalorder %s37, 0
      %p142 = por %p140, %p141
      %p143 = scmp.ne.s32.totalorder %s131, %s132
      %p144 = scmp.eq.s32.totalorder %s38, 1
      %p145 = por %p143, %p144
      %p147 = scmp.ne.s32.totalorder %s132, %s146
      %p148 = scmp.eq.s32.totalorder %s38, 0
      %p149 = por %p147, %p148
      %s151 = sadd.s32 %s150, 1
      %p154 = scmp.eq.s32.totalorder %s32, 1
      %p155 = scmp.ne.s32.totalorder %s150, %s152
      %p156 = scmp.eq.s32.totalorder %s32, 0
      %p157 = por %p155, %p156
      %p158 = scmp.ne.s32.totalorder %s150, %s152
      %p159 = scmp.eq.s32.totalorder %s37, 1
      %p160 = por %p158, %p159
      %p161 = scmp.ne.s32.totalorder %s152, %s153
      %p162 = scmp.eq.s32.totalorder %s37, 0
      %p163 = por %p161, %p162
      %p164 = scmp.ne.s32.totalorder %s152, %s153
      %p165 = scmp.eq.s32.totalorder %s38, 1
      %p166 = por %p164, %p165
      %p168 = scmp.ne.s32.totalorder %s153, %s167
      %p169 = scmp.eq.s32.totalorder %s38, 0
      %p170 = por %p168, %p169
      %s172 = sadd.s32 %s171, 1
      %p175 = scmp.eq.s32.totalorder %s32, 1
      %p176 = scmp.ne.s32.totalorder %s171, %s173
      %p177 = scmp.eq.s32.totalorder %s32, 0
      %p178 = por %p176, %p177
      %p179 = scmp.ne.s32.totalorder %s171, %s173
      %p180 = scmp.eq.s32.totalorder %s37, 1
      %p181 = por %p179, %p180
      %p182 = scmp.ne.s32.totalorder %s173, %s174
      %p183 = scmp.eq.s32.totalorder %s37, 0
      %p184 = por %p182, %p183
      %p185 = scmp.ne.s32.totalorder %s173, %s174
      %p186 = scmp.eq.s32.totalorder %s38, 1
      %p187 = por %p185, %p186
      %p189 = scmp.ne.s32.totalorder %s174, %s188
      %p190 = scmp.eq.s32.totalorder %s38, 0
      %p191 = por %p189, %p190
      %s193 = sadd.s32 %s192, 1
      %p196 = scmp.eq.s32.totalorder %s32, 1
      %p197 = scmp.ne.s32.totalorder %s192, %s194
      %p198 = scmp.eq.s32.totalorder %s32, 0
      %p199 = por %p197, %p198
      %p200 = scmp.ne.s32.totalorder %s192, %s194
      %p201 = scmp.eq.s32.totalorder %s37, 1
      %p202 = por %p200, %p201
      %p203 = scmp.ne.s32.totalorder %s194, %s195
      %p204 = scmp.eq.s32.totalorder %s37, 0
      %p205 = por %p203, %p204
      %p206 = scmp.ne.s32.totalorder %s194, %s195
      %p207 = scmp.eq.s32.totalorder %s38, 1
      %p208 = por %p206, %p207
      %p210 = scmp.ne.s32.totalorder %s195, %s209
      %p211 = scmp.eq.s32.totalorder %s38, 0
      %p212 = por %p210, %p211
      %s214 = sadd.s32 %s213, 1
      %p217 = scmp.eq.s32.totalorder %s32, 1
      %p218 = scmp.ne.s32.totalorder %s213, %s215
      %p219 = scmp.eq.s32.totalorder %s32, 0
      %p220 = por %p218, %p219
      %p221 = scmp.ne.s32.totalorder %s213, %s215
      %p222 = scmp.eq.s32.totalorder %s37, 1
      %p223 = por %p221, %p222
      %p224 = scmp.ne.s32.totalorder %s215, %s216
      %p225 = scmp.eq.s32.totalorder %s37, 0
      %p226 = por %p224, %p225
      %p227 = scmp.ne.s32.totalorder %s215, %s216
      %p228 = scmp.eq.s32.totalorder %s38, 1
      %p229 = por %p227, %p228
      %p231 = scmp.ne.s32.totalorder %s216, %s230
      %p232 = scmp.eq.s32.totalorder %s38, 0
      %p233 = por %p231, %p232
      %s235 = sadd.s32 %s234, 1
      %p238 = scmp.eq.s32.totalorder %s32, 1
      %p239 = scmp.ne.s32.totalorder %s234, %s236
      %p240 = scmp.eq.s32.totalorder %s32, 0
      %p241 = por %p239, %p240
      %p242 = scmp.ne.s32.totalorder %s234, %s236
      %p243 = scmp.eq.s32.totalorder %s37, 1
      %p244 = por %p242, %p243
      %p245 = scmp.ne.s32.totalorder %s236, %s237
      %p246 = scmp.eq.s32.totalorder %s37, 0
      %p247 = por %p245, %p246
      %p248 = scmp.ne.s32.totalorder %s236, %s237
      %p249 = scmp.eq.s32.totalorder %s38, 1
      %p250 = por %p248, %p249
      %p252 = scmp.ne.s32.totalorder %s237, %s251
      %p253 = scmp.eq.s32.totalorder %s38, 0
      %p254 = por %p252, %p253
      %s256 = sadd.s32 %s255, 1
      %p259 = scmp.eq.s32.totalorder %s32, 1
      %p260 = scmp.ne.s32.totalorder %s255, %s257
      %p261 = scmp.eq.s32.totalorder %s32, 0
      %p262 = por %p260, %p261
      %p263 = scmp.ne.s32.totalorder %s255, %s257
      %p264 = scmp.eq.s32.totalorder %s37, 1
      %p265 = por %p263, %p264
      %p266 = scmp.ne.s32.totalorder %s257, %s258
      %p267 = scmp.eq.s32.totalorder %s37, 0
      %p268 = por %p266, %p267
      %p269 = scmp.ne.s32.totalorder %s257, %s258
      %p270 = scmp.eq.s32.totalorder %s38, 1
      %p271 = por %p269, %p270
      %p273 = scmp.ne.s32.totalorder %s258, %s272
      %p274 = scmp.eq.s32.totalorder %s38, 0
      %p275 = por %p273, %p274
      %s277 = sadd.s32 %s276, 1
      %p280 = scmp.eq.s32.totalorder %s32, 1
      %p281 = scmp.ne.s32.totalorder %s276, %s278
      %p282 = scmp.eq.s32.totalorder %s32, 0
      %p283 = por %p281, %p282
      %p284 = scmp.ne.s32.totalorder %s276, %s278
      %p285 = scmp.eq.s32.totalorder %s37, 1
      %p286 = por %p284, %p285
      %p287 = scmp.ne.s32.totalorder %s278, %s279
      %p288 = scmp.eq.s32.totalorder %s37, 0
      %p289 = por %p287, %p288
      %p290 = scmp.ne.s32.totalorder %s278, %s279
      %p291 = scmp.eq.s32.totalorder %s38, 1
      %p292 = por %p290, %p291
      %p294 = scmp.ne.s32.totalorder %s279, %s293
      %p295 = scmp.eq.s32.totalorder %s38, 0
      %p296 = por %p294, %p295
      %s298 = sadd.s32 %s297, 1
      %p301 = scmp.eq.s32.totalorder %s32, 1
      %p302 = scmp.ne.s32.totalorder %s297, %s299
      %p303 = scmp.eq.s32.totalorder %s32, 0
      %p304 = por %p302, %p303
      %p305 = scmp.ne.s32.totalorder %s297, %s299
      %p306 = scmp.eq.s32.totalorder %s37, 1
      %p307 = por %p305, %p306
      %p308 = scmp.ne.s32.totalorder %s299, %s300
      %p309 = scmp.eq.s32.totalorder %s37, 0
      %p310 = por %p308, %p309
      %p311 = scmp.ne.s32.totalorder %s299, %s300
      %p312 = scmp.eq.s32.totalorder %s38, 1
      %p313 = por %p311, %p312
      %p315 = scmp.ne.s32.totalorder %s300, %s314
      %p316 = scmp.eq.s32.totalorder %s38, 0
      %p317 = por %p315, %p316
      %s319 = sadd.s32 %s318, 1
      %p322 = scmp.eq.s32.totalorder %s32, 1
      %p323 = scmp.ne.s32.totalorder %s318, %s320
      %p324 = scmp.eq.s32.totalorder %s32, 0
      %p325 = por %p323, %p324
      %p326 = scmp.ne.s32.totalorder %s318, %s320
      %p327 = scmp.eq.s32.totalorder %s37, 1
      %p328 = por %p326, %p327
      %p329 = scmp.ne.s32.totalorder %s320, %s321
      %p330 = scmp.eq.s32.totalorder %s37, 0
      %p331 = por %p329, %p330
      %p332 = scmp.ne.s32.totalorder %s320, %s321
      %p333 = scmp.eq.s32.totalorder %s38, 1
      %p334 = por %p332, %p333
      %p336 = scmp.ne.s32.totalorder %s321, %s335
      %p337 = scmp.eq.s32.totalorder %s38, 0
      %p338 = por %p336, %p337
      %s340 = sadd.s32 %s339, 1
      %p343 = scmp.eq.s32.totalorder %s32, 1
      %p344 = scmp.ne.s32.totalorder %s339, %s341
      %p345 = scmp.eq.s32.totalorder %s32, 0
      %p346 = por %p344, %p345
      %p347 = scmp.ne.s32.totalorder %s339, %s341
      %p348 = scmp.eq.s32.totalorder %s37, 1
      %p349 = por %p347, %p348
      %p350 = scmp.ne.s32.totalorder %s341, %s342
      %p351 = scmp.eq.s32.totalorder %s37, 0
      %p352 = por %p350, %p351
      %p353 = scmp.ne.s32.totalorder %s341, %s342
      %p354 = scmp.eq.s32.totalorder %s38, 1
      %p355 = por %p353, %p354
      %p357 = scmp.ne.s32.totalorder %s342, %s356
      %p358 = scmp.eq.s32.totalorder %s38, 0
      %p359 = por %p357, %p358
      %s361 = sadd.s32 %s360, 1
      %p364 = scmp.eq.s32.totalorder %s32, 1
      %p365 = scmp.ne.s32.totalorder %s360, %s362
      %p366 = scmp.eq.s32.totalorder %s32, 0
      %p367 = por %p365, %p366
      %p368 = scmp.ne.s32.totalorder %s360, %s362
      %p369 = scmp.eq.s32.totalorder %s37, 1
      %p370 = por %p368, %p369
      %p371 = scmp.ne.s32.totalorder %s362, %s363
      %p372 = scmp.eq.s32.totalorder %s37, 0
      %p373 = por %p371, %p372
      %p374 = scmp.ne.s32.totalorder %s362, %s363
      %p375 = scmp.eq.s32.totalorder %s38, 1
      %p376 = por %p374, %p375
      %p378 = scmp.ne.s32.totalorder %s363, %s377
      %p379 = scmp.eq.s32.totalorder %s38, 0
      %p380 = por %p378, %p379
      %s382 = sadd.s32 %s381, 1
      %p385 = scmp.eq.s32.totalorder %s32, 1
      %p386 = scmp.ne.s32.totalorder %s381, %s383
      %p387 = scmp.eq.s32.totalorder %s32, 0
      %p388 = por %p386, %p387
      %p389 = scmp.ne.s32.totalorder %s381, %s383
      %p390 = scmp.eq.s32.totalorder %s37, 1
      %p391 = por %p389, %p390
      %p392 = scmp.ne.s32.totalorder %s383, %s384
      %p393 = scmp.eq.s32.totalorder %s37, 0
      %p394 = por %p392, %p393
      %p395 = scmp.ne.s32.totalorder %s383, %s384
      %p396 = scmp.eq.s32.totalorder %s38, 1
      %p397 = por %p395, %p396
      %p399 = scmp.ne.s32.totalorder %s384, %s398
      %p400 = scmp.eq.s32.totalorder %s38, 0
      %p401 = por %p399, %p400
      %s402 = ssub.s32 %s32, %s39
      %p403 = scmp.eq.s32.totalorder %s402, 0
      %s405 = sadd.s32 %s404, 1
      %s406 = scalar_select %p403, %s404, %s405
      %p409 = pneg %p403
      %p410 = scmp.eq.s32.totalorder %s32, 1
      %p411 = por %p409, %p410
      %p412 = scmp.ne.s32.totalorder %s404, %s407
      %p413 = scmp.eq.s32.totalorder %s32, 0
      %p414 = por %p412, %p413
      %p415 = scmp.ne.s32.totalorder %s404, %s407
      %p416 = scmp.eq.s32.totalorder %s37, 1
      %p417 = por %p415, %p416
      %p418 = scmp.ne.s32.totalorder %s407, %s408
      %p419 = scmp.eq.s32.totalorder %s37, 0
      %p420 = por %p418, %p419
      %p421 = scmp.ne.s32.totalorder %s407, %s408
      %p422 = scmp.eq.s32.totalorder %s38, 1
      %p423 = por %p421, %p422
      %p425 = scmp.ne.s32.totalorder %s408, %s424
      %p426 = scmp.eq.s32.totalorder %s38, 0
      %p427 = por %p425, %p426
      %p428 = scmp.le.s32.totalorder 1, %s32
      %p429 = scmp.lt.s32.totalorder %s32, 3
      %p430 = pnand %p428, %p429
      %p431 = pneg %p430
      // Predicated region
      $region9: #{generator_forward.1} parent=5 // pred_check
        _
      $region10: #{generator_forward.1} parent=5 // pred_check_branch
        %433 = sbr.rel (%p430) target = $region12
      $region11: #{generator_forward.1} parent=5 // pred_region
        %s434 = ssub.s32 %s32, 1
        // Predicated region
        $region13: #{generator_forward.1} parent=11 // pred_check
          %p435 = pneg %p79
        $region14: #{generator_forward.1} parent=11 // pred_check_branch
          %437 = sbr.rel (%p435) target = $region16
        $region15: #{generator_forward.1} parent=11 // pred_region
          %s439 = ssub.s32 256, 256
          %440 = vsyncadd [#allocation5], %s439
          %s441 = sshll.u32 [#allocation4], 4
          %s442 = int_to_ptr.vmem [resolvable:$true] %s441
          %447 = dma.hbm_to_vmem [thread:$0]  %s1, 256, %s442, [#allocation5], 64, 64, 4
        $region16: #{generator_forward.1} parent=11 // pred_fallthru
          _
        // Predicated region
        $region17: #{generator_forward.1} parent=11 // pred_check
          %p448 = pneg %p100
        $region18: #{generator_forward.1} parent=11 // pred_check_branch
          %450 = sbr.rel (%p448) target = $region20
        $region19: #{generator_forward.1} parent=11 // pred_region
          %s452 = ssub.s32 16, 16
          %453 = vsyncadd [#allocation5], %s452
          %s455 = sshll.u32 [#allocation6], 4
          %s456 = int_to_ptr.vmem [resolvable:$true] %s455
          %458 = dma.hbm_to_vmem [thread:$0]  %s2, 16, %s456, [#allocation5]
        $region20: #{generator_forward.1} parent=11 // pred_fallthru
          _
        // Predicated region
        $region21: #{generator_forward.1} parent=11 // pred_check
          %p459 = pneg %p121
        $region22: #{generator_forward.1} parent=11 // pred_check_branch
          %461 = sbr.rel (%p459) target = $region24
        $region23: #{generator_forward.1} parent=11 // pred_region
          %s463 = ssub.s32 2048, 2048
          %464 = vsyncadd [#allocation8], %s463
          %s465 = sshll.u32 [#allocation7], 4
          %s466 = int_to_ptr.vmem [resolvable:$true] %s465
          %471 = dma.hbm_to_vmem [thread:$0]  %s3, 2048, %s466, [#allocation8], 128, 128, 8
        $region24: #{generator_forward.1} parent=11 // pred_fallthru
          _
        // Predicated region
        $region25: #{generator_forward.1} parent=11 // pred_check
          %p472 = pneg %p142
        $region26: #{generator_forward.1} parent=11 // pred_check_branch
          %474 = sbr.rel (%p472) target = $region28
        $region27: #{generator_forward.1} parent=11 // pred_region
          %s476 = ssub.s32 32, 32
          %477 = vsyncadd [#allocation8], %s476
          %s479 = sshll.u32 [#allocation9], 4
          %s480 = int_to_ptr.vmem [resolvable:$true] %s479
          %482 = dma.hbm_to_vmem [thread:$0]  %s4, 32, %s480, [#allocation8]
        $region28: #{generator_forward.1} parent=11 // pred_fallthru
          _
        // Predicated region
        $region29: #{generator_forward.1} parent=11 // pred_check
          %p483 = pneg %p163
        $region30: #{generator_forward.1} parent=11 // pred_check_branch
          %485 = sbr.rel (%p483) target = $region32
        $region31: #{generator_forward.1} parent=11 // pred_region
          %s487 = ssub.s32 32, 32
          %488 = vsyncadd [#allocation11], %s487
          %s490 = sshll.u32 [#allocation10], 4
          %s491 = int_to_ptr.vmem [resolvable:$true] %s490
          %493 = dma.hbm_to_vmem [thread:$0]  %s5, 32, %s491, [#allocation11]
        $region32: #{generator_forward.1} parent=11 // pred_fallthru
          _
        // Predicated region
        $region33: #{generator_forward.1} parent=11 // pred_check
          %p494 = pneg %p184
        $region34: #{generator_forward.1} parent=11 // pred_check_branch
          %496 = sbr.rel (%p494) target = $region36
        $region35: #{generator_forward.1} parent=11 // pred_region
          %s498 = ssub.s32 32, 32
          %499 = vsyncadd [#allocation11], %s498
          %s501 = sshll.u32 [#allocation12], 4
          %s502 = int_to_ptr.vmem [resolvable:$true] %s501
          %504 = dma.hbm_to_vmem [thread:$0]  %s6, 32, %s502, [#allocation11]
        $region36: #{generator_forward.1} parent=11 // pred_fallthru
          _
        // Predicated region
        $region37: #{generator_forward.1} parent=11 // pred_check
          %p505 = pneg %p205
        $region38: #{generator_forward.1} parent=11 // pred_check_branch
          %507 = sbr.rel (%p505) target = $region40
        $region39: #{generator_forward.1} parent=11 // pred_region
          %s509 = ssub.s32 8192, 8192
          %510 = vsyncadd [#allocation14], %s509
          %s511 = sshll.u32 [#allocation13], 4
          %s512 = int_to_ptr.vmem [resolvable:$true] %s511
          %517 = dma.hbm_to_vmem [thread:$0]  %s7, 8192, %s512, [#allocation14], 256, 256, 16
        $region40: #{generator_forward.1} parent=11 // pred_fallthru
          _
        // Predicated region
        $region41: #{generator_forward.1} parent=11 // pred_check
          %p518 = pneg %p226
        $region42: #{generator_forward.1} parent=11 // pred_check_branch
          %520 = sbr.rel (%p518) target = $region44
        $region43: #{generator_forward.1} parent=11 // pred_region
          %s522 = ssub.s32 64, 64
          %523 = vsyncadd [#allocation14], %s522
          %s525 = sshll.u32 [#allocation15], 4
          %s526 = int_to_ptr.vmem [resolvable:$true] %s525
          %528 = dma.hbm_to_vmem [thread:$0]  %s8, 64, %s526, [#allocation14]
        $region44: #{generator_forward.1} parent=11 // pred_fallthru
          _
        // Predicated region
        $region45: #{generator_forward.1} parent=11 // pred_check
          %p529 = pneg %p247
        $region46: #{generator_forward.1} parent=11 // pred_check_branch
          %531 = sbr.rel (%p529) target = $region48
        $region47: #{generator_forward.1} parent=11 // pred_region
          %s533 = ssub.s32 64, 64
          %534 = vsyncadd [#allocation17], %s533
          %s536 = sshll.u32 [#allocation16], 4
          %s537 = int_to_ptr.vmem [resolvable:$true] %s536
          %539 = dma.hbm_to_vmem [thread:$0]  %s9, 64, %s537, [#allocation17]
        $region48: #{generator_forward.1} parent=11 // pred_fallthru
          _
        // Predicated region
        $region49: #{generator_forward.1} parent=11 // pred_check
          %p540 = pneg %p268
        $region50: #{generator_forward.1} parent=11 // pred_check_branch
          %542 = sbr.rel (%p540) target = $region52
        $region51: #{generator_forward.1} parent=11 // pred_region
          %s544 = ssub.s32 64, 64
          %545 = vsyncadd [#allocation17], %s544
          %s547 = sshll.u32 [#allocation18], 4
          %s548 = int_to_ptr.vmem [resolvable:$true] %s547
          %550 = dma.hbm_to_vmem [thread:$0]  %s10, 64, %s548, [#allocation17]
        $region52: #{generator_forward.1} parent=11 // pred_fallthru
          _
        // Predicated region
        $region53: #{generator_forward.1} parent=11 // pred_check
          %p551 = pneg %p289
        $region54: #{generator_forward.1} parent=11 // pred_check_branch
          %553 = sbr.rel (%p551) target = $region56
        $region55: #{generator_forward.1} parent=11 // pred_region
          %s555 = ssub.s32 32768, 32768
          %556 = vsyncadd [#allocation20], %s555
          %s557 = sshll.u32 [#allocation19], 4
          %s558 = int_to_ptr.vmem [resolvable:$true] %s557
          %563 = dma.hbm_to_vmem [thread:$0]  %s11, 32768, %s558, [#allocation20], 512, 512, 32
        $region56: #{generator_forward.1} parent=11 // pred_fallthru
          _
        // Predicated region
        $region57: #{generator_forward.1} parent=11 // pred_check
          %p564 = pneg %p310
        $region58: #{generator_forward.1} parent=11 // pred_check_branch
          %566 = sbr.rel (%p564) target = $region60
        $region59: #{generator_forward.1} parent=11 // pred_region
          _
        $region60: #{generator_forward.1} parent=11 // pred_fallthru
          _
        // Predicated region
        $region61: #{generator_forward.1} parent=11 // pred_check
          %p567 = pneg %p331
        $region62: #{generator_forward.1} parent=11 // pred_check_branch
          %569 = sbr.rel (%p567) target = $region64
        $region63: #{generator_forward.1} parent=11 // pred_region
          _
        $region64: #{generator_forward.1} parent=11 // pred_fallthru
          _
        // Predicated region
        $region65: #{generator_forward.1} parent=11 // pred_check
          %p570 = pneg %p352
        $region66: #{generator_forward.1} parent=11 // pred_check_branch
          %572 = sbr.rel (%p570) target = $region68
        $region67: #{generator_forward.1} parent=11 // pred_region
          _
        $region68: #{generator_forward.1} parent=11 // pred_fallthru
          _
        // Predicated region
        $region69: #{generator_forward.1} parent=11 // pred_check
          %p573 = pneg %p373
        $region70: #{generator_forward.1} parent=11 // pred_check_branch
          %575 = sbr.rel (%p573) target = $region72
        $region71: #{generator_forward.1} parent=11 // pred_region
          %s577 = ssub.s32 16384, 16384
          %578 = vsyncadd [#allocation20], %s577
          %s579 = sshll.u32 [#allocation21], 4
          %s580 = int_to_ptr.vmem [resolvable:$true] %s579
          %585 = dma.hbm_to_vmem [thread:$0]  %s15, 16384, %s580, [#allocation20], 128, 128, 8
        $region72: #{generator_forward.1} parent=11 // pred_fallthru
          _
        // Predicated region
        $region73: #{generator_forward.1} parent=11 // pred_check
          %p586 = pneg %p394
        $region74: #{generator_forward.1} parent=11 // pred_check_branch
          %588 = sbr.rel (%p586) target = $region76
        $region75: #{generator_forward.1} parent=11 // pred_region
          _
        $region76: #{generator_forward.1} parent=11 // pred_fallthru
          _
      $region12: #{generator_forward.1} parent=5 // pred_fallthru
        _
      %p589 = scmp.lt.s32.totalorder %s32, 2
      // Predicated region
      $region77: #{generator_forward.1} parent=5 // pred_check
        %p590 = pneg %p589
      $region78: #{generator_forward.1} parent=5 // pred_check_branch
        %592 = sbr.rel (%p590) target = $region80
      $region79: #{generator_forward.1} parent=5 // pred_region
        // Predicated region
        $region81: #{generator_forward.1} parent=79 // pred_check
          %p593 = pneg %p52
        $region82: #{generator_forward.1} parent=79 // pred_check_branch
          %595 = sbr.rel (%p593) target = $region84
        $region83: #{generator_forward.1} parent=79 // pred_region
          %s596 = sand.u32 %s42, 1
          %s597 = scalar_lea.sflag [#allocation3], %s596
          %s598 = sand.u32 %s42, 1
          %s599 = smul.addr %s598, 32
          %s600 = scalar_lea.vmem [#allocation2], %s599
          %s601 = smul.u32 4, %s32
          %s603 = ssub.s32 512, 512
          %604 = vsyncadd %s597, %s603
          %s605 = smul.addr %s601, 128
          %s606 = scalar_lea.hbm %s0, %s605
          %s607 = sshll.u32 %s600, 4
          %s608 = int_to_ptr.vmem [resolvable:$true] %s607
          %613 = dma.hbm_to_vmem [thread:$0]  %s606, 512, %s608, %s597, 128, 128, 8
        $region84: #{generator_forward.1} parent=79 // pred_fallthru
          _
      $region80: #{generator_forward.1} parent=5 // pred_fallthru
        _
      %p614 = scmp.le.s32.totalorder 1, %s32
      %p615 = scmp.lt.s32.totalorder %s32, 3
      %p616 = pnand %p614, %p615
      %p617 = pneg %p616
      // Predicated region
      $region85: #{generator_forward.1} parent=5 // pred_check
        _
      $region86: #{generator_forward.1} parent=5 // pred_check_branch
        %619 = sbr.rel (%p616) target = $region88
      $region87: #{generator_forward.1} parent=5 // pred_region
        %s620 = ssub.s32 %s32, 1
        %s621 = sand.u32 %s45, 1
        %s622 = scalar_lea.sflag [#allocation3], %s621
        %s623 = sand.u32 %s45, 1
        %s624 = smul.addr %s623, 32
        %s625 = scalar_lea.vmem [#allocation2], %s624
        // Predicated region
        $region89: #{generator_forward.1} parent=87 // pred_check
          %p626 = pneg %p58
        $region90: #{generator_forward.1} parent=87 // pred_check_branch
          %628 = sbr.rel (%p626) target = $region92
        $region91: #{generator_forward.1} parent=87 // pred_region
          %629 = dma.done %s622, 512
        $region92: #{generator_forward.1} parent=87 // pred_fallthru
          _
        // Predicated region
        $region93: #{generator_forward.1} parent=87 // pred_check
          %p630 = pneg %p79
        $region94: #{generator_forward.1} parent=87 // pred_check_branch
          %632 = sbr.rel (%p630) target = $region96
        $region95: #{generator_forward.1} parent=87 // pred_region
          %633 = dma.done [#allocation5], 256
        $region96: #{generator_forward.1} parent=87 // pred_fallthru
          _
        // Predicated region
        $region97: #{generator_forward.1} parent=87 // pred_check
          %p634 = pneg %p100
        $region98: #{generator_forward.1} parent=87 // pred_check_branch
          %636 = sbr.rel (%p634) target = $region100
        $region99: #{generator_forward.1} parent=87 // pred_region
          %637 = dma.done [#allocation5], 16
        $region100: #{generator_forward.1} parent=87 // pred_fallthru
          _
        // Predicated region
        $region101: #{generator_forward.1} parent=87 // pred_check
          %p638 = pneg %p121
        $region102: #{generator_forward.1} parent=87 // pred_check_branch
          %640 = sbr.rel (%p638) target = $region104
        $region103: #{generator_forward.1} parent=87 // pred_region
          %641 = dma.done [#allocation8], 2048
        $region104: #{generator_forward.1} parent=87 // pred_fallthru
          _
        // Predicated region
        $region105: #{generator_forward.1} parent=87 // pred_check
          %p642 = pneg %p142
        $region106: #{generator_forward.1} parent=87 // pred_check_branch
          %644 = sbr.rel (%p642) target = $region108
        $region107: #{generator_forward.1} parent=87 // pred_region
          %645 = dma.done [#allocation8], 32
        $region108: #{generator_forward.1} parent=87 // pred_fallthru
          _
        // Predicated region
        $region109: #{generator_forward.1} parent=87 // pred_check
          %p646 = pneg %p163
        $region110: #{generator_forward.1} parent=87 // pred_check_branch
          %648 = sbr.rel (%p646) target = $region112
        $region111: #{generator_forward.1} parent=87 // pred_region
          %649 = dma.done [#allocation11], 32
        $region112: #{generator_forward.1} parent=87 // pred_fallthru
          _
        // Predicated region
        $region113: #{generator_forward.1} parent=87 // pred_check
          %p650 = pneg %p184
        $region114: #{generator_forward.1} parent=87 // pred_check_branch
          %652 = sbr.rel (%p650) target = $region116
        $region115: #{generator_forward.1} parent=87 // pred_region
          %653 = dma.done [#allocation11], 32
        $region116: #{generator_forward.1} parent=87 // pred_fallthru
          _
        // Predicated region
        $region117: #{generator_forward.1} parent=87 // pred_check
          %p654 = pneg %p205
        $region118: #{generator_forward.1} parent=87 // pred_check_branch
          %656 = sbr.rel (%p654) target = $region120
        $region119: #{generator_forward.1} parent=87 // pred_region
          %657 = dma.done [#allocation14], 8192
        $region120: #{generator_forward.1} parent=87 // pred_fallthru
          _
        // Predicated region
        $region121: #{generator_forward.1} parent=87 // pred_check
          %p658 = pneg %p226
        $region122: #{generator_forward.1} parent=87 // pred_check_branch
          %660 = sbr.rel (%p658) target = $region124
        $region123: #{generator_forward.1} parent=87 // pred_region
          %661 = dma.done [#allocation14], 64
        $region124: #{generator_forward.1} parent=87 // pred_fallthru
          _
        // Predicated region
        $region125: #{generator_forward.1} parent=87 // pred_check
          %p662 = pneg %p247
        $region126: #{generator_forward.1} parent=87 // pred_check_branch
          %664 = sbr.rel (%p662) target = $region128
        $region127: #{generator_forward.1} parent=87 // pred_region
          %665 = dma.done [#allocation17], 64
        $region128: #{generator_forward.1} parent=87 // pred_fallthru
          _
        // Predicated region
        $region129: #{generator_forward.1} parent=87 // pred_check
          %p666 = pneg %p268
        $region130: #{generator_forward.1} parent=87 // pred_check_branch
          %668 = sbr.rel (%p666) target = $region132
        $region131: #{generator_forward.1} parent=87 // pred_region
          %669 = dma.done [#allocation17], 64
        $region132: #{generator_forward.1} parent=87 // pred_fallthru
          _
        // Predicated region
        $region133: #{generator_forward.1} parent=87 // pred_check
          %p670 = pneg %p289
        $region134: #{generator_forward.1} parent=87 // pred_check_branch
          %672 = sbr.rel (%p670) target = $region136
        $region135: #{generator_forward.1} parent=87 // pred_region
          %673 = dma.done [#allocation20], 32768
        $region136: #{generator_forward.1} parent=87 // pred_fallthru
          _
        // Predicated region
        $region137: #{generator_forward.1} parent=87 // pred_check
          %p674 = pneg %p373
        $region138: #{generator_forward.1} parent=87 // pred_check_branch
          %676 = sbr.rel (%p674) target = $region140
        $region139: #{generator_forward.1} parent=87 // pred_region
          %677 = dma.done [#allocation20], 16384
        $region140: #{generator_forward.1} parent=87 // pred_fallthru
          _
        %s678 = sand.u32 %s45, 1
        %s679 = scalar_lea.sflag [#allocation3], %s678
        %s680 = sand.u32 %s45, 1
        %s681 = smul.addr %s680, 32
        %s682 = scalar_lea.vmem [#allocation2], %s681
        %p683 = pneg %p58
        %p684 = pneg %p55
        %p685 = pneg %p79
        %p686 = pneg %p76
        %p687 = pneg %p100
        %p688 = pneg %p97
        %p689 = pneg %p121
        %p690 = pneg %p118
        %p691 = pneg %p142
        %p692 = pneg %p139
        %p693 = pneg %p163
        %p694 = pneg %p160
        %p695 = pneg %p184
        %p696 = pneg %p181
        %p697 = pneg %p205
        %p698 = pneg %p202
        %p699 = pneg %p226
        %p700 = pneg %p223
        %p701 = pneg %p247
        %p702 = pneg %p244
        %p703 = pneg %p268
        %p704 = pneg %p265
        %p705 = pneg %p289
        %p706 = pneg %p286
        %p707 = pneg %p310
        %p708 = pneg %p307
        %p709 = pneg %p331
        %p710 = pneg %p328
        %p711 = pneg %p352
        %p712 = pneg %p349
        %p713 = pneg %p373
        %p714 = pneg %p370
        %p715 = pneg %p394
        %p716 = pneg %p391
        %p717 = pneg %p420
        %p718 = pneg %p417
        %s719 = smul.u32 4, %s37
        %p720 = scmp.lt.s32.totalorder %s719, 7
        %s721 = scalar_select %p720, %s719, 7
        %s722 = smul.addr %s721, 2
        %s723 = smul.addr %s722, 8
        %s724 = scalar_lea.vmem %s17, %s723
        %s725 = smul.u32 4, %s37
        %s726 = smul.u32 4, %s37
        %p727 = scmp.lt.s32.totalorder %s726, 7
        %s728 = scalar_select %p727, %s726, 7
        %s729 = smul.addr %s728, 2
        %s730 = smul.addr %s729, 8
        %s731 = scalar_lea.vmem %s17, %s730
        %s732 = smul.u32 4, %s37
        %v734 = vld [vmem:[%s625] sm:$0xff]
        %v735 = vld [vmem:[%s625 + $0x8] sm:$0xff]
        %v736 = vld [vmem:[%s625 + $0x10] sm:$0xff]
        %v737 = vld [vmem:[%s625 + $0x18] sm:$0xff]
        %v738 = vpack.c.bf16 %v735, %v734
        %v739 = vpack.c.bf16 %v737, %v736
        %v740 = vld [vmem:[#allocation4] sm:$0xf]
        %v741 = vld [vmem:[#allocation4 + $0x4] sm:$0xf]
        %v742 = vld [vmem:[#allocation4 + $0x8] sm:$0xf]
        %v743 = vld [vmem:[#allocation4 + $0xc] sm:$0xf]
        %v744 = vld [vmem:[#allocation6] sm:$0x1]
        %v745 = vunpack.c.l.bf16 %v744
        %v746 = vlaneseq
        %v747 = vshrl.u32 %v746, 7
        %v748 = vsub.s32 0, %v747
        %v749 = vrot.slane %v745, %v748
        %v754 = vunpack.c.l.b16 %v740
        %v755 = vunpack.c.l.b16 %v741
        %v756 = vunpack.c.l.b16 %v742
        %v757 = vunpack.c.l.b16 %v743
        %v758 = vpack.c.b16 %v755, %v754
        %v759 = vpack.c.b16 %v757, %v756
        %vm762 = vcmask 261120
        %v764 = vsel %vm762, %v738, 0
        %v767 = vsel %vm762, %v739, 0
        %769 = vmatprep.subr.bf16.mxu0 0
        %770 = vmatpush1.bf16.msra.mxu0 0
        %771 = vmatprep.subr.bf16.mxu0 0
        %772 = vmatpush1.bf16.msra.mxu0 0
        %773 = vmatprep.subr.bf16.mxu0 0
        %774 = vmatpush1.bf16.msra.mxu0 0
        %775 = vmatprep.subr.bf16.mxu0 0
        %776 = vmatpush1.bf16.msra.mxu0 0
        %777 = vmatprep.subr.bf16.mxu0 0
        %778 = vmatpush1.bf16.msra.mxu0 0
        %779 = vmatprep.subr.bf16.mxu0 0
        %780 = vmatpush1.bf16.msra.mxu0 0
        %781 = vmatprep.subr.bf16.mxu0 0
        %782 = vmatpush1.bf16.msra.mxu0 %v759
        %783 = vmatprep.subr.bf16.mxu0 0
        %784 = vmatpush1.bf16.msra.mxu0 %v758
        %785 = vmatprep.subr.bf16.mxu0 0
        %786 = vmatpush2.bf16.msra.mxu0 0
        %787 = vmatprep.subr.bf16.mxu0 0
        %788 = vmatpush2.bf16.msra.mxu0 0
        %789 = vmatprep.subr.bf16.mxu0 0
        %790 = vmatpush2.bf16.msra.mxu0 0
        %791 = vmatprep.subr.bf16.mxu0 0
        %792 = vmatpush2.bf16.msra.mxu0 0
        %793 = vmatprep.subr.bf16.mxu0 0
        %794 = vmatpush2.bf16.msra.mxu0 0
        %795 = vmatprep.subr.bf16.mxu0 0
        %796 = vmatpush2.bf16.msra.mxu0 0
        %797 = vmatprep.subr.bf16.mxu0 0
        %798 = vmatpush2.bf16.msra.mxu0 0
        %799 = vmatprep.subr.bf16.mxu0 0
        %800 = vmatpush2.bf16.msra.mxu0 0
        %801 = vmatprep.mubr.bf16.mxu0 0
        %802 = vmatmul.mubr.bf16.gmra.mxu0 %v764
        %v803 = vpop.f32.mrf.mxu0
        %v804 = vadd.f32 %v749, %v803
        %v805 = vpop.f32.mrf.mxu0
        %v806 = vpop.f32.mrf.mxu0
        %v807 = vadd.f32 %v749, %v806
        %v808 = vpop.f32.mrf.mxu0
        %809 = vmatprep.mubr.bf16.mxu0 0
        %810 = vmatmul.mubr.bf16.gmra.mxu0 %v767
        %v811 = vpop.f32.mrf.mxu0
        %v812 = vadd.f32 %v749, %v811
        %v813 = vpop.f32.mrf.mxu0
        %v814 = vpop.f32.mrf.mxu0
        %v815 = vadd.f32 %v749, %v814
        %v816 = vpop.f32.mrf.mxu0
        %817 = vdwg.mxu0
        %vm818 = vcmp.gt.f32.partialorder %v804, 0.0
        %vm819 = vcmp.gt.f32.partialorder %v807, 0.0
        %vm820 = vcmp.gt.f32.partialorder %v812, 0.0
        %vm821 = vcmp.gt.f32.partialorder %v815, 0.0
        %v822 = vmul.f32 %v804, 0.2
        %v823 = vmul.f32 %v807, 0.2
        %v824 = vmul.f32 %v812, 0.2
        %v825 = vmul.f32 %v815, 0.2
        %v826 = vsel %vm818, %v804, %v822
        %v827 = vsel %vm819, %v807, %v823
        %v828 = vsel %vm820, %v812, %v824
        %v829 = vsel %vm821, %v815, %v825
        %v830 = vpack.c.bf16 %v827, %v826
        %v831 = vpack.c.bf16 %v829, %v828
        %v832 = vld [vmem:[#allocation7] sm:$0xff]
        %v833 = vld [vmem:[#allocation7 + $0x8] sm:$0xff]
        %v834 = vld [vmem:[#allocation7 + $0x10] sm:$0xff]
        %v835 = vld [vmem:[#allocation7 + $0x18] sm:$0xff]
        %v836 = vld [vmem:[#allocation7 + $0x20] sm:$0xff]
        %v837 = vld [vmem:[#allocation7 + $0x28] sm:$0xff]
        %v838 = vld [vmem:[#allocation7 + $0x30] sm:$0xff]
        %v839 = vld [vmem:[#allocation7 + $0x38] sm:$0xff]
        %v840 = vld [vmem:[#allocation7 + $0x40] sm:$0xff]
        %v841 = vld [vmem:[#allocation7 + $0x48] sm:$0xff]
        %v842 = vld [vmem:[#allocation7 + $0x50] sm:$0xff]
        %v843 = vld [vmem:[#allocation7 + $0x58] sm:$0xff]
        %v844 = vld [vmem:[#allocation7 + $0x60] sm:$0xff]
        %v845 = vld [vmem:[#allocation7 + $0x68] sm:$0xff]
        %v846 = vld [vmem:[#allocation7 + $0x70] sm:$0xff]
        %v847 = vld [vmem:[#allocation7 + $0x78] sm:$0xff]
        %v848 = vld [vmem:[#allocation9] sm:$0x3]
        %v849 = vunpack.c.l.bf16 %v848
        %v851 = vlaneseq
        %v852 = vshrl.u32 %v851, 7
        %v853 = vsub.s32 0, %v852
        %v854 = vrot.slane %v849, %v853
        %v855 = vlaneseq
        %v856 = vshrl.u32 %v855, 7
        %v857 = vsub.s32 2, %v856
        %v858 = vrot.slane %v849, %v857
        %v861 = vlaneseq
        %v862 = vshrl.u32 %v861, 7
        %v863 = vsub.s32 0, %v862
        %v864 = vrot.slane %v854, %v863
        %v865 = vlaneseq
        %v866 = vshrl.u32 %v865, 7
        %v867 = vsub.s32 0, %v866
        %v868 = vrot.slane %v858, %v867
        %v885 = vunpack.c.l.b16 %v832
        %v886 = vunpack.c.h.b16 %v832
        %v887 = vunpack.c.l.b16 %v833
        %v888 = vunpack.c.h.b16 %v833
        %v889 = vunpack.c.l.b16 %v834
        %v890 = vunpack.c.h.b16 %v834
        %v891 = vunpack.c.l.b16 %v835
        %v892 = vunpack.c.h.b16 %v835
        %v893 = vunpack.c.l.b16 %v836
        %v894 = vunpack.c.h.b16 %v836
        %v895 = vunpack.c.l.b16 %v837
        %v896 = vunpack.c.h.b16 %v837
        %v897 = vunpack.c.l.b16 %v838
        %v898 = vunpack.c.h.b16 %v838
        %v899 = vunpack.c.l.b16 %v839
        %v900 = vunpack.c.h.b16 %v839
        %v901 = vunpack.c.l.b16 %v840
        %v902 = vunpack.c.h.b16 %v840
        %v903 = vunpack.c.l.b16 %v841
        %v904 = vunpack.c.h.b16 %v841
        %v905 = vunpack.c.l.b16 %v842
        %v906 = vunpack.c.h.b16 %v842
        %v907 = vunpack.c.l.b16 %v843
        %v908 = vunpack.c.h.b16 %v843
        %v909 = vunpack.c.l.b16 %v844
        %v910 = vunpack.c.h.b16 %v844
        %v911 = vunpack.c.l.b16 %v845
        %v912 = vunpack.c.h.b16 %v845
        %v913 = vunpack.c.l.b16 %v846
        %v914 = vunpack.c.h.b16 %v846
        %v915 = vunpack.c.l.b16 %v847
        %v916 = vunpack.c.h.b16 %v847
        %v917 = vpack.c.b16 %v887, %v885
        %v918 = vpack.c.b16 %v888, %v886
        %v919 = vpack.c.b16 %v891, %v889
        %v920 = vpack.c.b16 %v892, %v890
        %v921 = vpack.c.b16 %v895, %v893
        %v922 = vpack.c.b16 %v896, %v894
        %v923 = vpack.c.b16 %v899, %v897
        %v924 = vpack.c.b16 %v900, %v898
        %v925 = vpack.c.b16 %v903, %v901
        %v926 = vpack.c.b16 %v904, %v902
        %v927 = vpack.c.b16 %v907, %v905
        %v928 = vpack.c.b16 %v908, %v906
        %v929 = vpack.c.b16 %v911, %v909
        %v930 = vpack.c.b16 %v912, %v910
        %v931 = vpack.c.b16 %v915, %v913
        %v932 = vpack.c.b16 %v916, %v914
        %949 = vmatprep.subr.bf16.mxu0 %v932
        %950 = vmatpush1.bf16.msra.mxu0 %v931
        %951 = vmatprep.subr.bf16.mxu0 %v930
        %952 = vmatpush1.bf16.msra.mxu0 %v929
        %953 = vmatprep.subr.bf16.mxu0 %v928
        %954 = vmatpush1.bf16.msra.mxu0 %v927
        %955 = vmatprep.subr.bf16.mxu0 %v926
        %956 = vmatpush1.bf16.msra.mxu0 %v925
        %957 = vmatprep.subr.bf16.mxu0 %v924
        %958 = vmatpush1.bf16.msra.mxu0 %v923
        %959 = vmatprep.subr.bf16.mxu0 %v922
        %960 = vmatpush1.bf16.msra.mxu0 %v921
        %961 = vmatprep.subr.bf16.mxu0 %v920
        %962 = vmatpush1.bf16.msra.mxu0 %v919
        %963 = vmatprep.subr.bf16.mxu0 %v918
        %964 = vmatpush1.bf16.msra.mxu0 %v917
        %965 = vmatprep.subr.bf16.mxu0 0
        %966 = vmatpush2.bf16.msra.mxu0 0
        %967 = vmatprep.subr.bf16.mxu0 0
        %968 = vmatpush2.bf16.msra.mxu0 0
        %969 = vmatprep.subr.bf16.mxu0 0
        %970 = vmatpush2.bf16.msra.mxu0 0
        %971 = vmatprep.subr.bf16.mxu0 0
        %972 = vmatpush2.bf16.msra.mxu0 0
        %973 = vmatprep.subr.bf16.mxu0 0
        %974 = vmatpush2.bf16.msra.mxu0 0
        %975 = vmatprep.subr.bf16.mxu0 0
        %976 = vmatpush2.bf16.msra.mxu0 0
        %977 = vmatprep.subr.bf16.mxu0 0
        %978 = vmatpush2.bf16.msra.mxu0 0
        %979 = vmatprep.subr.bf16.mxu0 0
        %980 = vmatpush2.bf16.msra.mxu0 0
        %981 = vmatprep.mubr.bf16.mxu0 0
        %982 = vmatmul.mubr.bf16.gmra.mxu0 %v830
        %v983 = vpop.f32.mrf.mxu0
        %v984 = vadd.f32 %v864, %v983
        %v985 = vpop.f32.mrf.mxu0
        %v986 = vadd.f32 %v868, %v985
        %v987 = vpop.f32.mrf.mxu0
        %v988 = vadd.f32 %v864, %v987
        %v989 = vpop.f32.mrf.mxu0
        %v990 = vadd.f32 %v868, %v989
        %991 = vmatprep.mubr.bf16.mxu0 0
        %992 = vmatmul.mubr.bf16.gmra.mxu0 %v831
        %v993 = vpop.f32.mrf.mxu0
        %v994 = vadd.f32 %v864, %v993
        %v995 = vpop.f32.mrf.mxu0
        %v996 = vadd.f32 %v868, %v995
        %v997 = vpop.f32.mrf.mxu0
        %v998 = vadd.f32 %v864, %v997
        %v999 = vpop.f32.mrf.mxu0
        %v1000 = vadd.f32 %v868, %v999
        %1001 = vdwg.mxu0
        %v1002 = vrot.slane %v984, 4
        %v1003 = vadd.f32 %v984, %v1002
        %v1004 = vrot.slane %v1003, 2
        %v1005 = vadd.f32 %v1003, %v1004
        %v1006 = vrot.slane %v1005, 1
        %v1007 = vadd.f32 %v1005, %v1006
        %v1008 = vrot.slane %v986, 4
        %v1009 = vadd.f32 %v986, %v1008
        %v1010 = vrot.slane %v1009, 2
        %v1011 = vadd.f32 %v1009, %v1010
        %v1012 = vrot.slane %v1011, 1
        %v1013 = vadd.f32 %v1011, %v1012
        %v1014 = vrot.slane %v988, 4
        %v1015 = vadd.f32 %v988, %v1014
        %v1016 = vrot.slane %v1015, 2
        %v1017 = vadd.f32 %v1015, %v1016
        %v1018 = vrot.slane %v1017, 1
        %v1019 = vadd.f32 %v1017, %v1018
        %v1020 = vrot.slane %v990, 4
        %v1021 = vadd.f32 %v990, %v1020
        %v1022 = vrot.slane %v1021, 2
        %v1023 = vadd.f32 %v1021, %v1022
        %v1024 = vrot.slane %v1023, 1
        %v1025 = vadd.f32 %v1023, %v1024
        %v1026 = vrot.slane %v994, 4
        %v1027 = vadd.f32 %v994, %v1026
        %v1028 = vrot.slane %v1027, 2
        %v1029 = vadd.f32 %v1027, %v1028
        %v1030 = vrot.slane %v1029, 1
        %v1031 = vadd.f32 %v1029, %v1030
        %v1032 = vrot.slane %v996, 4
        %v1033 = vadd.f32 %v996, %v1032
        %v1034 = vrot.slane %v1033, 2
        %v1035 = vadd.f32 %v1033, %v1034
        %v1036 = vrot.slane %v1035, 1
        %v1037 = vadd.f32 %v1035, %v1036
        %v1038 = vrot.slane %v998, 4
        %v1039 = vadd.f32 %v998, %v1038
        %v1040 = vrot.slane %v1039, 2
        %v1041 = vadd.f32 %v1039, %v1040
        %v1042 = vrot.slane %v1041, 1
        %v1043 = vadd.f32 %v1041, %v1042
        %v1044 = vrot.slane %v1000, 4
        %v1045 = vadd.f32 %v1000, %v1044
        %v1046 = vrot.slane %v1045, 2
        %v1047 = vadd.f32 %v1045, %v1046
        %v1048 = vrot.slane %v1047, 1
        %v1049 = vadd.f32 %v1047, %v1048
        %v1050 = vrcp.pop 8.0
        %v1051 = vmul.f32 %v1007, %v1050
        %v1052 = vmul.f32 %v1013, %v1050
        %v1053 = vmul.f32 %v1019, %v1050
        %v1054 = vmul.f32 %v1025, %v1050
        %v1055 = vmul.f32 %v1031, %v1050
        %v1056 = vmul.f32 %v1037, %v1050
        %v1057 = vmul.f32 %v1043, %v1050
        %v1058 = vmul.f32 %v1049, %v1050
        %v1059 = vsub.f32 %v984, %v1051
        %v1060 = vsub.f32 %v986, %v1052
        %v1061 = vsub.f32 %v988, %v1053
        %v1062 = vsub.f32 %v990, %v1054
        %v1063 = vsub.f32 %v994, %v1055
        %v1064 = vsub.f32 %v996, %v1056
        %v1065 = vsub.f32 %v998, %v1057
        %v1066 = vsub.f32 %v1000, %v1058
        %v1067 = vmul.f32 %v1059, %v1059
        %v1068 = vmul.f32 %v1060, %v1060
        %v1069 = vmul.f32 %v1061, %v1061
        %v1070 = vmul.f32 %v1062, %v1062
        %v1071 = vmul.f32 %v1063, %v1063
        %v1072 = vmul.f32 %v1064, %v1064
        %v1073 = vmul.f32 %v1065, %v1065
        %v1074 = vmul.f32 %v1066, %v1066
        %v1075 = vrot.slane %v1067, 4
        %v1076 = vadd.f32 %v1067, %v1075
        %v1077 = vrot.slane %v1076, 2
        %v1078 = vadd.f32 %v1076, %v1077
        %v1079 = vrot.slane %v1078, 1
        %v1080 = vadd.f32 %v1078, %v1079
        %v1081 = vrot.slane %v1068, 4
        %v1082 = vadd.f32 %v1068, %v1081
        %v1083 = vrot.slane %v1082, 2
        %v1084 = vadd.f32 %v1082, %v1083
        %v1085 = vrot.slane %v1084, 1
        %v1086 = vadd.f32 %v1084, %v1085
        %v1087 = vrot.slane %v1069, 4
        %v1088 = vadd.f32 %v1069, %v1087
        %v1089 = vrot.slane %v1088, 2
        %v1090 = vadd.f32 %v1088, %v1089
        %v1091 = vrot.slane %v1090, 1
        %v1092 = vadd.f32 %v1090, %v1091
        %v1093 = vrot.slane %v1070, 4
        %v1094 = vadd.f32 %v1070, %v1093
        %v1095 = vrot.slane %v1094, 2
        %v1096 = vadd.f32 %v1094, %v1095
        %v1097 = vrot.slane %v1096, 1
        %v1098 = vadd.f32 %v1096, %v1097
        %v1099 = vrot.slane %v1071, 4
        %v1100 = vadd.f32 %v1071, %v1099
        %v1101 = vrot.slane %v1100, 2
        %v1102 = vadd.f32 %v1100, %v1101
        %v1103 = vrot.slane %v1102, 1
        %v1104 = vadd.f32 %v1102, %v1103
        %v1105 = vrot.slane %v1072, 4
        %v1106 = vadd.f32 %v1072, %v1105
        %v1107 = vrot.slane %v1106, 2
        %v1108 = vadd.f32 %v1106, %v1107
        %v1109 = vrot.slane %v1108, 1
        %v1110 = vadd.f32 %v1108, %v1109
        %v1111 = vrot.slane %v1073, 4
        %v1112 = vadd.f32 %v1073, %v1111
        %v1113 = vrot.slane %v1112, 2
        %v1114 = vadd.f32 %v1112, %v1113
        %v1115 = vrot.slane %v1114, 1
        %v1116 = vadd.f32 %v1114, %v1115
        %v1117 = vrot.slane %v1074, 4
        %v1118 = vadd.f32 %v1074, %v1117
        %v1119 = vrot.slane %v1118, 2
        %v1120 = vadd.f32 %v1118, %v1119
        %v1121 = vrot.slane %v1120, 1
        %v1122 = vadd.f32 %v1120, %v1121
        %v1123 = vmul.f32 %v1080, %v1050
        %v1124 = vmul.f32 %v1086, %v1050
        %v1125 = vmul.f32 %v1092, %v1050
        %v1126 = vmul.f32 %v1098, %v1050
        %v1127 = vmul.f32 %v1104, %v1050
        %v1128 = vmul.f32 %v1110, %v1050
        %v1129 = vmul.f32 %v1116, %v1050
        %v1130 = vmul.f32 %v1122, %v1050
        %v1131 = vld [vmem:[#allocation10] sm:$0x3]
        %v1132 = vadd.f32 %v1123, 0.8
        %v1133 = vadd.f32 %v1124, 0.8
        %v1134 = vadd.f32 %v1125, 0.8
        %v1135 = vadd.f32 %v1126, 0.8
        %v1136 = vadd.f32 %v1127, 0.8
        %v1137 = vadd.f32 %v1128, 0.8
        %v1138 = vadd.f32 %v1129, 0.8
        %v1139 = vadd.f32 %v1130, 0.8
        %v1140 = vrsqrt.pop %v1132
        %v1141 = vrsqrt.pop %v1133
        %v1142 = vrsqrt.pop %v1134
        %v1143 = vrsqrt.pop %v1135
        %v1144 = vrsqrt.pop %v1136
        %v1145 = vrsqrt.pop %v1137
        %v1146 = vrsqrt.pop %v1138
        %v1147 = vrsqrt.pop %v1139
        %v1156 = vcombine.low %v1140, %v1141
        %v1158 = vunpack.c.l.s4 1966171168
        %v1159 = vunpack.c.0.s8 %v1158
        %v1160 = vlaneseq
        %v1161 = vshrl.u32 %v1160, 7
        %v1162 = vsub.s32 %v1159, %v1161
        %v1163 = vrot.slane %v1156, %v1162
        %v1165 = vunpack.c.l.s4 1966171168
        %v1166 = vunpack.c.0.s8 %v1165
        %v1167 = vlaneseq
        %v1168 = vshrl.u32 %v1167, 7
        %v1169 = vsub.s32 %v1166, %v1168
        %v1170 = vrot.slane %v1163, %v1169
        %v1171 = vcombine.low %v1142, %v1143
        %v1173 = vunpack.c.l.s4 1966171168
        %v1174 = vunpack.c.0.s8 %v1173
        %v1175 = vlaneseq
        %v1176 = vshrl.u32 %v1175, 7
        %v1177 = vsub.s32 %v1174, %v1176
        %v1178 = vrot.slane %v1171, %v1177
        %v1180 = vunpack.c.l.s4 1966171168
        %v1181 = vunpack.c.0.s8 %v1180
        %v1182 = vlaneseq
        %v1183 = vshrl.u32 %v1182, 7
        %v1184 = vsub.s32 %v1181, %v1183
        %v1185 = vrot.slane %v1178, %v1184
        %v1186 = vcombine.low %v1144, %v1145
        %v1188 = vunpack.c.l.s4 1966171168
        %v1189 = vunpack.c.0.s8 %v1188
        %v1190 = vlaneseq
        %v1191 = vshrl.u32 %v1190, 7
        %v1192 = vsub.s32 %v1189, %v1191
        %v1193 = vrot.slane %v1186, %v1192
        %v1195 = vunpack.c.l.s4 1966171168
        %v1196 = vunpack.c.0.s8 %v1195
        %v1197 = vlaneseq
        %v1198 = vshrl.u32 %v1197, 7
        %v1199 = vsub.s32 %v1196, %v1198
        %v1200 = vrot.slane %v1193, %v1199
        %v1201 = vcombine.low %v1146, %v1147
        %v1203 = vunpack.c.l.s4 1966171168
        %v1204 = vunpack.c.0.s8 %v1203
        %v1205 = vlaneseq
        %v1206 = vshrl.u32 %v1205, 7
        %v1207 = vsub.s32 %v1204, %v1206
        %v1208 = vrot.slane %v1201, %v1207
        %v1210 = vunpack.c.l.s4 1966171168
        %v1211 = vunpack.c.0.s8 %v1210
        %v1212 = vlaneseq
        %v1213 = vshrl.u32 %v1212, 7
        %v1214 = vsub.s32 %v1211, %v1213
        %v1215 = vrot.slane %v1208, %v1214
        %v1220 = vmul.f32 %v1131, %v1170
        %v1221 = vmul.f32 %v1131, %v1185
        %v1222 = vmul.f32 %v1131, %v1200
        %v1223 = vmul.f32 %v1131, %v1215
        %v1224 = vld [vmem:[#allocation12] sm:$0x3]
        %v1229 = vlaneseq
        %v1230 = vshrl.u32 %v1229, 7
        %v1231 = vsub.s32 0, %v1230
        %v1232 = vrot.slane %v1220, %v1231
        %v1233 = vlaneseq
        %v1234 = vshrl.u32 %v1233, 7
        %v1235 = vsub.s32 1, %v1234
        %v1236 = vrot.slane %v1220, %v1235
        %v1237 = vlaneseq
        %v1238 = vshrl.u32 %v1237, 7
        %v1239 = vsub.s32 0, %v1238
        %v1240 = vrot.slane %v1221, %v1239
        %v1241 = vlaneseq
        %v1242 = vshrl.u32 %v1241, 7
        %v1243 = vsub.s32 1, %v1242
        %v1244 = vrot.slane %v1221, %v1243
        %v1245 = vlaneseq
        %v1246 = vshrl.u32 %v1245, 7
        %v1247 = vsub.s32 0, %v1246
        %v1248 = vrot.slane %v1222, %v1247
        %v1249 = vlaneseq
        %v1250 = vshrl.u32 %v1249, 7
        %v1251 = vsub.s32 1, %v1250
        %v1252 = vrot.slane %v1222, %v1251
        %v1253 = vlaneseq
        %v1254 = vshrl.u32 %v1253, 7
        %v1255 = vsub.s32 0, %v1254
        %v1256 = vrot.slane %v1223, %v1255
        %v1257 = vlaneseq
        %v1258 = vshrl.u32 %v1257, 7
        %v1259 = vsub.s32 1, %v1258
        %v1260 = vrot.slane %v1223, %v1259
        %v1269 = vmul.f32 %v1051, %v1232
        %v1270 = vmul.f32 %v1052, %v1236
        %v1271 = vmul.f32 %v1053, %v1240
        %v1272 = vmul.f32 %v1054, %v1244
        %v1273 = vmul.f32 %v1055, %v1248
        %v1274 = vmul.f32 %v1056, %v1252
        %v1275 = vmul.f32 %v1057, %v1256
        %v1276 = vmul.f32 %v1058, %v1260
        %v1285 = vcombine.low %v1269, %v1270
        %v1287 = vunpack.c.l.s4 1966171168
        %v1288 = vunpack.c.0.s8 %v1287
        %v1289 = vlaneseq
        %v1290 = vshrl.u32 %v1289, 7
        %v1291 = vsub.s32 %v1288, %v1290
        %v1292 = vrot.slane %v1285, %v1291
        %v1294 = vunpack.c.l.s4 1966171168
        %v1295 = vunpack.c.0.s8 %v1294
        %v1296 = vlaneseq
        %v1297 = vshrl.u32 %v1296, 7
        %v1298 = vsub.s32 %v1295, %v1297
        %v1299 = vrot.slane %v1292, %v1298
        %v1300 = vcombine.low %v1271, %v1272
        %v1302 = vunpack.c.l.s4 1966171168
        %v1303 = vunpack.c.0.s8 %v1302
        %v1304 = vlaneseq
        %v1305 = vshrl.u32 %v1304, 7
        %v1306 = vsub.s32 %v1303, %v1305
        %v1307 = vrot.slane %v1300, %v1306
        %v1309 = vunpack.c.l.s4 1966171168
        %v1310 = vunpack.c.0.s8 %v1309
        %v1311 = vlaneseq
        %v1312 = vshrl.u32 %v1311, 7
        %v1313 = vsub.s32 %v1310, %v1312
        %v1314 = vrot.slane %v1307, %v1313
        %v1315 = vcombine.low %v1273, %v1274
        %v1317 = vunpack.c.l.s4 1966171168
        %v1318 = vunpack.c.0.s8 %v1317
        %v1319 = vlaneseq
        %v1320 = vshrl.u32 %v1319, 7
        %v1321 = vsub.s32 %v1318, %v1320
        %v1322 = vrot.slane %v1315, %v1321
        %v1324 = vunpack.c.l.s4 1966171168
        %v1325 = vunpack.c.0.s8 %v1324
        %v1326 = vlaneseq
        %v1327 = vshrl.u32 %v1326, 7
        %v1328 = vsub.s32 %v1325, %v1327
        %v1329 = vrot.slane %v1322, %v1328
        %v1330 = vcombine.low %v1275, %v1276
        %v1332 = vunpack.c.l.s4 1966171168
        %v1333 = vunpack.c.0.s8 %v1332
        %v1334 = vlaneseq
        %v1335 = vshrl.u32 %v1334, 7
        %v1336 = vsub.s32 %v1333, %v1335
        %v1337 = vrot.slane %v1330, %v1336
        %v1339 = vunpack.c.l.s4 1966171168
        %v1340 = vunpack.c.0.s8 %v1339
        %v1341 = vlaneseq
        %v1342 = vshrl.u32 %v1341, 7
        %v1343 = vsub.s32 %v1340, %v1342
        %v1344 = vrot.slane %v1337, %v1343
        %v1349 = vsub.f32 %v1224, %v1299
        %v1350 = vsub.f32 %v1224, %v1314
        %v1351 = vsub.f32 %v1224, %v1329
        %v1352 = vsub.f32 %v1224, %v1344
        %v1353 = vmul.f32 %v984, %v1232
        %v1354 = vmul.f32 %v986, %v1236
        %v1355 = vmul.f32 %v988, %v1240
        %v1356 = vmul.f32 %v990, %v1244
        %v1357 = vmul.f32 %v994, %v1248
        %v1358 = vmul.f32 %v996, %v1252
        %v1359 = vmul.f32 %v998, %v1256
        %v1360 = vmul.f32 %v1000, %v1260
        %v1365 = vlaneseq
        %v1366 = vshrl.u32 %v1365, 7
        %v1367 = vsub.s32 0, %v1366
        %v1368 = vrot.slane %v1349, %v1367
        %v1369 = vlaneseq
        %v1370 = vshrl.u32 %v1369, 7
        %v1371 = vsub.s32 1, %v1370
        %v1372 = vrot.slane %v1349, %v1371
        %v1373 = vlaneseq
        %v1374 = vshrl.u32 %v1373, 7
        %v1375 = vsub.s32 0, %v1374
        %v1376 = vrot.slane %v1350, %v1375
        %v1377 = vlaneseq
        %v1378 = vshrl.u32 %v1377, 7
        %v1379 = vsub.s32 1, %v1378
        %v1380 = vrot.slane %v1350, %v1379
        %v1381 = vlaneseq
        %v1382 = vshrl.u32 %v1381, 7
        %v1383 = vsub.s32 0, %v1382
        %v1384 = vrot.slane %v1351, %v1383
        %v1385 = vlaneseq
        %v1386 = vshrl.u32 %v1385, 7
        %v1387 = vsub.s32 1, %v1386
        %v1388 = vrot.slane %v1351, %v1387
        %v1389 = vlaneseq
        %v1390 = vshrl.u32 %v1389, 7
        %v1391 = vsub.s32 0, %v1390
        %v1392 = vrot.slane %v1352, %v1391
        %v1393 = vlaneseq
        %v1394 = vshrl.u32 %v1393, 7
        %v1395 = vsub.s32 1, %v1394
        %v1396 = vrot.slane %v1352, %v1395
        %v1405 = vadd.f32 %v1353, %v1368
        %v1406 = vadd.f32 %v1354, %v1372
        %v1407 = vadd.f32 %v1355, %v1376
        %v1408 = vadd.f32 %v1356, %v1380
        %v1409 = vadd.f32 %v1357, %v1384
        %v1410 = vadd.f32 %v1358, %v1388
        %v1411 = vadd.f32 %v1359, %v1392
        %v1412 = vadd.f32 %v1360, %v1396
        %vm1413 = vcmp.gt.f32.partialorder %v1405, 0.0
        %vm1414 = vcmp.gt.f32.partialorder %v1406, 0.0
        %vm1415 = vcmp.gt.f32.partialorder %v1407, 0.0
        %vm1416 = vcmp.gt.f32.partialorder %v1408, 0.0
        %vm1417 = vcmp.gt.f32.partialorder %v1409, 0.0
        %vm1418 = vcmp.gt.f32.partialorder %v1410, 0.0
        %vm1419 = vcmp.gt.f32.partialorder %v1411, 0.0
        %vm1420 = vcmp.gt.f32.partialorder %v1412, 0.0
        %v1421 = vmul.f32 %v1405, 0.2
        %v1422 = vmul.f32 %v1406, 0.2
        %v1423 = vmul.f32 %v1407, 0.2
        %v1424 = vmul.f32 %v1408, 0.2
        %v1425 = vmul.f32 %v1409, 0.2
        %v1426 = vmul.f32 %v1410, 0.2
        %v1427 = vmul.f32 %v1411, 0.2
        %v1428 = vmul.f32 %v1412, 0.2
        %v1429 = vsel %vm1413, %v1405, %v1421
        %v1430 = vsel %vm1414, %v1406, %v1422
        %v1431 = vsel %vm1415, %v1407, %v1423
        %v1432 = vsel %vm1416, %v1408, %v1424
        %v1433 = vsel %vm1417, %v1409, %v1425
        %v1434 = vsel %vm1418, %v1410, %v1426
        %v1435 = vsel %vm1419, %v1411, %v1427
        %v1436 = vsel %vm1420, %v1412, %v1428
        %v1437 = vpack.c.bf16 %v1431, %v1429
        %v1438 = vpack.c.bf16 %v1432, %v1430
        %v1439 = vpack.c.bf16 %v1435, %v1433
        %v1440 = vpack.c.bf16 %v1436, %v1434
        %v1441 = vld [vmem:[#allocation13] sm:$0xff]
        %v1442 = vld [vmem:[#allocation13 + $0x8] sm:$0xff]
        %v1443 = vld [vmem:[#allocation13 + $0x10] sm:$0xff]
        %v1444 = vld [vmem:[#allocation13 + $0x18] sm:$0xff]
        %v1445 = vld [vmem:[#allocation13 + $0x20] sm:$0xff]
        %v1446 = vld [vmem:[#allocation13 + $0x28] sm:$0xff]
        %v1447 = vld [vmem:[#allocation13 + $0x30] sm:$0xff]
        %v1448 = vld [vmem:[#allocation13 + $0x38] sm:$0xff]
        %v1449 = vld [vmem:[#allocation13 + $0x40] sm:$0xff]
        %v1450 = vld [vmem:[#allocation13 + $0x48] sm:$0xff]
        %v1451 = vld [vmem:[#allocation13 + $0x50] sm:$0xff]
        %v1452 = vld [vmem:[#allocation13 + $0x58] sm:$0xff]
        %v1453 = vld [vmem:[#allocation13 + $0x60] sm:$0xff]
        %v1454 = vld [vmem:[#allocation13 + $0x68] sm:$0xff]
        %v1455 = vld [vmem:[#allocation13 + $0x70] sm:$0xff]
        %v1456 = vld [vmem:[#allocation13 + $0x78] sm:$0xff]
        %v1457 = vld [vmem:[#allocation13 + $0x80] sm:$0xff]
        %v1458 = vld [vmem:[#allocation13 + $0x88] sm:$0xff]
        %v1459 = vld [vmem:[#allocation13 + $0x90] sm:$0xff]
        %v1460 = vld [vmem:[#allocation13 + $0x98] sm:$0xff]
        %v1461 = vld [vmem:[#allocation13 + $0xa0] sm:$0xff]
        %v1462 = vld [vmem:[#allocation13 + $0xa8] sm:$0xff]
        %v1463 = vld [vmem:[#allocation13 + $0xb0] sm:$0xff]
        %v1464 = vld [vmem:[#allocation13 + $0xb8] sm:$0xff]
        %v1465 = vld [vmem:[#allocation13 + $0xc0] sm:$0xff]
        %v1466 = vld [vmem:[#allocation13 + $0xc8] sm:$0xff]
        %v1467 = vld [vmem:[#allocation13 + $0xd0] sm:$0xff]
        %v1468 = vld [vmem:[#allocation13 + $0xd8] sm:$0xff]
        %v1469 = vld [vmem:[#allocation13 + $0xe0] sm:$0xff]
        %v1470 = vld [vmem:[#allocation13 + $0xe8] sm:$0xff]
        %v1471 = vld [vmem:[#allocation13 + $0xf0] sm:$0xff]
        %v1472 = vld [vmem:[#allocation13 + $0xf8] sm:$0xff]
        %v1473 = vld [vmem:[#allocation13 + $0x100] sm:$0xff]
        %v1474 = vld [vmem:[#allocation13 + $0x108] sm:$0xff]
        %v1475 = vld [vmem:[#allocation13 + $0x110] sm:$0xff]
        %v1476 = vld [vmem:[#allocation13 + $0x118] sm:$0xff]
        %v1477 = vld [vmem:[#allocation13 + $0x120] sm:$0xff]
        %v1478 = vld [vmem:[#allocation13 + $0x128] sm:$0xff]
        %v1479 = vld [vmem:[#allocation13 + $0x130] sm:$0xff]
        %v1480 = vld [vmem:[#allocation13 + $0x138] sm:$0xff]
        %v1481 = vld [vmem:[#allocation13 + $0x140] sm:$0xff]
        %v1482 = vld [vmem:[#allocation13 + $0x148] sm:$0xff]
        %v1483 = vld [vmem:[#allocation13 + $0x150] sm:$0xff]
        %v1484 = vld [vmem:[#allocation13 + $0x158] sm:$0xff]
        %v1485 = vld [vmem:[#allocation13 + $0x160] sm:$0xff]
        %v1486 = vld [vmem:[#allocation13 + $0x168] sm:$0xff]
        %v1487 = vld [vmem:[#allocation13 + $0x170] sm:$0xff]
        %v1488 = vld [vmem:[#allocation13 + $0x178] sm:$0xff]
        %v1489 = vld [vmem:[#allocation13 + $0x180] sm:$0xff]
        %v1490 = vld [vmem:[#allocation13 + $0x188] sm:$0xff]
        %v1491 = vld [vmem:[#allocation13 + $0x190] sm:$0xff]
        %v1492 = vld [vmem:[#allocation13 + $0x198] sm:$0xff]
        %v1493 = vld [vmem:[#allocation13 + $0x1a0] sm:$0xff]
        %v1494 = vld [vmem:[#allocation13 + $0x1a8] sm:$0xff]
        %v1495 = vld [vmem:[#allocation13 + $0x1b0] sm:$0xff]
        %v1496 = vld [vmem:[#allocation13 + $0x1b8] sm:$0xff]
        %v1497 = vld [vmem:[#allocation13 + $0x1c0] sm:$0xff]
        %v1498 = vld [vmem:[#allocation13 + $0x1c8] sm:$0xff]
        %v1499 = vld [vmem:[#allocation13 + $0x1d0] sm:$0xff]
        %v1500 = vld [vmem:[#allocation13 + $0x1d8] sm:$0xff]
        %v1501 = vld [vmem:[#allocation13 + $0x1e0] sm:$0xff]
        %v1502 = vld [vmem:[#allocation13 + $0x1e8] sm:$0xff]
        %v1503 = vld [vmem:[#allocation13 + $0x1f0] sm:$0xff]
        %v1504 = vld [vmem:[#allocation13 + $0x1f8] sm:$0xff]
        %v1505 = vld [vmem:[#allocation15] sm:$0xf]
        %v1506 = vunpack.c.l.bf16 %v1505
        %v1508 = vlaneseq
        %v1509 = vshrl.u32 %v1508, 7
        %v1510 = vsub.s32 0, %v1509
        %v1511 = vrot.slane %v1506, %v1510
        %v1512 = vlaneseq
        %v1513 = vshrl.u32 %v1512, 7
        %v1514 = vsub.s32 2, %v1513
        %v1515 = vrot.slane %v1506, %v1514
        %v1516 = vlaneseq
        %v1517 = vshrl.u32 %v1516, 7
        %v1518 = vsub.s32 4, %v1517
        %v1519 = vrot.slane %v1506, %v1518
        %v1520 = vlaneseq
        %v1521 = vshrl.u32 %v1520, 7
        %v1522 = vsub.s32 6, %v1521
        %v1523 = vrot.slane %v1506, %v1522
        %v1528 = vlaneseq
        %v1529 = vshrl.u32 %v1528, 7
        %v1530 = vsub.s32 0, %v1529
        %v1531 = vrot.slane %v1511, %v1530
        %v1532 = vlaneseq
        %v1533 = vshrl.u32 %v1532, 7
        %v1534 = vsub.s32 0, %v1533
        %v1535 = vrot.slane %v1515, %v1534
        %v1536 = vlaneseq
        %v1537 = vshrl.u32 %v1536, 7
        %v1538 = vsub.s32 0, %v1537
        %v1539 = vrot.slane %v1519, %v1538
        %v1540 = vlaneseq
        %v1541 = vshrl.u32 %v1540, 7
        %v1542 = vsub.s32 0, %v1541
        %v1543 = vrot.slane %v1523, %v1542
        %v1608 = vunpack.c.l.b16 %v1441
        %v1609 = vunpack.c.h.b16 %v1441
        %v1610 = vunpack.c.l.b16 %v1442
        %v1611 = vunpack.c.h.b16 %v1442
        %v1612 = vunpack.c.l.b16 %v1443
        %v1613 = vunpack.c.h.b16 %v1443
        %v1614 = vunpack.c.l.b16 %v1444
        %v1615 = vunpack.c.h.b16 %v1444
        %v1616 = vunpack.c.l.b16 %v1445
        %v1617 = vunpack.c.h.b16 %v1445
        %v1618 = vunpack.c.l.b16 %v1446
        %v1619 = vunpack.c.h.b16 %v1446
        %v1620 = vunpack.c.l.b16 %v1447
        %v1621 = vunpack.c.h.b16 %v1447
        %v1622 = vunpack.c.l.b16 %v1448
        %v1623 = vunpack.c.h.b16 %v1448
        %v1624 = vunpack.c.l.b16 %v1449
        %v1625 = vunpack.c.h.b16 %v1449
        %v1626 = vunpack.c.l.b16 %v1450
        %v1627 = vunpack.c.h.b16 %v1450
        %v1628 = vunpack.c.l.b16 %v1451
        %v1629 = vunpack.c.h.b16 %v1451
        %v1630 = vunpack.c.l.b16 %v1452
        %v1631 = vunpack.c.h.b16 %v1452
        %v1632 = vunpack.c.l.b16 %v1453
        %v1633 = vunpack.c.h.b16 %v1453
        %v1634 = vunpack.c.l.b16 %v1454
        %v1635 = vunpack.c.h.b16 %v1454
        %v1636 = vunpack.c.l.b16 %v1455
        %v1637 = vunpack.c.h.b16 %v1455
        %v1638 = vunpack.c.l.b16 %v1456
        %v1639 = vunpack.c.h.b16 %v1456
        %v1640 = vunpack.c.l.b16 %v1457
        %v1641 = vunpack.c.h.b16 %v1457
        %v1642 = vunpack.c.l.b16 %v1458
        %v1643 = vunpack.c.h.b16 %v1458
        %v1644 = vunpack.c.l.b16 %v1459
        %v1645 = vunpack.c.h.b16 %v1459
        %v1646 = vunpack.c.l.b16 %v1460
        %v1647 = vunpack.c.h.b16 %v1460
        %v1648 = vunpack.c.l.b16 %v1461
        %v1649 = vunpack.c.h.b16 %v1461
        %v1650 = vunpack.c.l.b16 %v1462
        %v1651 = vunpack.c.h.b16 %v1462
        %v1652 = vunpack.c.l.b16 %v1463
        %v1653 = vunpack.c.h.b16 %v1463
        %v1654 = vunpack.c.l.b16 %v1464
        %v1655 = vunpack.c.h.b16 %v1464
        %v1656 = vunpack.c.l.b16 %v1465
        %v1657 = vunpack.c.h.b16 %v1465
        %v1658 = vunpack.c.l.b16 %v1466
        %v1659 = vunpack.c.h.b16 %v1466
        %v1660 = vunpack.c.l.b16 %v1467
        %v1661 = vunpack.c.h.b16 %v1467
        %v1662 = vunpack.c.l.b16 %v1468
        %v1663 = vunpack.c.h.b16 %v1468
        %v1664 = vunpack.c.l.b16 %v1469
        %v1665 = vunpack.c.h.b16 %v1469
        %v1666 = vunpack.c.l.b16 %v1470
        %v1667 = vunpack.c.h.b16 %v1470
        %v1668 = vunpack.c.l.b16 %v1471
        %v1669 = vunpack.c.h.b16 %v1471
        %v1670 = vunpack.c.l.b16 %v1472
        %v1671 = vunpack.c.h.b16 %v1472
        %v1672 = vunpack.c.l.b16 %v1473
        %v1673 = vunpack.c.h.b16 %v1473
        %v1674 = vunpack.c.l.b16 %v1474
        %v1675 = vunpack.c.h.b16 %v1474
        %v1676 = vunpack.c.l.b16 %v1475
        %v1677 = vunpack.c.h.b16 %v1475
        %v1678 = vunpack.c.l.b16 %v1476
        %v1679 = vunpack.c.h.b16 %v1476
        %v1680 = vunpack.c.l.b16 %v1477
        %v1681 = vunpack.c.h.b16 %v1477
        %v1682 = vunpack.c.l.b16 %v1478
        %v1683 = vunpack.c.h.b16 %v1478
        %v1684 = vunpack.c.l.b16 %v1479
        %v1685 = vunpack.c.h.b16 %v1479
        %v1686 = vunpack.c.l.b16 %v1480
        %v1687 = vunpack.c.h.b16 %v1480
        %v1688 = vunpack.c.l.b16 %v1481
        %v1689 = vunpack.c.h.b16 %v1481
        %v1690 = vunpack.c.l.b16 %v1482
        %v1691 = vunpack.c.h.b16 %v1482
        %v1692 = vunpack.c.l.b16 %v1483
        %v1693 = vunpack.c.h.b16 %v1483
        %v1694 = vunpack.c.l.b16 %v1484
        %v1695 = vunpack.c.h.b16 %v1484
        %v1696 = vunpack.c.l.b16 %v1485
        %v1697 = vunpack.c.h.b16 %v1485
        %v1698 = vunpack.c.l.b16 %v1486
        %v1699 = vunpack.c.h.b16 %v1486
        %v1700 = vunpack.c.l.b16 %v1487
        %v1701 = vunpack.c.h.b16 %v1487
        %v1702 = vunpack.c.l.b16 %v1488
        %v1703 = vunpack.c.h.b16 %v1488
        %v1704 = vunpack.c.l.b16 %v1489
        %v1705 = vunpack.c.h.b16 %v1489
        %v1706 = vunpack.c.l.b16 %v1490
        %v1707 = vunpack.c.h.b16 %v1490
        %v1708 = vunpack.c.l.b16 %v1491
        %v1709 = vunpack.c.h.b16 %v1491
        %v1710 = vunpack.c.l.b16 %v1492
        %v1711 = vunpack.c.h.b16 %v1492
        %v1712 = vunpack.c.l.b16 %v1493
        %v1713 = vunpack.c.h.b16 %v1493
        %v1714 = vunpack.c.l.b16 %v1494
        %v1715 = vunpack.c.h.b16 %v1494
        %v1716 = vunpack.c.l.b16 %v1495
        %v1717 = vunpack.c.h.b16 %v1495
        %v1718 = vunpack.c.l.b16 %v1496
        %v1719 = vunpack.c.h.b16 %v1496
        %v1720 = vunpack.c.l.b16 %v1497
        %v1721 = vunpack.c.h.b16 %v1497
        %v1722 = vunpack.c.l.b16 %v1498
        %v1723 = vunpack.c.h.b16 %v1498
        %v1724 = vunpack.c.l.b16 %v1499
        %v1725 = vunpack.c.h.b16 %v1499
        %v1726 = vunpack.c.l.b16 %v1500
        %v1727 = vunpack.c.h.b16 %v1500
        %v1728 = vunpack.c.l.b16 %v1501
        %v1729 = vunpack.c.h.b16 %v1501
        %v1730 = vunpack.c.l.b16 %v1502
        %v1731 = vunpack.c.h.b16 %v1502
        %v1732 = vunpack.c.l.b16 %v1503
        %v1733 = vunpack.c.h.b16 %v1503
        %v1734 = vunpack.c.l.b16 %v1504
        %v1735 = vunpack.c.h.b16 %v1504
        %v1736 = vpack.c.b16 %v1612, %v1608
        %v1737 = vpack.c.b16 %v1613, %v1609
        %v1738 = vpack.c.b16 %v1614, %v1610
        %v1739 = vpack.c.b16 %v1615, %v1611
        %v1740 = vpack.c.b16 %v1620, %v1616
        %v1741 = vpack.c.b16 %v1621, %v1617
        %v1742 = vpack.c.b16 %v1622, %v1618
        %v1743 = vpack.c.b16 %v1623, %v1619
        %v1744 = vpack.c.b16 %v1628, %v1624
        %v1745 = vpack.c.b16 %v1629, %v1625
        %v1746 = vpack.c.b16 %v1630, %v1626
        %v1747 = vpack.c.b16 %v1631, %v1627
        %v1748 = vpack.c.b16 %v1636, %v1632
        %v1749 = vpack.c.b16 %v1637, %v1633
        %v1750 = vpack.c.b16 %v1638, %v1634
        %v1751 = vpack.c.b16 %v1639, %v1635
        %v1752 = vpack.c.b16 %v1644, %v1640
        %v1753 = vpack.c.b16 %v1645, %v1641
        %v1754 = vpack.c.b16 %v1646, %v1642
        %v1755 = vpack.c.b16 %v1647, %v1643
        %v1756 = vpack.c.b16 %v1652, %v1648
        %v1757 = vpack.c.b16 %v1653, %v1649
        %v1758 = vpack.c.b16 %v1654, %v1650
        %v1759 = vpack.c.b16 %v1655, %v1651
        %v1760 = vpack.c.b16 %v1660, %v1656
        %v1761 = vpack.c.b16 %v1661, %v1657
        %v1762 = vpack.c.b16 %v1662, %v1658
        %v1763 = vpack.c.b16 %v1663, %v1659
        %v1764 = vpack.c.b16 %v1668, %v1664
        %v1765 = vpack.c.b16 %v1669, %v1665
        %v1766 = vpack.c.b16 %v1670, %v1666
        %v1767 = vpack.c.b16 %v1671, %v1667
        %v1768 = vpack.c.b16 %v1676, %v1672
        %v1769 = vpack.c.b16 %v1677, %v1673
        %v1770 = vpack.c.b16 %v1678, %v1674
        %v1771 = vpack.c.b16 %v1679, %v1675
        %v1772 = vpack.c.b16 %v1684, %v1680
        %v1773 = vpack.c.b16 %v1685, %v1681
        %v1774 = vpack.c.b16 %v1686, %v1682
        %v1775 = vpack.c.b16 %v1687, %v1683
        %v1776 = vpack.c.b16 %v1692, %v1688
        %v1777 = vpack.c.b16 %v1693, %v1689
        %v1778 = vpack.c.b16 %v1694, %v1690
        %v1779 = vpack.c.b16 %v1695, %v1691
        %v1780 = vpack.c.b16 %v1700, %v1696
        %v1781 = vpack.c.b16 %v1701, %v1697
        %v1782 = vpack.c.b16 %v1702, %v1698
        %v1783 = vpack.c.b16 %v1703, %v1699
        %v1784 = vpack.c.b16 %v1708, %v1704
        %v1785 = vpack.c.b16 %v1709, %v1705
        %v1786 = vpack.c.b16 %v1710, %v1706
        %v1787 = vpack.c.b16 %v1711, %v1707
        %v1788 = vpack.c.b16 %v1716, %v1712
        %v1789 = vpack.c.b16 %v1717, %v1713
        %v1790 = vpack.c.b16 %v1718, %v1714
        %v1791 = vpack.c.b16 %v1719, %v1715
        %v1792 = vpack.c.b16 %v1724, %v1720
        %v1793 = vpack.c.b16 %v1725, %v1721
        %v1794 = vpack.c.b16 %v1726, %v1722
        %v1795 = vpack.c.b16 %v1727, %v1723
        %v1796 = vpack.c.b16 %v1732, %v1728
        %v1797 = vpack.c.b16 %v1733, %v1729
        %v1798 = vpack.c.b16 %v1734, %v1730
        %v1799 = vpack.c.b16 %v1735, %v1731
        %1864 = vmatprep.subr.bf16.mxu0 %v1765
        %1865 = vmatpush1.bf16.msra.mxu0 %v1764
        %1866 = vmatprep.subr.bf16.mxu0 %v1761
        %1867 = vmatpush1.bf16.msra.mxu0 %v1760
        %1868 = vmatprep.subr.bf16.mxu0 %v1757
        %1869 = vmatpush1.bf16.msra.mxu0 %v1756
        %1870 = vmatprep.subr.bf16.mxu0 %v1753
        %1871 = vmatpush1.bf16.msra.mxu0 %v1752
        %1872 = vmatprep.subr.bf16.mxu0 %v1749
        %1873 = vmatpush1.bf16.msra.mxu0 %v1748
        %1874 = vmatprep.subr.bf16.mxu0 %v1745
        %1875 = vmatpush1.bf16.msra.mxu0 %v1744
        %1876 = vmatprep.subr.bf16.mxu0 %v1741
        %1877 = vmatpush1.bf16.msra.mxu0 %v1740
        %1878 = vmatprep.subr.bf16.mxu0 %v1737
        %1879 = vmatpush1.bf16.msra.mxu0 %v1736
        %1880 = vmatprep.subr.bf16.mxu0 %v1797
        %1881 = vmatpush2.bf16.msra.mxu0 %v1796
        %1882 = vmatprep.subr.bf16.mxu0 %v1793
        %1883 = vmatpush2.bf16.msra.mxu0 %v1792
        %1884 = vmatprep.subr.bf16.mxu0 %v1789
        %1885 = vmatpush2.bf16.msra.mxu0 %v1788
        %1886 = vmatprep.subr.bf16.mxu0 %v1785
        %1887 = vmatpush2.bf16.msra.mxu0 %v1784
        %1888 = vmatprep.subr.bf16.mxu0 %v1781
        %1889 = vmatpush2.bf16.msra.mxu0 %v1780
        %1890 = vmatprep.subr.bf16.mxu0 %v1777
        %1891 = vmatpush2.bf16.msra.mxu0 %v1776
        %1892 = vmatprep.subr.bf16.mxu0 %v1773
        %1893 = vmatpush2.bf16.msra.mxu0 %v1772
        %1894 = vmatprep.subr.bf16.mxu0 %v1769
        %1895 = vmatpush2.bf16.msra.mxu0 %v1768
        %1896 = vmatprep.mubr.bf16.mxu0 %v1438
        %1897 = vmatmul.mubr.bf16.gmra.mxu0 %v1437
        %v1898 = vpop.f32.mrf.mxu0
        %v1899 = vadd.f32 %v1531, %v1898
        %v1900 = vpop.f32.mrf.mxu0
        %v1901 = vadd.f32 %v1535, %v1900
        %v1902 = vpop.f32.mrf.mxu0
        %v1903 = vadd.f32 %v1531, %v1902
        %v1904 = vpop.f32.mrf.mxu0
        %v1905 = vadd.f32 %v1535, %v1904
        %1906 = vmatprep.mubr.bf16.mxu0 %v1440
        %1907 = vmatmul.mubr.bf16.gmra.mxu0 %v1439
        %v1908 = vpop.f32.mrf.mxu0
        %v1909 = vadd.f32 %v1531, %v1908
        %v1910 = vpop.f32.mrf.mxu0
        %v1911 = vadd.f32 %v1535, %v1910
        %v1912 = vpop.f32.mrf.mxu0
        %v1913 = vadd.f32 %v1531, %v1912
        %v1914 = vpop.f32.mrf.mxu0
        %v1915 = vadd.f32 %v1535, %v1914
        %1916 = vdwg.mxu0
        %1917 = vmatprep.subr.bf16.mxu0 %v1767
        %1918 = vmatpush1.bf16.msra.mxu0 %v1766
        %1919 = vmatprep.subr.bf16.mxu0 %v1763
        %1920 = vmatpush1.bf16.msra.mxu0 %v1762
        %1921 = vmatprep.subr.bf16.mxu0 %v1759
        %1922 = vmatpush1.bf16.msra.mxu0 %v1758
        %1923 = vmatprep.subr.bf16.mxu0 %v1755
        %1924 = vmatpush1.bf16.msra.mxu0 %v1754
        %1925 = vmatprep.subr.bf16.mxu0 %v1751
        %1926 = vmatpush1.bf16.msra.mxu0 %v1750
        %1927 = vmatprep.subr.bf16.mxu0 %v1747
        %1928 = vmatpush1.bf16.msra.mxu0 %v1746
        %1929 = vmatprep.subr.bf16.mxu0 %v1743
        %1930 = vmatpush1.bf16.msra.mxu0 %v1742
        %1931 = vmatprep.subr.bf16.mxu0 %v1739
        %1932 = vmatpush1.bf16.msra.mxu0 %v1738
        %1933 = vmatprep.subr.bf16.mxu0 %v1799
        %1934 = vmatpush2.bf16.msra.mxu0 %v1798
        %1935 = vmatprep.subr.bf16.mxu0 %v1795
        %1936 = vmatpush2.bf16.msra.mxu0 %v1794
        %1937 = vmatprep.subr.bf16.mxu0 %v1791
        %1938 = vmatpush2.bf16.msra.mxu0 %v1790
        %1939 = vmatprep.subr.bf16.mxu0 %v1787
        %1940 = vmatpush2.bf16.msra.mxu0 %v1786
        %1941 = vmatprep.subr.bf16.mxu0 %v1783
        %1942 = vmatpush2.bf16.msra.mxu0 %v1782
        %1943 = vmatprep.subr.bf16.mxu0 %v1779
        %1944 = vmatpush2.bf16.msra.mxu0 %v1778
        %1945 = vmatprep.subr.bf16.mxu0 %v1775
        %1946 = vmatpush2.bf16.msra.mxu0 %v1774
        %1947 = vmatprep.subr.bf16.mxu0 %v1771
        %1948 = vmatpush2.bf16.msra.mxu0 %v1770
        %1949 = vmatprep.mubr.bf16.mxu0 %v1438
        %1950 = vmatmul.mubr.bf16.gmra.mxu0 %v1437
        %v1951 = vpop.f32.mrf.mxu0
        %v1952 = vadd.f32 %v1539, %v1951
        %v1953 = vpop.f32.mrf.mxu0
        %v1954 = vadd.f32 %v1543, %v1953
        %v1955 = vpop.f32.mrf.mxu0
        %v1956 = vadd.f32 %v1539, %v1955
        %v1957 = vpop.f32.mrf.mxu0
        %v1958 = vadd.f32 %v1543, %v1957
        %1959 = vmatprep.mubr.bf16.mxu0 %v1440
        %1960 = vmatmul.mubr.bf16.gmra.mxu0 %v1439
        %v1961 = vpop.f32.mrf.mxu0
        %v1962 = vadd.f32 %v1539, %v1961
        %v1963 = vpop.f32.mrf.mxu0
        %v1964 = vadd.f32 %v1543, %v1963
        %v1965 = vpop.f32.mrf.mxu0
        %v1966 = vadd.f32 %v1539, %v1965
        %v1967 = vpop.f32.mrf.mxu0
        %v1968 = vadd.f32 %v1543, %v1967
        %1969 = vdwg.mxu0
        %v1970 = vrot.slane %v1899, 4
        %v1971 = vadd.f32 %v1899, %v1970
        %v1972 = vrot.slane %v1971, 2
        %v1973 = vadd.f32 %v1971, %v1972
        %v1974 = vrot.slane %v1973, 1
        %v1975 = vadd.f32 %v1973, %v1974
        %v1976 = vrot.slane %v1901, 4
        %v1977 = vadd.f32 %v1901, %v1976
        %v1978 = vrot.slane %v1977, 2
        %v1979 = vadd.f32 %v1977, %v1978
        %v1980 = vrot.slane %v1979, 1
        %v1981 = vadd.f32 %v1979, %v1980
        %v1982 = vrot.slane %v1952, 4
        %v1983 = vadd.f32 %v1952, %v1982
        %v1984 = vrot.slane %v1983, 2
        %v1985 = vadd.f32 %v1983, %v1984
        %v1986 = vrot.slane %v1985, 1
        %v1987 = vadd.f32 %v1985, %v1986
        %v1988 = vrot.slane %v1954, 4
        %v1989 = vadd.f32 %v1954, %v1988
        %v1990 = vrot.slane %v1989, 2
        %v1991 = vadd.f32 %v1989, %v1990
        %v1992 = vrot.slane %v1991, 1
        %v1993 = vadd.f32 %v1991, %v1992
        %v1994 = vrot.slane %v1903, 4
        %v1995 = vadd.f32 %v1903, %v1994
        %v1996 = vrot.slane %v1995, 2
        %v1997 = vadd.f32 %v1995, %v1996
        %v1998 = vrot.slane %v1997, 1
        %v1999 = vadd.f32 %v1997, %v1998
        %v2000 = vrot.slane %v1905, 4
        %v2001 = vadd.f32 %v1905, %v2000
        %v2002 = vrot.slane %v2001, 2
        %v2003 = vadd.f32 %v2001, %v2002
        %v2004 = vrot.slane %v2003, 1
        %v2005 = vadd.f32 %v2003, %v2004
        %v2006 = vrot.slane %v1956, 4
        %v2007 = vadd.f32 %v1956, %v2006
        %v2008 = vrot.slane %v2007, 2
        %v2009 = vadd.f32 %v2007, %v2008
        %v2010 = vrot.slane %v2009, 1
        %v2011 = vadd.f32 %v2009, %v2010
        %v2012 = vrot.slane %v1958, 4
        %v2013 = vadd.f32 %v1958, %v2012
        %v2014 = vrot.slane %v2013, 2
        %v2015 = vadd.f32 %v2013, %v2014
        %v2016 = vrot.slane %v2015, 1
        %v2017 = vadd.f32 %v2015, %v2016
        %v2018 = vrot.slane %v1909, 4
        %v2019 = vadd.f32 %v1909, %v2018
        %v2020 = vrot.slane %v2019, 2
        %v2021 = vadd.f32 %v2019, %v2020
        %v2022 = vrot.slane %v2021, 1
        %v2023 = vadd.f32 %v2021, %v2022
        %v2024 = vrot.slane %v1911, 4
        %v2025 = vadd.f32 %v1911, %v2024
        %v2026 = vrot.slane %v2025, 2
        %v2027 = vadd.f32 %v2025, %v2026
        %v2028 = vrot.slane %v2027, 1
        %v2029 = vadd.f32 %v2027, %v2028
        %v2030 = vrot.slane %v1962, 4
        %v2031 = vadd.f32 %v1962, %v2030
        %v2032 = vrot.slane %v2031, 2
        %v2033 = vadd.f32 %v2031, %v2032
        %v2034 = vrot.slane %v2033, 1
        %v2035 = vadd.f32 %v2033, %v2034
        %v2036 = vrot.slane %v1964, 4
        %v2037 = vadd.f32 %v1964, %v2036
        %v2038 = vrot.slane %v2037, 2
        %v2039 = vadd.f32 %v2037, %v2038
        %v2040 = vrot.slane %v2039, 1
        %v2041 = vadd.f32 %v2039, %v2040
        %v2042 = vrot.slane %v1913, 4
        %v2043 = vadd.f32 %v1913, %v2042
        %v2044 = vrot.slane %v2043, 2
        %v2045 = vadd.f32 %v2043, %v2044
        %v2046 = vrot.slane %v2045, 1
        %v2047 = vadd.f32 %v2045, %v2046
        %v2048 = vrot.slane %v1915, 4
        %v2049 = vadd.f32 %v1915, %v2048
        %v2050 = vrot.slane %v2049, 2
        %v2051 = vadd.f32 %v2049, %v2050
        %v2052 = vrot.slane %v2051, 1
        %v2053 = vadd.f32 %v2051, %v2052
        %v2054 = vrot.slane %v1966, 4
        %v2055 = vadd.f32 %v1966, %v2054
        %v2056 = vrot.slane %v2055, 2
        %v2057 = vadd.f32 %v2055, %v2056
        %v2058 = vrot.slane %v2057, 1
        %v2059 = vadd.f32 %v2057, %v2058
        %v2060 = vrot.slane %v1968, 4
        %v2061 = vadd.f32 %v1968, %v2060
        %v2062 = vrot.slane %v2061, 2
        %v2063 = vadd.f32 %v2061, %v2062
        %v2064 = vrot.slane %v2063, 1
        %v2065 = vadd.f32 %v2063, %v2064
        %v2066 = vmul.f32 %v1975, %v1050
        %v2067 = vmul.f32 %v1981, %v1050
        %v2068 = vmul.f32 %v1987, %v1050
        %v2069 = vmul.f32 %v1993, %v1050
        %v2070 = vmul.f32 %v1999, %v1050
        %v2071 = vmul.f32 %v2005, %v1050
        %v2072 = vmul.f32 %v2011, %v1050
        %v2073 = vmul.f32 %v2017, %v1050
        %v2074 = vmul.f32 %v2023, %v1050
        %v2075 = vmul.f32 %v2029, %v1050
        %v2076 = vmul.f32 %v2035, %v1050
        %v2077 = vmul.f32 %v2041, %v1050
        %v2078 = vmul.f32 %v2047, %v1050
        %v2079 = vmul.f32 %v2053, %v1050
        %v2080 = vmul.f32 %v2059, %v1050
        %v2081 = vmul.f32 %v2065, %v1050
        %v2082 = vsub.f32 %v1899, %v2066
        %v2083 = vsub.f32 %v1901, %v2067
        %v2084 = vsub.f32 %v1952, %v2068
        %v2085 = vsub.f32 %v1954, %v2069
        %v2086 = vsub.f32 %v1903, %v2070
        %v2087 = vsub.f32 %v1905, %v2071
        %v2088 = vsub.f32 %v1956, %v2072
        %v2089 = vsub.f32 %v1958, %v2073
        %v2090 = vsub.f32 %v1909, %v2074
        %v2091 = vsub.f32 %v1911, %v2075
        %v2092 = vsub.f32 %v1962, %v2076
        %v2093 = vsub.f32 %v1964, %v2077
        %v2094 = vsub.f32 %v1913, %v2078
        %v2095 = vsub.f32 %v1915, %v2079
        %v2096 = vsub.f32 %v1966, %v2080
        %v2097 = vsub.f32 %v1968, %v2081
        %v2098 = vmul.f32 %v2082, %v2082
        %v2099 = vmul.f32 %v2083, %v2083
        %v2100 = vmul.f32 %v2084, %v2084
        %v2101 = vmul.f32 %v2085, %v2085
        %v2102 = vmul.f32 %v2086, %v2086
        %v2103 = vmul.f32 %v2087, %v2087
        %v2104 = vmul.f32 %v2088, %v2088
        %v2105 = vmul.f32 %v2089, %v2089
        %v2106 = vmul.f32 %v2090, %v2090
        %v2107 = vmul.f32 %v2091, %v2091
        %v2108 = vmul.f32 %v2092, %v2092
        %v2109 = vmul.f32 %v2093, %v2093
        %v2110 = vmul.f32 %v2094, %v2094
        %v2111 = vmul.f32 %v2095, %v2095
        %v2112 = vmul.f32 %v2096, %v2096
        %v2113 = vmul.f32 %v2097, %v2097
        %v2114 = vrot.slane %v2098, 4
        %v2115 = vadd.f32 %v2098, %v2114
        %v2116 = vrot.slane %v2115, 2
        %v2117 = vadd.f32 %v2115, %v2116
        %v2118 = vrot.slane %v2117, 1
        %v2119 = vadd.f32 %v2117, %v2118
        %v2120 = vrot.slane %v2099, 4
        %v2121 = vadd.f32 %v2099, %v2120
        %v2122 = vrot.slane %v2121, 2
        %v2123 = vadd.f32 %v2121, %v2122
        %v2124 = vrot.slane %v2123, 1
        %v2125 = vadd.f32 %v2123, %v2124
        %v2126 = vrot.slane %v2100, 4
        %v2127 = vadd.f32 %v2100, %v2126
        %v2128 = vrot.slane %v2127, 2
        %v2129 = vadd.f32 %v2127, %v2128
        %v2130 = vrot.slane %v2129, 1
        %v2131 = vadd.f32 %v2129, %v2130
        %v2132 = vrot.slane %v2101, 4
        %v2133 = vadd.f32 %v2101, %v2132
        %v2134 = vrot.slane %v2133, 2
        %v2135 = vadd.f32 %v2133, %v2134
        %v2136 = vrot.slane %v2135, 1
        %v2137 = vadd.f32 %v2135, %v2136
        %v2138 = vrot.slane %v2102, 4
        %v2139 = vadd.f32 %v2102, %v2138
        %v2140 = vrot.slane %v2139, 2
        %v2141 = vadd.f32 %v2139, %v2140
        %v2142 = vrot.slane %v2141, 1
        %v2143 = vadd.f32 %v2141, %v2142
        %v2144 = vrot.slane %v2103, 4
        %v2145 = vadd.f32 %v2103, %v2144
        %v2146 = vrot.slane %v2145, 2
        %v2147 = vadd.f32 %v2145, %v2146
        %v2148 = vrot.slane %v2147, 1
        %v2149 = vadd.f32 %v2147, %v2148
        %v2150 = vrot.slane %v2104, 4
        %v2151 = vadd.f32 %v2104, %v2150
        %v2152 = vrot.slane %v2151, 2
        %v2153 = vadd.f32 %v2151, %v2152
        %v2154 = vrot.slane %v2153, 1
        %v2155 = vadd.f32 %v2153, %v2154
        %v2156 = vrot.slane %v2105, 4
        %v2157 = vadd.f32 %v2105, %v2156
        %v2158 = vrot.slane %v2157, 2
        %v2159 = vadd.f32 %v2157, %v2158
        %v2160 = vrot.slane %v2159, 1
        %v2161 = vadd.f32 %v2159, %v2160
        %v2162 = vrot.slane %v2106, 4
        %v2163 = vadd.f32 %v2106, %v2162
        %v2164 = vrot.slane %v2163, 2
        %v2165 = vadd.f32 %v2163, %v2164
        %v2166 = vrot.slane %v2165, 1
        %v2167 = vadd.f32 %v2165, %v2166
        %v2168 = vrot.slane %v2107, 4
        %v2169 = vadd.f32 %v2107, %v2168
        %v2170 = vrot.slane %v2169, 2
        %v2171 = vadd.f32 %v2169, %v2170
        %v2172 = vrot.slane %v2171, 1
        %v2173 = vadd.f32 %v2171, %v2172
        %v2174 = vrot.slane %v2108, 4
        %v2175 = vadd.f32 %v2108, %v2174
        %v2176 = vrot.slane %v2175, 2
        %v2177 = vadd.f32 %v2175, %v2176
        %v2178 = vrot.slane %v2177, 1
        %v2179 = vadd.f32 %v2177, %v2178
        %v2180 = vrot.slane %v2109, 4
        %v2181 = vadd.f32 %v2109, %v2180
        %v2182 = vrot.slane %v2181, 2
        %v2183 = vadd.f32 %v2181, %v2182
        %v2184 = vrot.slane %v2183, 1
        %v2185 = vadd.f32 %v2183, %v2184
        %v2186 = vrot.slane %v2110, 4
        %v2187 = vadd.f32 %v2110, %v2186
        %v2188 = vrot.slane %v2187, 2
        %v2189 = vadd.f32 %v2187, %v2188
        %v2190 = vrot.slane %v2189, 1
        %v2191 = vadd.f32 %v2189, %v2190
        %v2192 = vrot.slane %v2111, 4
        %v2193 = vadd.f32 %v2111, %v2192
        %v2194 = vrot.slane %v2193, 2
        %v2195 = vadd.f32 %v2193, %v2194
        %v2196 = vrot.slane %v2195, 1
        %v2197 = vadd.f32 %v2195, %v2196
        %v2198 = vrot.slane %v2112, 4
        %v2199 = vadd.f32 %v2112, %v2198
        %v2200 = vrot.slane %v2199, 2
        %v2201 = vadd.f32 %v2199, %v2200
        %v2202 = vrot.slane %v2201, 1
        %v2203 = vadd.f32 %v2201, %v2202
        %v2204 = vrot.slane %v2113, 4
        %v2205 = vadd.f32 %v2113, %v2204
        %v2206 = vrot.slane %v2205, 2
        %v2207 = vadd.f32 %v2205, %v2206
        %v2208 = vrot.slane %v2207, 1
        %v2209 = vadd.f32 %v2207, %v2208
        %v2210 = vmul.f32 %v2119, %v1050
        %v2211 = vmul.f32 %v2125, %v1050
        %v2212 = vmul.f32 %v2131, %v1050
        %v2213 = vmul.f32 %v2137, %v1050
        %v2214 = vmul.f32 %v2143, %v1050
        %v2215 = vmul.f32 %v2149, %v1050
        %v2216 = vmul.f32 %v2155, %v1050
        %v2217 = vmul.f32 %v2161, %v1050
        %v2218 = vmul.f32 %v2167, %v1050
        %v2219 = vmul.f32 %v2173, %v1050
        %v2220 = vmul.f32 %v2179, %v1050
        %v2221 = vmul.f32 %v2185, %v1050
        %v2222 = vmul.f32 %v2191, %v1050
        %v2223 = vmul.f32 %v2197, %v1050
        %v2224 = vmul.f32 %v2203, %v1050
        %v2225 = vmul.f32 %v2209, %v1050
        %v2226 = vld [vmem:[#allocation16] sm:$0xf]
        %v2227 = vadd.f32 %v2210, 0.8
        %v2228 = vadd.f32 %v2211, 0.8
        %v2229 = vadd.f32 %v2212, 0.8
        %v2230 = vadd.f32 %v2213, 0.8
        %v2231 = vadd.f32 %v2214, 0.8
        %v2232 = vadd.f32 %v2215, 0.8
        %v2233 = vadd.f32 %v2216, 0.8
        %v2234 = vadd.f32 %v2217, 0.8
        %v2235 = vadd.f32 %v2218, 0.8
        %v2236 = vadd.f32 %v2219, 0.8
        %v2237 = vadd.f32 %v2220, 0.8
        %v2238 = vadd.f32 %v2221, 0.8
        %v2239 = vadd.f32 %v2222, 0.8
        %v2240 = vadd.f32 %v2223, 0.8
        %v2241 = vadd.f32 %v2224, 0.8
        %v2242 = vadd.f32 %v2225, 0.8
        %v2243 = vrsqrt.pop %v2227
        %v2244 = vrsqrt.pop %v2228
        %v2245 = vrsqrt.pop %v2229
        %v2246 = vrsqrt.pop %v2230
        %v2247 = vrsqrt.pop %v2231
        %v2248 = vrsqrt.pop %v2232
        %v2249 = vrsqrt.pop %v2233
        %v2250 = vrsqrt.pop %v2234
        %v2251 = vrsqrt.pop %v2235
        %v2252 = vrsqrt.pop %v2236
        %v2253 = vrsqrt.pop %v2237
        %v2254 = vrsqrt.pop %v2238
        %v2255 = vrsqrt.pop %v2239
        %v2256 = vrsqrt.pop %v2240
        %v2257 = vrsqrt.pop %v2241
        %v2258 = vrsqrt.pop %v2242
        %v2275 = vcombine.low %v2243, %v2244
        %v2276 = vcombine.low %v2245, %v2246
        %v2278 = vunpack.c.l.s4 1966171168
        %v2279 = vunpack.c.0.s8 %v2278
        %v2280 = vlaneseq
        %v2281 = vshrl.u32 %v2280, 7
        %v2282 = vsub.s32 %v2279, %v2281
        %v2283 = vrot.slane %v2275, %v2282
        %v2285 = vunpack.c.l.s4 1966171168
        %v2286 = vunpack.c.0.s8 %v2285
        %v2287 = vlaneseq
        %v2288 = vshrl.u32 %v2287, 7
        %v2289 = vsub.s32 %v2286, %v2288
        %v2290 = vrot.slane %v2276, %v2289
        %v2291 = vcombine.low %v2283, %v2290
        %v2293 = vunpack.c.l.s4 1966171168
        %v2294 = vunpack.c.0.s8 %v2293
        %v2295 = vlaneseq
        %v2296 = vshrl.u32 %v2295, 7
        %v2297 = vsub.s32 %v2294, %v2296
        %v2298 = vrot.slane %v2291, %v2297
        %v2299 = vcombine.low %v2247, %v2248
        %v2300 = vcombine.low %v2249, %v2250
        %v2302 = vunpack.c.l.s4 1966171168
        %v2303 = vunpack.c.0.s8 %v2302
        %v2304 = vlaneseq
        %v2305 = vshrl.u32 %v2304, 7
        %v2306 = vsub.s32 %v2303, %v2305
        %v2307 = vrot.slane %v2299, %v2306
        %v2309 = vunpack.c.l.s4 1966171168
        %v2310 = vunpack.c.0.s8 %v2309
        %v2311 = vlaneseq
        %v2312 = vshrl.u32 %v2311, 7
        %v2313 = vsub.s32 %v2310, %v2312
        %v2314 = vrot.slane %v2300, %v2313
        %v2315 = vcombine.low %v2307, %v2314
        %v2317 = vunpack.c.l.s4 1966171168
        %v2318 = vunpack.c.0.s8 %v2317
        %v2319 = vlaneseq
        %v2320 = vshrl.u32 %v2319, 7
        %v2321 = vsub.s32 %v2318, %v2320
        %v2322 = vrot.slane %v2315, %v2321
        %v2323 = vcombine.low %v2251, %v2252
        %v2324 = vcombine.low %v2253, %v2254
        %v2326 = vunpack.c.l.s4 1966171168
        %v2327 = vunpack.c.0.s8 %v2326
        %v2328 = vlaneseq
        %v2329 = vshrl.u32 %v2328, 7
        %v2330 = vsub.s32 %v2327, %v2329
        %v2331 = vrot.slane %v2323, %v2330
        %v2333 = vunpack.c.l.s4 1966171168
        %v2334 = vunpack.c.0.s8 %v2333
        %v2335 = vlaneseq
        %v2336 = vshrl.u32 %v2335, 7
        %v2337 = vsub.s32 %v2334, %v2336
        %v2338 = vrot.slane %v2324, %v2337
        %v2339 = vcombine.low %v2331, %v2338
        %v2341 = vunpack.c.l.s4 1966171168
        %v2342 = vunpack.c.0.s8 %v2341
        %v2343 = vlaneseq
        %v2344 = vshrl.u32 %v2343, 7
        %v2345 = vsub.s32 %v2342, %v2344
        %v2346 = vrot.slane %v2339, %v2345
        %v2347 = vcombine.low %v2255, %v2256
        %v2348 = vcombine.low %v2257, %v2258
        %v2350 = vunpack.c.l.s4 1966171168
        %v2351 = vunpack.c.0.s8 %v2350
        %v2352 = vlaneseq
        %v2353 = vshrl.u32 %v2352, 7
        %v2354 = vsub.s32 %v2351, %v2353
        %v2355 = vrot.slane %v2347, %v2354
        %v2357 = vunpack.c.l.s4 1966171168
        %v2358 = vunpack.c.0.s8 %v2357
        %v2359 = vlaneseq
        %v2360 = vshrl.u32 %v2359, 7
        %v2361 = vsub.s32 %v2358, %v2360
        %v2362 = vrot.slane %v2348, %v2361
        %v2363 = vcombine.low %v2355, %v2362
        %v2365 = vunpack.c.l.s4 1966171168
        %v2366 = vunpack.c.0.s8 %v2365
        %v2367 = vlaneseq
        %v2368 = vshrl.u32 %v2367, 7
        %v2369 = vsub.s32 %v2366, %v2368
        %v2370 = vrot.slane %v2363, %v2369
        %v2375 = vmul.f32 %v2226, %v2298
        %v2376 = vmul.f32 %v2226, %v2322
        %v2377 = vmul.f32 %v2226, %v2346
        %v2378 = vmul.f32 %v2226, %v2370
        %v2379 = vld [vmem:[#allocation18] sm:$0xf]
        %v2384 = vlaneseq
        %v2385 = vshrl.u32 %v2384, 7
        %v2386 = vsub.s32 0, %v2385
        %v2387 = vrot.slane %v2375, %v2386
        %v2388 = vlaneseq
        %v2389 = vshrl.u32 %v2388, 7
        %v2390 = vsub.s32 1, %v2389
        %v2391 = vrot.slane %v2375, %v2390
        %v2392 = vlaneseq
        %v2393 = vshrl.u32 %v2392, 7
        %v2394 = vsub.s32 2, %v2393
        %v2395 = vrot.slane %v2375, %v2394
        %v2396 = vlaneseq
        %v2397 = vshrl.u32 %v2396, 7
        %v2398 = vsub.s32 3, %v2397
        %v2399 = vrot.slane %v2375, %v2398
        %v2400 = vlaneseq
        %v2401 = vshrl.u32 %v2400, 7
        %v2402 = vsub.s32 0, %v2401
        %v2403 = vrot.slane %v2376, %v2402
        %v2404 = vlaneseq
        %v2405 = vshrl.u32 %v2404, 7
        %v2406 = vsub.s32 1, %v2405
        %v2407 = vrot.slane %v2376, %v2406
        %v2408 = vlaneseq
        %v2409 = vshrl.u32 %v2408, 7
        %v2410 = vsub.s32 2, %v2409
        %v2411 = vrot.slane %v2376, %v2410
        %v2412 = vlaneseq
        %v2413 = vshrl.u32 %v2412, 7
        %v2414 = vsub.s32 3, %v2413
        %v2415 = vrot.slane %v2376, %v2414
        %v2416 = vlaneseq
        %v2417 = vshrl.u32 %v2416, 7
        %v2418 = vsub.s32 0, %v2417
        %v2419 = vrot.slane %v2377, %v2418
        %v2420 = vlaneseq
        %v2421 = vshrl.u32 %v2420, 7
        %v2422 = vsub.s32 1, %v2421
        %v2423 = vrot.slane %v2377, %v2422
        %v2424 = vlaneseq
        %v2425 = vshrl.u32 %v2424, 7
        %v2426 = vsub.s32 2, %v2425
        %v2427 = vrot.slane %v2377, %v2426
        %v2428 = vlaneseq
        %v2429 = vshrl.u32 %v2428, 7
        %v2430 = vsub.s32 3, %v2429
        %v2431 = vrot.slane %v2377, %v2430
        %v2432 = vlaneseq
        %v2433 = vshrl.u32 %v2432, 7
        %v2434 = vsub.s32 0, %v2433
        %v2435 = vrot.slane %v2378, %v2434
        %v2436 = vlaneseq
        %v2437 = vshrl.u32 %v2436, 7
        %v2438 = vsub.s32 1, %v2437
        %v2439 = vrot.slane %v2378, %v2438
        %v2440 = vlaneseq
        %v2441 = vshrl.u32 %v2440, 7
        %v2442 = vsub.s32 2, %v2441
        %v2443 = vrot.slane %v2378, %v2442
        %v2444 = vlaneseq
        %v2445 = vshrl.u32 %v2444, 7
        %v2446 = vsub.s32 3, %v2445
        %v2447 = vrot.slane %v2378, %v2446
        %v2464 = vmul.f32 %v2066, %v2387
        %v2465 = vmul.f32 %v2067, %v2391
        %v2466 = vmul.f32 %v2068, %v2395
        %v2467 = vmul.f32 %v2069, %v2399
        %v2468 = vmul.f32 %v2070, %v2403
        %v2469 = vmul.f32 %v2071, %v2407
        %v2470 = vmul.f32 %v2072, %v2411
        %v2471 = vmul.f32 %v2073, %v2415
        %v2472 = vmul.f32 %v2074, %v2419
        %v2473 = vmul.f32 %v2075, %v2423
        %v2474 = vmul.f32 %v2076, %v2427
        %v2475 = vmul.f32 %v2077, %v2431
        %v2476 = vmul.f32 %v2078, %v2435
        %v2477 = vmul.f32 %v2079, %v2439
        %v2478 = vmul.f32 %v2080, %v2443
        %v2479 = vmul.f32 %v2081, %v2447
        %v2496 = vcombine.low %v2464, %v2465
        %v2497 = vcombine.low %v2466, %v2467
        %v2499 = vunpack.c.l.s4 1966171168
        %v2500 = vunpack.c.0.s8 %v2499
        %v2501 = vlaneseq
        %v2502 = vshrl.u32 %v2501, 7
        %v2503 = vsub.s32 %v2500, %v2502
        %v2504 = vrot.slane %v2496, %v2503
        %v2506 = vunpack.c.l.s4 1966171168
        %v2507 = vunpack.c.0.s8 %v2506
        %v2508 = vlaneseq
        %v2509 = vshrl.u32 %v2508, 7
        %v2510 = vsub.s32 %v2507, %v2509
        %v2511 = vrot.slane %v2497, %v2510
        %v2512 = vcombine.low %v2504, %v2511
        %v2514 = vunpack.c.l.s4 1966171168
        %v2515 = vunpack.c.0.s8 %v2514
        %v2516 = vlaneseq
        %v2517 = vshrl.u32 %v2516, 7
        %v2518 = vsub.s32 %v2515, %v2517
        %v2519 = vrot.slane %v2512, %v2518
        %v2520 = vcombine.low %v2468, %v2469
        %v2521 = vcombine.low %v2470, %v2471
        %v2523 = vunpack.c.l.s4 1966171168
        %v2524 = vunpack.c.0.s8 %v2523
        %v2525 = vlaneseq
        %v2526 = vshrl.u32 %v2525, 7
        %v2527 = vsub.s32 %v2524, %v2526
        %v2528 = vrot.slane %v2520, %v2527
        %v2530 = vunpack.c.l.s4 1966171168
        %v2531 = vunpack.c.0.s8 %v2530
        %v2532 = vlaneseq
        %v2533 = vshrl.u32 %v2532, 7
        %v2534 = vsub.s32 %v2531, %v2533
        %v2535 = vrot.slane %v2521, %v2534
        %v2536 = vcombine.low %v2528, %v2535
        %v2538 = vunpack.c.l.s4 1966171168
        %v2539 = vunpack.c.0.s8 %v2538
        %v2540 = vlaneseq
        %v2541 = vshrl.u32 %v2540, 7
        %v2542 = vsub.s32 %v2539, %v2541
        %v2543 = vrot.slane %v2536, %v2542
        %v2544 = vcombine.low %v2472, %v2473
        %v2545 = vcombine.low %v2474, %v2475
        %v2547 = vunpack.c.l.s4 1966171168
        %v2548 = vunpack.c.0.s8 %v2547
        %v2549 = vlaneseq
        %v2550 = vshrl.u32 %v2549, 7
        %v2551 = vsub.s32 %v2548, %v2550
        %v2552 = vrot.slane %v2544, %v2551
        %v2554 = vunpack.c.l.s4 1966171168
        %v2555 = vunpack.c.0.s8 %v2554
        %v2556 = vlaneseq
        %v2557 = vshrl.u32 %v2556, 7
        %v2558 = vsub.s32 %v2555, %v2557
        %v2559 = vrot.slane %v2545, %v2558
        %v2560 = vcombine.low %v2552, %v2559
        %v2562 = vunpack.c.l.s4 1966171168
        %v2563 = vunpack.c.0.s8 %v2562
        %v2564 = vlaneseq
        %v2565 = vshrl.u32 %v2564, 7
        %v2566 = vsub.s32 %v2563, %v2565
        %v2567 = vrot.slane %v2560, %v2566
        %v2568 = vcombine.low %v2476, %v2477
        %v2569 = vcombine.low %v2478, %v2479
        %v2571 = vunpack.c.l.s4 1966171168
        %v2572 = vunpack.c.0.s8 %v2571
        %v2573 = vlaneseq
        %v2574 = vshrl.u32 %v2573, 7
        %v2575 = vsub.s32 %v2572, %v2574
        %v2576 = vrot.slane %v2568, %v2575
        %v2578 = vunpack.c.l.s4 1966171168
        %v2579 = vunpack.c.0.s8 %v2578
        %v2580 = vlaneseq
        %v2581 = vshrl.u32 %v2580, 7
        %v2582 = vsub.s32 %v2579, %v2581
        %v2583 = vrot.slane %v2569, %v2582
        %v2584 = vcombine.low %v2576, %v2583
        %v2586 = vunpack.c.l.s4 1966171168
        %v2587 = vunpack.c.0.s8 %v2586
        %v2588 = vlaneseq
        %v2589 = vshrl.u32 %v2588, 7
        %v2590 = vsub.s32 %v2587, %v2589
        %v2591 = vrot.slane %v2584, %v2590
        %v2596 = vsub.f32 %v2379, %v2519
        %v2597 = vsub.f32 %v2379, %v2543
        %v2598 = vsub.f32 %v2379, %v2567
        %v2599 = vsub.f32 %v2379, %v2591
        %v2600 = vmul.f32 %v1899, %v2387
        %v2601 = vmul.f32 %v1901, %v2391
        %v2602 = vmul.f32 %v1952, %v2395
        %v2603 = vmul.f32 %v1954, %v2399
        %v2604 = vmul.f32 %v1903, %v2403
        %v2605 = vmul.f32 %v1905, %v2407
        %v2606 = vmul.f32 %v1956, %v2411
        %v2607 = vmul.f32 %v1958, %v2415
        %v2608 = vmul.f32 %v1909, %v2419
        %v2609 = vmul.f32 %v1911, %v2423
        %v2610 = vmul.f32 %v1962, %v2427
        %v2611 = vmul.f32 %v1964, %v2431
        %v2612 = vmul.f32 %v1913, %v2435
        %v2613 = vmul.f32 %v1915, %v2439
        %v2614 = vmul.f32 %v1966, %v2443
        %v2615 = vmul.f32 %v1968, %v2447
        %v2620 = vlaneseq
        %v2621 = vshrl.u32 %v2620, 7
        %v2622 = vsub.s32 0, %v2621
        %v2623 = vrot.slane %v2596, %v2622
        %v2624 = vlaneseq
        %v2625 = vshrl.u32 %v2624, 7
        %v2626 = vsub.s32 1, %v2625
        %v2627 = vrot.slane %v2596, %v2626
        %v2628 = vlaneseq
        %v2629 = vshrl.u32 %v2628, 7
        %v2630 = vsub.s32 2, %v2629
        %v2631 = vrot.slane %v2596, %v2630
        %v2632 = vlaneseq
        %v2633 = vshrl.u32 %v2632, 7
        %v2634 = vsub.s32 3, %v2633
        %v2635 = vrot.slane %v2596, %v2634
        %v2636 = vlaneseq
        %v2637 = vshrl.u32 %v2636, 7
        %v2638 = vsub.s32 0, %v2637
        %v2639 = vrot.slane %v2597, %v2638
        %v2640 = vlaneseq
        %v2641 = vshrl.u32 %v2640, 7
        %v2642 = vsub.s32 1, %v2641
        %v2643 = vrot.slane %v2597, %v2642
        %v2644 = vlaneseq
        %v2645 = vshrl.u32 %v2644, 7
        %v2646 = vsub.s32 2, %v2645
        %v2647 = vrot.slane %v2597, %v2646
        %v2648 = vlaneseq
        %v2649 = vshrl.u32 %v2648, 7
        %v2650 = vsub.s32 3, %v2649
        %v2651 = vrot.slane %v2597, %v2650
        %v2652 = vlaneseq
        %v2653 = vshrl.u32 %v2652, 7
        %v2654 = vsub.s32 0, %v2653
        %v2655 = vrot.slane %v2598, %v2654
        %v2656 = vlaneseq
        %v2657 = vshrl.u32 %v2656, 7
        %v2658 = vsub.s32 1, %v2657
        %v2659 = vrot.slane %v2598, %v2658
        %v2660 = vlaneseq
        %v2661 = vshrl.u32 %v2660, 7
        %v2662 = vsub.s32 2, %v2661
        %v2663 = vrot.slane %v2598, %v2662
        %v2664 = vlaneseq
        %v2665 = vshrl.u32 %v2664, 7
        %v2666 = vsub.s32 3, %v2665
        %v2667 = vrot.slane %v2598, %v2666
        %v2668 = vlaneseq
        %v2669 = vshrl.u32 %v2668, 7
        %v2670 = vsub.s32 0, %v2669
        %v2671 = vrot.slane %v2599, %v2670
        %v2672 = vlaneseq
        %v2673 = vshrl.u32 %v2672, 7
        %v2674 = vsub.s32 1, %v2673
        %v2675 = vrot.slane %v2599, %v2674
        %v2676 = vlaneseq
        %v2677 = vshrl.u32 %v2676, 7
        %v2678 = vsub.s32 2, %v2677
        %v2679 = vrot.slane %v2599, %v2678
        %v2680 = vlaneseq
        %v2681 = vshrl.u32 %v2680, 7
        %v2682 = vsub.s32 3, %v2681
        %v2683 = vrot.slane %v2599, %v2682
        %v2700 = vadd.f32 %v2600, %v2623
        %v2701 = vadd.f32 %v2601, %v2627
        %v2702 = vadd.f32 %v2602, %v2631
        %v2703 = vadd.f32 %v2603, %v2635
        %v2704 = vadd.f32 %v2604, %v2639
        %v2705 = vadd.f32 %v2605, %v2643
        %v2706 = vadd.f32 %v2606, %v2647
        %v2707 = vadd.f32 %v2607, %v2651
        %v2708 = vadd.f32 %v2608, %v2655
        %v2709 = vadd.f32 %v2609, %v2659
        %v2710 = vadd.f32 %v2610, %v2663
        %v2711 = vadd.f32 %v2611, %v2667
        %v2712 = vadd.f32 %v2612, %v2671
        %v2713 = vadd.f32 %v2613, %v2675
        %v2714 = vadd.f32 %v2614, %v2679
        %v2715 = vadd.f32 %v2615, %v2683
        %vm2716 = vcmp.gt.f32.partialorder %v2700, 0.0
        %vm2717 = vcmp.gt.f32.partialorder %v2701, 0.0
        %vm2718 = vcmp.gt.f32.partialorder %v2702, 0.0
        %vm2719 = vcmp.gt.f32.partialorder %v2703, 0.0
        %vm2720 = vcmp.gt.f32.partialorder %v2704, 0.0
        %vm2721 = vcmp.gt.f32.partialorder %v2705, 0.0
        %vm2722 = vcmp.gt.f32.partialorder %v2706, 0.0
        %vm2723 = vcmp.gt.f32.partialorder %v2707, 0.0
        %vm2724 = vcmp.gt.f32.partialorder %v2708, 0.0
        %vm2725 = vcmp.gt.f32.partialorder %v2709, 0.0
        %vm2726 = vcmp.gt.f32.partialorder %v2710, 0.0
        %vm2727 = vcmp.gt.f32.partialorder %v2711, 0.0
        %vm2728 = vcmp.gt.f32.partialorder %v2712, 0.0
        %vm2729 = vcmp.gt.f32.partialorder %v2713, 0.0
        %vm2730 = vcmp.gt.f32.partialorder %v2714, 0.0
        %vm2731 = vcmp.gt.f32.partialorder %v2715, 0.0
        %v2732 = vmul.f32 %v2700, 0.2
        %v2733 = vmul.f32 %v2701, 0.2
        %v2734 = vmul.f32 %v2702, 0.2
        %v2735 = vmul.f32 %v2703, 0.2
        %v2736 = vmul.f32 %v2704, 0.2
        %v2737 = vmul.f32 %v2705, 0.2
        %v2738 = vmul.f32 %v2706, 0.2
        %v2739 = vmul.f32 %v2707, 0.2
        %v2740 = vmul.f32 %v2708, 0.2
        %v2741 = vmul.f32 %v2709, 0.2
        %v2742 = vmul.f32 %v2710, 0.2
        %v2743 = vmul.f32 %v2711, 0.2
        %v2744 = vmul.f32 %v2712, 0.2
        %v2745 = vmul.f32 %v2713, 0.2
        %v2746 = vmul.f32 %v2714, 0.2
        %v2747 = vmul.f32 %v2715, 0.2
        %v2748 = vsel %vm2716, %v2700, %v2732
        %v2749 = vsel %vm2717, %v2701, %v2733
        %v2750 = vsel %vm2718, %v2702, %v2734
        %v2751 = vsel %vm2719, %v2703, %v2735
        %v2752 = vsel %vm2720, %v2704, %v2736
        %v2753 = vsel %vm2721, %v2705, %v2737
        %v2754 = vsel %vm2722, %v2706, %v2738
        %v2755 = vsel %vm2723, %v2707, %v2739
        %v2756 = vsel %vm2724, %v2708, %v2740
        %v2757 = vsel %vm2725, %v2709, %v2741
        %v2758 = vsel %vm2726, %v2710, %v2742
        %v2759 = vsel %vm2727, %v2711, %v2743
        %v2760 = vsel %vm2728, %v2712, %v2744
        %v2761 = vsel %vm2729, %v2713, %v2745
        %v2762 = vsel %vm2730, %v2714, %v2746
        %v2763 = vsel %vm2731, %v2715, %v2747
        %v2764 = vpack.c.bf16 %v2752, %v2748
        %v2765 = vpack.c.bf16 %v2753, %v2749
        %v2766 = vpack.c.bf16 %v2754, %v2750
        %v2767 = vpack.c.bf16 %v2755, %v2751
        %v2768 = vpack.c.bf16 %v2760, %v2756
        %v2769 = vpack.c.bf16 %v2761, %v2757
        %v2770 = vpack.c.bf16 %v2762, %v2758
        %v2771 = vpack.c.bf16 %v2763, %v2759
        %v2772 = vld [vmem:[#allocation19] sm:$0xff]
        %v2773 = vld [vmem:[#allocation19 + $0x8] sm:$0xff]
        %v2774 = vld [vmem:[#allocation19 + $0x10] sm:$0xff]
        %v2775 = vld [vmem:[#allocation19 + $0x18] sm:$0xff]
        %v2776 = vld [vmem:[#allocation19 + $0x20] sm:$0xff]
        %v2777 = vld [vmem:[#allocation19 + $0x28] sm:$0xff]
        %v2778 = vld [vmem:[#allocation19 + $0x30] sm:$0xff]
        %v2779 = vld [vmem:[#allocation19 + $0x38] sm:$0xff]
        %v2780 = vld [vmem:[#allocation19 + $0x40] sm:$0xff]
        %v2781 = vld [vmem:[#allocation19 + $0x48] sm:$0xff]
        %v2782 = vld [vmem:[#allocation19 + $0x50] sm:$0xff]
        %v2783 = vld [vmem:[#allocation19 + $0x58] sm:$0xff]
        %v2784 = vld [vmem:[#allocation19 + $0x60] sm:$0xff]
        %v2785 = vld [vmem:[#allocation19 + $0x68] sm:$0xff]
        %v2786 = vld [vmem:[#allocation19 + $0x70] sm:$0xff]
        %v2787 = vld [vmem:[#allocation19 + $0x78] sm:$0xff]
        %v2788 = vld [vmem:[#allocation19 + $0x80] sm:$0xff]
        %v2789 = vld [vmem:[#allocation19 + $0x88] sm:$0xff]
        %v2790 = vld [vmem:[#allocation19 + $0x90] sm:$0xff]
        %v2791 = vld [vmem:[#allocation19 + $0x98] sm:$0xff]
        %v2792 = vld [vmem:[#allocation19 + $0xa0] sm:$0xff]
        %v2793 = vld [vmem:[#allocation19 + $0xa8] sm:$0xff]
        %v2794 = vld [vmem:[#allocation19 + $0xb0] sm:$0xff]
        %v2795 = vld [vmem:[#allocation19 + $0xb8] sm:$0xff]
        %v2796 = vld [vmem:[#allocation19 + $0xc0] sm:$0xff]
        %v2797 = vld [vmem:[#allocation19 + $0xc8] sm:$0xff]
        %v2798 = vld [vmem:[#allocation19 + $0xd0] sm:$0xff]
        %v2799 = vld [vmem:[#allocation19 + $0xd8] sm:$0xff]
        %v2800 = vld [vmem:[#allocation19 + $0xe0] sm:$0xff]
        %v2801 = vld [vmem:[#allocation19 + $0xe8] sm:$0xff]
        %v2802 = vld [vmem:[#allocation19 + $0xf0] sm:$0xff]
        %v2803 = vld [vmem:[#allocation19 + $0xf8] sm:$0xff]
        %v2804 = vld [vmem:[#allocation19 + $0x100] sm:$0xff]
        %v2805 = vld [vmem:[#allocation19 + $0x108] sm:$0xff]
        %v2806 = vld [vmem:[#allocation19 + $0x110] sm:$0xff]
        %v2807 = vld [vmem:[#allocation19 + $0x118] sm:$0xff]
        %v2808 = vld [vmem:[#allocation19 + $0x120] sm:$0xff]
        %v2809 = vld [vmem:[#allocation19 + $0x128] sm:$0xff]
        %v2810 = vld [vmem:[#allocation19 + $0x130] sm:$0xff]
        %v2811 = vld [vmem:[#allocation19 + $0x138] sm:$0xff]
        %v2812 = vld [vmem:[#allocation19 + $0x140] sm:$0xff]
        %v2813 = vld [vmem:[#allocation19 + $0x148] sm:$0xff]
        %v2814 = vld [vmem:[#allocation19 + $0x150] sm:$0xff]
        %v2815 = vld [vmem:[#allocation19 + $0x158] sm:$0xff]
        %v2816 = vld [vmem:[#allocation19 + $0x160] sm:$0xff]
        %v2817 = vld [vmem:[#allocation19 + $0x168] sm:$0xff]
        %v2818 = vld [vmem:[#allocation19 + $0x170] sm:$0xff]
        %v2819 = vld [vmem:[#allocation19 + $0x178] sm:$0xff]
        %v2820 = vld [vmem:[#allocation19 + $0x180] sm:$0xff]
        %v2821 = vld [vmem:[#allocation19 + $0x188] sm:$0xff]
        %v2822 = vld [vmem:[#allocation19 + $0x190] sm:$0xff]
        %v2823 = vld [vmem:[#allocation19 + $0x198] sm:$0xff]
        %v2824 = vld [vmem:[#allocation19 + $0x1a0] sm:$0xff]
        %v2825 = vld [vmem:[#allocation19 + $0x1a8] sm:$0xff]
        %v2826 = vld [vmem:[#allocation19 + $0x1b0] sm:$0xff]
        %v2827 = vld [vmem:[#allocation19 + $0x1b8] sm:$0xff]
        %v2828 = vld [vmem:[#allocation19 + $0x1c0] sm:$0xff]
        %v2829 = vld [vmem:[#allocation19 + $0x1c8] sm:$0xff]
        %v2830 = vld [vmem:[#allocation19 + $0x1d0] sm:$0xff]
        %v2831 = vld [vmem:[#allocation19 + $0x1d8] sm:$0xff]
        %v2832 = vld [vmem:[#allocation19 + $0x1e0] sm:$0xff]
        %v2833 = vld [vmem:[#allocation19 + $0x1e8] sm:$0xff]
        %v2834 = vld [vmem:[#allocation19 + $0x1f0] sm:$0xff]
        %v2835 = vld [vmem:[#allocation19 + $0x1f8] sm:$0xff]
        %v2836 = vld [vmem:[#allocation19 + $0x200] sm:$0xff]
        %v2837 = vld [vmem:[#allocation19 + $0x208] sm:$0xff]
        %v2838 = vld [vmem:[#allocation19 + $0x210] sm:$0xff]
        %v2839 = vld [vmem:[#allocation19 + $0x218] sm:$0xff]
        %v2840 = vld [vmem:[#allocation19 + $0x220] sm:$0xff]
        %v2841 = vld [vmem:[#allocation19 + $0x228] sm:$0xff]
        %v2842 = vld [vmem:[#allocation19 + $0x230] sm:$0xff]
        %v2843 = vld [vmem:[#allocation19 + $0x238] sm:$0xff]
        %v2844 = vld [vmem:[#allocation19 + $0x240] sm:$0xff]
        %v2845 = vld [vmem:[#allocation19 + $0x248] sm:$0xff]
        %v2846 = vld [vmem:[#allocation19 + $0x250] sm:$0xff]
        %v2847 = vld [vmem:[#allocation19 + $0x258] sm:$0xff]
        %v2848 = vld [vmem:[#allocation19 + $0x260] sm:$0xff]
        %v2849 = vld [vmem:[#allocation19 + $0x268] sm:$0xff]
        %v2850 = vld [vmem:[#allocation19 + $0x270] sm:$0xff]
        %v2851 = vld [vmem:[#allocation19 + $0x278] sm:$0xff]
        %v2852 = vld [vmem:[#allocation19 + $0x280] sm:$0xff]
        %v2853 = vld [vmem:[#allocation19 + $0x288] sm:$0xff]
        %v2854 = vld [vmem:[#allocation19 + $0x290] sm:$0xff]
        %v2855 = vld [vmem:[#allocation19 + $0x298] sm:$0xff]
        %v2856 = vld [vmem:[#allocation19 + $0x2a0] sm:$0xff]
        %v2857 = vld [vmem:[#allocation19 + $0x2a8] sm:$0xff]
        %v2858 = vld [vmem:[#allocation19 + $0x2b0] sm:$0xff]
        %v2859 = vld [vmem:[#allocation19 + $0x2b8] sm:$0xff]
        %v2860 = vld [vmem:[#allocation19 + $0x2c0] sm:$0xff]
        %v2861 = vld [vmem:[#allocation19 + $0x2c8] sm:$0xff]
        %v2862 = vld [vmem:[#allocation19 + $0x2d0] sm:$0xff]
        %v2863 = vld [vmem:[#allocation19 + $0x2d8] sm:$0xff]
        %v2864 = vld [vmem:[#allocation19 + $0x2e0] sm:$0xff]
        %v2865 = vld [vmem:[#allocation19 + $0x2e8] sm:$0xff]
        %v2866 = vld [vmem:[#allocation19 + $0x2f0] sm:$0xff]
        %v2867 = vld [vmem:[#allocation19 + $0x2f8] sm:$0xff]
        %v2868 = vld [vmem:[#allocation19 + $0x300] sm:$0xff]
        %v2869 = vld [vmem:[#allocation19 + $0x308] sm:$0xff]
        %v2870 = vld [vmem:[#allocation19 + $0x310] sm:$0xff]
        %v2871 = vld [vmem:[#allocation19 + $0x318] sm:$0xff]
        %v2872 = vld [vmem:[#allocation19 + $0x320] sm:$0xff]
        %v2873 = vld [vmem:[#allocation19 + $0x328] sm:$0xff]
        %v2874 = vld [vmem:[#allocation19 + $0x330] sm:$0xff]
        %v2875 = vld [vmem:[#allocation19 + $0x338] sm:$0xff]
        %v2876 = vld [vmem:[#allocation19 + $0x340] sm:$0xff]
        %v2877 = vld [vmem:[#allocation19 + $0x348] sm:$0xff]
        %v2878 = vld [vmem:[#allocation19 + $0x350] sm:$0xff]
        %v2879 = vld [vmem:[#allocation19 + $0x358] sm:$0xff]
        %v2880 = vld [vmem:[#allocation19 + $0x360] sm:$0xff]
        %v2881 = vld [vmem:[#allocation19 + $0x368] sm:$0xff]
        %v2882 = vld [vmem:[#allocation19 + $0x370] sm:$0xff]
        %v2883 = vld [vmem:[#allocation19 + $0x378] sm:$0xff]
        %v2884 = vld [vmem:[#allocation19 + $0x380] sm:$0xff]
        %v2885 = vld [vmem:[#allocation19 + $0x388] sm:$0xff]
        %v2886 = vld [vmem:[#allocation19 + $0x390] sm:$0xff]
        %v2887 = vld [vmem:[#allocation19 + $0x398] sm:$0xff]
        %v2888 = vld [vmem:[#allocation19 + $0x3a0] sm:$0xff]
        %v2889 = vld [vmem:[#allocation19 + $0x3a8] sm:$0xff]
        %v2890 = vld [vmem:[#allocation19 + $0x3b0] sm:$0xff]
        %v2891 = vld [vmem:[#allocation19 + $0x3b8] sm:$0xff]
        %v2892 = vld [vmem:[#allocation19 + $0x3c0] sm:$0xff]
        %v2893 = vld [vmem:[#allocation19 + $0x3c8] sm:$0xff]
        %v2894 = vld [vmem:[#allocation19 + $0x3d0] sm:$0xff]
        %v2895 = vld [vmem:[#allocation19 + $0x3d8] sm:$0xff]
        %v2896 = vld [vmem:[#allocation19 + $0x3e0] sm:$0xff]
        %v2897 = vld [vmem:[#allocation19 + $0x3e8] sm:$0xff]
        %v2898 = vld [vmem:[#allocation19 + $0x3f0] sm:$0xff]
        %v2899 = vld [vmem:[#allocation19 + $0x3f8] sm:$0xff]
        %v2900 = vld [vmem:[#allocation19 + $0x400] sm:$0xff]
        %v2901 = vld [vmem:[#allocation19 + $0x408] sm:$0xff]
        %v2902 = vld [vmem:[#allocation19 + $0x410] sm:$0xff]
        %v2903 = vld [vmem:[#allocation19 + $0x418] sm:$0xff]
        %v2904 = vld [vmem:[#allocation19 + $0x420] sm:$0xff]
        %v2905 = vld [vmem:[#allocation19 + $0x428] sm:$0xff]
        %v2906 = vld [vmem:[#allocation19 + $0x430] sm:$0xff]
        %v2907 = vld [vmem:[#allocation19 + $0x438] sm:$0xff]
        %v2908 = vld [vmem:[#allocation19 + $0x440] sm:$0xff]
        %v2909 = vld [vmem:[#allocation19 + $0x448] sm:$0xff]
        %v2910 = vld [vmem:[#allocation19 + $0x450] sm:$0xff]
        %v2911 = vld [vmem:[#allocation19 + $0x458] sm:$0xff]
        %v2912 = vld [vmem:[#allocation19 + $0x460] sm:$0xff]
        %v2913 = vld [vmem:[#allocation19 + $0x468] sm:$0xff]
        %v2914 = vld [vmem:[#allocation19 + $0x470] sm:$0xff]
        %v2915 = vld [vmem:[#allocation19 + $0x478] sm:$0xff]
        %v2916 = vld [vmem:[#allocation19 + $0x480] sm:$0xff]
        %v2917 = vld [vmem:[#allocation19 + $0x488] sm:$0xff]
        %v2918 = vld [vmem:[#allocation19 + $0x490] sm:$0xff]
        %v2919 = vld [vmem:[#allocation19 + $0x498] sm:$0xff]
        %v2920 = vld [vmem:[#allocation19 + $0x4a0] sm:$0xff]
        %v2921 = vld [vmem:[#allocation19 + $0x4a8] sm:$0xff]
        %v2922 = vld [vmem:[#allocation19 + $0x4b0] sm:$0xff]
        %v2923 = vld [vmem:[#allocation19 + $0x4b8] sm:$0xff]
        %v2924 = vld [vmem:[#allocation19 + $0x4c0] sm:$0xff]
        %v2925 = vld [vmem:[#allocation19 + $0x4c8] sm:$0xff]
        %v2926 = vld [vmem:[#allocation19 + $0x4d0] sm:$0xff]
        %v2927 = vld [vmem:[#allocation19 + $0x4d8] sm:$0xff]
        %v2928 = vld [vmem:[#allocation19 + $0x4e0] sm:$0xff]
        %v2929 = vld [vmem:[#allocation19 + $0x4e8] sm:$0xff]
        %v2930 = vld [vmem:[#allocation19 + $0x4f0] sm:$0xff]
        %v2931 = vld [vmem:[#allocation19 + $0x4f8] sm:$0xff]
        %v2932 = vld [vmem:[#allocation19 + $0x500] sm:$0xff]
        %v2933 = vld [vmem:[#allocation19 + $0x508] sm:$0xff]
        %v2934 = vld [vmem:[#allocation19 + $0x510] sm:$0xff]
        %v2935 = vld [vmem:[#allocation19 + $0x518] sm:$0xff]
        %v2936 = vld [vmem:[#allocation19 + $0x520] sm:$0xff]
        %v2937 = vld [vmem:[#allocation19 + $0x528] sm:$0xff]
        %v2938 = vld [vmem:[#allocation19 + $0x530] sm:$0xff]
        %v2939 = vld [vmem:[#allocation19 + $0x538] sm:$0xff]
        %v2940 = vld [vmem:[#allocation19 + $0x540] sm:$0xff]
        %v2941 = vld [vmem:[#allocation19 + $0x548] sm:$0xff]
        %v2942 = vld [vmem:[#allocation19 + $0x550] sm:$0xff]
        %v2943 = vld [vmem:[#allocation19 + $0x558] sm:$0xff]
        %v2944 = vld [vmem:[#allocation19 + $0x560] sm:$0xff]
        %v2945 = vld [vmem:[#allocation19 + $0x568] sm:$0xff]
        %v2946 = vld [vmem:[#allocation19 + $0x570] sm:$0xff]
        %v2947 = vld [vmem:[#allocation19 + $0x578] sm:$0xff]
        %v2948 = vld [vmem:[#allocation19 + $0x580] sm:$0xff]
        %v2949 = vld [vmem:[#allocation19 + $0x588] sm:$0xff]
        %v2950 = vld [vmem:[#allocation19 + $0x590] sm:$0xff]
        %v2951 = vld [vmem:[#allocation19 + $0x598] sm:$0xff]
        %v2952 = vld [vmem:[#allocation19 + $0x5a0] sm:$0xff]
        %v2953 = vld [vmem:[#allocation19 + $0x5a8] sm:$0xff]
        %v2954 = vld [vmem:[#allocation19 + $0x5b0] sm:$0xff]
        %v2955 = vld [vmem:[#allocation19 + $0x5b8] sm:$0xff]
        %v2956 = vld [vmem:[#allocation19 + $0x5c0] sm:$0xff]
        %v2957 = vld [vmem:[#allocation19 + $0x5c8] sm:$0xff]
        %v2958 = vld [vmem:[#allocation19 + $0x5d0] sm:$0xff]
        %v2959 = vld [vmem:[#allocation19 + $0x5d8] sm:$0xff]
        %v2960 = vld [vmem:[#allocation19 + $0x5e0] sm:$0xff]
        %v2961 = vld [vmem:[#allocation19 + $0x5e8] sm:$0xff]
        %v2962 = vld [vmem:[#allocation19 + $0x5f0] sm:$0xff]
        %v2963 = vld [vmem:[#allocation19 + $0x5f8] sm:$0xff]
        %v2964 = vld [vmem:[#allocation19 + $0x600] sm:$0xff]
        %v2965 = vld [vmem:[#allocation19 + $0x608] sm:$0xff]
        %v2966 = vld [vmem:[#allocation19 + $0x610] sm:$0xff]
        %v2967 = vld [vmem:[#allocation19 + $0x618] sm:$0xff]
        %v2968 = vld [vmem:[#allocation19 + $0x620] sm:$0xff]
        %v2969 = vld [vmem:[#allocation19 + $0x628] sm:$0xff]
        %v2970 = vld [vmem:[#allocation19 + $0x630] sm:$0xff]
        %v2971 = vld [vmem:[#allocation19 + $0x638] sm:$0xff]
        %v2972 = vld [vmem:[#allocation19 + $0x640] sm:$0xff]
        %v2973 = vld [vmem:[#allocation19 + $0x648] sm:$0xff]
        %v2974 = vld [vmem:[#allocation19 + $0x650] sm:$0xff]
        %v2975 = vld [vmem:[#allocation19 + $0x658] sm:$0xff]
        %v2976 = vld [vmem:[#allocation19 + $0x660] sm:$0xff]
        %v2977 = vld [vmem:[#allocation19 + $0x668] sm:$0xff]
        %v2978 = vld [vmem:[#allocation19 + $0x670] sm:$0xff]
        %v2979 = vld [vmem:[#allocation19 + $0x678] sm:$0xff]
        %v2980 = vld [vmem:[#allocation19 + $0x680] sm:$0xff]
        %v2981 = vld [vmem:[#allocation19 + $0x688] sm:$0xff]
        %v2982 = vld [vmem:[#allocation19 + $0x690] sm:$0xff]
        %v2983 = vld [vmem:[#allocation19 + $0x698] sm:$0xff]
        %v2984 = vld [vmem:[#allocation19 + $0x6a0] sm:$0xff]
        %v2985 = vld [vmem:[#allocation19 + $0x6a8] sm:$0xff]
        %v2986 = vld [vmem:[#allocation19 + $0x6b0] sm:$0xff]
        %v2987 = vld [vmem:[#allocation19 + $0x6b8] sm:$0xff]
        %v2988 = vld [vmem:[#allocation19 + $0x6c0] sm:$0xff]
        %v2989 = vld [vmem:[#allocation19 + $0x6c8] sm:$0xff]
        %v2990 = vld [vmem:[#allocation19 + $0x6d0] sm:$0xff]
        %v2991 = vld [vmem:[#allocation19 + $0x6d8] sm:$0xff]
        %v2992 = vld [vmem:[#allocation19 + $0x6e0] sm:$0xff]
        %v2993 = vld [vmem:[#allocation19 + $0x6e8] sm:$0xff]
        %v2994 = vld [vmem:[#allocation19 + $0x6f0] sm:$0xff]
        %v2995 = vld [vmem:[#allocation19 + $0x6f8] sm:$0xff]
        %v2996 = vld [vmem:[#allocation19 + $0x700] sm:$0xff]
        %v2997 = vld [vmem:[#allocation19 + $0x708] sm:$0xff]
        %v2998 = vld [vmem:[#allocation19 + $0x710] sm:$0xff]
        %v2999 = vld [vmem:[#allocation19 + $0x718] sm:$0xff]
        %v3000 = vld [vmem:[#allocation19 + $0x720] sm:$0xff]
        %v3001 = vld [vmem:[#allocation19 + $0x728] sm:$0xff]
        %v3002 = vld [vmem:[#allocation19 + $0x730] sm:$0xff]
        %v3003 = vld [vmem:[#allocation19 + $0x738] sm:$0xff]
        %v3004 = vld [vmem:[#allocation19 + $0x740] sm:$0xff]
        %v3005 = vld [vmem:[#allocation19 + $0x748] sm:$0xff]
        %v3006 = vld [vmem:[#allocation19 + $0x750] sm:$0xff]
        %v3007 = vld [vmem:[#allocation19 + $0x758] sm:$0xff]
        %v3008 = vld [vmem:[#allocation19 + $0x760] sm:$0xff]
        %v3009 = vld [vmem:[#allocation19 + $0x768] sm:$0xff]
        %v3010 = vld [vmem:[#allocation19 + $0x770] sm:$0xff]
        %v3011 = vld [vmem:[#allocation19 + $0x778] sm:$0xff]
        %v3012 = vld [vmem:[#allocation19 + $0x780] sm:$0xff]
        %v3013 = vld [vmem:[#allocation19 + $0x788] sm:$0xff]
        %v3014 = vld [vmem:[#allocation19 + $0x790] sm:$0xff]
        %v3015 = vld [vmem:[#allocation19 + $0x798] sm:$0xff]
        %v3016 = vld [vmem:[#allocation19 + $0x7a0] sm:$0xff]
        %v3017 = vld [vmem:[#allocation19 + $0x7a8] sm:$0xff]
        %v3018 = vld [vmem:[#allocation19 + $0x7b0] sm:$0xff]
        %v3019 = vld [vmem:[#allocation19 + $0x7b8] sm:$0xff]
        %v3020 = vld [vmem:[#allocation19 + $0x7c0] sm:$0xff]
        %v3021 = vld [vmem:[#allocation19 + $0x7c8] sm:$0xff]
        %v3022 = vld [vmem:[#allocation19 + $0x7d0] sm:$0xff]
        %v3023 = vld [vmem:[#allocation19 + $0x7d8] sm:$0xff]
        %v3024 = vld [vmem:[#allocation19 + $0x7e0] sm:$0xff]
        %v3025 = vld [vmem:[#allocation19 + $0x7e8] sm:$0xff]
        %v3026 = vld [vmem:[#allocation19 + $0x7f0] sm:$0xff]
        %v3027 = vld [vmem:[#allocation19 + $0x7f8] sm:$0xff]
        %v3028 = vld [vmem:[%s12] sm:$0xff]
        %v3029 = vunpack.c.l.bf16 %v3028
        %v3030 = vunpack.c.h.bf16 %v3028
        %v3033 = vlaneseq
        %v3034 = vshrl.u32 %v3033, 7
        %v3035 = vsub.s32 0, %v3034
        %v3036 = vrot.slane %v3029, %v3035
        %v3037 = vlaneseq
        %v3038 = vshrl.u32 %v3037, 7
        %v3039 = vsub.s32 2, %v3038
        %v3040 = vrot.slane %v3029, %v3039
        %v3041 = vlaneseq
        %v3042 = vshrl.u32 %v3041, 7
        %v3043 = vsub.s32 4, %v3042
        %v3044 = vrot.slane %v3029, %v3043
        %v3045 = vlaneseq
        %v3046 = vshrl.u32 %v3045, 7
        %v3047 = vsub.s32 6, %v3046
        %v3048 = vrot.slane %v3029, %v3047
        %v3049 = vlaneseq
        %v3050 = vshrl.u32 %v3049, 7
        %v3051 = vsub.s32 0, %v3050
        %v3052 = vrot.slane %v3030, %v3051
        %v3053 = vlaneseq
        %v3054 = vshrl.u32 %v3053, 7
        %v3055 = vsub.s32 2, %v3054
        %v3056 = vrot.slane %v3030, %v3055
        %v3057 = vlaneseq
        %v3058 = vshrl.u32 %v3057, 7
        %v3059 = vsub.s32 4, %v3058
        %v3060 = vrot.slane %v3030, %v3059
        %v3061 = vlaneseq
        %v3062 = vshrl.u32 %v3061, 7
        %v3063 = vsub.s32 6, %v3062
        %v3064 = vrot.slane %v3030, %v3063
        %v3073 = vlaneseq
        %v3074 = vshrl.u32 %v3073, 7
        %v3075 = vsub.s32 0, %v3074
        %v3076 = vrot.slane %v3036, %v3075
        %v3077 = vlaneseq
        %v3078 = vshrl.u32 %v3077, 7
        %v3079 = vsub.s32 0, %v3078
        %v3080 = vrot.slane %v3040, %v3079
        %v3081 = vlaneseq
        %v3082 = vshrl.u32 %v3081, 7
        %v3083 = vsub.s32 0, %v3082
        %v3084 = vrot.slane %v3044, %v3083
        %v3085 = vlaneseq
        %v3086 = vshrl.u32 %v3085, 7
        %v3087 = vsub.s32 0, %v3086
        %v3088 = vrot.slane %v3048, %v3087
        %v3089 = vlaneseq
        %v3090 = vshrl.u32 %v3089, 7
        %v3091 = vsub.s32 0, %v3090
        %v3092 = vrot.slane %v3052, %v3091
        %v3093 = vlaneseq
        %v3094 = vshrl.u32 %v3093, 7
        %v3095 = vsub.s32 0, %v3094
        %v3096 = vrot.slane %v3056, %v3095
        %v3097 = vlaneseq
        %v3098 = vshrl.u32 %v3097, 7
        %v3099 = vsub.s32 0, %v3098
        %v3100 = vrot.slane %v3060, %v3099
        %v3101 = vlaneseq
        %v3102 = vshrl.u32 %v3101, 7
        %v3103 = vsub.s32 0, %v3102
        %v3104 = vrot.slane %v3064, %v3103
        %v3361 = vunpack.c.l.b16 %v2772
        %v3362 = vunpack.c.h.b16 %v2772
        %v3363 = vunpack.c.l.b16 %v2773
        %v3364 = vunpack.c.h.b16 %v2773
        %v3365 = vunpack.c.l.b16 %v2774
        %v3366 = vunpack.c.h.b16 %v2774
        %v3367 = vunpack.c.l.b16 %v2775
        %v3368 = vunpack.c.h.b16 %v2775
        %v3369 = vunpack.c.l.b16 %v2776
        %v3370 = vunpack.c.h.b16 %v2776
        %v3371 = vunpack.c.l.b16 %v2777
        %v3372 = vunpack.c.h.b16 %v2777
        %v3373 = vunpack.c.l.b16 %v2778
        %v3374 = vunpack.c.h.b16 %v2778
        %v3375 = vunpack.c.l.b16 %v2779
        %v3376 = vunpack.c.h.b16 %v2779
        %v3377 = vunpack.c.l.b16 %v2780
        %v3378 = vunpack.c.h.b16 %v2780
        %v3379 = vunpack.c.l.b16 %v2781
        %v3380 = vunpack.c.h.b16 %v2781
        %v3381 = vunpack.c.l.b16 %v2782
        %v3382 = vunpack.c.h.b16 %v2782
        %v3383 = vunpack.c.l.b16 %v2783
        %v3384 = vunpack.c.h.b16 %v2783
        %v3385 = vunpack.c.l.b16 %v2784
        %v3386 = vunpack.c.h.b16 %v2784
        %v3387 = vunpack.c.l.b16 %v2785
        %v3388 = vunpack.c.h.b16 %v2785
        %v3389 = vunpack.c.l.b16 %v2786
        %v3390 = vunpack.c.h.b16 %v2786
        %v3391 = vunpack.c.l.b16 %v2787
        %v3392 = vunpack.c.h.b16 %v2787
        %v3393 = vunpack.c.l.b16 %v2788
        %v3394 = vunpack.c.h.b16 %v2788
        %v3395 = vunpack.c.l.b16 %v2789
        %v3396 = vunpack.c.h.b16 %v2789
        %v3397 = vunpack.c.l.b16 %v2790
        %v3398 = vunpack.c.h.b16 %v2790
        %v3399 = vunpack.c.l.b16 %v2791
        %v3400 = vunpack.c.h.b16 %v2791
        %v3401 = vunpack.c.l.b16 %v2792
        %v3402 = vunpack.c.h.b16 %v2792
        %v3403 = vunpack.c.l.b16 %v2793
        %v3404 = vunpack.c.h.b16 %v2793
        %v3405 = vunpack.c.l.b16 %v2794
        %v3406 = vunpack.c.h.b16 %v2794
        %v3407 = vunpack.c.l.b16 %v2795
        %v3408 = vunpack.c.h.b16 %v2795
        %v3409 = vunpack.c.l.b16 %v2796
        %v3410 = vunpack.c.h.b16 %v2796
        %v3411 = vunpack.c.l.b16 %v2797
        %v3412 = vunpack.c.h.b16 %v2797
        %v3413 = vunpack.c.l.b16 %v2798
        %v3414 = vunpack.c.h.b16 %v2798
        %v3415 = vunpack.c.l.b16 %v2799
        %v3416 = vunpack.c.h.b16 %v2799
        %v3417 = vunpack.c.l.b16 %v2800
        %v3418 = vunpack.c.h.b16 %v2800
        %v3419 = vunpack.c.l.b16 %v2801
        %v3420 = vunpack.c.h.b16 %v2801
        %v3421 = vunpack.c.l.b16 %v2802
        %v3422 = vunpack.c.h.b16 %v2802
        %v3423 = vunpack.c.l.b16 %v2803
        %v3424 = vunpack.c.h.b16 %v2803
        %v3425 = vunpack.c.l.b16 %v2804
        %v3426 = vunpack.c.h.b16 %v2804
        %v3427 = vunpack.c.l.b16 %v2805
        %v3428 = vunpack.c.h.b16 %v2805
        %v3429 = vunpack.c.l.b16 %v2806
        %v3430 = vunpack.c.h.b16 %v2806
        %v3431 = vunpack.c.l.b16 %v2807
        %v3432 = vunpack.c.h.b16 %v2807
        %v3433 = vunpack.c.l.b16 %v2808
        %v3434 = vunpack.c.h.b16 %v2808
        %v3435 = vunpack.c.l.b16 %v2809
        %v3436 = vunpack.c.h.b16 %v2809
        %v3437 = vunpack.c.l.b16 %v2810
        %v3438 = vunpack.c.h.b16 %v2810
        %v3439 = vunpack.c.l.b16 %v2811
        %v3440 = vunpack.c.h.b16 %v2811
        %v3441 = vunpack.c.l.b16 %v2812
        %v3442 = vunpack.c.h.b16 %v2812
        %v3443 = vunpack.c.l.b16 %v2813
        %v3444 = vunpack.c.h.b16 %v2813
        %v3445 = vunpack.c.l.b16 %v2814
        %v3446 = vunpack.c.h.b16 %v2814
        %v3447 = vunpack.c.l.b16 %v2815
        %v3448 = vunpack.c.h.b16 %v2815
        %v3449 = vunpack.c.l.b16 %v2816
        %v3450 = vunpack.c.h.b16 %v2816
        %v3451 = vunpack.c.l.b16 %v2817
        %v3452 = vunpack.c.h.b16 %v2817
        %v3453 = vunpack.c.l.b16 %v2818
        %v3454 = vunpack.c.h.b16 %v2818
        %v3455 = vunpack.c.l.b16 %v2819
        %v3456 = vunpack.c.h.b16 %v2819
        %v3457 = vunpack.c.l.b16 %v2820
        %v3458 = vunpack.c.h.b16 %v2820
        %v3459 = vunpack.c.l.b16 %v2821
        %v3460 = vunpack.c.h.b16 %v2821
        %v3461 = vunpack.c.l.b16 %v2822
        %v3462 = vunpack.c.h.b16 %v2822
        %v3463 = vunpack.c.l.b16 %v2823
        %v3464 = vunpack.c.h.b16 %v2823
        %v3465 = vunpack.c.l.b16 %v2824
        %v3466 = vunpack.c.h.b16 %v2824
        %v3467 = vunpack.c.l.b16 %v2825
        %v3468 = vunpack.c.h.b16 %v2825
        %v3469 = vunpack.c.l.b16 %v2826
        %v3470 = vunpack.c.h.b16 %v2826
        %v3471 = vunpack.c.l.b16 %v2827
        %v3472 = vunpack.c.h.b16 %v2827
        %v3473 = vunpack.c.l.b16 %v2828
        %v3474 = vunpack.c.h.b16 %v2828
        %v3475 = vunpack.c.l.b16 %v2829
        %v3476 = vunpack.c.h.b16 %v2829
        %v3477 = vunpack.c.l.b16 %v2830
        %v3478 = vunpack.c.h.b16 %v2830
        %v3479 = vunpack.c.l.b16 %v2831
        %v3480 = vunpack.c.h.b16 %v2831
        %v3481 = vunpack.c.l.b16 %v2832
        %v3482 = vunpack.c.h.b16 %v2832
        %v3483 = vunpack.c.l.b16 %v2833
        %v3484 = vunpack.c.h.b16 %v2833
        %v3485 = vunpack.c.l.b16 %v2834
        %v3486 = vunpack.c.h.b16 %v2834
        %v3487 = vunpack.c.l.b16 %v2835
        %v3488 = vunpack.c.h.b16 %v2835
        %v3489 = vunpack.c.l.b16 %v2836
        %v3490 = vunpack.c.h.b16 %v2836
        %v3491 = vunpack.c.l.b16 %v2837
        %v3492 = vunpack.c.h.b16 %v2837
        %v3493 = vunpack.c.l.b16 %v2838
        %v3494 = vunpack.c.h.b16 %v2838
        %v3495 = vunpack.c.l.b16 %v2839
        %v3496 = vunpack.c.h.b16 %v2839
        %v3497 = vunpack.c.l.b16 %v2840
        %v3498 = vunpack.c.h.b16 %v2840
        %v3499 = vunpack.c.l.b16 %v2841
        %v3500 = vunpack.c.h.b16 %v2841
        %v3501 = vunpack.c.l.b16 %v2842
        %v3502 = vunpack.c.h.b16 %v2842
        %v3503 = vunpack.c.l.b16 %v2843
        %v3504 = vunpack.c.h.b16 %v2843
        %v3505 = vunpack.c.l.b16 %v2844
        %v3506 = vunpack.c.h.b16 %v2844
        %v3507 = vunpack.c.l.b16 %v2845
        %v3508 = vunpack.c.h.b16 %v2845
        %v3509 = vunpack.c.l.b16 %v2846
        %v3510 = vunpack.c.h.b16 %v2846
        %v3511 = vunpack.c.l.b16 %v2847
        %v3512 = vunpack.c.h.b16 %v2847
        %v3513 = vunpack.c.l.b16 %v2848
        %v3514 = vunpack.c.h.b16 %v2848
        %v3515 = vunpack.c.l.b16 %v2849
        %v3516 = vunpack.c.h.b16 %v2849
        %v3517 = vunpack.c.l.b16 %v2850
        %v3518 = vunpack.c.h.b16 %v2850
        %v3519 = vunpack.c.l.b16 %v2851
        %v3520 = vunpack.c.h.b16 %v2851
        %v3521 = vunpack.c.l.b16 %v2852
        %v3522 = vunpack.c.h.b16 %v2852
        %v3523 = vunpack.c.l.b16 %v2853
        %v3524 = vunpack.c.h.b16 %v2853
        %v3525 = vunpack.c.l.b16 %v2854
        %v3526 = vunpack.c.h.b16 %v2854
        %v3527 = vunpack.c.l.b16 %v2855
        %v3528 = vunpack.c.h.b16 %v2855
        %v3529 = vunpack.c.l.b16 %v2856
        %v3530 = vunpack.c.h.b16 %v2856
        %v3531 = vunpack.c.l.b16 %v2857
        %v3532 = vunpack.c.h.b16 %v2857
        %v3533 = vunpack.c.l.b16 %v2858
        %v3534 = vunpack.c.h.b16 %v2858
        %v3535 = vunpack.c.l.b16 %v2859
        %v3536 = vunpack.c.h.b16 %v2859
        %v3537 = vunpack.c.l.b16 %v2860
        %v3538 = vunpack.c.h.b16 %v2860
        %v3539 = vunpack.c.l.b16 %v2861
        %v3540 = vunpack.c.h.b16 %v2861
        %v3541 = vunpack.c.l.b16 %v2862
        %v3542 = vunpack.c.h.b16 %v2862
        %v3543 = vunpack.c.l.b16 %v2863
        %v3544 = vunpack.c.h.b16 %v2863
        %v3545 = vunpack.c.l.b16 %v2864
        %v3546 = vunpack.c.h.b16 %v2864
        %v3547 = vunpack.c.l.b16 %v2865
        %v3548 = vunpack.c.h.b16 %v2865
        %v3549 = vunpack.c.l.b16 %v2866
        %v3550 = vunpack.c.h.b16 %v2866
        %v3551 = vunpack.c.l.b16 %v2867
        %v3552 = vunpack.c.h.b16 %v2867
        %v3553 = vunpack.c.l.b16 %v2868
        %v3554 = vunpack.c.h.b16 %v2868
        %v3555 = vunpack.c.l.b16 %v2869
        %v3556 = vunpack.c.h.b16 %v2869
        %v3557 = vunpack.c.l.b16 %v2870
        %v3558 = vunpack.c.h.b16 %v2870
        %v3559 = vunpack.c.l.b16 %v2871
        %v3560 = vunpack.c.h.b16 %v2871
        %v3561 = vunpack.c.l.b16 %v2872
        %v3562 = vunpack.c.h.b16 %v2872
        %v3563 = vunpack.c.l.b16 %v2873
        %v3564 = vunpack.c.h.b16 %v2873
        %v3565 = vunpack.c.l.b16 %v2874
        %v3566 = vunpack.c.h.b16 %v2874
        %v3567 = vunpack.c.l.b16 %v2875
        %v3568 = vunpack.c.h.b16 %v2875
        %v3569 = vunpack.c.l.b16 %v2876
        %v3570 = vunpack.c.h.b16 %v2876
        %v3571 = vunpack.c.l.b16 %v2877
        %v3572 = vunpack.c.h.b16 %v2877
        %v3573 = vunpack.c.l.b16 %v2878
        %v3574 = vunpack.c.h.b16 %v2878
        %v3575 = vunpack.c.l.b16 %v2879
        %v3576 = vunpack.c.h.b16 %v2879
        %v3577 = vunpack.c.l.b16 %v2880
        %v3578 = vunpack.c.h.b16 %v2880
        %v3579 = vunpack.c.l.b16 %v2881
        %v3580 = vunpack.c.h.b16 %v2881
        %v3581 = vunpack.c.l.b16 %v2882
        %v3582 = vunpack.c.h.b16 %v2882
        %v3583 = vunpack.c.l.b16 %v2883
        %v3584 = vunpack.c.h.b16 %v2883
        %v3585 = vunpack.c.l.b16 %v2884
        %v3586 = vunpack.c.h.b16 %v2884
        %v3587 = vunpack.c.l.b16 %v2885
        %v3588 = vunpack.c.h.b16 %v2885
        %v3589 = vunpack.c.l.b16 %v2886
        %v3590 = vunpack.c.h.b16 %v2886
        %v3591 = vunpack.c.l.b16 %v2887
        %v3592 = vunpack.c.h.b16 %v2887
        %v3593 = vunpack.c.l.b16 %v2888
        %v3594 = vunpack.c.h.b16 %v2888
        %v3595 = vunpack.c.l.b16 %v2889
        %v3596 = vunpack.c.h.b16 %v2889
        %v3597 = vunpack.c.l.b16 %v2890
        %v3598 = vunpack.c.h.b16 %v2890
        %v3599 = vunpack.c.l.b16 %v2891
        %v3600 = vunpack.c.h.b16 %v2891
        %v3601 = vunpack.c.l.b16 %v2892
        %v3602 = vunpack.c.h.b16 %v2892
        %v3603 = vunpack.c.l.b16 %v2893
        %v3604 = vunpack.c.h.b16 %v2893
        %v3605 = vunpack.c.l.b16 %v2894
        %v3606 = vunpack.c.h.b16 %v2894
        %v3607 = vunpack.c.l.b16 %v2895
        %v3608 = vunpack.c.h.b16 %v2895
        %v3609 = vunpack.c.l.b16 %v2896
        %v3610 = vunpack.c.h.b16 %v2896
        %v3611 = vunpack.c.l.b16 %v2897
        %v3612 = vunpack.c.h.b16 %v2897
        %v3613 = vunpack.c.l.b16 %v2898
        %v3614 = vunpack.c.h.b16 %v2898
        %v3615 = vunpack.c.l.b16 %v2899
        %v3616 = vunpack.c.h.b16 %v2899
        %v3617 = vunpack.c.l.b16 %v2900
        %v3618 = vunpack.c.h.b16 %v2900
        %v3619 = vunpack.c.l.b16 %v2901
        %v3620 = vunpack.c.h.b16 %v2901
        %v3621 = vunpack.c.l.b16 %v2902
        %v3622 = vunpack.c.h.b16 %v2902
        %v3623 = vunpack.c.l.b16 %v2903
        %v3624 = vunpack.c.h.b16 %v2903
        %v3625 = vunpack.c.l.b16 %v2904
        %v3626 = vunpack.c.h.b16 %v2904
        %v3627 = vunpack.c.l.b16 %v2905
        %v3628 = vunpack.c.h.b16 %v2905
        %v3629 = vunpack.c.l.b16 %v2906
        %v3630 = vunpack.c.h.b16 %v2906
        %v3631 = vunpack.c.l.b16 %v2907
        %v3632 = vunpack.c.h.b16 %v2907
        %v3633 = vunpack.c.l.b16 %v2908
        %v3634 = vunpack.c.h.b16 %v2908
        %v3635 = vunpack.c.l.b16 %v2909
        %v3636 = vunpack.c.h.b16 %v2909
        %v3637 = vunpack.c.l.b16 %v2910
        %v3638 = vunpack.c.h.b16 %v2910
        %v3639 = vunpack.c.l.b16 %v2911
        %v3640 = vunpack.c.h.b16 %v2911
        %v3641 = vunpack.c.l.b16 %v2912
        %v3642 = vunpack.c.h.b16 %v2912
        %v3643 = vunpack.c.l.b16 %v2913
        %v3644 = vunpack.c.h.b16 %v2913
        %v3645 = vunpack.c.l.b16 %v2914
        %v3646 = vunpack.c.h.b16 %v2914
        %v3647 = vunpack.c.l.b16 %v2915
        %v3648 = vunpack.c.h.b16 %v2915
        %v3649 = vunpack.c.l.b16 %v2916
        %v3650 = vunpack.c.h.b16 %v2916
        %v3651 = vunpack.c.l.b16 %v2917
        %v3652 = vunpack.c.h.b16 %v2917
        %v3653 = vunpack.c.l.b16 %v2918
        %v3654 = vunpack.c.h.b16 %v2918
        %v3655 = vunpack.c.l.b16 %v2919
        %v3656 = vunpack.c.h.b16 %v2919
        %v3657 = vunpack.c.l.b16 %v2920
        %v3658 = vunpack.c.h.b16 %v2920
        %v3659 = vunpack.c.l.b16 %v2921
        %v3660 = vunpack.c.h.b16 %v2921
        %v3661 = vunpack.c.l.b16 %v2922
        %v3662 = vunpack.c.h.b16 %v2922
        %v3663 = vunpack.c.l.b16 %v2923
        %v3664 = vunpack.c.h.b16 %v2923
        %v3665 = vunpack.c.l.b16 %v2924
        %v3666 = vunpack.c.h.b16 %v2924
        %v3667 = vunpack.c.l.b16 %v2925
        %v3668 = vunpack.c.h.b16 %v2925
        %v3669 = vunpack.c.l.b16 %v2926
        %v3670 = vunpack.c.h.b16 %v2926
        %v3671 = vunpack.c.l.b16 %v2927
        %v3672 = vunpack.c.h.b16 %v2927
        %v3673 = vunpack.c.l.b16 %v2928
        %v3674 = vunpack.c.h.b16 %v2928
        %v3675 = vunpack.c.l.b16 %v2929
        %v3676 = vunpack.c.h.b16 %v2929
        %v3677 = vunpack.c.l.b16 %v2930
        %v3678 = vunpack.c.h.b16 %v2930
        %v3679 = vunpack.c.l.b16 %v2931
        %v3680 = vunpack.c.h.b16 %v2931
        %v3681 = vunpack.c.l.b16 %v2932
        %v3682 = vunpack.c.h.b16 %v2932
        %v3683 = vunpack.c.l.b16 %v2933
        %v3684 = vunpack.c.h.b16 %v2933
        %v3685 = vunpack.c.l.b16 %v2934
        %v3686 = vunpack.c.h.b16 %v2934
        %v3687 = vunpack.c.l.b16 %v2935
        %v3688 = vunpack.c.h.b16 %v2935
        %v3689 = vunpack.c.l.b16 %v2936
        %v3690 = vunpack.c.h.b16 %v2936
        %v3691 = vunpack.c.l.b16 %v2937
        %v3692 = vunpack.c.h.b16 %v2937
        %v3693 = vunpack.c.l.b16 %v2938
        %v3694 = vunpack.c.h.b16 %v2938
        %v3695 = vunpack.c.l.b16 %v2939
        %v3696 = vunpack.c.h.b16 %v2939
        %v3697 = vunpack.c.l.b16 %v2940
        %v3698 = vunpack.c.h.b16 %v2940
        %v3699 = vunpack.c.l.b16 %v2941
        %v3700 = vunpack.c.h.b16 %v2941
        %v3701 = vunpack.c.l.b16 %v2942
        %v3702 = vunpack.c.h.b16 %v2942
        %v3703 = vunpack.c.l.b16 %v2943
        %v3704 = vunpack.c.h.b16 %v2943
        %v3705 = vunpack.c.l.b16 %v2944
        %v3706 = vunpack.c.h.b16 %v2944
        %v3707 = vunpack.c.l.b16 %v2945
        %v3708 = vunpack.c.h.b16 %v2945
        %v3709 = vunpack.c.l.b16 %v2946
        %v3710 = vunpack.c.h.b16 %v2946
        %v3711 = vunpack.c.l.b16 %v2947
        %v3712 = vunpack.c.h.b16 %v2947
        %v3713 = vunpack.c.l.b16 %v2948
        %v3714 = vunpack.c.h.b16 %v2948
        %v3715 = vunpack.c.l.b16 %v2949
        %v3716 = vunpack.c.h.b16 %v2949
        %v3717 = vunpack.c.l.b16 %v2950
        %v3718 = vunpack.c.h.b16 %v2950
        %v3719 = vunpack.c.l.b16 %v2951
        %v3720 = vunpack.c.h.b16 %v2951
        %v3721 = vunpack.c.l.b16 %v2952
        %v3722 = vunpack.c.h.b16 %v2952
        %v3723 = vunpack.c.l.b16 %v2953
        %v3724 = vunpack.c.h.b16 %v2953
        %v3725 = vunpack.c.l.b16 %v2954
        %v3726 = vunpack.c.h.b16 %v2954
        %v3727 = vunpack.c.l.b16 %v2955
        %v3728 = vunpack.c.h.b16 %v2955
        %v3729 = vunpack.c.l.b16 %v2956
        %v3730 = vunpack.c.h.b16 %v2956
        %v3731 = vunpack.c.l.b16 %v2957
        %v3732 = vunpack.c.h.b16 %v2957
        %v3733 = vunpack.c.l.b16 %v2958
        %v3734 = vunpack.c.h.b16 %v2958
        %v3735 = vunpack.c.l.b16 %v2959
        %v3736 = vunpack.c.h.b16 %v2959
        %v3737 = vunpack.c.l.b16 %v2960
        %v3738 = vunpack.c.h.b16 %v2960
        %v3739 = vunpack.c.l.b16 %v2961
        %v3740 = vunpack.c.h.b16 %v2961
        %v3741 = vunpack.c.l.b16 %v2962
        %v3742 = vunpack.c.h.b16 %v2962
        %v3743 = vunpack.c.l.b16 %v2963
        %v3744 = vunpack.c.h.b16 %v2963
        %v3745 = vunpack.c.l.b16 %v2964
        %v3746 = vunpack.c.h.b16 %v2964
        %v3747 = vunpack.c.l.b16 %v2965
        %v3748 = vunpack.c.h.b16 %v2965
        %v3749 = vunpack.c.l.b16 %v2966
        %v3750 = vunpack.c.h.b16 %v2966
        %v3751 = vunpack.c.l.b16 %v2967
        %v3752 = vunpack.c.h.b16 %v2967
        %v3753 = vunpack.c.l.b16 %v2968
        %v3754 = vunpack.c.h.b16 %v2968
        %v3755 = vunpack.c.l.b16 %v2969
        %v3756 = vunpack.c.h.b16 %v2969
        %v3757 = vunpack.c.l.b16 %v2970
        %v3758 = vunpack.c.h.b16 %v2970
        %v3759 = vunpack.c.l.b16 %v2971
        %v3760 = vunpack.c.h.b16 %v2971
        %v3761 = vunpack.c.l.b16 %v2972
        %v3762 = vunpack.c.h.b16 %v2972
        %v3763 = vunpack.c.l.b16 %v2973
        %v3764 = vunpack.c.h.b16 %v2973
        %v3765 = vunpack.c.l.b16 %v2974
        %v3766 = vunpack.c.h.b16 %v2974
        %v3767 = vunpack.c.l.b16 %v2975
        %v3768 = vunpack.c.h.b16 %v2975
        %v3769 = vunpack.c.l.b16 %v2976
        %v3770 = vunpack.c.h.b16 %v2976
        %v3771 = vunpack.c.l.b16 %v2977
        %v3772 = vunpack.c.h.b16 %v2977
        %v3773 = vunpack.c.l.b16 %v2978
        %v3774 = vunpack.c.h.b16 %v2978
        %v3775 = vunpack.c.l.b16 %v2979
        %v3776 = vunpack.c.h.b16 %v2979
        %v3777 = vunpack.c.l.b16 %v2980
        %v3778 = vunpack.c.h.b16 %v2980
        %v3779 = vunpack.c.l.b16 %v2981
        %v3780 = vunpack.c.h.b16 %v2981
        %v3781 = vunpack.c.l.b16 %v2982
        %v3782 = vunpack.c.h.b16 %v2982
        %v3783 = vunpack.c.l.b16 %v2983
        %v3784 = vunpack.c.h.b16 %v2983
        %v3785 = vunpack.c.l.b16 %v2984
        %v3786 = vunpack.c.h.b16 %v2984
        %v3787 = vunpack.c.l.b16 %v2985
        %v3788 = vunpack.c.h.b16 %v2985
        %v3789 = vunpack.c.l.b16 %v2986
        %v3790 = vunpack.c.h.b16 %v2986
        %v3791 = vunpack.c.l.b16 %v2987
        %v3792 = vunpack.c.h.b16 %v2987
        %v3793 = vunpack.c.l.b16 %v2988
        %v3794 = vunpack.c.h.b16 %v2988
        %v3795 = vunpack.c.l.b16 %v2989
        %v3796 = vunpack.c.h.b16 %v2989
        %v3797 = vunpack.c.l.b16 %v2990
        %v3798 = vunpack.c.h.b16 %v2990
        %v3799 = vunpack.c.l.b16 %v2991
        %v3800 = vunpack.c.h.b16 %v2991
        %v3801 = vunpack.c.l.b16 %v2992
        %v3802 = vunpack.c.h.b16 %v2992
        %v3803 = vunpack.c.l.b16 %v2993
        %v3804 = vunpack.c.h.b16 %v2993
        %v3805 = vunpack.c.l.b16 %v2994
        %v3806 = vunpack.c.h.b16 %v2994
        %v3807 = vunpack.c.l.b16 %v2995
        %v3808 = vunpack.c.h.b16 %v2995
        %v3809 = vunpack.c.l.b16 %v2996
        %v3810 = vunpack.c.h.b16 %v2996
        %v3811 = vunpack.c.l.b16 %v2997
        %v3812 = vunpack.c.h.b16 %v2997
        %v3813 = vunpack.c.l.b16 %v2998
        %v3814 = vunpack.c.h.b16 %v2998
        %v3815 = vunpack.c.l.b16 %v2999
        %v3816 = vunpack.c.h.b16 %v2999
        %v3817 = vunpack.c.l.b16 %v3000
        %v3818 = vunpack.c.h.b16 %v3000
        %v3819 = vunpack.c.l.b16 %v3001
        %v3820 = vunpack.c.h.b16 %v3001
        %v3821 = vunpack.c.l.b16 %v3002
        %v3822 = vunpack.c.h.b16 %v3002
        %v3823 = vunpack.c.l.b16 %v3003
        %v3824 = vunpack.c.h.b16 %v3003
        %v3825 = vunpack.c.l.b16 %v3004
        %v3826 = vunpack.c.h.b16 %v3004
        %v3827 = vunpack.c.l.b16 %v3005
        %v3828 = vunpack.c.h.b16 %v3005
        %v3829 = vunpack.c.l.b16 %v3006
        %v3830 = vunpack.c.h.b16 %v3006
        %v3831 = vunpack.c.l.b16 %v3007
        %v3832 = vunpack.c.h.b16 %v3007
        %v3833 = vunpack.c.l.b16 %v3008
        %v3834 = vunpack.c.h.b16 %v3008
        %v3835 = vunpack.c.l.b16 %v3009
        %v3836 = vunpack.c.h.b16 %v3009
        %v3837 = vunpack.c.l.b16 %v3010
        %v3838 = vunpack.c.h.b16 %v3010
        %v3839 = vunpack.c.l.b16 %v3011
        %v3840 = vunpack.c.h.b16 %v3011
        %v3841 = vunpack.c.l.b16 %v3012
        %v3842 = vunpack.c.h.b16 %v3012
        %v3843 = vunpack.c.l.b16 %v3013
        %v3844 = vunpack.c.h.b16 %v3013
        %v3845 = vunpack.c.l.b16 %v3014
        %v3846 = vunpack.c.h.b16 %v3014
        %v3847 = vunpack.c.l.b16 %v3015
        %v3848 = vunpack.c.h.b16 %v3015
        %v3849 = vunpack.c.l.b16 %v3016
        %v3850 = vunpack.c.h.b16 %v3016
        %v3851 = vunpack.c.l.b16 %v3017
        %v3852 = vunpack.c.h.b16 %v3017
        %v3853 = vunpack.c.l.b16 %v3018
        %v3854 = vunpack.c.h.b16 %v3018
        %v3855 = vunpack.c.l.b16 %v3019
        %v3856 = vunpack.c.h.b16 %v3019
        %v3857 = vunpack.c.l.b16 %v3020
        %v3858 = vunpack.c.h.b16 %v3020
        %v3859 = vunpack.c.l.b16 %v3021
        %v3860 = vunpack.c.h.b16 %v3021
        %v3861 = vunpack.c.l.b16 %v3022
        %v3862 = vunpack.c.h.b16 %v3022
        %v3863 = vunpack.c.l.b16 %v3023
        %v3864 = vunpack.c.h.b16 %v3023
        %v3865 = vunpack.c.l.b16 %v3024
        %v3866 = vunpack.c.h.b16 %v3024
        %v3867 = vunpack.c.l.b16 %v3025
        %v3868 = vunpack.c.h.b16 %v3025
        %v3869 = vunpack.c.l.b16 %v3026
        %v3870 = vunpack.c.h.b16 %v3026
        %v3871 = vunpack.c.l.b16 %v3027
        %v3872 = vunpack.c.h.b16 %v3027
        %v3873 = vpack.c.b16 %v3369, %v3361
        %v3874 = vpack.c.b16 %v3370, %v3362
        %v3875 = vpack.c.b16 %v3371, %v3363
        %v3876 = vpack.c.b16 %v3372, %v3364
        %v3877 = vpack.c.b16 %v3373, %v3365
        %v3878 = vpack.c.b16 %v3374, %v3366
        %v3879 = vpack.c.b16 %v3375, %v3367
        %v3880 = vpack.c.b16 %v3376, %v3368
        %v3881 = vpack.c.b16 %v3385, %v3377
        %v3882 = vpack.c.b16 %v3386, %v3378
        %v3883 = vpack.c.b16 %v3387, %v3379
        %v3884 = vpack.c.b16 %v3388, %v3380
        %v3885 = vpack.c.b16 %v3389, %v3381
        %v3886 = vpack.c.b16 %v3390, %v3382
        %v3887 = vpack.c.b16 %v3391, %v3383
        %v3888 = vpack.c.b16 %v3392, %v3384
        %v3889 = vpack.c.b16 %v3401, %v3393
        %v3890 = vpack.c.b16 %v3402, %v3394
        %v3891 = vpack.c.b16 %v3403, %v3395
        %v3892 = vpack.c.b16 %v3404, %v3396
        %v3893 = vpack.c.b16 %v3405, %v3397
        %v3894 = vpack.c.b16 %v3406, %v3398
        %v3895 = vpack.c.b16 %v3407, %v3399
        %v3896 = vpack.c.b16 %v3408, %v3400
        %v3897 = vpack.c.b16 %v3417, %v3409
        %v3898 = vpack.c.b16 %v3418, %v3410
        %v3899 = vpack.c.b16 %v3419, %v3411
        %v3900 = vpack.c.b16 %v3420, %v3412
        %v3901 = vpack.c.b16 %v3421, %v3413
        %v3902 = vpack.c.b16 %v3422, %v3414
        %v3903 = vpack.c.b16 %v3423, %v3415
        %v3904 = vpack.c.b16 %v3424, %v3416
        %v3905 = vpack.c.b16 %v3433, %v3425
        %v3906 = vpack.c.b16 %v3434, %v3426
        %v3907 = vpack.c.b16 %v3435, %v3427
        %v3908 = vpack.c.b16 %v3436, %v3428
        %v3909 = vpack.c.b16 %v3437, %v3429
        %v3910 = vpack.c.b16 %v3438, %v3430
        %v3911 = vpack.c.b16 %v3439, %v3431
        %v3912 = vpack.c.b16 %v3440, %v3432
        %v3913 = vpack.c.b16 %v3449, %v3441
        %v3914 = vpack.c.b16 %v3450, %v3442
        %v3915 = vpack.c.b16 %v3451, %v3443
        %v3916 = vpack.c.b16 %v3452, %v3444
        %v3917 = vpack.c.b16 %v3453, %v3445
        %v3918 = vpack.c.b16 %v3454, %v3446
        %v3919 = vpack.c.b16 %v3455, %v3447
        %v3920 = vpack.c.b16 %v3456, %v3448
        %v3921 = vpack.c.b16 %v3465, %v3457
        %v3922 = vpack.c.b16 %v3466, %v3458
        %v3923 = vpack.c.b16 %v3467, %v3459
        %v3924 = vpack.c.b16 %v3468, %v3460
        %v3925 = vpack.c.b16 %v3469, %v3461
        %v3926 = vpack.c.b16 %v3470, %v3462
        %v3927 = vpack.c.b16 %v3471, %v3463
        %v3928 = vpack.c.b16 %v3472, %v3464
        %v3929 = vpack.c.b16 %v3481, %v3473
        %v3930 = vpack.c.b16 %v3482, %v3474
        %v3931 = vpack.c.b16 %v3483, %v3475
        %v3932 = vpack.c.b16 %v3484, %v3476
        %v3933 = vpack.c.b16 %v3485, %v3477
        %v3934 = vpack.c.b16 %v3486, %v3478
        %v3935 = vpack.c.b16 %v3487, %v3479
        %v3936 = vpack.c.b16 %v3488, %v3480
        %v3937 = vpack.c.b16 %v3497, %v3489
        %v3938 = vpack.c.b16 %v3498, %v3490
        %v3939 = vpack.c.b16 %v3499, %v3491
        %v3940 = vpack.c.b16 %v3500, %v3492
        %v3941 = vpack.c.b16 %v3501, %v3493
        %v3942 = vpack.c.b16 %v3502, %v3494
        %v3943 = vpack.c.b16 %v3503, %v3495
        %v3944 = vpack.c.b16 %v3504, %v3496
        %v3945 = vpack.c.b16 %v3513, %v3505
        %v3946 = vpack.c.b16 %v3514, %v3506
        %v3947 = vpack.c.b16 %v3515, %v3507
        %v3948 = vpack.c.b16 %v3516, %v3508
        %v3949 = vpack.c.b16 %v3517, %v3509
        %v3950 = vpack.c.b16 %v3518, %v3510
        %v3951 = vpack.c.b16 %v3519, %v3511
        %v3952 = vpack.c.b16 %v3520, %v3512
        %v3953 = vpack.c.b16 %v3529, %v3521
        %v3954 = vpack.c.b16 %v3530, %v3522
        %v3955 = vpack.c.b16 %v3531, %v3523
        %v3956 = vpack.c.b16 %v3532, %v3524
        %v3957 = vpack.c.b16 %v3533, %v3525
        %v3958 = vpack.c.b16 %v3534, %v3526
        %v3959 = vpack.c.b16 %v3535, %v3527
        %v3960 = vpack.c.b16 %v3536, %v3528
        %v3961 = vpack.c.b16 %v3545, %v3537
        %v3962 = vpack.c.b16 %v3546, %v3538
        %v3963 = vpack.c.b16 %v3547, %v3539
        %v3964 = vpack.c.b16 %v3548, %v3540
        %v3965 = vpack.c.b16 %v3549, %v3541
        %v3966 = vpack.c.b16 %v3550, %v3542
        %v3967 = vpack.c.b16 %v3551, %v3543
        %v3968 = vpack.c.b16 %v3552, %v3544
        %v3969 = vpack.c.b16 %v3561, %v3553
        %v3970 = vpack.c.b16 %v3562, %v3554
        %v3971 = vpack.c.b16 %v3563, %v3555
        %v3972 = vpack.c.b16 %v3564, %v3556
        %v3973 = vpack.c.b16 %v3565, %v3557
        %v3974 = vpack.c.b16 %v3566, %v3558
        %v3975 = vpack.c.b16 %v3567, %v3559
        %v3976 = vpack.c.b16 %v3568, %v3560
        %v3977 = vpack.c.b16 %v3577, %v3569
        %v3978 = vpack.c.b16 %v3578, %v3570
        %v3979 = vpack.c.b16 %v3579, %v3571
        %v3980 = vpack.c.b16 %v3580, %v3572
        %v3981 = vpack.c.b16 %v3581, %v3573
        %v3982 = vpack.c.b16 %v3582, %v3574
        %v3983 = vpack.c.b16 %v3583, %v3575
        %v3984 = vpack.c.b16 %v3584, %v3576
        %v3985 = vpack.c.b16 %v3593, %v3585
        %v3986 = vpack.c.b16 %v3594, %v3586
        %v3987 = vpack.c.b16 %v3595, %v3587
        %v3988 = vpack.c.b16 %v3596, %v3588
        %v3989 = vpack.c.b16 %v3597, %v3589
        %v3990 = vpack.c.b16 %v3598, %v3590
        %v3991 = vpack.c.b16 %v3599, %v3591
        %v3992 = vpack.c.b16 %v3600, %v3592
        %v3993 = vpack.c.b16 %v3609, %v3601
        %v3994 = vpack.c.b16 %v3610, %v3602
        %v3995 = vpack.c.b16 %v3611, %v3603
        %v3996 = vpack.c.b16 %v3612, %v3604
        %v3997 = vpack.c.b16 %v3613, %v3605
        %v3998 = vpack.c.b16 %v3614, %v3606
        %v3999 = vpack.c.b16 %v3615, %v3607
        %v4000 = vpack.c.b16 %v3616, %v3608
        %v4001 = vpack.c.b16 %v3625, %v3617
        %v4002 = vpack.c.b16 %v3626, %v3618
        %v4003 = vpack.c.b16 %v3627, %v3619
        %v4004 = vpack.c.b16 %v3628, %v3620
        %v4005 = vpack.c.b16 %v3629, %v3621
        %v4006 = vpack.c.b16 %v3630, %v3622
        %v4007 = vpack.c.b16 %v3631, %v3623
        %v4008 = vpack.c.b16 %v3632, %v3624
        %v4009 = vpack.c.b16 %v3641, %v3633
        %v4010 = vpack.c.b16 %v3642, %v3634
        %v4011 = vpack.c.b16 %v3643, %v3635
        %v4012 = vpack.c.b16 %v3644, %v3636
        %v4013 = vpack.c.b16 %v3645, %v3637
        %v4014 = vpack.c.b16 %v3646, %v3638
        %v4015 = vpack.c.b16 %v3647, %v3639
        %v4016 = vpack.c.b16 %v3648, %v3640
        %v4017 = vpack.c.b16 %v3657, %v3649
        %v4018 = vpack.c.b16 %v3658, %v3650
        %v4019 = vpack.c.b16 %v3659, %v3651
        %v4020 = vpack.c.b16 %v3660, %v3652
        %v4021 = vpack.c.b16 %v3661, %v3653
        %v4022 = vpack.c.b16 %v3662, %v3654
        %v4023 = vpack.c.b16 %v3663, %v3655
        %v4024 = vpack.c.b16 %v3664, %v3656
        %v4025 = vpack.c.b16 %v3673, %v3665
        %v4026 = vpack.c.b16 %v3674, %v3666
        %v4027 = vpack.c.b16 %v3675, %v3667
        %v4028 = vpack.c.b16 %v3676, %v3668
        %v4029 = vpack.c.b16 %v3677, %v3669
        %v4030 = vpack.c.b16 %v3678, %v3670
        %v4031 = vpack.c.b16 %v3679, %v3671
        %v4032 = vpack.c.b16 %v3680, %v3672
        %v4033 = vpack.c.b16 %v3689, %v3681
        %v4034 = vpack.c.b16 %v3690, %v3682
        %v4035 = vpack.c.b16 %v3691, %v3683
        %v4036 = vpack.c.b16 %v3692, %v3684
        %v4037 = vpack.c.b16 %v3693, %v3685
        %v4038 = vpack.c.b16 %v3694, %v3686
        %v4039 = vpack.c.b16 %v3695, %v3687
        %v4040 = vpack.c.b16 %v3696, %v3688
        %v4041 = vpack.c.b16 %v3705, %v3697
        %v4042 = vpack.c.b16 %v3706, %v3698
        %v4043 = vpack.c.b16 %v3707, %v3699
        %v4044 = vpack.c.b16 %v3708, %v3700
        %v4045 = vpack.c.b16 %v3709, %v3701
        %v4046 = vpack.c.b16 %v3710, %v3702
        %v4047 = vpack.c.b16 %v3711, %v3703
        %v4048 = vpack.c.b16 %v3712, %v3704
        %v4049 = vpack.c.b16 %v3721, %v3713
        %v4050 = vpack.c.b16 %v3722, %v3714
        %v4051 = vpack.c.b16 %v3723, %v3715
        %v4052 = vpack.c.b16 %v3724, %v3716
        %v4053 = vpack.c.b16 %v3725, %v3717
        %v4054 = vpack.c.b16 %v3726, %v3718
        %v4055 = vpack.c.b16 %v3727, %v3719
        %v4056 = vpack.c.b16 %v3728, %v3720
        %v4057 = vpack.c.b16 %v3737, %v3729
        %v4058 = vpack.c.b16 %v3738, %v3730
        %v4059 = vpack.c.b16 %v3739, %v3731
        %v4060 = vpack.c.b16 %v3740, %v3732
        %v4061 = vpack.c.b16 %v3741, %v3733
        %v4062 = vpack.c.b16 %v3742, %v3734
        %v4063 = vpack.c.b16 %v3743, %v3735
        %v4064 = vpack.c.b16 %v3744, %v3736
        %v4065 = vpack.c.b16 %v3753, %v3745
        %v4066 = vpack.c.b16 %v3754, %v3746
        %v4067 = vpack.c.b16 %v3755, %v3747
        %v4068 = vpack.c.b16 %v3756, %v3748
        %v4069 = vpack.c.b16 %v3757, %v3749
        %v4070 = vpack.c.b16 %v3758, %v3750
        %v4071 = vpack.c.b16 %v3759, %v3751
        %v4072 = vpack.c.b16 %v3760, %v3752
        %v4073 = vpack.c.b16 %v3769, %v3761
        %v4074 = vpack.c.b16 %v3770, %v3762
        %v4075 = vpack.c.b16 %v3771, %v3763
        %v4076 = vpack.c.b16 %v3772, %v3764
        %v4077 = vpack.c.b16 %v3773, %v3765
        %v4078 = vpack.c.b16 %v3774, %v3766
        %v4079 = vpack.c.b16 %v3775, %v3767
        %v4080 = vpack.c.b16 %v3776, %v3768
        %v4081 = vpack.c.b16 %v3785, %v3777
        %v4082 = vpack.c.b16 %v3786, %v3778
        %v4083 = vpack.c.b16 %v3787, %v3779
        %v4084 = vpack.c.b16 %v3788, %v3780
        %v4085 = vpack.c.b16 %v3789, %v3781
        %v4086 = vpack.c.b16 %v3790, %v3782
        %v4087 = vpack.c.b16 %v3791, %v3783
        %v4088 = vpack.c.b16 %v3792, %v3784
        %v4089 = vpack.c.b16 %v3801, %v3793
        %v4090 = vpack.c.b16 %v3802, %v3794
        %v4091 = vpack.c.b16 %v3803, %v3795
        %v4092 = vpack.c.b16 %v3804, %v3796
        %v4093 = vpack.c.b16 %v3805, %v3797
        %v4094 = vpack.c.b16 %v3806, %v3798
        %v4095 = vpack.c.b16 %v3807, %v3799
        %v4096 = vpack.c.b16 %v3808, %v3800
        %v4097 = vpack.c.b16 %v3817, %v3809
        %v4098 = vpack.c.b16 %v3818, %v3810
        %v4099 = vpack.c.b16 %v3819, %v3811
        %v4100 = vpack.c.b16 %v3820, %v3812
        %v4101 = vpack.c.b16 %v3821, %v3813
        %v4102 = vpack.c.b16 %v3822, %v3814
        %v4103 = vpack.c.b16 %v3823, %v3815
        %v4104 = vpack.c.b16 %v3824, %v3816
        %v4105 = vpack.c.b16 %v3833, %v3825
        %v4106 = vpack.c.b16 %v3834, %v3826
        %v4107 = vpack.c.b16 %v3835, %v3827
        %v4108 = vpack.c.b16 %v3836, %v3828
        %v4109 = vpack.c.b16 %v3837, %v3829
        %v4110 = vpack.c.b16 %v3838, %v3830
        %v4111 = vpack.c.b16 %v3839, %v3831
        %v4112 = vpack.c.b16 %v3840, %v3832
        %v4113 = vpack.c.b16 %v3849, %v3841
        %v4114 = vpack.c.b16 %v3850, %v3842
        %v4115 = vpack.c.b16 %v3851, %v3843
        %v4116 = vpack.c.b16 %v3852, %v3844
        %v4117 = vpack.c.b16 %v3853, %v3845
        %v4118 = vpack.c.b16 %v3854, %v3846
        %v4119 = vpack.c.b16 %v3855, %v3847
        %v4120 = vpack.c.b16 %v3856, %v3848
        %v4121 = vpack.c.b16 %v3865, %v3857
        %v4122 = vpack.c.b16 %v3866, %v3858
        %v4123 = vpack.c.b16 %v3867, %v3859
        %v4124 = vpack.c.b16 %v3868, %v3860
        %v4125 = vpack.c.b16 %v3869, %v3861
        %v4126 = vpack.c.b16 %v3870, %v3862
        %v4127 = vpack.c.b16 %v3871, %v3863
        %v4128 = vpack.c.b16 %v3872, %v3864
        %4385 = vmatprep.subr.bf16.mxu0 %v3930
        %4386 = vmatpush1.bf16.msra.mxu0 %v3929
        %4387 = vmatprep.subr.bf16.mxu0 %v3922
        %4388 = vmatpush1.bf16.msra.mxu0 %v3921
        %4389 = vmatprep.subr.bf16.mxu0 %v3914
        %4390 = vmatpush1.bf16.msra.mxu0 %v3913
        %4391 = vmatprep.subr.bf16.mxu0 %v3906
        %4392 = vmatpush1.bf16.msra.mxu0 %v3905
        %4393 = vmatprep.subr.bf16.mxu0 %v3898
        %4394 = vmatpush1.bf16.msra.mxu0 %v3897
        %4395 = vmatprep.subr.bf16.mxu0 %v3890
        %4396 = vmatpush1.bf16.msra.mxu0 %v3889
        %4397 = vmatprep.subr.bf16.mxu0 %v3882
        %4398 = vmatpush1.bf16.msra.mxu0 %v3881
        %4399 = vmatprep.subr.bf16.mxu0 %v3874
        %4400 = vmatpush1.bf16.msra.mxu0 %v3873
        %4401 = vmatprep.subr.bf16.mxu0 %v3994
        %4402 = vmatpush2.bf16.msra.mxu0 %v3993
        %4403 = vmatprep.subr.bf16.mxu0 %v3986
        %4404 = vmatpush2.bf16.msra.mxu0 %v3985
        %4405 = vmatprep.subr.bf16.mxu0 %v3978
        %4406 = vmatpush2.bf16.msra.mxu0 %v3977
        %4407 = vmatprep.subr.bf16.mxu0 %v3970
        %4408 = vmatpush2.bf16.msra.mxu0 %v3969
        %4409 = vmatprep.subr.bf16.mxu0 %v3962
        %4410 = vmatpush2.bf16.msra.mxu0 %v3961
        %4411 = vmatprep.subr.bf16.mxu0 %v3954
        %4412 = vmatpush2.bf16.msra.mxu0 %v3953
        %4413 = vmatprep.subr.bf16.mxu0 %v3946
        %4414 = vmatpush2.bf16.msra.mxu0 %v3945
        %4415 = vmatprep.subr.bf16.mxu0 %v3938
        %4416 = vmatpush2.bf16.msra.mxu0 %v3937
        %4417 = vmatprep.mubr.bf16.mxu0 %v2765
        %4418 = vmatmul.mubr.bf16.gmra.mxu0 %v2764
        %v4419 = vpop.f32.mrf.mxu0
        %v4420 = vadd.f32 %v3076, %v4419
        %v4421 = vpop.f32.mrf.mxu0
        %v4422 = vadd.f32 %v3080, %v4421
        %v4423 = vpop.f32.mrf.mxu0
        %v4424 = vadd.f32 %v3076, %v4423
        %v4425 = vpop.f32.mrf.mxu0
        %v4426 = vadd.f32 %v3080, %v4425
        %4427 = vmatprep.mubr.bf16.mxu0 %v2769
        %4428 = vmatmul.mubr.bf16.gmra.mxu0 %v2768
        %v4429 = vpop.f32.mrf.mxu0
        %v4430 = vadd.f32 %v3076, %v4429
        %v4431 = vpop.f32.mrf.mxu0
        %v4432 = vadd.f32 %v3080, %v4431
        %v4433 = vpop.f32.mrf.mxu0
        %v4434 = vadd.f32 %v3076, %v4433
        %v4435 = vpop.f32.mrf.mxu0
        %v4436 = vadd.f32 %v3080, %v4435
        %4437 = vdwg.mxu0
        %4438 = vmatprep.subr.bf16.mxu0 %v4058
        %4439 = vmatpush1.bf16.msra.mxu0 %v4057
        %4440 = vmatprep.subr.bf16.mxu0 %v4050
        %4441 = vmatpush1.bf16.msra.mxu0 %v4049
        %4442 = vmatprep.subr.bf16.mxu0 %v4042
        %4443 = vmatpush1.bf16.msra.mxu0 %v4041
        %4444 = vmatprep.subr.bf16.mxu0 %v4034
        %4445 = vmatpush1.bf16.msra.mxu0 %v4033
        %4446 = vmatprep.subr.bf16.mxu0 %v4026
        %4447 = vmatpush1.bf16.msra.mxu0 %v4025
        %4448 = vmatprep.subr.bf16.mxu0 %v4018
        %4449 = vmatpush1.bf16.msra.mxu0 %v4017
        %4450 = vmatprep.subr.bf16.mxu0 %v4010
        %4451 = vmatpush1.bf16.msra.mxu0 %v4009
        %4452 = vmatprep.subr.bf16.mxu0 %v4002
        %4453 = vmatpush1.bf16.msra.mxu0 %v4001
        %4454 = vmatprep.subr.bf16.mxu0 %v4122
        %4455 = vmatpush2.bf16.msra.mxu0 %v4121
        %4456 = vmatprep.subr.bf16.mxu0 %v4114
        %4457 = vmatpush2.bf16.msra.mxu0 %v4113
        %4458 = vmatprep.subr.bf16.mxu0 %v4106
        %4459 = vmatpush2.bf16.msra.mxu0 %v4105
        %4460 = vmatprep.subr.bf16.mxu0 %v4098
        %4461 = vmatpush2.bf16.msra.mxu0 %v4097
        %4462 = vmatprep.subr.bf16.mxu0 %v4090
        %4463 = vmatpush2.bf16.msra.mxu0 %v4089
        %4464 = vmatprep.subr.bf16.mxu0 %v4082
        %4465 = vmatpush2.bf16.msra.mxu0 %v4081
        %4466 = vmatprep.subr.bf16.mxu0 %v4074
        %4467 = vmatpush2.bf16.msra.mxu0 %v4073
        %4468 = vmatprep.subr.bf16.mxu0 %v4066
        %4469 = vmatpush2.bf16.msra.mxu0 %v4065
        %4470 = vmatprep.mubr.bf16.mxu0 %v2767
        %4471 = vmatmul.mubr.bf16.gmra.mxu0 %v2766
        %v4472 = vpop.f32.mrf.mxu0
        %v4473 = vadd.f32 %v4420, %v4472
        %v4474 = vpop.f32.mrf.mxu0
        %v4475 = vadd.f32 %v4422, %v4474
        %v4476 = vpop.f32.mrf.mxu0
        %v4477 = vadd.f32 %v4424, %v4476
        %v4478 = vpop.f32.mrf.mxu0
        %v4479 = vadd.f32 %v4426, %v4478
        %4480 = vmatprep.mubr.bf16.mxu0 %v2771
        %4481 = vmatmul.mubr.bf16.gmra.mxu0 %v2770
        %v4482 = vpop.f32.mrf.mxu0
        %v4483 = vadd.f32 %v4430, %v4482
        %v4484 = vpop.f32.mrf.mxu0
        %v4485 = vadd.f32 %v4432, %v4484
        %v4486 = vpop.f32.mrf.mxu0
        %v4487 = vadd.f32 %v4434, %v4486
        %v4488 = vpop.f32.mrf.mxu0
        %v4489 = vadd.f32 %v4436, %v4488
        %4490 = vdwg.mxu0
        %4491 = vmatprep.subr.bf16.mxu0 %v3932
        %4492 = vmatpush1.bf16.msra.mxu0 %v3931
        %4493 = vmatprep.subr.bf16.mxu0 %v3924
        %4494 = vmatpush1.bf16.msra.mxu0 %v3923
        %4495 = vmatprep.subr.bf16.mxu0 %v3916
        %4496 = vmatpush1.bf16.msra.mxu0 %v3915
        %4497 = vmatprep.subr.bf16.mxu0 %v3908
        %4498 = vmatpush1.bf16.msra.mxu0 %v3907
        %4499 = vmatprep.subr.bf16.mxu0 %v3900
        %4500 = vmatpush1.bf16.msra.mxu0 %v3899
        %4501 = vmatprep.subr.bf16.mxu0 %v3892
        %4502 = vmatpush1.bf16.msra.mxu0 %v3891
        %4503 = vmatprep.subr.bf16.mxu0 %v3884
        %4504 = vmatpush1.bf16.msra.mxu0 %v3883
        %4505 = vmatprep.subr.bf16.mxu0 %v3876
        %4506 = vmatpush1.bf16.msra.mxu0 %v3875
        %4507 = vmatprep.subr.bf16.mxu0 %v3996
        %4508 = vmatpush2.bf16.msra.mxu0 %v3995
        %4509 = vmatprep.subr.bf16.mxu0 %v3988
        %4510 = vmatpush2.bf16.msra.mxu0 %v3987
        %4511 = vmatprep.subr.bf16.mxu0 %v3980
        %4512 = vmatpush2.bf16.msra.mxu0 %v3979
        %4513 = vmatprep.subr.bf16.mxu0 %v3972
        %4514 = vmatpush2.bf16.msra.mxu0 %v3971
        %4515 = vmatprep.subr.bf16.mxu0 %v3964
        %4516 = vmatpush2.bf16.msra.mxu0 %v3963
        %4517 = vmatprep.subr.bf16.mxu0 %v3956
        %4518 = vmatpush2.bf16.msra.mxu0 %v3955
        %4519 = vmatprep.subr.bf16.mxu0 %v3948
        %4520 = vmatpush2.bf16.msra.mxu0 %v3947
        %4521 = vmatprep.subr.bf16.mxu0 %v3940
        %4522 = vmatpush2.bf16.msra.mxu0 %v3939
        %4523 = vmatprep.mubr.bf16.mxu0 %v2765
        %4524 = vmatmul.mubr.bf16.gmra.mxu0 %v2764
        %v4525 = vpop.f32.mrf.mxu0
        %v4526 = vadd.f32 %v3084, %v4525
        %v4527 = vpop.f32.mrf.mxu0
        %v4528 = vadd.f32 %v3088, %v4527
        %v4529 = vpop.f32.mrf.mxu0
        %v4530 = vadd.f32 %v3084, %v4529
        %v4531 = vpop.f32.mrf.mxu0
        %v4532 = vadd.f32 %v3088, %v4531
        %4533 = vmatprep.mubr.bf16.mxu0 %v2769
        %4534 = vmatmul.mubr.bf16.gmra.mxu0 %v2768
        %v4535 = vpop.f32.mrf.mxu0
        %v4536 = vadd.f32 %v3084, %v4535
        %v4537 = vpop.f32.mrf.mxu0
        %v4538 = vadd.f32 %v3088, %v4537
        %v4539 = vpop.f32.mrf.mxu0
        %v4540 = vadd.f32 %v3084, %v4539
        %v4541 = vpop.f32.mrf.mxu0
        %v4542 = vadd.f32 %v3088, %v4541
        %4543 = vdwg.mxu0
        %4544 = vmatprep.subr.bf16.mxu0 %v4060
        %4545 = vmatpush1.bf16.msra.mxu0 %v4059
        %4546 = vmatprep.subr.bf16.mxu0 %v4052
        %4547 = vmatpush1.bf16.msra.mxu0 %v4051
        %4548 = vmatprep.subr.bf16.mxu0 %v4044
        %4549 = vmatpush1.bf16.msra.mxu0 %v4043
        %4550 = vmatprep.subr.bf16.mxu0 %v4036
        %4551 = vmatpush1.bf16.msra.mxu0 %v4035
        %4552 = vmatprep.subr.bf16.mxu0 %v4028
        %4553 = vmatpush1.bf16.msra.mxu0 %v4027
        %4554 = vmatprep.subr.bf16.mxu0 %v4020
        %4555 = vmatpush1.bf16.msra.mxu0 %v4019
        %4556 = vmatprep.subr.bf16.mxu0 %v4012
        %4557 = vmatpush1.bf16.msra.mxu0 %v4011
        %4558 = vmatprep.subr.bf16.mxu0 %v4004
        %4559 = vmatpush1.bf16.msra.mxu0 %v4003
        %4560 = vmatprep.subr.bf16.mxu0 %v4124
        %4561 = vmatpush2.bf16.msra.mxu0 %v4123
        %4562 = vmatprep.subr.bf16.mxu0 %v4116
        %4563 = vmatpush2.bf16.msra.mxu0 %v4115
        %4564 = vmatprep.subr.bf16.mxu0 %v4108
        %4565 = vmatpush2.bf16.msra.mxu0 %v4107
        %4566 = vmatprep.subr.bf16.mxu0 %v4100
        %4567 = vmatpush2.bf16.msra.mxu0 %v4099
        %4568 = vmatprep.subr.bf16.mxu0 %v4092
        %4569 = vmatpush2.bf16.msra.mxu0 %v4091
        %4570 = vmatprep.subr.bf16.mxu0 %v4084
        %4571 = vmatpush2.bf16.msra.mxu0 %v4083
        %4572 = vmatprep.subr.bf16.mxu0 %v4076
        %4573 = vmatpush2.bf16.msra.mxu0 %v4075
        %4574 = vmatprep.subr.bf16.mxu0 %v4068
        %4575 = vmatpush2.bf16.msra.mxu0 %v4067
        %4576 = vmatprep.mubr.bf16.mxu0 %v2767
        %4577 = vmatmul.mubr.bf16.gmra.mxu0 %v2766
        %v4578 = vpop.f32.mrf.mxu0
        %v4579 = vadd.f32 %v4526, %v4578
        %v4580 = vpop.f32.mrf.mxu0
        %v4581 = vadd.f32 %v4528, %v4580
        %v4582 = vpop.f32.mrf.mxu0
        %v4583 = vadd.f32 %v4530, %v4582
        %v4584 = vpop.f32.mrf.mxu0
        %v4585 = vadd.f32 %v4532, %v4584
        %4586 = vmatprep.mubr.bf16.mxu0 %v2771
        %4587 = vmatmul.mubr.bf16.gmra.mxu0 %v2770
        %v4588 = vpop.f32.mrf.mxu0
        %v4589 = vadd.f32 %v4536, %v4588
        %v4590 = vpop.f32.mrf.mxu0
        %v4591 = vadd.f32 %v4538, %v4590
        %v4592 = vpop.f32.mrf.mxu0
        %v4593 = vadd.f32 %v4540, %v4592
        %v4594 = vpop.f32.mrf.mxu0
        %v4595 = vadd.f32 %v4542, %v4594
        %4596 = vdwg.mxu0
        %4597 = vmatprep.subr.bf16.mxu0 %v3934
        %4598 = vmatpush1.bf16.msra.mxu0 %v3933
        %4599 = vmatprep.subr.bf16.mxu0 %v3926
        %4600 = vmatpush1.bf16.msra.mxu0 %v3925
        %4601 = vmatprep.subr.bf16.mxu0 %v3918
        %4602 = vmatpush1.bf16.msra.mxu0 %v3917
        %4603 = vmatprep.subr.bf16.mxu0 %v3910
        %4604 = vmatpush1.bf16.msra.mxu0 %v3909
        %4605 = vmatprep.subr.bf16.mxu0 %v3902
        %4606 = vmatpush1.bf16.msra.mxu0 %v3901
        %4607 = vmatprep.subr.bf16.mxu0 %v3894
        %4608 = vmatpush1.bf16.msra.mxu0 %v3893
        %4609 = vmatprep.subr.bf16.mxu0 %v3886
        %4610 = vmatpush1.bf16.msra.mxu0 %v3885
        %4611 = vmatprep.subr.bf16.mxu0 %v3878
        %4612 = vmatpush1.bf16.msra.mxu0 %v3877
        %4613 = vmatprep.subr.bf16.mxu0 %v3998
        %4614 = vmatpush2.bf16.msra.mxu0 %v3997
        %4615 = vmatprep.subr.bf16.mxu0 %v3990
        %4616 = vmatpush2.bf16.msra.mxu0 %v3989
        %4617 = vmatprep.subr.bf16.mxu0 %v3982
        %4618 = vmatpush2.bf16.msra.mxu0 %v3981
        %4619 = vmatprep.subr.bf16.mxu0 %v3974
        %4620 = vmatpush2.bf16.msra.mxu0 %v3973
        %4621 = vmatprep.subr.bf16.mxu0 %v3966
        %4622 = vmatpush2.bf16.msra.mxu0 %v3965
        %4623 = vmatprep.subr.bf16.mxu0 %v3958
        %4624 = vmatpush2.bf16.msra.mxu0 %v3957
        %4625 = vmatprep.subr.bf16.mxu0 %v3950
        %4626 = vmatpush2.bf16.msra.mxu0 %v3949
        %4627 = vmatprep.subr.bf16.mxu0 %v3942
        %4628 = vmatpush2.bf16.msra.mxu0 %v3941
        %4629 = vmatprep.mubr.bf16.mxu0 %v2765
        %4630 = vmatmul.mubr.bf16.gmra.mxu0 %v2764
        %v4631 = vpop.f32.mrf.mxu0
        %v4632 = vadd.f32 %v3092, %v4631
        %v4633 = vpop.f32.mrf.mxu0
        %v4634 = vadd.f32 %v3096, %v4633
        %v4635 = vpop.f32.mrf.mxu0
        %v4636 = vadd.f32 %v3092, %v4635
        %v4637 = vpop.f32.mrf.mxu0
        %v4638 = vadd.f32 %v3096, %v4637
        %4639 = vmatprep.mubr.bf16.mxu0 %v2769
        %4640 = vmatmul.mubr.bf16.gmra.mxu0 %v2768
        %v4641 = vpop.f32.mrf.mxu0
        %v4642 = vadd.f32 %v3092, %v4641
        %v4643 = vpop.f32.mrf.mxu0
        %v4644 = vadd.f32 %v3096, %v4643
        %v4645 = vpop.f32.mrf.mxu0
        %v4646 = vadd.f32 %v3092, %v4645
        %v4647 = vpop.f32.mrf.mxu0
        %v4648 = vadd.f32 %v3096, %v4647
        %4649 = vdwg.mxu0
        %4650 = vmatprep.subr.bf16.mxu0 %v4062
        %4651 = vmatpush1.bf16.msra.mxu0 %v4061
        %4652 = vmatprep.subr.bf16.mxu0 %v4054
        %4653 = vmatpush1.bf16.msra.mxu0 %v4053
        %4654 = vmatprep.subr.bf16.mxu0 %v4046
        %4655 = vmatpush1.bf16.msra.mxu0 %v4045
        %4656 = vmatprep.subr.bf16.mxu0 %v4038
        %4657 = vmatpush1.bf16.msra.mxu0 %v4037
        %4658 = vmatprep.subr.bf16.mxu0 %v4030
        %4659 = vmatpush1.bf16.msra.mxu0 %v4029
        %4660 = vmatprep.subr.bf16.mxu0 %v4022
        %4661 = vmatpush1.bf16.msra.mxu0 %v4021
        %4662 = vmatprep.subr.bf16.mxu0 %v4014
        %4663 = vmatpush1.bf16.msra.mxu0 %v4013
        %4664 = vmatprep.subr.bf16.mxu0 %v4006
        %4665 = vmatpush1.bf16.msra.mxu0 %v4005
        %4666 = vmatprep.subr.bf16.mxu0 %v4126
        %4667 = vmatpush2.bf16.msra.mxu0 %v4125
        %4668 = vmatprep.subr.bf16.mxu0 %v4118
        %4669 = vmatpush2.bf16.msra.mxu0 %v4117
        %4670 = vmatprep.subr.bf16.mxu0 %v4110
        %4671 = vmatpush2.bf16.msra.mxu0 %v4109
        %4672 = vmatprep.subr.bf16.mxu0 %v4102
        %4673 = vmatpush2.bf16.msra.mxu0 %v4101
        %4674 = vmatprep.subr.bf16.mxu0 %v4094
        %4675 = vmatpush2.bf16.msra.mxu0 %v4093
        %4676 = vmatprep.subr.bf16.mxu0 %v4086
        %4677 = vmatpush2.bf16.msra.mxu0 %v4085
        %4678 = vmatprep.subr.bf16.mxu0 %v4078
        %4679 = vmatpush2.bf16.msra.mxu0 %v4077
        %4680 = vmatprep.subr.bf16.mxu0 %v4070
        %4681 = vmatpush2.bf16.msra.mxu0 %v4069
        %4682 = vmatprep.mubr.bf16.mxu0 %v2767
        %4683 = vmatmul.mubr.bf16.gmra.mxu0 %v2766
        %v4684 = vpop.f32.mrf.mxu0
        %v4685 = vadd.f32 %v4632, %v4684
        %v4686 = vpop.f32.mrf.mxu0
        %v4687 = vadd.f32 %v4634, %v4686
        %v4688 = vpop.f32.mrf.mxu0
        %v4689 = vadd.f32 %v4636, %v4688
        %v4690 = vpop.f32.mrf.mxu0
        %v4691 = vadd.f32 %v4638, %v4690
        %4692 = vmatprep.mubr.bf16.mxu0 %v2771
        %4693 = vmatmul.mubr.bf16.gmra.mxu0 %v2770
        %v4694 = vpop.f32.mrf.mxu0
        %v4695 = vadd.f32 %v4642, %v4694
        %v4696 = vpop.f32.mrf.mxu0
        %v4697 = vadd.f32 %v4644, %v4696
        %v4698 = vpop.f32.mrf.mxu0
        %v4699 = vadd.f32 %v4646, %v4698
        %v4700 = vpop.f32.mrf.mxu0
        %v4701 = vadd.f32 %v4648, %v4700
        %4702 = vdwg.mxu0
        %4703 = vmatprep.subr.bf16.mxu0 %v3936
        %4704 = vmatpush1.bf16.msra.mxu0 %v3935
        %4705 = vmatprep.subr.bf16.mxu0 %v3928
        %4706 = vmatpush1.bf16.msra.mxu0 %v3927
        %4707 = vmatprep.subr.bf16.mxu0 %v3920
        %4708 = vmatpush1.bf16.msra.mxu0 %v3919
        %4709 = vmatprep.subr.bf16.mxu0 %v3912
        %4710 = vmatpush1.bf16.msra.mxu0 %v3911
        %4711 = vmatprep.subr.bf16.mxu0 %v3904
        %4712 = vmatpush1.bf16.msra.mxu0 %v3903
        %4713 = vmatprep.subr.bf16.mxu0 %v3896
        %4714 = vmatpush1.bf16.msra.mxu0 %v3895
        %4715 = vmatprep.subr.bf16.mxu0 %v3888
        %4716 = vmatpush1.bf16.msra.mxu0 %v3887
        %4717 = vmatprep.subr.bf16.mxu0 %v3880
        %4718 = vmatpush1.bf16.msra.mxu0 %v3879
        %4719 = vmatprep.subr.bf16.mxu0 %v4000
        %4720 = vmatpush2.bf16.msra.mxu0 %v3999
        %4721 = vmatprep.subr.bf16.mxu0 %v3992
        %4722 = vmatpush2.bf16.msra.mxu0 %v3991
        %4723 = vmatprep.subr.bf16.mxu0 %v3984
        %4724 = vmatpush2.bf16.msra.mxu0 %v3983
        %4725 = vmatprep.subr.bf16.mxu0 %v3976
        %4726 = vmatpush2.bf16.msra.mxu0 %v3975
        %4727 = vmatprep.subr.bf16.mxu0 %v3968
        %4728 = vmatpush2.bf16.msra.mxu0 %v3967
        %4729 = vmatprep.subr.bf16.mxu0 %v3960
        %4730 = vmatpush2.bf16.msra.mxu0 %v3959
        %4731 = vmatprep.subr.bf16.mxu0 %v3952
        %4732 = vmatpush2.bf16.msra.mxu0 %v3951
        %4733 = vmatprep.subr.bf16.mxu0 %v3944
        %4734 = vmatpush2.bf16.msra.mxu0 %v3943
        %4735 = vmatprep.mubr.bf16.mxu0 %v2765
        %4736 = vmatmul.mubr.bf16.gmra.mxu0 %v2764
        %v4737 = vpop.f32.mrf.mxu0
        %v4738 = vadd.f32 %v3100, %v4737
        %v4739 = vpop.f32.mrf.mxu0
        %v4740 = vadd.f32 %v3104, %v4739
        %v4741 = vpop.f32.mrf.mxu0
        %v4742 = vadd.f32 %v3100, %v4741
        %v4743 = vpop.f32.mrf.mxu0
        %v4744 = vadd.f32 %v3104, %v4743
        %4745 = vmatprep.mubr.bf16.mxu0 %v2769
        %4746 = vmatmul.mubr.bf16.gmra.mxu0 %v2768
        %v4747 = vpop.f32.mrf.mxu0
        %v4748 = vadd.f32 %v3100, %v4747
        %v4749 = vpop.f32.mrf.mxu0
        %v4750 = vadd.f32 %v3104, %v4749
        %v4751 = vpop.f32.mrf.mxu0
        %v4752 = vadd.f32 %v3100, %v4751
        %v4753 = vpop.f32.mrf.mxu0
        %v4754 = vadd.f32 %v3104, %v4753
        %4755 = vdwg.mxu0
        %4756 = vmatprep.subr.bf16.mxu0 %v4064
        %4757 = vmatpush1.bf16.msra.mxu0 %v4063
        %4758 = vmatprep.subr.bf16.mxu0 %v4056
        %4759 = vmatpush1.bf16.msra.mxu0 %v4055
        %4760 = vmatprep.subr.bf16.mxu0 %v4048
        %4761 = vmatpush1.bf16.msra.mxu0 %v4047
        %4762 = vmatprep.subr.bf16.mxu0 %v4040
        %4763 = vmatpush1.bf16.msra.mxu0 %v4039
        %4764 = vmatprep.subr.bf16.mxu0 %v4032
        %4765 = vmatpush1.bf16.msra.mxu0 %v4031
        %4766 = vmatprep.subr.bf16.mxu0 %v4024
        %4767 = vmatpush1.bf16.msra.mxu0 %v4023
        %4768 = vmatprep.subr.bf16.mxu0 %v4016
        %4769 = vmatpush1.bf16.msra.mxu0 %v4015
        %4770 = vmatprep.subr.bf16.mxu0 %v4008
        %4771 = vmatpush1.bf16.msra.mxu0 %v4007
        %4772 = vmatprep.subr.bf16.mxu0 %v4128
        %4773 = vmatpush2.bf16.msra.mxu0 %v4127
        %4774 = vmatprep.subr.bf16.mxu0 %v4120
        %4775 = vmatpush2.bf16.msra.mxu0 %v4119
        %4776 = vmatprep.subr.bf16.mxu0 %v4112
        %4777 = vmatpush2.bf16.msra.mxu0 %v4111
        %4778 = vmatprep.subr.bf16.mxu0 %v4104
        %4779 = vmatpush2.bf16.msra.mxu0 %v4103
        %4780 = vmatprep.subr.bf16.mxu0 %v4096
        %4781 = vmatpush2.bf16.msra.mxu0 %v4095
        %4782 = vmatprep.subr.bf16.mxu0 %v4088
        %4783 = vmatpush2.bf16.msra.mxu0 %v4087
        %4784 = vmatprep.subr.bf16.mxu0 %v4080
        %4785 = vmatpush2.bf16.msra.mxu0 %v4079
        %4786 = vmatprep.subr.bf16.mxu0 %v4072
        %4787 = vmatpush2.bf16.msra.mxu0 %v4071
        %4788 = vmatprep.mubr.bf16.mxu0 %v2767
        %4789 = vmatmul.mubr.bf16.gmra.mxu0 %v2766
        %v4790 = vpop.f32.mrf.mxu0
        %v4791 = vadd.f32 %v4738, %v4790
        %v4792 = vpop.f32.mrf.mxu0
        %v4793 = vadd.f32 %v4740, %v4792
        %v4794 = vpop.f32.mrf.mxu0
        %v4795 = vadd.f32 %v4742, %v4794
        %v4796 = vpop.f32.mrf.mxu0
        %v4797 = vadd.f32 %v4744, %v4796
        %4798 = vmatprep.mubr.bf16.mxu0 %v2771
        %4799 = vmatmul.mubr.bf16.gmra.mxu0 %v2770
        %v4800 = vpop.f32.mrf.mxu0
        %v4801 = vadd.f32 %v4748, %v4800
        %v4802 = vpop.f32.mrf.mxu0
        %v4803 = vadd.f32 %v4750, %v4802
        %v4804 = vpop.f32.mrf.mxu0
        %v4805 = vadd.f32 %v4752, %v4804
        %v4806 = vpop.f32.mrf.mxu0
        %v4807 = vadd.f32 %v4754, %v4806
        %4808 = vdwg.mxu0
        %v4809 = vrot.slane %v4473, 4
        %v4810 = vadd.f32 %v4473, %v4809
        %v4811 = vrot.slane %v4810, 2
        %v4812 = vadd.f32 %v4810, %v4811
        %v4813 = vrot.slane %v4812, 1
        %v4814 = vadd.f32 %v4812, %v4813
        %v4815 = vrot.slane %v4475, 4
        %v4816 = vadd.f32 %v4475, %v4815
        %v4817 = vrot.slane %v4816, 2
        %v4818 = vadd.f32 %v4816, %v4817
        %v4819 = vrot.slane %v4818, 1
        %v4820 = vadd.f32 %v4818, %v4819
        %v4821 = vrot.slane %v4579, 4
        %v4822 = vadd.f32 %v4579, %v4821
        %v4823 = vrot.slane %v4822, 2
        %v4824 = vadd.f32 %v4822, %v4823
        %v4825 = vrot.slane %v4824, 1
        %v4826 = vadd.f32 %v4824, %v4825
        %v4827 = vrot.slane %v4581, 4
        %v4828 = vadd.f32 %v4581, %v4827
        %v4829 = vrot.slane %v4828, 2
        %v4830 = vadd.f32 %v4828, %v4829
        %v4831 = vrot.slane %v4830, 1
        %v4832 = vadd.f32 %v4830, %v4831
        %v4833 = vrot.slane %v4685, 4
        %v4834 = vadd.f32 %v4685, %v4833
        %v4835 = vrot.slane %v4834, 2
        %v4836 = vadd.f32 %v4834, %v4835
        %v4837 = vrot.slane %v4836, 1
        %v4838 = vadd.f32 %v4836, %v4837
        %v4839 = vrot.slane %v4687, 4
        %v4840 = vadd.f32 %v4687, %v4839
        %v4841 = vrot.slane %v4840, 2
        %v4842 = vadd.f32 %v4840, %v4841
        %v4843 = vrot.slane %v4842, 1
        %v4844 = vadd.f32 %v4842, %v4843
        %v4845 = vrot.slane %v4791, 4
        %v4846 = vadd.f32 %v4791, %v4845
        %v4847 = vrot.slane %v4846, 2
        %v4848 = vadd.f32 %v4846, %v4847
        %v4849 = vrot.slane %v4848, 1
        %v4850 = vadd.f32 %v4848, %v4849
        %v4851 = vrot.slane %v4793, 4
        %v4852 = vadd.f32 %v4793, %v4851
        %v4853 = vrot.slane %v4852, 2
        %v4854 = vadd.f32 %v4852, %v4853
        %v4855 = vrot.slane %v4854, 1
        %v4856 = vadd.f32 %v4854, %v4855
        %v4857 = vrot.slane %v4477, 4
        %v4858 = vadd.f32 %v4477, %v4857
        %v4859 = vrot.slane %v4858, 2
        %v4860 = vadd.f32 %v4858, %v4859
        %v4861 = vrot.slane %v4860, 1
        %v4862 = vadd.f32 %v4860, %v4861
        %v4863 = vrot.slane %v4479, 4
        %v4864 = vadd.f32 %v4479, %v4863
        %v4865 = vrot.slane %v4864, 2
        %v4866 = vadd.f32 %v4864, %v4865
        %v4867 = vrot.slane %v4866, 1
        %v4868 = vadd.f32 %v4866, %v4867
        %v4869 = vrot.slane %v4583, 4
        %v4870 = vadd.f32 %v4583, %v4869
        %v4871 = vrot.slane %v4870, 2
        %v4872 = vadd.f32 %v4870, %v4871
        %v4873 = vrot.slane %v4872, 1
        %v4874 = vadd.f32 %v4872, %v4873
        %v4875 = vrot.slane %v4585, 4
        %v4876 = vadd.f32 %v4585, %v4875
        %v4877 = vrot.slane %v4876, 2
        %v4878 = vadd.f32 %v4876, %v4877
        %v4879 = vrot.slane %v4878, 1
        %v4880 = vadd.f32 %v4878, %v4879
        %v4881 = vrot.slane %v4689, 4
        %v4882 = vadd.f32 %v4689, %v4881
        %v4883 = vrot.slane %v4882, 2
        %v4884 = vadd.f32 %v4882, %v4883
        %v4885 = vrot.slane %v4884, 1
        %v4886 = vadd.f32 %v4884, %v4885
        %v4887 = vrot.slane %v4691, 4
        %v4888 = vadd.f32 %v4691, %v4887
        %v4889 = vrot.slane %v4888, 2
        %v4890 = vadd.f32 %v4888, %v4889
        %v4891 = vrot.slane %v4890, 1
        %v4892 = vadd.f32 %v4890, %v4891
        %v4893 = vrot.slane %v4795, 4
        %v4894 = vadd.f32 %v4795, %v4893
        %v4895 = vrot.slane %v4894, 2
        %v4896 = vadd.f32 %v4894, %v4895
        %v4897 = vrot.slane %v4896, 1
        %v4898 = vadd.f32 %v4896, %v4897
        %v4899 = vrot.slane %v4797, 4
        %v4900 = vadd.f32 %v4797, %v4899
        %v4901 = vrot.slane %v4900, 2
        %v4902 = vadd.f32 %v4900, %v4901
        %v4903 = vrot.slane %v4902, 1
        %v4904 = vadd.f32 %v4902, %v4903
        %v4905 = vrot.slane %v4483, 4
        %v4906 = vadd.f32 %v4483, %v4905
        %v4907 = vrot.slane %v4906, 2
        %v4908 = vadd.f32 %v4906, %v4907
        %v4909 = vrot.slane %v4908, 1
        %v4910 = vadd.f32 %v4908, %v4909
        %v4911 = vrot.slane %v4485, 4
        %v4912 = vadd.f32 %v4485, %v4911
        %v4913 = vrot.slane %v4912, 2
        %v4914 = vadd.f32 %v4912, %v4913
        %v4915 = vrot.slane %v4914, 1
        %v4916 = vadd.f32 %v4914, %v4915
        %v4917 = vrot.slane %v4589, 4
        %v4918 = vadd.f32 %v4589, %v4917
        %v4919 = vrot.slane %v4918, 2
        %v4920 = vadd.f32 %v4918, %v4919
        %v4921 = vrot.slane %v4920, 1
        %v4922 = vadd.f32 %v4920, %v4921
        %v4923 = vrot.slane %v4591, 4
        %v4924 = vadd.f32 %v4591, %v4923
        %v4925 = vrot.slane %v4924, 2
        %v4926 = vadd.f32 %v4924, %v4925
        %v4927 = vrot.slane %v4926, 1
        %v4928 = vadd.f32 %v4926, %v4927
        %v4929 = vrot.slane %v4695, 4
        %v4930 = vadd.f32 %v4695, %v4929
        %v4931 = vrot.slane %v4930, 2
        %v4932 = vadd.f32 %v4930, %v4931
        %v4933 = vrot.slane %v4932, 1
        %v4934 = vadd.f32 %v4932, %v4933
        %v4935 = vrot.slane %v4697, 4
        %v4936 = vadd.f32 %v4697, %v4935
        %v4937 = vrot.slane %v4936, 2
        %v4938 = vadd.f32 %v4936, %v4937
        %v4939 = vrot.slane %v4938, 1
        %v4940 = vadd.f32 %v4938, %v4939
        %v4941 = vrot.slane %v4801, 4
        %v4942 = vadd.f32 %v4801, %v4941
        %v4943 = vrot.slane %v4942, 2
        %v4944 = vadd.f32 %v4942, %v4943
        %v4945 = vrot.slane %v4944, 1
        %v4946 = vadd.f32 %v4944, %v4945
        %v4947 = vrot.slane %v4803, 4
        %v4948 = vadd.f32 %v4803, %v4947
        %v4949 = vrot.slane %v4948, 2
        %v4950 = vadd.f32 %v4948, %v4949
        %v4951 = vrot.slane %v4950, 1
        %v4952 = vadd.f32 %v4950, %v4951
        %v4953 = vrot.slane %v4487, 4
        %v4954 = vadd.f32 %v4487, %v4953
        %v4955 = vrot.slane %v4954, 2
        %v4956 = vadd.f32 %v4954, %v4955
        %v4957 = vrot.slane %v4956, 1
        %v4958 = vadd.f32 %v4956, %v4957
        %v4959 = vrot.slane %v4489, 4
        %v4960 = vadd.f32 %v4489, %v4959
        %v4961 = vrot.slane %v4960, 2
        %v4962 = vadd.f32 %v4960, %v4961
        %v4963 = vrot.slane %v4962, 1
        %v4964 = vadd.f32 %v4962, %v4963
        %v4965 = vrot.slane %v4593, 4
        %v4966 = vadd.f32 %v4593, %v4965
        %v4967 = vrot.slane %v4966, 2
        %v4968 = vadd.f32 %v4966, %v4967
        %v4969 = vrot.slane %v4968, 1
        %v4970 = vadd.f32 %v4968, %v4969
        %v4971 = vrot.slane %v4595, 4
        %v4972 = vadd.f32 %v4595, %v4971
        %v4973 = vrot.slane %v4972, 2
        %v4974 = vadd.f32 %v4972, %v4973
        %v4975 = vrot.slane %v4974, 1
        %v4976 = vadd.f32 %v4974, %v4975
        %v4977 = vrot.slane %v4699, 4
        %v4978 = vadd.f32 %v4699, %v4977
        %v4979 = vrot.slane %v4978, 2
        %v4980 = vadd.f32 %v4978, %v4979
        %v4981 = vrot.slane %v4980, 1
        %v4982 = vadd.f32 %v4980, %v4981
        %v4983 = vrot.slane %v4701, 4
        %v4984 = vadd.f32 %v4701, %v4983
        %v4985 = vrot.slane %v4984, 2
        %v4986 = vadd.f32 %v4984, %v4985
        %v4987 = vrot.slane %v4986, 1
        %v4988 = vadd.f32 %v4986, %v4987
        %v4989 = vrot.slane %v4805, 4
        %v4990 = vadd.f32 %v4805, %v4989
        %v4991 = vrot.slane %v4990, 2
        %v4992 = vadd.f32 %v4990, %v4991
        %v4993 = vrot.slane %v4992, 1
        %v4994 = vadd.f32 %v4992, %v4993
        %v4995 = vrot.slane %v4807, 4
        %v4996 = vadd.f32 %v4807, %v4995
        %v4997 = vrot.slane %v4996, 2
        %v4998 = vadd.f32 %v4996, %v4997
        %v4999 = vrot.slane %v4998, 1
        %v5000 = vadd.f32 %v4998, %v4999
        %v5001 = vmul.f32 %v4814, %v1050
        %v5002 = vmul.f32 %v4820, %v1050
        %v5003 = vmul.f32 %v4826, %v1050
        %v5004 = vmul.f32 %v4832, %v1050
        %v5005 = vmul.f32 %v4838, %v1050
        %v5006 = vmul.f32 %v4844, %v1050
        %v5007 = vmul.f32 %v4850, %v1050
        %v5008 = vmul.f32 %v4856, %v1050
        %v5009 = vmul.f32 %v4862, %v1050
        %v5010 = vmul.f32 %v4868, %v1050
        %v5011 = vmul.f32 %v4874, %v1050
        %v5012 = vmul.f32 %v4880, %v1050
        %v5013 = vmul.f32 %v4886, %v1050
        %v5014 = vmul.f32 %v4892, %v1050
        %v5015 = vmul.f32 %v4898, %v1050
        %v5016 = vmul.f32 %v4904, %v1050
        %v5017 = vmul.f32 %v4910, %v1050
        %v5018 = vmul.f32 %v4916, %v1050
        %v5019 = vmul.f32 %v4922, %v1050
        %v5020 = vmul.f32 %v4928, %v1050
        %v5021 = vmul.f32 %v4934, %v1050
        %v5022 = vmul.f32 %v4940, %v1050
        %v5023 = vmul.f32 %v4946, %v1050
        %v5024 = vmul.f32 %v4952, %v1050
        %v5025 = vmul.f32 %v4958, %v1050
        %v5026 = vmul.f32 %v4964, %v1050
        %v5027 = vmul.f32 %v4970, %v1050
        %v5028 = vmul.f32 %v4976, %v1050
        %v5029 = vmul.f32 %v4982, %v1050
        %v5030 = vmul.f32 %v4988, %v1050
        %v5031 = vmul.f32 %v4994, %v1050
        %v5032 = vmul.f32 %v5000, %v1050
        %v5033 = vsub.f32 %v4473, %v5001
        %v5034 = vsub.f32 %v4475, %v5002
        %v5035 = vsub.f32 %v4579, %v5003
        %v5036 = vsub.f32 %v4581, %v5004
        %v5037 = vsub.f32 %v4685, %v5005
        %v5038 = vsub.f32 %v4687, %v5006
        %v5039 = vsub.f32 %v4791, %v5007
        %v5040 = vsub.f32 %v4793, %v5008
        %v5041 = vsub.f32 %v4477, %v5009
        %v5042 = vsub.f32 %v4479, %v5010
        %v5043 = vsub.f32 %v4583, %v5011
        %v5044 = vsub.f32 %v4585, %v5012
        %v5045 = vsub.f32 %v4689, %v5013
        %v5046 = vsub.f32 %v4691, %v5014
        %v5047 = vsub.f32 %v4795, %v5015
        %v5048 = vsub.f32 %v4797, %v5016
        %v5049 = vsub.f32 %v4483, %v5017
        %v5050 = vsub.f32 %v4485, %v5018
        %v5051 = vsub.f32 %v4589, %v5019
        %v5052 = vsub.f32 %v4591, %v5020
        %v5053 = vsub.f32 %v4695, %v5021
        %v5054 = vsub.f32 %v4697, %v5022
        %v5055 = vsub.f32 %v4801, %v5023
        %v5056 = vsub.f32 %v4803, %v5024
        %v5057 = vsub.f32 %v4487, %v5025
        %v5058 = vsub.f32 %v4489, %v5026
        %v5059 = vsub.f32 %v4593, %v5027
        %v5060 = vsub.f32 %v4595, %v5028
        %v5061 = vsub.f32 %v4699, %v5029
        %v5062 = vsub.f32 %v4701, %v5030
        %v5063 = vsub.f32 %v4805, %v5031
        %v5064 = vsub.f32 %v4807, %v5032
        %v5065 = vmul.f32 %v5033, %v5033
        %v5066 = vmul.f32 %v5034, %v5034
        %v5067 = vmul.f32 %v5035, %v5035
        %v5068 = vmul.f32 %v5036, %v5036
        %v5069 = vmul.f32 %v5037, %v5037
        %v5070 = vmul.f32 %v5038, %v5038
        %v5071 = vmul.f32 %v5039, %v5039
        %v5072 = vmul.f32 %v5040, %v5040
        %v5073 = vmul.f32 %v5041, %v5041
        %v5074 = vmul.f32 %v5042, %v5042
        %v5075 = vmul.f32 %v5043, %v5043
        %v5076 = vmul.f32 %v5044, %v5044
        %v5077 = vmul.f32 %v5045, %v5045
        %v5078 = vmul.f32 %v5046, %v5046
        %v5079 = vmul.f32 %v5047, %v5047
        %v5080 = vmul.f32 %v5048, %v5048
        %v5081 = vmul.f32 %v5049, %v5049
        %v5082 = vmul.f32 %v5050, %v5050
        %v5083 = vmul.f32 %v5051, %v5051
        %v5084 = vmul.f32 %v5052, %v5052
        %v5085 = vmul.f32 %v5053, %v5053
        %v5086 = vmul.f32 %v5054, %v5054
        %v5087 = vmul.f32 %v5055, %v5055
        %v5088 = vmul.f32 %v5056, %v5056
        %v5089 = vmul.f32 %v5057, %v5057
        %v5090 = vmul.f32 %v5058, %v5058
        %v5091 = vmul.f32 %v5059, %v5059
        %v5092 = vmul.f32 %v5060, %v5060
        %v5093 = vmul.f32 %v5061, %v5061
        %v5094 = vmul.f32 %v5062, %v5062
        %v5095 = vmul.f32 %v5063, %v5063
        %v5096 = vmul.f32 %v5064, %v5064
        %v5097 = vrot.slane %v5065, 4
        %v5098 = vadd.f32 %v5065, %v5097
        %v5099 = vrot.slane %v5098, 2
        %v5100 = vadd.f32 %v5098, %v5099
        %v5101 = vrot.slane %v5100, 1
        %v5102 = vadd.f32 %v5100, %v5101
        %v5103 = vrot.slane %v5066, 4
        %v5104 = vadd.f32 %v5066, %v5103
        %v5105 = vrot.slane %v5104, 2
        %v5106 = vadd.f32 %v5104, %v5105
        %v5107 = vrot.slane %v5106, 1
        %v5108 = vadd.f32 %v5106, %v5107
        %v5109 = vrot.slane %v5067, 4
        %v5110 = vadd.f32 %v5067, %v5109
        %v5111 = vrot.slane %v5110, 2
        %v5112 = vadd.f32 %v5110, %v5111
        %v5113 = vrot.slane %v5112, 1
        %v5114 = vadd.f32 %v5112, %v5113
        %v5115 = vrot.slane %v5068, 4
        %v5116 = vadd.f32 %v5068, %v5115
        %v5117 = vrot.slane %v5116, 2
        %v5118 = vadd.f32 %v5116, %v5117
        %v5119 = vrot.slane %v5118, 1
        %v5120 = vadd.f32 %v5118, %v5119
        %v5121 = vrot.slane %v5069, 4
        %v5122 = vadd.f32 %v5069, %v5121
        %v5123 = vrot.slane %v5122, 2
        %v5124 = vadd.f32 %v5122, %v5123
        %v5125 = vrot.slane %v5124, 1
        %v5126 = vadd.f32 %v5124, %v5125
        %v5127 = vrot.slane %v5070, 4
        %v5128 = vadd.f32 %v5070, %v5127
        %v5129 = vrot.slane %v5128, 2
        %v5130 = vadd.f32 %v5128, %v5129
        %v5131 = vrot.slane %v5130, 1
        %v5132 = vadd.f32 %v5130, %v5131
        %v5133 = vrot.slane %v5071, 4
        %v5134 = vadd.f32 %v5071, %v5133
        %v5135 = vrot.slane %v5134, 2
        %v5136 = vadd.f32 %v5134, %v5135
        %v5137 = vrot.slane %v5136, 1
        %v5138 = vadd.f32 %v5136, %v5137
        %v5139 = vrot.slane %v5072, 4
        %v5140 = vadd.f32 %v5072, %v5139
        %v5141 = vrot.slane %v5140, 2
        %v5142 = vadd.f32 %v5140, %v5141
        %v5143 = vrot.slane %v5142, 1
        %v5144 = vadd.f32 %v5142, %v5143
        %v5145 = vrot.slane %v5073, 4
        %v5146 = vadd.f32 %v5073, %v5145
        %v5147 = vrot.slane %v5146, 2
        %v5148 = vadd.f32 %v5146, %v5147
        %v5149 = vrot.slane %v5148, 1
        %v5150 = vadd.f32 %v5148, %v5149
        %v5151 = vrot.slane %v5074, 4
        %v5152 = vadd.f32 %v5074, %v5151
        %v5153 = vrot.slane %v5152, 2
        %v5154 = vadd.f32 %v5152, %v5153
        %v5155 = vrot.slane %v5154, 1
        %v5156 = vadd.f32 %v5154, %v5155
        %v5157 = vrot.slane %v5075, 4
        %v5158 = vadd.f32 %v5075, %v5157
        %v5159 = vrot.slane %v5158, 2
        %v5160 = vadd.f32 %v5158, %v5159
        %v5161 = vrot.slane %v5160, 1
        %v5162 = vadd.f32 %v5160, %v5161
        %v5163 = vrot.slane %v5076, 4
        %v5164 = vadd.f32 %v5076, %v5163
        %v5165 = vrot.slane %v5164, 2
        %v5166 = vadd.f32 %v5164, %v5165
        %v5167 = vrot.slane %v5166, 1
        %v5168 = vadd.f32 %v5166, %v5167
        %v5169 = vrot.slane %v5077, 4
        %v5170 = vadd.f32 %v5077, %v5169
        %v5171 = vrot.slane %v5170, 2
        %v5172 = vadd.f32 %v5170, %v5171
        %v5173 = vrot.slane %v5172, 1
        %v5174 = vadd.f32 %v5172, %v5173
        %v5175 = vrot.slane %v5078, 4
        %v5176 = vadd.f32 %v5078, %v5175
        %v5177 = vrot.slane %v5176, 2
        %v5178 = vadd.f32 %v5176, %v5177
        %v5179 = vrot.slane %v5178, 1
        %v5180 = vadd.f32 %v5178, %v5179
        %v5181 = vrot.slane %v5079, 4
        %v5182 = vadd.f32 %v5079, %v5181
        %v5183 = vrot.slane %v5182, 2
        %v5184 = vadd.f32 %v5182, %v5183
        %v5185 = vrot.slane %v5184, 1
        %v5186 = vadd.f32 %v5184, %v5185
        %v5187 = vrot.slane %v5080, 4
        %v5188 = vadd.f32 %v5080, %v5187
        %v5189 = vrot.slane %v5188, 2
        %v5190 = vadd.f32 %v5188, %v5189
        %v5191 = vrot.slane %v5190, 1
        %v5192 = vadd.f32 %v5190, %v5191
        %v5193 = vrot.slane %v5081, 4
        %v5194 = vadd.f32 %v5081, %v5193
        %v5195 = vrot.slane %v5194, 2
        %v5196 = vadd.f32 %v5194, %v5195
        %v5197 = vrot.slane %v5196, 1
        %v5198 = vadd.f32 %v5196, %v5197
        %v5199 = vrot.slane %v5082, 4
        %v5200 = vadd.f32 %v5082, %v5199
        %v5201 = vrot.slane %v5200, 2
        %v5202 = vadd.f32 %v5200, %v5201
        %v5203 = vrot.slane %v5202, 1
        %v5204 = vadd.f32 %v5202, %v5203
        %v5205 = vrot.slane %v5083, 4
        %v5206 = vadd.f32 %v5083, %v5205
        %v5207 = vrot.slane %v5206, 2
        %v5208 = vadd.f32 %v5206, %v5207
        %v5209 = vrot.slane %v5208, 1
        %v5210 = vadd.f32 %v5208, %v5209
        %v5211 = vrot.slane %v5084, 4
        %v5212 = vadd.f32 %v5084, %v5211
        %v5213 = vrot.slane %v5212, 2
        %v5214 = vadd.f32 %v5212, %v5213
        %v5215 = vrot.slane %v5214, 1
        %v5216 = vadd.f32 %v5214, %v5215
        %v5217 = vrot.slane %v5085, 4
        %v5218 = vadd.f32 %v5085, %v5217
        %v5219 = vrot.slane %v5218, 2
        %v5220 = vadd.f32 %v5218, %v5219
        %v5221 = vrot.slane %v5220, 1
        %v5222 = vadd.f32 %v5220, %v5221
        %v5223 = vrot.slane %v5086, 4
        %v5224 = vadd.f32 %v5086, %v5223
        %v5225 = vrot.slane %v5224, 2
        %v5226 = vadd.f32 %v5224, %v5225
        %v5227 = vrot.slane %v5226, 1
        %v5228 = vadd.f32 %v5226, %v5227
        %v5229 = vrot.slane %v5087, 4
        %v5230 = vadd.f32 %v5087, %v5229
        %v5231 = vrot.slane %v5230, 2
        %v5232 = vadd.f32 %v5230, %v5231
        %v5233 = vrot.slane %v5232, 1
        %v5234 = vadd.f32 %v5232, %v5233
        %v5235 = vrot.slane %v5088, 4
        %v5236 = vadd.f32 %v5088, %v5235
        %v5237 = vrot.slane %v5236, 2
        %v5238 = vadd.f32 %v5236, %v5237
        %v5239 = vrot.slane %v5238, 1
        %v5240 = vadd.f32 %v5238, %v5239
        %v5241 = vrot.slane %v5089, 4
        %v5242 = vadd.f32 %v5089, %v5241
        %v5243 = vrot.slane %v5242, 2
        %v5244 = vadd.f32 %v5242, %v5243
        %v5245 = vrot.slane %v5244, 1
        %v5246 = vadd.f32 %v5244, %v5245
        %v5247 = vrot.slane %v5090, 4
        %v5248 = vadd.f32 %v5090, %v5247
        %v5249 = vrot.slane %v5248, 2
        %v5250 = vadd.f32 %v5248, %v5249
        %v5251 = vrot.slane %v5250, 1
        %v5252 = vadd.f32 %v5250, %v5251
        %v5253 = vrot.slane %v5091, 4
        %v5254 = vadd.f32 %v5091, %v5253
        %v5255 = vrot.slane %v5254, 2
        %v5256 = vadd.f32 %v5254, %v5255
        %v5257 = vrot.slane %v5256, 1
        %v5258 = vadd.f32 %v5256, %v5257
        %v5259 = vrot.slane %v5092, 4
        %v5260 = vadd.f32 %v5092, %v5259
        %v5261 = vrot.slane %v5260, 2
        %v5262 = vadd.f32 %v5260, %v5261
        %v5263 = vrot.slane %v5262, 1
        %v5264 = vadd.f32 %v5262, %v5263
        %v5265 = vrot.slane %v5093, 4
        %v5266 = vadd.f32 %v5093, %v5265
        %v5267 = vrot.slane %v5266, 2
        %v5268 = vadd.f32 %v5266, %v5267
        %v5269 = vrot.slane %v5268, 1
        %v5270 = vadd.f32 %v5268, %v5269
        %v5271 = vrot.slane %v5094, 4
        %v5272 = vadd.f32 %v5094, %v5271
        %v5273 = vrot.slane %v5272, 2
        %v5274 = vadd.f32 %v5272, %v5273
        %v5275 = vrot.slane %v5274, 1
        %v5276 = vadd.f32 %v5274, %v5275
        %v5277 = vrot.slane %v5095, 4
        %v5278 = vadd.f32 %v5095, %v5277
        %v5279 = vrot.slane %v5278, 2
        %v5280 = vadd.f32 %v5278, %v5279
        %v5281 = vrot.slane %v5280, 1
        %v5282 = vadd.f32 %v5280, %v5281
        %v5283 = vrot.slane %v5096, 4
        %v5284 = vadd.f32 %v5096, %v5283
        %v5285 = vrot.slane %v5284, 2
        %v5286 = vadd.f32 %v5284, %v5285
        %v5287 = vrot.slane %v5286, 1
        %v5288 = vadd.f32 %v5286, %v5287
        %v5289 = vmul.f32 %v5102, %v1050
        %v5290 = vmul.f32 %v5108, %v1050
        %v5291 = vmul.f32 %v5114, %v1050
        %v5292 = vmul.f32 %v5120, %v1050
        %v5293 = vmul.f32 %v5126, %v1050
        %v5294 = vmul.f32 %v5132, %v1050
        %v5295 = vmul.f32 %v5138, %v1050
        %v5296 = vmul.f32 %v5144, %v1050
        %v5297 = vmul.f32 %v5150, %v1050
        %v5298 = vmul.f32 %v5156, %v1050
        %v5299 = vmul.f32 %v5162, %v1050
        %v5300 = vmul.f32 %v5168, %v1050
        %v5301 = vmul.f32 %v5174, %v1050
        %v5302 = vmul.f32 %v5180, %v1050
        %v5303 = vmul.f32 %v5186, %v1050
        %v5304 = vmul.f32 %v5192, %v1050
        %v5305 = vmul.f32 %v5198, %v1050
        %v5306 = vmul.f32 %v5204, %v1050
        %v5307 = vmul.f32 %v5210, %v1050
        %v5308 = vmul.f32 %v5216, %v1050
        %v5309 = vmul.f32 %v5222, %v1050
        %v5310 = vmul.f32 %v5228, %v1050
        %v5311 = vmul.f32 %v5234, %v1050
        %v5312 = vmul.f32 %v5240, %v1050
        %v5313 = vmul.f32 %v5246, %v1050
        %v5314 = vmul.f32 %v5252, %v1050
        %v5315 = vmul.f32 %v5258, %v1050
        %v5316 = vmul.f32 %v5264, %v1050
        %v5317 = vmul.f32 %v5270, %v1050
        %v5318 = vmul.f32 %v5276, %v1050
        %v5319 = vmul.f32 %v5282, %v1050
        %v5320 = vmul.f32 %v5288, %v1050
        %v5321 = vld [vmem:[%s13] sm:$0xff]
        %v5322 = vadd.f32 %v5289, 0.8
        %v5323 = vadd.f32 %v5290, 0.8
        %v5324 = vadd.f32 %v5291, 0.8
        %v5325 = vadd.f32 %v5292, 0.8
        %v5326 = vadd.f32 %v5293, 0.8
        %v5327 = vadd.f32 %v5294, 0.8
        %v5328 = vadd.f32 %v5295, 0.8
        %v5329 = vadd.f32 %v5296, 0.8
        %v5330 = vadd.f32 %v5297, 0.8
        %v5331 = vadd.f32 %v5298, 0.8
        %v5332 = vadd.f32 %v5299, 0.8
        %v5333 = vadd.f32 %v5300, 0.8
        %v5334 = vadd.f32 %v5301, 0.8
        %v5335 = vadd.f32 %v5302, 0.8
        %v5336 = vadd.f32 %v5303, 0.8
        %v5337 = vadd.f32 %v5304, 0.8
        %v5338 = vadd.f32 %v5305, 0.8
        %v5339 = vadd.f32 %v5306, 0.8
        %v5340 = vadd.f32 %v5307, 0.8
        %v5341 = vadd.f32 %v5308, 0.8
        %v5342 = vadd.f32 %v5309, 0.8
        %v5343 = vadd.f32 %v5310, 0.8
        %v5344 = vadd.f32 %v5311, 0.8
        %v5345 = vadd.f32 %v5312, 0.8
        %v5346 = vadd.f32 %v5313, 0.8
        %v5347 = vadd.f32 %v5314, 0.8
        %v5348 = vadd.f32 %v5315, 0.8
        %v5349 = vadd.f32 %v5316, 0.8
        %v5350 = vadd.f32 %v5317, 0.8
        %v5351 = vadd.f32 %v5318, 0.8
        %v5352 = vadd.f32 %v5319, 0.8
        %v5353 = vadd.f32 %v5320, 0.8
        %v5354 = vrsqrt.pop %v5322
        %v5355 = vrsqrt.pop %v5323
        %v5356 = vrsqrt.pop %v5324
        %v5357 = vrsqrt.pop %v5325
        %v5358 = vrsqrt.pop %v5326
        %v5359 = vrsqrt.pop %v5327
        %v5360 = vrsqrt.pop %v5328
        %v5361 = vrsqrt.pop %v5329
        %v5362 = vrsqrt.pop %v5330
        %v5363 = vrsqrt.pop %v5331
        %v5364 = vrsqrt.pop %v5332
        %v5365 = vrsqrt.pop %v5333
        %v5366 = vrsqrt.pop %v5334
        %v5367 = vrsqrt.pop %v5335
        %v5368 = vrsqrt.pop %v5336
        %v5369 = vrsqrt.pop %v5337
        %v5370 = vrsqrt.pop %v5338
        %v5371 = vrsqrt.pop %v5339
        %v5372 = vrsqrt.pop %v5340
        %v5373 = vrsqrt.pop %v5341
        %v5374 = vrsqrt.pop %v5342
        %v5375 = vrsqrt.pop %v5343
        %v5376 = vrsqrt.pop %v5344
        %v5377 = vrsqrt.pop %v5345
        %v5378 = vrsqrt.pop %v5346
        %v5379 = vrsqrt.pop %v5347
        %v5380 = vrsqrt.pop %v5348
        %v5381 = vrsqrt.pop %v5349
        %v5382 = vrsqrt.pop %v5350
        %v5383 = vrsqrt.pop %v5351
        %v5384 = vrsqrt.pop %v5352
        %v5385 = vrsqrt.pop %v5353
        %v5418 = vcombine.low %v5354, %v5355
        %v5419 = vcombine.low %v5356, %v5357
        %v5420 = vcombine.low %v5358, %v5359
        %v5421 = vcombine.low %v5360, %v5361
        %v5423 = vunpack.c.l.s4 1966171168
        %v5424 = vunpack.c.0.s8 %v5423
        %v5425 = vlaneseq
        %v5426 = vshrl.u32 %v5425, 7
        %v5427 = vsub.s32 %v5424, %v5426
        %v5428 = vrot.slane %v5418, %v5427
        %v5430 = vunpack.c.l.s4 1966171168
        %v5431 = vunpack.c.0.s8 %v5430
        %v5432 = vlaneseq
        %v5433 = vshrl.u32 %v5432, 7
        %v5434 = vsub.s32 %v5431, %v5433
        %v5435 = vrot.slane %v5419, %v5434
        %v5437 = vunpack.c.l.s4 1966171168
        %v5438 = vunpack.c.0.s8 %v5437
        %v5439 = vlaneseq
        %v5440 = vshrl.u32 %v5439, 7
        %v5441 = vsub.s32 %v5438, %v5440
        %v5442 = vrot.slane %v5420, %v5441
        %v5444 = vunpack.c.l.s4 1966171168
        %v5445 = vunpack.c.0.s8 %v5444
        %v5446 = vlaneseq
        %v5447 = vshrl.u32 %v5446, 7
        %v5448 = vsub.s32 %v5445, %v5447
        %v5449 = vrot.slane %v5421, %v5448
        %v5450 = vcombine.low %v5428, %v5435
        %v5451 = vcombine.low %v5442, %v5449
        %v5453 = vunpack.c.l.s4 1966171168
        %v5454 = vunpack.c.0.s8 %v5453
        %v5455 = vlaneseq
        %v5456 = vshrl.u32 %v5455, 7
        %v5457 = vsub.s32 %v5454, %v5456
        %v5458 = vrot.slane %v5450, %v5457
        %v5460 = vunpack.c.l.s4 1966171168
        %v5461 = vunpack.c.0.s8 %v5460
        %v5462 = vlaneseq
        %v5463 = vshrl.u32 %v5462, 7
        %v5464 = vsub.s32 %v5461, %v5463
        %v5465 = vrot.slane %v5451, %v5464
        %v5466 = vcombine.low %v5458, %v5465
        %v5467 = vcombine.low %v5362, %v5363
        %v5468 = vcombine.low %v5364, %v5365
        %v5469 = vcombine.low %v5366, %v5367
        %v5470 = vcombine.low %v5368, %v5369
        %v5472 = vunpack.c.l.s4 1966171168
        %v5473 = vunpack.c.0.s8 %v5472
        %v5474 = vlaneseq
        %v5475 = vshrl.u32 %v5474, 7
        %v5476 = vsub.s32 %v5473, %v5475
        %v5477 = vrot.slane %v5467, %v5476
        %v5479 = vunpack.c.l.s4 1966171168
        %v5480 = vunpack.c.0.s8 %v5479
        %v5481 = vlaneseq
        %v5482 = vshrl.u32 %v5481, 7
        %v5483 = vsub.s32 %v5480, %v5482
        %v5484 = vrot.slane %v5468, %v5483
        %v5486 = vunpack.c.l.s4 1966171168
        %v5487 = vunpack.c.0.s8 %v5486
        %v5488 = vlaneseq
        %v5489 = vshrl.u32 %v5488, 7
        %v5490 = vsub.s32 %v5487, %v5489
        %v5491 = vrot.slane %v5469, %v5490
        %v5493 = vunpack.c.l.s4 1966171168
        %v5494 = vunpack.c.0.s8 %v5493
        %v5495 = vlaneseq
        %v5496 = vshrl.u32 %v5495, 7
        %v5497 = vsub.s32 %v5494, %v5496
        %v5498 = vrot.slane %v5470, %v5497
        %v5499 = vcombine.low %v5477, %v5484
        %v5500 = vcombine.low %v5491, %v5498
        %v5502 = vunpack.c.l.s4 1966171168
        %v5503 = vunpack.c.0.s8 %v5502
        %v5504 = vlaneseq
        %v5505 = vshrl.u32 %v5504, 7
        %v5506 = vsub.s32 %v5503, %v5505
        %v5507 = vrot.slane %v5499, %v5506
        %v5509 = vunpack.c.l.s4 1966171168
        %v5510 = vunpack.c.0.s8 %v5509
        %v5511 = vlaneseq
        %v5512 = vshrl.u32 %v5511, 7
        %v5513 = vsub.s32 %v5510, %v5512
        %v5514 = vrot.slane %v5500, %v5513
        %v5515 = vcombine.low %v5507, %v5514
        %v5516 = vcombine.low %v5370, %v5371
        %v5517 = vcombine.low %v5372, %v5373
        %v5518 = vcombine.low %v5374, %v5375
        %v5519 = vcombine.low %v5376, %v5377
        %v5521 = vunpack.c.l.s4 1966171168
        %v5522 = vunpack.c.0.s8 %v5521
        %v5523 = vlaneseq
        %v5524 = vshrl.u32 %v5523, 7
        %v5525 = vsub.s32 %v5522, %v5524
        %v5526 = vrot.slane %v5516, %v5525
        %v5528 = vunpack.c.l.s4 1966171168
        %v5529 = vunpack.c.0.s8 %v5528
        %v5530 = vlaneseq
        %v5531 = vshrl.u32 %v5530, 7
        %v5532 = vsub.s32 %v5529, %v5531
        %v5533 = vrot.slane %v5517, %v5532
        %v5535 = vunpack.c.l.s4 1966171168
        %v5536 = vunpack.c.0.s8 %v5535
        %v5537 = vlaneseq
        %v5538 = vshrl.u32 %v5537, 7
        %v5539 = vsub.s32 %v5536, %v5538
        %v5540 = vrot.slane %v5518, %v5539
        %v5542 = vunpack.c.l.s4 1966171168
        %v5543 = vunpack.c.0.s8 %v5542
        %v5544 = vlaneseq
        %v5545 = vshrl.u32 %v5544, 7
        %v5546 = vsub.s32 %v5543, %v5545
        %v5547 = vrot.slane %v5519, %v5546
        %v5548 = vcombine.low %v5526, %v5533
        %v5549 = vcombine.low %v5540, %v5547
        %v5551 = vunpack.c.l.s4 1966171168
        %v5552 = vunpack.c.0.s8 %v5551
        %v5553 = vlaneseq
        %v5554 = vshrl.u32 %v5553, 7
        %v5555 = vsub.s32 %v5552, %v5554
        %v5556 = vrot.slane %v5548, %v5555
        %v5558 = vunpack.c.l.s4 1966171168
        %v5559 = vunpack.c.0.s8 %v5558
        %v5560 = vlaneseq
        %v5561 = vshrl.u32 %v5560, 7
        %v5562 = vsub.s32 %v5559, %v5561
        %v5563 = vrot.slane %v5549, %v5562
        %v5564 = vcombine.low %v5556, %v5563
        %v5565 = vcombine.low %v5378, %v5379
        %v5566 = vcombine.low %v5380, %v5381
        %v5567 = vcombine.low %v5382, %v5383
        %v5568 = vcombine.low %v5384, %v5385
        %v5570 = vunpack.c.l.s4 1966171168
        %v5571 = vunpack.c.0.s8 %v5570
        %v5572 = vlaneseq
        %v5573 = vshrl.u32 %v5572, 7
        %v5574 = vsub.s32 %v5571, %v5573
        %v5575 = vrot.slane %v5565, %v5574
        %v5577 = vunpack.c.l.s4 1966171168
        %v5578 = vunpack.c.0.s8 %v5577
        %v5579 = vlaneseq
        %v5580 = vshrl.u32 %v5579, 7
        %v5581 = vsub.s32 %v5578, %v5580
        %v5582 = vrot.slane %v5566, %v5581
        %v5584 = vunpack.c.l.s4 1966171168
        %v5585 = vunpack.c.0.s8 %v5584
        %v5586 = vlaneseq
        %v5587 = vshrl.u32 %v5586, 7
        %v5588 = vsub.s32 %v5585, %v5587
        %v5589 = vrot.slane %v5567, %v5588
        %v5591 = vunpack.c.l.s4 1966171168
        %v5592 = vunpack.c.0.s8 %v5591
        %v5593 = vlaneseq
        %v5594 = vshrl.u32 %v5593, 7
        %v5595 = vsub.s32 %v5592, %v5594
        %v5596 = vrot.slane %v5568, %v5595
        %v5597 = vcombine.low %v5575, %v5582
        %v5598 = vcombine.low %v5589, %v5596
        %v5600 = vunpack.c.l.s4 1966171168
        %v5601 = vunpack.c.0.s8 %v5600
        %v5602 = vlaneseq
        %v5603 = vshrl.u32 %v5602, 7
        %v5604 = vsub.s32 %v5601, %v5603
        %v5605 = vrot.slane %v5597, %v5604
        %v5607 = vunpack.c.l.s4 1966171168
        %v5608 = vunpack.c.0.s8 %v5607
        %v5609 = vlaneseq
        %v5610 = vshrl.u32 %v5609, 7
        %v5611 = vsub.s32 %v5608, %v5610
        %v5612 = vrot.slane %v5598, %v5611
        %v5613 = vcombine.low %v5605, %v5612
        %v5618 = vmul.f32 %v5321, %v5466
        %v5619 = vmul.f32 %v5321, %v5515
        %v5620 = vmul.f32 %v5321, %v5564
        %v5621 = vmul.f32 %v5321, %v5613
        %v5622 = vld [vmem:[%s14] sm:$0xff]
        %v5627 = vlaneseq
        %v5628 = vshrl.u32 %v5627, 7
        %v5629 = vsub.s32 0, %v5628
        %v5630 = vrot.slane %v5618, %v5629
        %v5631 = vlaneseq
        %v5632 = vshrl.u32 %v5631, 7
        %v5633 = vsub.s32 1, %v5632
        %v5634 = vrot.slane %v5618, %v5633
        %v5635 = vlaneseq
        %v5636 = vshrl.u32 %v5635, 7
        %v5637 = vsub.s32 2, %v5636
        %v5638 = vrot.slane %v5618, %v5637
        %v5639 = vlaneseq
        %v5640 = vshrl.u32 %v5639, 7
        %v5641 = vsub.s32 3, %v5640
        %v5642 = vrot.slane %v5618, %v5641
        %v5643 = vlaneseq
        %v5644 = vshrl.u32 %v5643, 7
        %v5645 = vsub.s32 4, %v5644
        %v5646 = vrot.slane %v5618, %v5645
        %v5647 = vlaneseq
        %v5648 = vshrl.u32 %v5647, 7
        %v5649 = vsub.s32 5, %v5648
        %v5650 = vrot.slane %v5618, %v5649
        %v5651 = vlaneseq
        %v5652 = vshrl.u32 %v5651, 7
        %v5653 = vsub.s32 6, %v5652
        %v5654 = vrot.slane %v5618, %v5653
        %v5655 = vlaneseq
        %v5656 = vshrl.u32 %v5655, 7
        %v5657 = vsub.s32 7, %v5656
        %v5658 = vrot.slane %v5618, %v5657
        %v5659 = vlaneseq
        %v5660 = vshrl.u32 %v5659, 7
        %v5661 = vsub.s32 0, %v5660
        %v5662 = vrot.slane %v5619, %v5661
        %v5663 = vlaneseq
        %v5664 = vshrl.u32 %v5663, 7
        %v5665 = vsub.s32 1, %v5664
        %v5666 = vrot.slane %v5619, %v5665
        %v5667 = vlaneseq
        %v5668 = vshrl.u32 %v5667, 7
        %v5669 = vsub.s32 2, %v5668
        %v5670 = vrot.slane %v5619, %v5669
        %v5671 = vlaneseq
        %v5672 = vshrl.u32 %v5671, 7
        %v5673 = vsub.s32 3, %v5672
        %v5674 = vrot.slane %v5619, %v5673
        %v5675 = vlaneseq
        %v5676 = vshrl.u32 %v5675, 7
        %v5677 = vsub.s32 4, %v5676
        %v5678 = vrot.slane %v5619, %v5677
        %v5679 = vlaneseq
        %v5680 = vshrl.u32 %v5679, 7
        %v5681 = vsub.s32 5, %v5680
        %v5682 = vrot.slane %v5619, %v5681
        %v5683 = vlaneseq
        %v5684 = vshrl.u32 %v5683, 7
        %v5685 = vsub.s32 6, %v5684
        %v5686 = vrot.slane %v5619, %v5685
        %v5687 = vlaneseq
        %v5688 = vshrl.u32 %v5687, 7
        %v5689 = vsub.s32 7, %v5688
        %v5690 = vrot.slane %v5619, %v5689
        %v5691 = vlaneseq
        %v5692 = vshrl.u32 %v5691, 7
        %v5693 = vsub.s32 0, %v5692
        %v5694 = vrot.slane %v5620, %v5693
        %v5695 = vlaneseq
        %v5696 = vshrl.u32 %v5695, 7
        %v5697 = vsub.s32 1, %v5696
        %v5698 = vrot.slane %v5620, %v5697
        %v5699 = vlaneseq
        %v5700 = vshrl.u32 %v5699, 7
        %v5701 = vsub.s32 2, %v5700
        %v5702 = vrot.slane %v5620, %v5701
        %v5703 = vlaneseq
        %v5704 = vshrl.u32 %v5703, 7
        %v5705 = vsub.s32 3, %v5704
        %v5706 = vrot.slane %v5620, %v5705
        %v5707 = vlaneseq
        %v5708 = vshrl.u32 %v5707, 7
        %v5709 = vsub.s32 4, %v5708
        %v5710 = vrot.slane %v5620, %v5709
        %v5711 = vlaneseq
        %v5712 = vshrl.u32 %v5711, 7
        %v5713 = vsub.s32 5, %v5712
        %v5714 = vrot.slane %v5620, %v5713
        %v5715 = vlaneseq
        %v5716 = vshrl.u32 %v5715, 7
        %v5717 = vsub.s32 6, %v5716
        %v5718 = vrot.slane %v5620, %v5717
        %v5719 = vlaneseq
        %v5720 = vshrl.u32 %v5719, 7
        %v5721 = vsub.s32 7, %v5720
        %v5722 = vrot.slane %v5620, %v5721
        %v5723 = vlaneseq
        %v5724 = vshrl.u32 %v5723, 7
        %v5725 = vsub.s32 0, %v5724
        %v5726 = vrot.slane %v5621, %v5725
        %v5727 = vlaneseq
        %v5728 = vshrl.u32 %v5727, 7
        %v5729 = vsub.s32 1, %v5728
        %v5730 = vrot.slane %v5621, %v5729
        %v5731 = vlaneseq
        %v5732 = vshrl.u32 %v5731, 7
        %v5733 = vsub.s32 2, %v5732
        %v5734 = vrot.slane %v5621, %v5733
        %v5735 = vlaneseq
        %v5736 = vshrl.u32 %v5735, 7
        %v5737 = vsub.s32 3, %v5736
        %v5738 = vrot.slane %v5621, %v5737
        %v5739 = vlaneseq
        %v5740 = vshrl.u32 %v5739, 7
        %v5741 = vsub.s32 4, %v5740
        %v5742 = vrot.slane %v5621, %v5741
        %v5743 = vlaneseq
        %v5744 = vshrl.u32 %v5743, 7
        %v5745 = vsub.s32 5, %v5744
        %v5746 = vrot.slane %v5621, %v5745
        %v5747 = vlaneseq
        %v5748 = vshrl.u32 %v5747, 7
        %v5749 = vsub.s32 6, %v5748
        %v5750 = vrot.slane %v5621, %v5749
        %v5751 = vlaneseq
        %v5752 = vshrl.u32 %v5751, 7
        %v5753 = vsub.s32 7, %v5752
        %v5754 = vrot.slane %v5621, %v5753
        %v5787 = vmul.f32 %v5001, %v5630
        %v5788 = vmul.f32 %v5002, %v5634
        %v5789 = vmul.f32 %v5003, %v5638
        %v5790 = vmul.f32 %v5004, %v5642
        %v5791 = vmul.f32 %v5005, %v5646
        %v5792 = vmul.f32 %v5006, %v5650
        %v5793 = vmul.f32 %v5007, %v5654
        %v5794 = vmul.f32 %v5008, %v5658
        %v5795 = vmul.f32 %v5009, %v5662
        %v5796 = vmul.f32 %v5010, %v5666
        %v5797 = vmul.f32 %v5011, %v5670
        %v5798 = vmul.f32 %v5012, %v5674
        %v5799 = vmul.f32 %v5013, %v5678
        %v5800 = vmul.f32 %v5014, %v5682
        %v5801 = vmul.f32 %v5015, %v5686
        %v5802 = vmul.f32 %v5016, %v5690
        %v5803 = vmul.f32 %v5017, %v5694
        %v5804 = vmul.f32 %v5018, %v5698
        %v5805 = vmul.f32 %v5019, %v5702
        %v5806 = vmul.f32 %v5020, %v5706
        %v5807 = vmul.f32 %v5021, %v5710
        %v5808 = vmul.f32 %v5022, %v5714
        %v5809 = vmul.f32 %v5023, %v5718
        %v5810 = vmul.f32 %v5024, %v5722
        %v5811 = vmul.f32 %v5025, %v5726
        %v5812 = vmul.f32 %v5026, %v5730
        %v5813 = vmul.f32 %v5027, %v5734
        %v5814 = vmul.f32 %v5028, %v5738
        %v5815 = vmul.f32 %v5029, %v5742
        %v5816 = vmul.f32 %v5030, %v5746
        %v5817 = vmul.f32 %v5031, %v5750
        %v5818 = vmul.f32 %v5032, %v5754
        %v5851 = vcombine.low %v5787, %v5788
        %v5852 = vcombine.low %v5789, %v5790
        %v5853 = vcombine.low %v5791, %v5792
        %v5854 = vcombine.low %v5793, %v5794
        %v5856 = vunpack.c.l.s4 1966171168
        %v5857 = vunpack.c.0.s8 %v5856
        %v5858 = vlaneseq
        %v5859 = vshrl.u32 %v5858, 7
        %v5860 = vsub.s32 %v5857, %v5859
        %v5861 = vrot.slane %v5851, %v5860
        %v5863 = vunpack.c.l.s4 1966171168
        %v5864 = vunpack.c.0.s8 %v5863
        %v5865 = vlaneseq
        %v5866 = vshrl.u32 %v5865, 7
        %v5867 = vsub.s32 %v5864, %v5866
        %v5868 = vrot.slane %v5852, %v5867
        %v5870 = vunpack.c.l.s4 1966171168
        %v5871 = vunpack.c.0.s8 %v5870
        %v5872 = vlaneseq
        %v5873 = vshrl.u32 %v5872, 7
        %v5874 = vsub.s32 %v5871, %v5873
        %v5875 = vrot.slane %v5853, %v5874
        %v5877 = vunpack.c.l.s4 1966171168
        %v5878 = vunpack.c.0.s8 %v5877
        %v5879 = vlaneseq
        %v5880 = vshrl.u32 %v5879, 7
        %v5881 = vsub.s32 %v5878, %v5880
        %v5882 = vrot.slane %v5854, %v5881
        %v5883 = vcombine.low %v5861, %v5868
        %v5884 = vcombine.low %v5875, %v5882
        %v5886 = vunpack.c.l.s4 1966171168
        %v5887 = vunpack.c.0.s8 %v5886
        %v5888 = vlaneseq
        %v5889 = vshrl.u32 %v5888, 7
        %v5890 = vsub.s32 %v5887, %v5889
        %v5891 = vrot.slane %v5883, %v5890
        %v5893 = vunpack.c.l.s4 1966171168
        %v5894 = vunpack.c.0.s8 %v5893
        %v5895 = vlaneseq
        %v5896 = vshrl.u32 %v5895, 7
        %v5897 = vsub.s32 %v5894, %v5896
        %v5898 = vrot.slane %v5884, %v5897
        %v5899 = vcombine.low %v5891, %v5898
        %v5900 = vcombine.low %v5795, %v5796
        %v5901 = vcombine.low %v5797, %v5798
        %v5902 = vcombine.low %v5799, %v5800
        %v5903 = vcombine.low %v5801, %v5802
        %v5905 = vunpack.c.l.s4 1966171168
        %v5906 = vunpack.c.0.s8 %v5905
        %v5907 = vlaneseq
        %v5908 = vshrl.u32 %v5907, 7
        %v5909 = vsub.s32 %v5906, %v5908
        %v5910 = vrot.slane %v5900, %v5909
        %v5912 = vunpack.c.l.s4 1966171168
        %v5913 = vunpack.c.0.s8 %v5912
        %v5914 = vlaneseq
        %v5915 = vshrl.u32 %v5914, 7
        %v5916 = vsub.s32 %v5913, %v5915
        %v5917 = vrot.slane %v5901, %v5916
        %v5919 = vunpack.c.l.s4 1966171168
        %v5920 = vunpack.c.0.s8 %v5919
        %v5921 = vlaneseq
        %v5922 = vshrl.u32 %v5921, 7
        %v5923 = vsub.s32 %v5920, %v5922
        %v5924 = vrot.slane %v5902, %v5923
        %v5926 = vunpack.c.l.s4 1966171168
        %v5927 = vunpack.c.0.s8 %v5926
        %v5928 = vlaneseq
        %v5929 = vshrl.u32 %v5928, 7
        %v5930 = vsub.s32 %v5927, %v5929
        %v5931 = vrot.slane %v5903, %v5930
        %v5932 = vcombine.low %v5910, %v5917
        %v5933 = vcombine.low %v5924, %v5931
        %v5935 = vunpack.c.l.s4 1966171168
        %v5936 = vunpack.c.0.s8 %v5935
        %v5937 = vlaneseq
        %v5938 = vshrl.u32 %v5937, 7
        %v5939 = vsub.s32 %v5936, %v5938
        %v5940 = vrot.slane %v5932, %v5939
        %v5942 = vunpack.c.l.s4 1966171168
        %v5943 = vunpack.c.0.s8 %v5942
        %v5944 = vlaneseq
        %v5945 = vshrl.u32 %v5944, 7
        %v5946 = vsub.s32 %v5943, %v5945
        %v5947 = vrot.slane %v5933, %v5946
        %v5948 = vcombine.low %v5940, %v5947
        %v5949 = vcombine.low %v5803, %v5804
        %v5950 = vcombine.low %v5805, %v5806
        %v5951 = vcombine.low %v5807, %v5808
        %v5952 = vcombine.low %v5809, %v5810
        %v5954 = vunpack.c.l.s4 1966171168
        %v5955 = vunpack.c.0.s8 %v5954
        %v5956 = vlaneseq
        %v5957 = vshrl.u32 %v5956, 7
        %v5958 = vsub.s32 %v5955, %v5957
        %v5959 = vrot.slane %v5949, %v5958
        %v5961 = vunpack.c.l.s4 1966171168
        %v5962 = vunpack.c.0.s8 %v5961
        %v5963 = vlaneseq
        %v5964 = vshrl.u32 %v5963, 7
        %v5965 = vsub.s32 %v5962, %v5964
        %v5966 = vrot.slane %v5950, %v5965
        %v5968 = vunpack.c.l.s4 1966171168
        %v5969 = vunpack.c.0.s8 %v5968
        %v5970 = vlaneseq
        %v5971 = vshrl.u32 %v5970, 7
        %v5972 = vsub.s32 %v5969, %v5971
        %v5973 = vrot.slane %v5951, %v5972
        %v5975 = vunpack.c.l.s4 1966171168
        %v5976 = vunpack.c.0.s8 %v5975
        %v5977 = vlaneseq
        %v5978 = vshrl.u32 %v5977, 7
        %v5979 = vsub.s32 %v5976, %v5978
        %v5980 = vrot.slane %v5952, %v5979
        %v5981 = vcombine.low %v5959, %v5966
        %v5982 = vcombine.low %v5973, %v5980
        %v5984 = vunpack.c.l.s4 1966171168
        %v5985 = vunpack.c.0.s8 %v5984
        %v5986 = vlaneseq
        %v5987 = vshrl.u32 %v5986, 7
        %v5988 = vsub.s32 %v5985, %v5987
        %v5989 = vrot.slane %v5981, %v5988
        %v5991 = vunpack.c.l.s4 1966171168
        %v5992 = vunpack.c.0.s8 %v5991
        %v5993 = vlaneseq
        %v5994 = vshrl.u32 %v5993, 7
        %v5995 = vsub.s32 %v5992, %v5994
        %v5996 = vrot.slane %v5982, %v5995
        %v5997 = vcombine.low %v5989, %v5996
        %v5998 = vcombine.low %v5811, %v5812
        %v5999 = vcombine.low %v5813, %v5814
        %v6000 = vcombine.low %v5815, %v5816
        %v6001 = vcombine.low %v5817, %v5818
        %v6003 = vunpack.c.l.s4 1966171168
        %v6004 = vunpack.c.0.s8 %v6003
        %v6005 = vlaneseq
        %v6006 = vshrl.u32 %v6005, 7
        %v6007 = vsub.s32 %v6004, %v6006
        %v6008 = vrot.slane %v5998, %v6007
        %v6010 = vunpack.c.l.s4 1966171168
        %v6011 = vunpack.c.0.s8 %v6010
        %v6012 = vlaneseq
        %v6013 = vshrl.u32 %v6012, 7
        %v6014 = vsub.s32 %v6011, %v6013
        %v6015 = vrot.slane %v5999, %v6014
        %v6017 = vunpack.c.l.s4 1966171168
        %v6018 = vunpack.c.0.s8 %v6017
        %v6019 = vlaneseq
        %v6020 = vshrl.u32 %v6019, 7
        %v6021 = vsub.s32 %v6018, %v6020
        %v6022 = vrot.slane %v6000, %v6021
        %v6024 = vunpack.c.l.s4 1966171168
        %v6025 = vunpack.c.0.s8 %v6024
        %v6026 = vlaneseq
        %v6027 = vshrl.u32 %v6026, 7
        %v6028 = vsub.s32 %v6025, %v6027
        %v6029 = vrot.slane %v6001, %v6028
        %v6030 = vcombine.low %v6008, %v6015
        %v6031 = vcombine.low %v6022, %v6029
        %v6033 = vunpack.c.l.s4 1966171168
        %v6034 = vunpack.c.0.s8 %v6033
        %v6035 = vlaneseq
        %v6036 = vshrl.u32 %v6035, 7
        %v6037 = vsub.s32 %v6034, %v6036
        %v6038 = vrot.slane %v6030, %v6037
        %v6040 = vunpack.c.l.s4 1966171168
        %v6041 = vunpack.c.0.s8 %v6040
        %v6042 = vlaneseq
        %v6043 = vshrl.u32 %v6042, 7
        %v6044 = vsub.s32 %v6041, %v6043
        %v6045 = vrot.slane %v6031, %v6044
        %v6046 = vcombine.low %v6038, %v6045
        %v6051 = vsub.f32 %v5622, %v5899
        %v6052 = vsub.f32 %v5622, %v5948
        %v6053 = vsub.f32 %v5622, %v5997
        %v6054 = vsub.f32 %v5622, %v6046
        %v6055 = vmul.f32 %v4473, %v5630
        %v6056 = vmul.f32 %v4475, %v5634
        %v6057 = vmul.f32 %v4579, %v5638
        %v6058 = vmul.f32 %v4581, %v5642
        %v6059 = vmul.f32 %v4685, %v5646
        %v6060 = vmul.f32 %v4687, %v5650
        %v6061 = vmul.f32 %v4791, %v5654
        %v6062 = vmul.f32 %v4793, %v5658
        %v6063 = vmul.f32 %v4477, %v5662
        %v6064 = vmul.f32 %v4479, %v5666
        %v6065 = vmul.f32 %v4583, %v5670
        %v6066 = vmul.f32 %v4585, %v5674
        %v6067 = vmul.f32 %v4689, %v5678
        %v6068 = vmul.f32 %v4691, %v5682
        %v6069 = vmul.f32 %v4795, %v5686
        %v6070 = vmul.f32 %v4797, %v5690
        %v6071 = vmul.f32 %v4483, %v5694
        %v6072 = vmul.f32 %v4485, %v5698
        %v6073 = vmul.f32 %v4589, %v5702
        %v6074 = vmul.f32 %v4591, %v5706
        %v6075 = vmul.f32 %v4695, %v5710
        %v6076 = vmul.f32 %v4697, %v5714
        %v6077 = vmul.f32 %v4801, %v5718
        %v6078 = vmul.f32 %v4803, %v5722
        %v6079 = vmul.f32 %v4487, %v5726
        %v6080 = vmul.f32 %v4489, %v5730
        %v6081 = vmul.f32 %v4593, %v5734
        %v6082 = vmul.f32 %v4595, %v5738
        %v6083 = vmul.f32 %v4699, %v5742
        %v6084 = vmul.f32 %v4701, %v5746
        %v6085 = vmul.f32 %v4805, %v5750
        %v6086 = vmul.f32 %v4807, %v5754
        %v6091 = vlaneseq
        %v6092 = vshrl.u32 %v6091, 7
        %v6093 = vsub.s32 0, %v6092
        %v6094 = vrot.slane %v6051, %v6093
        %v6095 = vlaneseq
        %v6096 = vshrl.u32 %v6095, 7
        %v6097 = vsub.s32 1, %v6096
        %v6098 = vrot.slane %v6051, %v6097
        %v6099 = vlaneseq
        %v6100 = vshrl.u32 %v6099, 7
        %v6101 = vsub.s32 2, %v6100
        %v6102 = vrot.slane %v6051, %v6101
        %v6103 = vlaneseq
        %v6104 = vshrl.u32 %v6103, 7
        %v6105 = vsub.s32 3, %v6104
        %v6106 = vrot.slane %v6051, %v6105
        %v6107 = vlaneseq
        %v6108 = vshrl.u32 %v6107, 7
        %v6109 = vsub.s32 4, %v6108
        %v6110 = vrot.slane %v6051, %v6109
        %v6111 = vlaneseq
        %v6112 = vshrl.u32 %v6111, 7
        %v6113 = vsub.s32 5, %v6112
        %v6114 = vrot.slane %v6051, %v6113
        %v6115 = vlaneseq
        %v6116 = vshrl.u32 %v6115, 7
        %v6117 = vsub.s32 6, %v6116
        %v6118 = vrot.slane %v6051, %v6117
        %v6119 = vlaneseq
        %v6120 = vshrl.u32 %v6119, 7
        %v6121 = vsub.s32 7, %v6120
        %v6122 = vrot.slane %v6051, %v6121
        %v6123 = vlaneseq
        %v6124 = vshrl.u32 %v6123, 7
        %v6125 = vsub.s32 0, %v6124
        %v6126 = vrot.slane %v6052, %v6125
        %v6127 = vlaneseq
        %v6128 = vshrl.u32 %v6127, 7
        %v6129 = vsub.s32 1, %v6128
        %v6130 = vrot.slane %v6052, %v6129
        %v6131 = vlaneseq
        %v6132 = vshrl.u32 %v6131, 7
        %v6133 = vsub.s32 2, %v6132
        %v6134 = vrot.slane %v6052, %v6133
        %v6135 = vlaneseq
        %v6136 = vshrl.u32 %v6135, 7
        %v6137 = vsub.s32 3, %v6136
        %v6138 = vrot.slane %v6052, %v6137
        %v6139 = vlaneseq
        %v6140 = vshrl.u32 %v6139, 7
        %v6141 = vsub.s32 4, %v6140
        %v6142 = vrot.slane %v6052, %v6141
        %v6143 = vlaneseq
        %v6144 = vshrl.u32 %v6143, 7
        %v6145 = vsub.s32 5, %v6144
        %v6146 = vrot.slane %v6052, %v6145
        %v6147 = vlaneseq
        %v6148 = vshrl.u32 %v6147, 7
        %v6149 = vsub.s32 6, %v6148
        %v6150 = vrot.slane %v6052, %v6149
        %v6151 = vlaneseq
        %v6152 = vshrl.u32 %v6151, 7
        %v6153 = vsub.s32 7, %v6152
        %v6154 = vrot.slane %v6052, %v6153
        %v6155 = vlaneseq
        %v6156 = vshrl.u32 %v6155, 7
        %v6157 = vsub.s32 0, %v6156
        %v6158 = vrot.slane %v6053, %v6157
        %v6159 = vlaneseq
        %v6160 = vshrl.u32 %v6159, 7
        %v6161 = vsub.s32 1, %v6160
        %v6162 = vrot.slane %v6053, %v6161
        %v6163 = vlaneseq
        %v6164 = vshrl.u32 %v6163, 7
        %v6165 = vsub.s32 2, %v6164
        %v6166 = vrot.slane %v6053, %v6165
        %v6167 = vlaneseq
        %v6168 = vshrl.u32 %v6167, 7
        %v6169 = vsub.s32 3, %v6168
        %v6170 = vrot.slane %v6053, %v6169
        %v6171 = vlaneseq
        %v6172 = vshrl.u32 %v6171, 7
        %v6173 = vsub.s32 4, %v6172
        %v6174 = vrot.slane %v6053, %v6173
        %v6175 = vlaneseq
        %v6176 = vshrl.u32 %v6175, 7
        %v6177 = vsub.s32 5, %v6176
        %v6178 = vrot.slane %v6053, %v6177
        %v6179 = vlaneseq
        %v6180 = vshrl.u32 %v6179, 7
        %v6181 = vsub.s32 6, %v6180
        %v6182 = vrot.slane %v6053, %v6181
        %v6183 = vlaneseq
        %v6184 = vshrl.u32 %v6183, 7
        %v6185 = vsub.s32 7, %v6184
        %v6186 = vrot.slane %v6053, %v6185
        %v6187 = vlaneseq
        %v6188 = vshrl.u32 %v6187, 7
        %v6189 = vsub.s32 0, %v6188
        %v6190 = vrot.slane %v6054, %v6189
        %v6191 = vlaneseq
        %v6192 = vshrl.u32 %v6191, 7
        %v6193 = vsub.s32 1, %v6192
        %v6194 = vrot.slane %v6054, %v6193
        %v6195 = vlaneseq
        %v6196 = vshrl.u32 %v6195, 7
        %v6197 = vsub.s32 2, %v6196
        %v6198 = vrot.slane %v6054, %v6197
        %v6199 = vlaneseq
        %v6200 = vshrl.u32 %v6199, 7
        %v6201 = vsub.s32 3, %v6200
        %v6202 = vrot.slane %v6054, %v6201
        %v6203 = vlaneseq
        %v6204 = vshrl.u32 %v6203, 7
        %v6205 = vsub.s32 4, %v6204
        %v6206 = vrot.slane %v6054, %v6205
        %v6207 = vlaneseq
        %v6208 = vshrl.u32 %v6207, 7
        %v6209 = vsub.s32 5, %v6208
        %v6210 = vrot.slane %v6054, %v6209
        %v6211 = vlaneseq
        %v6212 = vshrl.u32 %v6211, 7
        %v6213 = vsub.s32 6, %v6212
        %v6214 = vrot.slane %v6054, %v6213
        %v6215 = vlaneseq
        %v6216 = vshrl.u32 %v6215, 7
        %v6217 = vsub.s32 7, %v6216
        %v6218 = vrot.slane %v6054, %v6217
        %v6251 = vadd.f32 %v6055, %v6094
        %v6252 = vadd.f32 %v6056, %v6098
        %v6253 = vadd.f32 %v6057, %v6102
        %v6254 = vadd.f32 %v6058, %v6106
        %v6255 = vadd.f32 %v6059, %v6110
        %v6256 = vadd.f32 %v6060, %v6114
        %v6257 = vadd.f32 %v6061, %v6118
        %v6258 = vadd.f32 %v6062, %v6122
        %v6259 = vadd.f32 %v6063, %v6126
        %v6260 = vadd.f32 %v6064, %v6130
        %v6261 = vadd.f32 %v6065, %v6134
        %v6262 = vadd.f32 %v6066, %v6138
        %v6263 = vadd.f32 %v6067, %v6142
        %v6264 = vadd.f32 %v6068, %v6146
        %v6265 = vadd.f32 %v6069, %v6150
        %v6266 = vadd.f32 %v6070, %v6154
        %v6267 = vadd.f32 %v6071, %v6158
        %v6268 = vadd.f32 %v6072, %v6162
        %v6269 = vadd.f32 %v6073, %v6166
        %v6270 = vadd.f32 %v6074, %v6170
        %v6271 = vadd.f32 %v6075, %v6174
        %v6272 = vadd.f32 %v6076, %v6178
        %v6273 = vadd.f32 %v6077, %v6182
        %v6274 = vadd.f32 %v6078, %v6186
        %v6275 = vadd.f32 %v6079, %v6190
        %v6276 = vadd.f32 %v6080, %v6194
        %v6277 = vadd.f32 %v6081, %v6198
        %v6278 = vadd.f32 %v6082, %v6202
        %v6279 = vadd.f32 %v6083, %v6206
        %v6280 = vadd.f32 %v6084, %v6210
        %v6281 = vadd.f32 %v6085, %v6214
        %v6282 = vadd.f32 %v6086, %v6218
        %vm6283 = vcmp.gt.f32.partialorder %v6251, 0.0
        %vm6284 = vcmp.gt.f32.partialorder %v6252, 0.0
        %vm6285 = vcmp.gt.f32.partialorder %v6253, 0.0
        %vm6286 = vcmp.gt.f32.partialorder %v6254, 0.0
        %vm6287 = vcmp.gt.f32.partialorder %v6255, 0.0
        %vm6288 = vcmp.gt.f32.partialorder %v6256, 0.0
        %vm6289 = vcmp.gt.f32.partialorder %v6257, 0.0
        %vm6290 = vcmp.gt.f32.partialorder %v6258, 0.0
        %vm6291 = vcmp.gt.f32.partialorder %v6259, 0.0
        %vm6292 = vcmp.gt.f32.partialorder %v6260, 0.0
        %vm6293 = vcmp.gt.f32.partialorder %v6261, 0.0
        %vm6294 = vcmp.gt.f32.partialorder %v6262, 0.0
        %vm6295 = vcmp.gt.f32.partialorder %v6263, 0.0
        %vm6296 = vcmp.gt.f32.partialorder %v6264, 0.0
        %vm6297 = vcmp.gt.f32.partialorder %v6265, 0.0
        %vm6298 = vcmp.gt.f32.partialorder %v6266, 0.0
        %vm6299 = vcmp.gt.f32.partialorder %v6267, 0.0
        %vm6300 = vcmp.gt.f32.partialorder %v6268, 0.0
        %vm6301 = vcmp.gt.f32.partialorder %v6269, 0.0
        %vm6302 = vcmp.gt.f32.partialorder %v6270, 0.0
        %vm6303 = vcmp.gt.f32.partialorder %v6271, 0.0
        %vm6304 = vcmp.gt.f32.partialorder %v6272, 0.0
        %vm6305 = vcmp.gt.f32.partialorder %v6273, 0.0
        %vm6306 = vcmp.gt.f32.partialorder %v6274, 0.0
        %vm6307 = vcmp.gt.f32.partialorder %v6275, 0.0
        %vm6308 = vcmp.gt.f32.partialorder %v6276, 0.0
        %vm6309 = vcmp.gt.f32.partialorder %v6277, 0.0
        %vm6310 = vcmp.gt.f32.partialorder %v6278, 0.0
        %vm6311 = vcmp.gt.f32.partialorder %v6279, 0.0
        %vm6312 = vcmp.gt.f32.partialorder %v6280, 0.0
        %vm6313 = vcmp.gt.f32.partialorder %v6281, 0.0
        %vm6314 = vcmp.gt.f32.partialorder %v6282, 0.0
        %v6315 = vmul.f32 %v6251, 0.2
        %v6316 = vmul.f32 %v6252, 0.2
        %v6317 = vmul.f32 %v6253, 0.2
        %v6318 = vmul.f32 %v6254, 0.2
        %v6319 = vmul.f32 %v6255, 0.2
        %v6320 = vmul.f32 %v6256, 0.2
        %v6321 = vmul.f32 %v6257, 0.2
        %v6322 = vmul.f32 %v6258, 0.2
        %v6323 = vmul.f32 %v6259, 0.2
        %v6324 = vmul.f32 %v6260, 0.2
        %v6325 = vmul.f32 %v6261, 0.2
        %v6326 = vmul.f32 %v6262, 0.2
        %v6327 = vmul.f32 %v6263, 0.2
        %v6328 = vmul.f32 %v6264, 0.2
        %v6329 = vmul.f32 %v6265, 0.2
        %v6330 = vmul.f32 %v6266, 0.2
        %v6331 = vmul.f32 %v6267, 0.2
        %v6332 = vmul.f32 %v6268, 0.2
        %v6333 = vmul.f32 %v6269, 0.2
        %v6334 = vmul.f32 %v6270, 0.2
        %v6335 = vmul.f32 %v6271, 0.2
        %v6336 = vmul.f32 %v6272, 0.2
        %v6337 = vmul.f32 %v6273, 0.2
        %v6338 = vmul.f32 %v6274, 0.2
        %v6339 = vmul.f32 %v6275, 0.2
        %v6340 = vmul.f32 %v6276, 0.2
        %v6341 = vmul.f32 %v6277, 0.2
        %v6342 = vmul.f32 %v6278, 0.2
        %v6343 = vmul.f32 %v6279, 0.2
        %v6344 = vmul.f32 %v6280, 0.2
        %v6345 = vmul.f32 %v6281, 0.2
        %v6346 = vmul.f32 %v6282, 0.2
        %v6347 = vsel %vm6283, %v6251, %v6315
        %v6348 = vsel %vm6284, %v6252, %v6316
        %v6349 = vsel %vm6285, %v6253, %v6317
        %v6350 = vsel %vm6286, %v6254, %v6318
        %v6351 = vsel %vm6287, %v6255, %v6319
        %v6352 = vsel %vm6288, %v6256, %v6320
        %v6353 = vsel %vm6289, %v6257, %v6321
        %v6354 = vsel %vm6290, %v6258, %v6322
        %v6355 = vsel %vm6291, %v6259, %v6323
        %v6356 = vsel %vm6292, %v6260, %v6324
        %v6357 = vsel %vm6293, %v6261, %v6325
        %v6358 = vsel %vm6294, %v6262, %v6326
        %v6359 = vsel %vm6295, %v6263, %v6327
        %v6360 = vsel %vm6296, %v6264, %v6328
        %v6361 = vsel %vm6297, %v6265, %v6329
        %v6362 = vsel %vm6298, %v6266, %v6330
        %v6363 = vsel %vm6299, %v6267, %v6331
        %v6364 = vsel %vm6300, %v6268, %v6332
        %v6365 = vsel %vm6301, %v6269, %v6333
        %v6366 = vsel %vm6302, %v6270, %v6334
        %v6367 = vsel %vm6303, %v6271, %v6335
        %v6368 = vsel %vm6304, %v6272, %v6336
        %v6369 = vsel %vm6305, %v6273, %v6337
        %v6370 = vsel %vm6306, %v6274, %v6338
        %v6371 = vsel %vm6307, %v6275, %v6339
        %v6372 = vsel %vm6308, %v6276, %v6340
        %v6373 = vsel %vm6309, %v6277, %v6341
        %v6374 = vsel %vm6310, %v6278, %v6342
        %v6375 = vsel %vm6311, %v6279, %v6343
        %v6376 = vsel %vm6312, %v6280, %v6344
        %v6377 = vsel %vm6313, %v6281, %v6345
        %v6378 = vsel %vm6314, %v6282, %v6346
        %v6379 = vpack.c.bf16 %v6355, %v6347
        %v6380 = vpack.c.bf16 %v6356, %v6348
        %v6381 = vpack.c.bf16 %v6357, %v6349
        %v6382 = vpack.c.bf16 %v6358, %v6350
        %v6383 = vpack.c.bf16 %v6359, %v6351
        %v6384 = vpack.c.bf16 %v6360, %v6352
        %v6385 = vpack.c.bf16 %v6361, %v6353
        %v6386 = vpack.c.bf16 %v6362, %v6354
        %v6387 = vpack.c.bf16 %v6371, %v6363
        %v6388 = vpack.c.bf16 %v6372, %v6364
        %v6389 = vpack.c.bf16 %v6373, %v6365
        %v6390 = vpack.c.bf16 %v6374, %v6366
        %v6391 = vpack.c.bf16 %v6375, %v6367
        %v6392 = vpack.c.bf16 %v6376, %v6368
        %v6393 = vpack.c.bf16 %v6377, %v6369
        %v6394 = vpack.c.bf16 %v6378, %v6370
        %v6395 = vld [vmem:[#allocation21] sm:$0xff]
        %v6396 = vld [vmem:[#allocation21 + $0x8] sm:$0xff]
        %v6397 = vld [vmem:[#allocation21 + $0x10] sm:$0xff]
        %v6398 = vld [vmem:[#allocation21 + $0x18] sm:$0xff]
        %v6399 = vld [vmem:[#allocation21 + $0x20] sm:$0xff]
        %v6400 = vld [vmem:[#allocation21 + $0x28] sm:$0xff]
        %v6401 = vld [vmem:[#allocation21 + $0x30] sm:$0xff]
        %v6402 = vld [vmem:[#allocation21 + $0x38] sm:$0xff]
        %v6403 = vld [vmem:[#allocation21 + $0x40] sm:$0xff]
        %v6404 = vld [vmem:[#allocation21 + $0x48] sm:$0xff]
        %v6405 = vld [vmem:[#allocation21 + $0x50] sm:$0xff]
        %v6406 = vld [vmem:[#allocation21 + $0x58] sm:$0xff]
        %v6407 = vld [vmem:[#allocation21 + $0x60] sm:$0xff]
        %v6408 = vld [vmem:[#allocation21 + $0x68] sm:$0xff]
        %v6409 = vld [vmem:[#allocation21 + $0x70] sm:$0xff]
        %v6410 = vld [vmem:[#allocation21 + $0x78] sm:$0xff]
        %v6411 = vld [vmem:[#allocation21 + $0x80] sm:$0xff]
        %v6412 = vld [vmem:[#allocation21 + $0x88] sm:$0xff]
        %v6413 = vld [vmem:[#allocation21 + $0x90] sm:$0xff]
        %v6414 = vld [vmem:[#allocation21 + $0x98] sm:$0xff]
        %v6415 = vld [vmem:[#allocation21 + $0xa0] sm:$0xff]
        %v6416 = vld [vmem:[#allocation21 + $0xa8] sm:$0xff]
        %v6417 = vld [vmem:[#allocation21 + $0xb0] sm:$0xff]
        %v6418 = vld [vmem:[#allocation21 + $0xb8] sm:$0xff]
        %v6419 = vld [vmem:[#allocation21 + $0xc0] sm:$0xff]
        %v6420 = vld [vmem:[#allocation21 + $0xc8] sm:$0xff]
        %v6421 = vld [vmem:[#allocation21 + $0xd0] sm:$0xff]
        %v6422 = vld [vmem:[#allocation21 + $0xd8] sm:$0xff]
        %v6423 = vld [vmem:[#allocation21 + $0xe0] sm:$0xff]
        %v6424 = vld [vmem:[#allocation21 + $0xe8] sm:$0xff]
        %v6425 = vld [vmem:[#allocation21 + $0xf0] sm:$0xff]
        %v6426 = vld [vmem:[#allocation21 + $0xf8] sm:$0xff]
        %v6427 = vld [vmem:[#allocation21 + $0x100] sm:$0xff]
        %v6428 = vld [vmem:[#allocation21 + $0x108] sm:$0xff]
        %v6429 = vld [vmem:[#allocation21 + $0x110] sm:$0xff]
        %v6430 = vld [vmem:[#allocation21 + $0x118] sm:$0xff]
        %v6431 = vld [vmem:[#allocation21 + $0x120] sm:$0xff]
        %v6432 = vld [vmem:[#allocation21 + $0x128] sm:$0xff]
        %v6433 = vld [vmem:[#allocation21 + $0x130] sm:$0xff]
        %v6434 = vld [vmem:[#allocation21 + $0x138] sm:$0xff]
        %v6435 = vld [vmem:[#allocation21 + $0x140] sm:$0xff]
        %v6436 = vld [vmem:[#allocation21 + $0x148] sm:$0xff]
        %v6437 = vld [vmem:[#allocation21 + $0x150] sm:$0xff]
        %v6438 = vld [vmem:[#allocation21 + $0x158] sm:$0xff]
        %v6439 = vld [vmem:[#allocation21 + $0x160] sm:$0xff]
        %v6440 = vld [vmem:[#allocation21 + $0x168] sm:$0xff]
        %v6441 = vld [vmem:[#allocation21 + $0x170] sm:$0xff]
        %v6442 = vld [vmem:[#allocation21 + $0x178] sm:$0xff]
        %v6443 = vld [vmem:[#allocation21 + $0x180] sm:$0xff]
        %v6444 = vld [vmem:[#allocation21 + $0x188] sm:$0xff]
        %v6445 = vld [vmem:[#allocation21 + $0x190] sm:$0xff]
        %v6446 = vld [vmem:[#allocation21 + $0x198] sm:$0xff]
        %v6447 = vld [vmem:[#allocation21 + $0x1a0] sm:$0xff]
        %v6448 = vld [vmem:[#allocation21 + $0x1a8] sm:$0xff]
        %v6449 = vld [vmem:[#allocation21 + $0x1b0] sm:$0xff]
        %v6450 = vld [vmem:[#allocation21 + $0x1b8] sm:$0xff]
        %v6451 = vld [vmem:[#allocation21 + $0x1c0] sm:$0xff]
        %v6452 = vld [vmem:[#allocation21 + $0x1c8] sm:$0xff]
        %v6453 = vld [vmem:[#allocation21 + $0x1d0] sm:$0xff]
        %v6454 = vld [vmem:[#allocation21 + $0x1d8] sm:$0xff]
        %v6455 = vld [vmem:[#allocation21 + $0x1e0] sm:$0xff]
        %v6456 = vld [vmem:[#allocation21 + $0x1e8] sm:$0xff]
        %v6457 = vld [vmem:[#allocation21 + $0x1f0] sm:$0xff]
        %v6458 = vld [vmem:[#allocation21 + $0x1f8] sm:$0xff]
        %v6459 = vld [vmem:[#allocation21 + $0x200] sm:$0xff]
        %v6460 = vld [vmem:[#allocation21 + $0x208] sm:$0xff]
        %v6461 = vld [vmem:[#allocation21 + $0x210] sm:$0xff]
        %v6462 = vld [vmem:[#allocation21 + $0x218] sm:$0xff]
        %v6463 = vld [vmem:[#allocation21 + $0x220] sm:$0xff]
        %v6464 = vld [vmem:[#allocation21 + $0x228] sm:$0xff]
        %v6465 = vld [vmem:[#allocation21 + $0x230] sm:$0xff]
        %v6466 = vld [vmem:[#allocation21 + $0x238] sm:$0xff]
        %v6467 = vld [vmem:[#allocation21 + $0x240] sm:$0xff]
        %v6468 = vld [vmem:[#allocation21 + $0x248] sm:$0xff]
        %v6469 = vld [vmem:[#allocation21 + $0x250] sm:$0xff]
        %v6470 = vld [vmem:[#allocation21 + $0x258] sm:$0xff]
        %v6471 = vld [vmem:[#allocation21 + $0x260] sm:$0xff]
        %v6472 = vld [vmem:[#allocation21 + $0x268] sm:$0xff]
        %v6473 = vld [vmem:[#allocation21 + $0x270] sm:$0xff]
        %v6474 = vld [vmem:[#allocation21 + $0x278] sm:$0xff]
        %v6475 = vld [vmem:[#allocation21 + $0x280] sm:$0xff]
        %v6476 = vld [vmem:[#allocation21 + $0x288] sm:$0xff]
        %v6477 = vld [vmem:[#allocation21 + $0x290] sm:$0xff]
        %v6478 = vld [vmem:[#allocation21 + $0x298] sm:$0xff]
        %v6479 = vld [vmem:[#allocation21 + $0x2a0] sm:$0xff]
        %v6480 = vld [vmem:[#allocation21 + $0x2a8] sm:$0xff]
        %v6481 = vld [vmem:[#allocation21 + $0x2b0] sm:$0xff]
        %v6482 = vld [vmem:[#allocation21 + $0x2b8] sm:$0xff]
        %v6483 = vld [vmem:[#allocation21 + $0x2c0] sm:$0xff]
        %v6484 = vld [vmem:[#allocation21 + $0x2c8] sm:$0xff]
        %v6485 = vld [vmem:[#allocation21 + $0x2d0] sm:$0xff]
        %v6486 = vld [vmem:[#allocation21 + $0x2d8] sm:$0xff]
        %v6487 = vld [vmem:[#allocation21 + $0x2e0] sm:$0xff]
        %v6488 = vld [vmem:[#allocation21 + $0x2e8] sm:$0xff]
        %v6489 = vld [vmem:[#allocation21 + $0x2f0] sm:$0xff]
        %v6490 = vld [vmem:[#allocation21 + $0x2f8] sm:$0xff]
        %v6491 = vld [vmem:[#allocation21 + $0x300] sm:$0xff]
        %v6492 = vld [vmem:[#allocation21 + $0x308] sm:$0xff]
        %v6493 = vld [vmem:[#allocation21 + $0x310] sm:$0xff]
        %v6494 = vld [vmem:[#allocation21 + $0x318] sm:$0xff]
        %v6495 = vld [vmem:[#allocation21 + $0x320] sm:$0xff]
        %v6496 = vld [vmem:[#allocation21 + $0x328] sm:$0xff]
        %v6497 = vld [vmem:[#allocation21 + $0x330] sm:$0xff]
        %v6498 = vld [vmem:[#allocation21 + $0x338] sm:$0xff]
        %v6499 = vld [vmem:[#allocation21 + $0x340] sm:$0xff]
        %v6500 = vld [vmem:[#allocation21 + $0x348] sm:$0xff]
        %v6501 = vld [vmem:[#allocation21 + $0x350] sm:$0xff]
        %v6502 = vld [vmem:[#allocation21 + $0x358] sm:$0xff]
        %v6503 = vld [vmem:[#allocation21 + $0x360] sm:$0xff]
        %v6504 = vld [vmem:[#allocation21 + $0x368] sm:$0xff]
        %v6505 = vld [vmem:[#allocation21 + $0x370] sm:$0xff]
        %v6506 = vld [vmem:[#allocation21 + $0x378] sm:$0xff]
        %v6507 = vld [vmem:[#allocation21 + $0x380] sm:$0xff]
        %v6508 = vld [vmem:[#allocation21 + $0x388] sm:$0xff]
        %v6509 = vld [vmem:[#allocation21 + $0x390] sm:$0xff]
        %v6510 = vld [vmem:[#allocation21 + $0x398] sm:$0xff]
        %v6511 = vld [vmem:[#allocation21 + $0x3a0] sm:$0xff]
        %v6512 = vld [vmem:[#allocation21 + $0x3a8] sm:$0xff]
        %v6513 = vld [vmem:[#allocation21 + $0x3b0] sm:$0xff]
        %v6514 = vld [vmem:[#allocation21 + $0x3b8] sm:$0xff]
        %v6515 = vld [vmem:[#allocation21 + $0x3c0] sm:$0xff]
        %v6516 = vld [vmem:[#allocation21 + $0x3c8] sm:$0xff]
        %v6517 = vld [vmem:[#allocation21 + $0x3d0] sm:$0xff]
        %v6518 = vld [vmem:[#allocation21 + $0x3d8] sm:$0xff]
        %v6519 = vld [vmem:[#allocation21 + $0x3e0] sm:$0xff]
        %v6520 = vld [vmem:[#allocation21 + $0x3e8] sm:$0xff]
        %v6521 = vld [vmem:[#allocation21 + $0x3f0] sm:$0xff]
        %v6522 = vld [vmem:[#allocation21 + $0x3f8] sm:$0xff]
        %v6523 = vld [vmem:[%s16] sm:$0x3]
        %v6524 = vunpack.c.l.bf16 %v6523
        %v6526 = vlaneseq
        %v6527 = vshrl.u32 %v6526, 7
        %v6528 = vsub.s32 0, %v6527
        %v6529 = vrot.slane %v6524, %v6528
        %v6530 = vlaneseq
        %v6531 = vshrl.u32 %v6530, 7
        %v6532 = vsub.s32 2, %v6531
        %v6533 = vrot.slane %v6524, %v6532
        %v6536 = vlaneseq
        %v6537 = vshrl.u32 %v6536, 7
        %v6538 = vsub.s32 0, %v6537
        %v6539 = vrot.slane %v6529, %v6538
        %v6540 = vlaneseq
        %v6541 = vshrl.u32 %v6540, 7
        %v6542 = vsub.s32 0, %v6541
        %v6543 = vrot.slane %v6533, %v6542
        %v6672 = vunpack.c.l.b16 %v6395
        %v6673 = vunpack.c.h.b16 %v6395
        %v6674 = vunpack.c.l.b16 %v6396
        %v6675 = vunpack.c.h.b16 %v6396
        %v6676 = vunpack.c.l.b16 %v6397
        %v6677 = vunpack.c.h.b16 %v6397
        %v6678 = vunpack.c.l.b16 %v6398
        %v6679 = vunpack.c.h.b16 %v6398
        %v6680 = vunpack.c.l.b16 %v6399
        %v6681 = vunpack.c.h.b16 %v6399
        %v6682 = vunpack.c.l.b16 %v6400
        %v6683 = vunpack.c.h.b16 %v6400
        %v6684 = vunpack.c.l.b16 %v6401
        %v6685 = vunpack.c.h.b16 %v6401
        %v6686 = vunpack.c.l.b16 %v6402
        %v6687 = vunpack.c.h.b16 %v6402
        %v6688 = vunpack.c.l.b16 %v6403
        %v6689 = vunpack.c.h.b16 %v6403
        %v6690 = vunpack.c.l.b16 %v6404
        %v6691 = vunpack.c.h.b16 %v6404
        %v6692 = vunpack.c.l.b16 %v6405
        %v6693 = vunpack.c.h.b16 %v6405
        %v6694 = vunpack.c.l.b16 %v6406
        %v6695 = vunpack.c.h.b16 %v6406
        %v6696 = vunpack.c.l.b16 %v6407
        %v6697 = vunpack.c.h.b16 %v6407
        %v6698 = vunpack.c.l.b16 %v6408
        %v6699 = vunpack.c.h.b16 %v6408
        %v6700 = vunpack.c.l.b16 %v6409
        %v6701 = vunpack.c.h.b16 %v6409
        %v6702 = vunpack.c.l.b16 %v6410
        %v6703 = vunpack.c.h.b16 %v6410
        %v6704 = vunpack.c.l.b16 %v6411
        %v6705 = vunpack.c.h.b16 %v6411
        %v6706 = vunpack.c.l.b16 %v6412
        %v6707 = vunpack.c.h.b16 %v6412
        %v6708 = vunpack.c.l.b16 %v6413
        %v6709 = vunpack.c.h.b16 %v6413
        %v6710 = vunpack.c.l.b16 %v6414
        %v6711 = vunpack.c.h.b16 %v6414
        %v6712 = vunpack.c.l.b16 %v6415
        %v6713 = vunpack.c.h.b16 %v6415
        %v6714 = vunpack.c.l.b16 %v6416
        %v6715 = vunpack.c.h.b16 %v6416
        %v6716 = vunpack.c.l.b16 %v6417
        %v6717 = vunpack.c.h.b16 %v6417
        %v6718 = vunpack.c.l.b16 %v6418
        %v6719 = vunpack.c.h.b16 %v6418
        %v6720 = vunpack.c.l.b16 %v6419
        %v6721 = vunpack.c.h.b16 %v6419
        %v6722 = vunpack.c.l.b16 %v6420
        %v6723 = vunpack.c.h.b16 %v6420
        %v6724 = vunpack.c.l.b16 %v6421
        %v6725 = vunpack.c.h.b16 %v6421
        %v6726 = vunpack.c.l.b16 %v6422
        %v6727 = vunpack.c.h.b16 %v6422
        %v6728 = vunpack.c.l.b16 %v6423
        %v6729 = vunpack.c.h.b16 %v6423
        %v6730 = vunpack.c.l.b16 %v6424
        %v6731 = vunpack.c.h.b16 %v6424
        %v6732 = vunpack.c.l.b16 %v6425
        %v6733 = vunpack.c.h.b16 %v6425
        %v6734 = vunpack.c.l.b16 %v6426
        %v6735 = vunpack.c.h.b16 %v6426
        %v6736 = vunpack.c.l.b16 %v6427
        %v6737 = vunpack.c.h.b16 %v6427
        %v6738 = vunpack.c.l.b16 %v6428
        %v6739 = vunpack.c.h.b16 %v6428
        %v6740 = vunpack.c.l.b16 %v6429
        %v6741 = vunpack.c.h.b16 %v6429
        %v6742 = vunpack.c.l.b16 %v6430
        %v6743 = vunpack.c.h.b16 %v6430
        %v6744 = vunpack.c.l.b16 %v6431
        %v6745 = vunpack.c.h.b16 %v6431
        %v6746 = vunpack.c.l.b16 %v6432
        %v6747 = vunpack.c.h.b16 %v6432
        %v6748 = vunpack.c.l.b16 %v6433
        %v6749 = vunpack.c.h.b16 %v6433
        %v6750 = vunpack.c.l.b16 %v6434
        %v6751 = vunpack.c.h.b16 %v6434
        %v6752 = vunpack.c.l.b16 %v6435
        %v6753 = vunpack.c.h.b16 %v6435
        %v6754 = vunpack.c.l.b16 %v6436
        %v6755 = vunpack.c.h.b16 %v6436
        %v6756 = vunpack.c.l.b16 %v6437
        %v6757 = vunpack.c.h.b16 %v6437
        %v6758 = vunpack.c.l.b16 %v6438
        %v6759 = vunpack.c.h.b16 %v6438
        %v6760 = vunpack.c.l.b16 %v6439
        %v6761 = vunpack.c.h.b16 %v6439
        %v6762 = vunpack.c.l.b16 %v6440
        %v6763 = vunpack.c.h.b16 %v6440
        %v6764 = vunpack.c.l.b16 %v6441
        %v6765 = vunpack.c.h.b16 %v6441
        %v6766 = vunpack.c.l.b16 %v6442
        %v6767 = vunpack.c.h.b16 %v6442
        %v6768 = vunpack.c.l.b16 %v6443
        %v6769 = vunpack.c.h.b16 %v6443
        %v6770 = vunpack.c.l.b16 %v6444
        %v6771 = vunpack.c.h.b16 %v6444
        %v6772 = vunpack.c.l.b16 %v6445
        %v6773 = vunpack.c.h.b16 %v6445
        %v6774 = vunpack.c.l.b16 %v6446
        %v6775 = vunpack.c.h.b16 %v6446
        %v6776 = vunpack.c.l.b16 %v6447
        %v6777 = vunpack.c.h.b16 %v6447
        %v6778 = vunpack.c.l.b16 %v6448
        %v6779 = vunpack.c.h.b16 %v6448
        %v6780 = vunpack.c.l.b16 %v6449
        %v6781 = vunpack.c.h.b16 %v6449
        %v6782 = vunpack.c.l.b16 %v6450
        %v6783 = vunpack.c.h.b16 %v6450
        %v6784 = vunpack.c.l.b16 %v6451
        %v6785 = vunpack.c.h.b16 %v6451
        %v6786 = vunpack.c.l.b16 %v6452
        %v6787 = vunpack.c.h.b16 %v6452
        %v6788 = vunpack.c.l.b16 %v6453
        %v6789 = vunpack.c.h.b16 %v6453
        %v6790 = vunpack.c.l.b16 %v6454
        %v6791 = vunpack.c.h.b16 %v6454
        %v6792 = vunpack.c.l.b16 %v6455
        %v6793 = vunpack.c.h.b16 %v6455
        %v6794 = vunpack.c.l.b16 %v6456
        %v6795 = vunpack.c.h.b16 %v6456
        %v6796 = vunpack.c.l.b16 %v6457
        %v6797 = vunpack.c.h.b16 %v6457
        %v6798 = vunpack.c.l.b16 %v6458
        %v6799 = vunpack.c.h.b16 %v6458
        %v6800 = vunpack.c.l.b16 %v6459
        %v6801 = vunpack.c.h.b16 %v6459
        %v6802 = vunpack.c.l.b16 %v6460
        %v6803 = vunpack.c.h.b16 %v6460
        %v6804 = vunpack.c.l.b16 %v6461
        %v6805 = vunpack.c.h.b16 %v6461
        %v6806 = vunpack.c.l.b16 %v6462
        %v6807 = vunpack.c.h.b16 %v6462
        %v6808 = vunpack.c.l.b16 %v6463
        %v6809 = vunpack.c.h.b16 %v6463
        %v6810 = vunpack.c.l.b16 %v6464
        %v6811 = vunpack.c.h.b16 %v6464
        %v6812 = vunpack.c.l.b16 %v6465
        %v6813 = vunpack.c.h.b16 %v6465
        %v6814 = vunpack.c.l.b16 %v6466
        %v6815 = vunpack.c.h.b16 %v6466
        %v6816 = vunpack.c.l.b16 %v6467
        %v6817 = vunpack.c.h.b16 %v6467
        %v6818 = vunpack.c.l.b16 %v6468
        %v6819 = vunpack.c.h.b16 %v6468
        %v6820 = vunpack.c.l.b16 %v6469
        %v6821 = vunpack.c.h.b16 %v6469
        %v6822 = vunpack.c.l.b16 %v6470
        %v6823 = vunpack.c.h.b16 %v6470
        %v6824 = vunpack.c.l.b16 %v6471
        %v6825 = vunpack.c.h.b16 %v6471
        %v6826 = vunpack.c.l.b16 %v6472
        %v6827 = vunpack.c.h.b16 %v6472
        %v6828 = vunpack.c.l.b16 %v6473
        %v6829 = vunpack.c.h.b16 %v6473
        %v6830 = vunpack.c.l.b16 %v6474
        %v6831 = vunpack.c.h.b16 %v6474
        %v6832 = vunpack.c.l.b16 %v6475
        %v6833 = vunpack.c.h.b16 %v6475
        %v6834 = vunpack.c.l.b16 %v6476
        %v6835 = vunpack.c.h.b16 %v6476
        %v6836 = vunpack.c.l.b16 %v6477
        %v6837 = vunpack.c.h.b16 %v6477
        %v6838 = vunpack.c.l.b16 %v6478
        %v6839 = vunpack.c.h.b16 %v6478
        %v6840 = vunpack.c.l.b16 %v6479
        %v6841 = vunpack.c.h.b16 %v6479
        %v6842 = vunpack.c.l.b16 %v6480
        %v6843 = vunpack.c.h.b16 %v6480
        %v6844 = vunpack.c.l.b16 %v6481
        %v6845 = vunpack.c.h.b16 %v6481
        %v6846 = vunpack.c.l.b16 %v6482
        %v6847 = vunpack.c.h.b16 %v6482
        %v6848 = vunpack.c.l.b16 %v6483
        %v6849 = vunpack.c.h.b16 %v6483
        %v6850 = vunpack.c.l.b16 %v6484
        %v6851 = vunpack.c.h.b16 %v6484
        %v6852 = vunpack.c.l.b16 %v6485
        %v6853 = vunpack.c.h.b16 %v6485
        %v6854 = vunpack.c.l.b16 %v6486
        %v6855 = vunpack.c.h.b16 %v6486
        %v6856 = vunpack.c.l.b16 %v6487
        %v6857 = vunpack.c.h.b16 %v6487
        %v6858 = vunpack.c.l.b16 %v6488
        %v6859 = vunpack.c.h.b16 %v6488
        %v6860 = vunpack.c.l.b16 %v6489
        %v6861 = vunpack.c.h.b16 %v6489
        %v6862 = vunpack.c.l.b16 %v6490
        %v6863 = vunpack.c.h.b16 %v6490
        %v6864 = vunpack.c.l.b16 %v6491
        %v6865 = vunpack.c.h.b16 %v6491
        %v6866 = vunpack.c.l.b16 %v6492
        %v6867 = vunpack.c.h.b16 %v6492
        %v6868 = vunpack.c.l.b16 %v6493
        %v6869 = vunpack.c.h.b16 %v6493
        %v6870 = vunpack.c.l.b16 %v6494
        %v6871 = vunpack.c.h.b16 %v6494
        %v6872 = vunpack.c.l.b16 %v6495
        %v6873 = vunpack.c.h.b16 %v6495
        %v6874 = vunpack.c.l.b16 %v6496
        %v6875 = vunpack.c.h.b16 %v6496
        %v6876 = vunpack.c.l.b16 %v6497
        %v6877 = vunpack.c.h.b16 %v6497
        %v6878 = vunpack.c.l.b16 %v6498
        %v6879 = vunpack.c.h.b16 %v6498
        %v6880 = vunpack.c.l.b16 %v6499
        %v6881 = vunpack.c.h.b16 %v6499
        %v6882 = vunpack.c.l.b16 %v6500
        %v6883 = vunpack.c.h.b16 %v6500
        %v6884 = vunpack.c.l.b16 %v6501
        %v6885 = vunpack.c.h.b16 %v6501
        %v6886 = vunpack.c.l.b16 %v6502
        %v6887 = vunpack.c.h.b16 %v6502
        %v6888 = vunpack.c.l.b16 %v6503
        %v6889 = vunpack.c.h.b16 %v6503
        %v6890 = vunpack.c.l.b16 %v6504
        %v6891 = vunpack.c.h.b16 %v6504
        %v6892 = vunpack.c.l.b16 %v6505
        %v6893 = vunpack.c.h.b16 %v6505
        %v6894 = vunpack.c.l.b16 %v6506
        %v6895 = vunpack.c.h.b16 %v6506
        %v6896 = vunpack.c.l.b16 %v6507
        %v6897 = vunpack.c.h.b16 %v6507
        %v6898 = vunpack.c.l.b16 %v6508
        %v6899 = vunpack.c.h.b16 %v6508
        %v6900 = vunpack.c.l.b16 %v6509
        %v6901 = vunpack.c.h.b16 %v6509
        %v6902 = vunpack.c.l.b16 %v6510
        %v6903 = vunpack.c.h.b16 %v6510
        %v6904 = vunpack.c.l.b16 %v6511
        %v6905 = vunpack.c.h.b16 %v6511
        %v6906 = vunpack.c.l.b16 %v6512
        %v6907 = vunpack.c.h.b16 %v6512
        %v6908 = vunpack.c.l.b16 %v6513
        %v6909 = vunpack.c.h.b16 %v6513
        %v6910 = vunpack.c.l.b16 %v6514
        %v6911 = vunpack.c.h.b16 %v6514
        %v6912 = vunpack.c.l.b16 %v6515
        %v6913 = vunpack.c.h.b16 %v6515
        %v6914 = vunpack.c.l.b16 %v6516
        %v6915 = vunpack.c.h.b16 %v6516
        %v6916 = vunpack.c.l.b16 %v6517
        %v6917 = vunpack.c.h.b16 %v6517
        %v6918 = vunpack.c.l.b16 %v6518
        %v6919 = vunpack.c.h.b16 %v6518
        %v6920 = vunpack.c.l.b16 %v6519
        %v6921 = vunpack.c.h.b16 %v6519
        %v6922 = vunpack.c.l.b16 %v6520
        %v6923 = vunpack.c.h.b16 %v6520
        %v6924 = vunpack.c.l.b16 %v6521
        %v6925 = vunpack.c.h.b16 %v6521
        %v6926 = vunpack.c.l.b16 %v6522
        %v6927 = vunpack.c.h.b16 %v6522
        %v6928 = vpack.c.b16 %v6674, %v6672
        %v6929 = vpack.c.b16 %v6675, %v6673
        %v6930 = vpack.c.b16 %v6678, %v6676
        %v6931 = vpack.c.b16 %v6679, %v6677
        %v6932 = vpack.c.b16 %v6682, %v6680
        %v6933 = vpack.c.b16 %v6683, %v6681
        %v6934 = vpack.c.b16 %v6686, %v6684
        %v6935 = vpack.c.b16 %v6687, %v6685
        %v6936 = vpack.c.b16 %v6690, %v6688
        %v6937 = vpack.c.b16 %v6691, %v6689
        %v6938 = vpack.c.b16 %v6694, %v6692
        %v6939 = vpack.c.b16 %v6695, %v6693
        %v6940 = vpack.c.b16 %v6698, %v6696
        %v6941 = vpack.c.b16 %v6699, %v6697
        %v6942 = vpack.c.b16 %v6702, %v6700
        %v6943 = vpack.c.b16 %v6703, %v6701
        %v6944 = vpack.c.b16 %v6706, %v6704
        %v6945 = vpack.c.b16 %v6707, %v6705
        %v6946 = vpack.c.b16 %v6710, %v6708
        %v6947 = vpack.c.b16 %v6711, %v6709
        %v6948 = vpack.c.b16 %v6714, %v6712
        %v6949 = vpack.c.b16 %v6715, %v6713
        %v6950 = vpack.c.b16 %v6718, %v6716
        %v6951 = vpack.c.b16 %v6719, %v6717
        %v6952 = vpack.c.b16 %v6722, %v6720
        %v6953 = vpack.c.b16 %v6723, %v6721
        %v6954 = vpack.c.b16 %v6726, %v6724
        %v6955 = vpack.c.b16 %v6727, %v6725
        %v6956 = vpack.c.b16 %v6730, %v6728
        %v6957 = vpack.c.b16 %v6731, %v6729
        %v6958 = vpack.c.b16 %v6734, %v6732
        %v6959 = vpack.c.b16 %v6735, %v6733
        %v6960 = vpack.c.b16 %v6738, %v6736
        %v6961 = vpack.c.b16 %v6739, %v6737
        %v6962 = vpack.c.b16 %v6742, %v6740
        %v6963 = vpack.c.b16 %v6743, %v6741
        %v6964 = vpack.c.b16 %v6746, %v6744
        %v6965 = vpack.c.b16 %v6747, %v6745
        %v6966 = vpack.c.b16 %v6750, %v6748
        %v6967 = vpack.c.b16 %v6751, %v6749
        %v6968 = vpack.c.b16 %v6754, %v6752
        %v6969 = vpack.c.b16 %v6755, %v6753
        %v6970 = vpack.c.b16 %v6758, %v6756
        %v6971 = vpack.c.b16 %v6759, %v6757
        %v6972 = vpack.c.b16 %v6762, %v6760
        %v6973 = vpack.c.b16 %v6763, %v6761
        %v6974 = vpack.c.b16 %v6766, %v6764
        %v6975 = vpack.c.b16 %v6767, %v6765
        %v6976 = vpack.c.b16 %v6770, %v6768
        %v6977 = vpack.c.b16 %v6771, %v6769
        %v6978 = vpack.c.b16 %v6774, %v6772
        %v6979 = vpack.c.b16 %v6775, %v6773
        %v6980 = vpack.c.b16 %v6778, %v6776
        %v6981 = vpack.c.b16 %v6779, %v6777
        %v6982 = vpack.c.b16 %v6782, %v6780
        %v6983 = vpack.c.b16 %v6783, %v6781
        %v6984 = vpack.c.b16 %v6786, %v6784
        %v6985 = vpack.c.b16 %v6787, %v6785
        %v6986 = vpack.c.b16 %v6790, %v6788
        %v6987 = vpack.c.b16 %v6791, %v6789
        %v6988 = vpack.c.b16 %v6794, %v6792
        %v6989 = vpack.c.b16 %v6795, %v6793
        %v6990 = vpack.c.b16 %v6798, %v6796
        %v6991 = vpack.c.b16 %v6799, %v6797
        %v6992 = vpack.c.b16 %v6802, %v6800
        %v6993 = vpack.c.b16 %v6803, %v6801
        %v6994 = vpack.c.b16 %v6806, %v6804
        %v6995 = vpack.c.b16 %v6807, %v6805
        %v6996 = vpack.c.b16 %v6810, %v6808
        %v6997 = vpack.c.b16 %v6811, %v6809
        %v6998 = vpack.c.b16 %v6814, %v6812
        %v6999 = vpack.c.b16 %v6815, %v6813
        %v7000 = vpack.c.b16 %v6818, %v6816
        %v7001 = vpack.c.b16 %v6819, %v6817
        %v7002 = vpack.c.b16 %v6822, %v6820
        %v7003 = vpack.c.b16 %v6823, %v6821
        %v7004 = vpack.c.b16 %v6826, %v6824
        %v7005 = vpack.c.b16 %v6827, %v6825
        %v7006 = vpack.c.b16 %v6830, %v6828
        %v7007 = vpack.c.b16 %v6831, %v6829
        %v7008 = vpack.c.b16 %v6834, %v6832
        %v7009 = vpack.c.b16 %v6835, %v6833
        %v7010 = vpack.c.b16 %v6838, %v6836
        %v7011 = vpack.c.b16 %v6839, %v6837
        %v7012 = vpack.c.b16 %v6842, %v6840
        %v7013 = vpack.c.b16 %v6843, %v6841
        %v7014 = vpack.c.b16 %v6846, %v6844
        %v7015 = vpack.c.b16 %v6847, %v6845
        %v7016 = vpack.c.b16 %v6850, %v6848
        %v7017 = vpack.c.b16 %v6851, %v6849
        %v7018 = vpack.c.b16 %v6854, %v6852
        %v7019 = vpack.c.b16 %v6855, %v6853
        %v7020 = vpack.c.b16 %v6858, %v6856
        %v7021 = vpack.c.b16 %v6859, %v6857
        %v7022 = vpack.c.b16 %v6862, %v6860
        %v7023 = vpack.c.b16 %v6863, %v6861
        %v7024 = vpack.c.b16 %v6866, %v6864
        %v7025 = vpack.c.b16 %v6867, %v6865
        %v7026 = vpack.c.b16 %v6870, %v6868
        %v7027 = vpack.c.b16 %v6871, %v6869
        %v7028 = vpack.c.b16 %v6874, %v6872
        %v7029 = vpack.c.b16 %v6875, %v6873
        %v7030 = vpack.c.b16 %v6878, %v6876
        %v7031 = vpack.c.b16 %v6879, %v6877
        %v7032 = vpack.c.b16 %v6882, %v6880
        %v7033 = vpack.c.b16 %v6883, %v6881
        %v7034 = vpack.c.b16 %v6886, %v6884
        %v7035 = vpack.c.b16 %v6887, %v6885
        %v7036 = vpack.c.b16 %v6890, %v6888
        %v7037 = vpack.c.b16 %v6891, %v6889
        %v7038 = vpack.c.b16 %v6894, %v6892
        %v7039 = vpack.c.b16 %v6895, %v6893
        %v7040 = vpack.c.b16 %v6898, %v6896
        %v7041 = vpack.c.b16 %v6899, %v6897
        %v7042 = vpack.c.b16 %v6902, %v6900
        %v7043 = vpack.c.b16 %v6903, %v6901
        %v7044 = vpack.c.b16 %v6906, %v6904
        %v7045 = vpack.c.b16 %v6907, %v6905
        %v7046 = vpack.c.b16 %v6910, %v6908
        %v7047 = vpack.c.b16 %v6911, %v6909
        %v7048 = vpack.c.b16 %v6914, %v6912
        %v7049 = vpack.c.b16 %v6915, %v6913
        %v7050 = vpack.c.b16 %v6918, %v6916
        %v7051 = vpack.c.b16 %v6919, %v6917
        %v7052 = vpack.c.b16 %v6922, %v6920
        %v7053 = vpack.c.b16 %v6923, %v6921
        %v7054 = vpack.c.b16 %v6926, %v6924
        %v7055 = vpack.c.b16 %v6927, %v6925
        %7184 = vmatprep.subr.bf16.mxu0 %v6943
        %7185 = vmatpush1.bf16.msra.mxu0 %v6942
        %7186 = vmatprep.subr.bf16.mxu0 %v6941
        %7187 = vmatpush1.bf16.msra.mxu0 %v6940
        %7188 = vmatprep.subr.bf16.mxu0 %v6939
        %7189 = vmatpush1.bf16.msra.mxu0 %v6938
        %7190 = vmatprep.subr.bf16.mxu0 %v6937
        %7191 = vmatpush1.bf16.msra.mxu0 %v6936
        %7192 = vmatprep.subr.bf16.mxu0 %v6935
        %7193 = vmatpush1.bf16.msra.mxu0 %v6934
        %7194 = vmatprep.subr.bf16.mxu0 %v6933
        %7195 = vmatpush1.bf16.msra.mxu0 %v6932
        %7196 = vmatprep.subr.bf16.mxu0 %v6931
        %7197 = vmatpush1.bf16.msra.mxu0 %v6930
        %7198 = vmatprep.subr.bf16.mxu0 %v6929
        %7199 = vmatpush1.bf16.msra.mxu0 %v6928
        %7200 = vmatprep.subr.bf16.mxu0 %v6959
        %7201 = vmatpush2.bf16.msra.mxu0 %v6958
        %7202 = vmatprep.subr.bf16.mxu0 %v6957
        %7203 = vmatpush2.bf16.msra.mxu0 %v6956
        %7204 = vmatprep.subr.bf16.mxu0 %v6955
        %7205 = vmatpush2.bf16.msra.mxu0 %v6954
        %7206 = vmatprep.subr.bf16.mxu0 %v6953
        %7207 = vmatpush2.bf16.msra.mxu0 %v6952
        %7208 = vmatprep.subr.bf16.mxu0 %v6951
        %7209 = vmatpush2.bf16.msra.mxu0 %v6950
        %7210 = vmatprep.subr.bf16.mxu0 %v6949
        %7211 = vmatpush2.bf16.msra.mxu0 %v6948
        %7212 = vmatprep.subr.bf16.mxu0 %v6947
        %7213 = vmatpush2.bf16.msra.mxu0 %v6946
        %7214 = vmatprep.subr.bf16.mxu0 %v6945
        %7215 = vmatpush2.bf16.msra.mxu0 %v6944
        %7216 = vmatprep.mubr.bf16.mxu0 %v6380
        %7217 = vmatmul.mubr.bf16.gmra.mxu0 %v6379
        %v7218 = vpop.f32.mrf.mxu0
        %v7219 = vadd.f32 %v6539, %v7218
        %v7220 = vpop.f32.mrf.mxu0
        %v7221 = vadd.f32 %v6543, %v7220
        %v7222 = vpop.f32.mrf.mxu0
        %v7223 = vadd.f32 %v6539, %v7222
        %v7224 = vpop.f32.mrf.mxu0
        %v7225 = vadd.f32 %v6543, %v7224
        %7226 = vmatprep.mubr.bf16.mxu0 %v6388
        %7227 = vmatmul.mubr.bf16.gmra.mxu0 %v6387
        %v7228 = vpop.f32.mrf.mxu0
        %v7229 = vadd.f32 %v6539, %v7228
        %v7230 = vpop.f32.mrf.mxu0
        %v7231 = vadd.f32 %v6543, %v7230
        %v7232 = vpop.f32.mrf.mxu0
        %v7233 = vadd.f32 %v6539, %v7232
        %v7234 = vpop.f32.mrf.mxu0
        %v7235 = vadd.f32 %v6543, %v7234
        %7236 = vdwg.mxu0
        %7237 = vmatprep.subr.bf16.mxu0 %v6975
        %7238 = vmatpush1.bf16.msra.mxu0 %v6974
        %7239 = vmatprep.subr.bf16.mxu0 %v6973
        %7240 = vmatpush1.bf16.msra.mxu0 %v6972
        %7241 = vmatprep.subr.bf16.mxu0 %v6971
        %7242 = vmatpush1.bf16.msra.mxu0 %v6970
        %7243 = vmatprep.subr.bf16.mxu0 %v6969
        %7244 = vmatpush1.bf16.msra.mxu0 %v6968
        %7245 = vmatprep.subr.bf16.mxu0 %v6967
        %7246 = vmatpush1.bf16.msra.mxu0 %v6966
        %7247 = vmatprep.subr.bf16.mxu0 %v6965
        %7248 = vmatpush1.bf16.msra.mxu0 %v6964
        %7249 = vmatprep.subr.bf16.mxu0 %v6963
        %7250 = vmatpush1.bf16.msra.mxu0 %v6962
        %7251 = vmatprep.subr.bf16.mxu0 %v6961
        %7252 = vmatpush1.bf16.msra.mxu0 %v6960
        %7253 = vmatprep.subr.bf16.mxu0 %v6991
        %7254 = vmatpush2.bf16.msra.mxu0 %v6990
        %7255 = vmatprep.subr.bf16.mxu0 %v6989
        %7256 = vmatpush2.bf16.msra.mxu0 %v6988
        %7257 = vmatprep.subr.bf16.mxu0 %v6987
        %7258 = vmatpush2.bf16.msra.mxu0 %v6986
        %7259 = vmatprep.subr.bf16.mxu0 %v6985
        %7260 = vmatpush2.bf16.msra.mxu0 %v6984
        %7261 = vmatprep.subr.bf16.mxu0 %v6983
        %7262 = vmatpush2.bf16.msra.mxu0 %v6982
        %7263 = vmatprep.subr.bf16.mxu0 %v6981
        %7264 = vmatpush2.bf16.msra.mxu0 %v6980
        %7265 = vmatprep.subr.bf16.mxu0 %v6979
        %7266 = vmatpush2.bf16.msra.mxu0 %v6978
        %7267 = vmatprep.subr.bf16.mxu0 %v6977
        %7268 = vmatpush2.bf16.msra.mxu0 %v6976
        %7269 = vmatprep.mubr.bf16.mxu0 %v6382
        %7270 = vmatmul.mubr.bf16.gmra.mxu0 %v6381
        %v7271 = vpop.f32.mrf.mxu0
        %v7272 = vadd.f32 %v7219, %v7271
        %v7273 = vpop.f32.mrf.mxu0
        %v7274 = vadd.f32 %v7221, %v7273
        %v7275 = vpop.f32.mrf.mxu0
        %v7276 = vadd.f32 %v7223, %v7275
        %v7277 = vpop.f32.mrf.mxu0
        %v7278 = vadd.f32 %v7225, %v7277
        %7279 = vmatprep.mubr.bf16.mxu0 %v6390
        %7280 = vmatmul.mubr.bf16.gmra.mxu0 %v6389
        %v7281 = vpop.f32.mrf.mxu0
        %v7282 = vadd.f32 %v7229, %v7281
        %v7283 = vpop.f32.mrf.mxu0
        %v7284 = vadd.f32 %v7231, %v7283
        %v7285 = vpop.f32.mrf.mxu0
        %v7286 = vadd.f32 %v7233, %v7285
        %v7287 = vpop.f32.mrf.mxu0
        %v7288 = vadd.f32 %v7235, %v7287
        %7289 = vdwg.mxu0
        %7290 = vmatprep.subr.bf16.mxu0 %v7007
        %7291 = vmatpush1.bf16.msra.mxu0 %v7006
        %7292 = vmatprep.subr.bf16.mxu0 %v7005
        %7293 = vmatpush1.bf16.msra.mxu0 %v7004
        %7294 = vmatprep.subr.bf16.mxu0 %v7003
        %7295 = vmatpush1.bf16.msra.mxu0 %v7002
        %7296 = vmatprep.subr.bf16.mxu0 %v7001
        %7297 = vmatpush1.bf16.msra.mxu0 %v7000
        %7298 = vmatprep.subr.bf16.mxu0 %v6999
        %7299 = vmatpush1.bf16.msra.mxu0 %v6998
        %7300 = vmatprep.subr.bf16.mxu0 %v6997
        %7301 = vmatpush1.bf16.msra.mxu0 %v6996
        %7302 = vmatprep.subr.bf16.mxu0 %v6995
        %7303 = vmatpush1.bf16.msra.mxu0 %v6994
        %7304 = vmatprep.subr.bf16.mxu0 %v6993
        %7305 = vmatpush1.bf16.msra.mxu0 %v6992
        %7306 = vmatprep.subr.bf16.mxu0 %v7023
        %7307 = vmatpush2.bf16.msra.mxu0 %v7022
        %7308 = vmatprep.subr.bf16.mxu0 %v7021
        %7309 = vmatpush2.bf16.msra.mxu0 %v7020
        %7310 = vmatprep.subr.bf16.mxu0 %v7019
        %7311 = vmatpush2.bf16.msra.mxu0 %v7018
        %7312 = vmatprep.subr.bf16.mxu0 %v7017
        %7313 = vmatpush2.bf16.msra.mxu0 %v7016
        %7314 = vmatprep.subr.bf16.mxu0 %v7015
        %7315 = vmatpush2.bf16.msra.mxu0 %v7014
        %7316 = vmatprep.subr.bf16.mxu0 %v7013
        %7317 = vmatpush2.bf16.msra.mxu0 %v7012
        %7318 = vmatprep.subr.bf16.mxu0 %v7011
        %7319 = vmatpush2.bf16.msra.mxu0 %v7010
        %7320 = vmatprep.subr.bf16.mxu0 %v7009
        %7321 = vmatpush2.bf16.msra.mxu0 %v7008
        %7322 = vmatprep.mubr.bf16.mxu0 %v6384
        %7323 = vmatmul.mubr.bf16.gmra.mxu0 %v6383
        %v7324 = vpop.f32.mrf.mxu0
        %v7325 = vadd.f32 %v7272, %v7324
        %v7326 = vpop.f32.mrf.mxu0
        %v7327 = vadd.f32 %v7274, %v7326
        %v7328 = vpop.f32.mrf.mxu0
        %v7329 = vadd.f32 %v7276, %v7328
        %v7330 = vpop.f32.mrf.mxu0
        %v7331 = vadd.f32 %v7278, %v7330
        %7332 = vmatprep.mubr.bf16.mxu0 %v6392
        %7333 = vmatmul.mubr.bf16.gmra.mxu0 %v6391
        %v7334 = vpop.f32.mrf.mxu0
        %v7335 = vadd.f32 %v7282, %v7334
        %v7336 = vpop.f32.mrf.mxu0
        %v7337 = vadd.f32 %v7284, %v7336
        %v7338 = vpop.f32.mrf.mxu0
        %v7339 = vadd.f32 %v7286, %v7338
        %v7340 = vpop.f32.mrf.mxu0
        %v7341 = vadd.f32 %v7288, %v7340
        %7342 = vdwg.mxu0
        %7343 = vmatprep.subr.bf16.mxu0 %v7039
        %7344 = vmatpush1.bf16.msra.mxu0 %v7038
        %7345 = vmatprep.subr.bf16.mxu0 %v7037
        %7346 = vmatpush1.bf16.msra.mxu0 %v7036
        %7347 = vmatprep.subr.bf16.mxu0 %v7035
        %7348 = vmatpush1.bf16.msra.mxu0 %v7034
        %7349 = vmatprep.subr.bf16.mxu0 %v7033
        %7350 = vmatpush1.bf16.msra.mxu0 %v7032
        %7351 = vmatprep.subr.bf16.mxu0 %v7031
        %7352 = vmatpush1.bf16.msra.mxu0 %v7030
        %7353 = vmatprep.subr.bf16.mxu0 %v7029
        %7354 = vmatpush1.bf16.msra.mxu0 %v7028
        %7355 = vmatprep.subr.bf16.mxu0 %v7027
        %7356 = vmatpush1.bf16.msra.mxu0 %v7026
        %7357 = vmatprep.subr.bf16.mxu0 %v7025
        %7358 = vmatpush1.bf16.msra.mxu0 %v7024
        %7359 = vmatprep.subr.bf16.mxu0 %v7055
        %7360 = vmatpush2.bf16.msra.mxu0 %v7054
        %7361 = vmatprep.subr.bf16.mxu0 %v7053
        %7362 = vmatpush2.bf16.msra.mxu0 %v7052
        %7363 = vmatprep.subr.bf16.mxu0 %v7051
        %7364 = vmatpush2.bf16.msra.mxu0 %v7050
        %7365 = vmatprep.subr.bf16.mxu0 %v7049
        %7366 = vmatpush2.bf16.msra.mxu0 %v7048
        %7367 = vmatprep.subr.bf16.mxu0 %v7047
        %7368 = vmatpush2.bf16.msra.mxu0 %v7046
        %7369 = vmatprep.subr.bf16.mxu0 %v7045
        %7370 = vmatpush2.bf16.msra.mxu0 %v7044
        %7371 = vmatprep.subr.bf16.mxu0 %v7043
        %7372 = vmatpush2.bf16.msra.mxu0 %v7042
        %7373 = vmatprep.subr.bf16.mxu0 %v7041
        %7374 = vmatpush2.bf16.msra.mxu0 %v7040
        %7375 = vmatprep.mubr.bf16.mxu0 %v6386
        %7376 = vmatmul.mubr.bf16.gmra.mxu0 %v6385
        %v7377 = vpop.f32.mrf.mxu0
        %v7378 = vadd.f32 %v7325, %v7377
        %v7379 = vpop.f32.mrf.mxu0
        %v7380 = vadd.f32 %v7327, %v7379
        %v7381 = vpop.f32.mrf.mxu0
        %v7382 = vadd.f32 %v7329, %v7381
        %v7383 = vpop.f32.mrf.mxu0
        %v7384 = vadd.f32 %v7331, %v7383
        %7385 = vmatprep.mubr.bf16.mxu0 %v6394
        %7386 = vmatmul.mubr.bf16.gmra.mxu0 %v6393
        %v7387 = vpop.f32.mrf.mxu0
        %v7388 = vadd.f32 %v7335, %v7387
        %v7389 = vpop.f32.mrf.mxu0
        %v7390 = vadd.f32 %v7337, %v7389
        %v7391 = vpop.f32.mrf.mxu0
        %v7392 = vadd.f32 %v7339, %v7391
        %v7393 = vpop.f32.mrf.mxu0
        %v7394 = vadd.f32 %v7341, %v7393
        %7395 = vdwg.mxu0
        %v7396 = vtanh.pop %v7378
        %v7397 = vtanh.pop %v7380
        %v7398 = vtanh.pop %v7382
        %v7399 = vtanh.pop %v7384
        %v7400 = vtanh.pop %v7388
        %v7401 = vtanh.pop %v7390
        %v7402 = vtanh.pop %v7392
        %v7403 = vtanh.pop %v7394
        %7404 = vst [vmem:[%s731] sm:$0xff] %v7396
        %7405 = vst [vmem:[%s731 + $0x8] sm:$0xff] %v7397
        %7406 = vst [vmem:[%s731 + $0x10] sm:$0xff] %v7398
        %7407 = vst [vmem:[%s731 + $0x18] sm:$0xff] %v7399
        %7408 = vst [vmem:[%s731 + $0x20] sm:$0xff] %v7400
        %7409 = vst [vmem:[%s731 + $0x28] sm:$0xff] %v7401
        %7410 = vst [vmem:[%s731 + $0x30] sm:$0xff] %v7402
        %7411 = vst [vmem:[%s731 + $0x38] sm:$0xff] %v7403
        %s7412 = smul.u32 4, %s37
        %p7413 = scmp.lt.s32.totalorder %s7412, 7
        %s7414 = scalar_select %p7413, %s7412, 7
        %s7415 = smul.addr %s7414, 2
        %s7416 = smul.addr %s7415, 8
        %s7417 = scalar_lea.vmem %s17, %s7416
        // Predicated region
        $region141: #{generator_forward.1} parent=87 // pred_check
          %p7418 = pneg %p417
        $region142: #{generator_forward.1} parent=87 // pred_check_branch
          %7420 = sbr.rel (%p7418) target = $region144
        $region143: #{generator_forward.1} parent=87 // pred_region
          %s7421 = smul.u32 4, %s37
        $region144: #{generator_forward.1} parent=87 // pred_fallthru
          _
      $region88: #{generator_forward.1} parent=5 // pred_fallthru
        _
      %p7422 = scmp.le.s32.totalorder 2, %s32
      // Predicated region
      $region145: #{generator_forward.1} parent=5 // pred_check
        %p7423 = pneg %p7422
      $region146: #{generator_forward.1} parent=5 // pred_check_branch
        %7425 = sbr.rel (%p7423) target = $region148
      $region147: #{generator_forward.1} parent=5 // pred_region
        %s7426 = ssub.s32 %s32, 2
        // Predicated region
        $region149: #{generator_forward.1} parent=147 // pred_check
          %p7427 = pneg %p423
        $region150: #{generator_forward.1} parent=147 // pred_check_branch
          %7429 = sbr.rel (%p7427) target = $region152
        $region151: #{generator_forward.1} parent=147 // pred_region
          %s7430 = smul.u32 4, %s38
          %p7431 = scmp.lt.s32.totalorder %s7430, 7
          %s7432 = scalar_select %p7431, %s7430, 7
          %s7433 = smul.addr %s7432, 2
          %s7434 = smul.addr %s7433, 8
          %s7435 = scalar_lea.vmem %s17, %s7434
        $region152: #{generator_forward.1} parent=147 // pred_fallthru
          _
      $region148: #{generator_forward.1} parent=5 // pred_fallthru
        _
    $region6: #{generator_forward.1} parent=1 // loop_footer
      %s36 = sadd.s32 1, %s32
    $region7: #{generator_forward.1} parent=1 // loop_footer_branch
      %31 = sbr.rel target = $region3
    $region8: #{generator_forward.1} parent=1 // loop_exit
      _
    %7436 = vsyncpa [#allocation3], 1
    %s7437 = scalar_lea.sflag [#allocation3], 1
    %7438 = vsyncpa %s7437, 1
    %7439 = vsyncpa [#allocation5], 1
    %7440 = vsyncpa [#allocation8], 1
    %7441 = vsyncpa [#allocation11], 1
    %7442 = vsyncpa [#allocation14], 1
    %7443 = vsyncpa [#allocation17], 1
    %7444 = vsyncpa [#allocation20], 1

</llo_original>
